<compile_context>
chip_gen: v5e
topology: v5e:2x2
jax: 0.10.0
libtpu: 0.0.40
codegen_flags: <defaults>
</compile_context>

<pallas_src>
import numpy as np
import jax
import jax.numpy as jnp
from jax import lax
from jax.experimental import pallas as pl
from jax.experimental.pallas import tpu as pltpu

HIDDEN = 8


def _round_up(x, m):
    return ((x + m - 1) // m) * m


# ----------------------------------------------------------------------------
# Fused pyramid kernel: one batch element per grid step.
# ----------------------------------------------------------------------------
def _pyramid_kernel(
    # 12 scalar-prefetch weight/bias refs (SMEM, flattened f32)
    wq1, bq1, wq2, bq2, wh1, bh1, wh2, bh2, wf1, bf1, wf2, bf2,
    # VMEM inputs
    xA_ref,      # (1, H, W)     full-res LQ depth
    x4_ref,      # (1, H4, W4)   quarter-res LQ depth
    uhq_ref,     # (H2, H4)      row-duplication operator  quarter->half
    uwq_ref,     # (Wp4, Wp2)    col-duplication operator  quarter->half (zero padded)
    uhh_ref,     # (H, H2)       row-duplication operator  half->full
    uwh_ref,     # (Wp2, Wp)     col-duplication operator  half->full (zero padded)
    # VMEM outputs
    out_full_ref,    # (1, H, W)
    out_half_ref,    # (1, H2, W2)
    out_q_ref,       # (1, H4, W4)
    # VMEM scratch: halo-padded planes, interior rows [1:h+1], cols [0:w)
    pad_q_in,    # (1,      Hp4, Wp4)
    pad_q_f,     # (HIDDEN, Hp4, Wp4)
    pad_h_in,    # (1,      Hp2, Wp2)
    pad_h_f,     # (HIDDEN, Hp2, Wp2)
    pad_f_in,    # (2,      Hp,  Wp)
    pad_f_f,     # (HIDDEN, Hp,  Wp)
):
    f32 = jnp.float32
    H4, W4 = x4_ref.shape[1], x4_ref.shape[2]
    H, W = xA_ref.shape[1], xA_ref.shape[2]
    H2, W2 = 2 * H4, 2 * W4
    Wp4 = pad_q_in.shape[2]
    Wp2 = pad_h_in.shape[2]
    Wp = pad_f_in.shape[2]
    hidden = pad_q_f.shape[0]

    # -- unconditional per-step zero of the top/bottom halo rows (megacore-safe) --
    def zero_borders(ref, h):
        c, _, wp = ref.shape
        zrow = jnp.zeros((1, wp), f32)
        for ci in range(c):
            ref[ci, 0:1, :] = zrow
            ref[ci, h + 1:h + 2, :] = zrow

    zero_borders(pad_q_in, H4)
    zero_borders(pad_q_f, H4)
    zero_borders(pad_h_in, H2)
    zero_borders(pad_h_f, H2)
    zero_borders(pad_f_in, H)
    zero_borders(pad_f_f, H)

    def lane_mask(h, wp, w):
        return lax.broadcasted_iota(jnp.int32, (h, wp), 1) < w

    def conv3x3(pad_ref, cin, w_ref, b_ref, cout, h, wp, relu):
        """3x3 'same' conv, tap-outer / cout-inner.

        One lane-aligned row-window load per (ci, dy); the dx=0/2 taps come from
        XLU lane rolls (wrap reads land on guaranteed-zero columns).  Returns
        `cout` full-width (h, wp) f32 maps; columns >= w hold junk and must be
        masked by the caller before being stored back into a padded plane.
        """
        accs = [jnp.zeros((h, wp), f32) + b_ref[co] for co in range(cout)]
        for ci in range(cin):
            for dy in range(3):
                row = pad_ref[ci, dy:dy + h, :]              # one aligned load
                taps = (
                    pltpu.roll(row, 1, axis=1),              # dx=0: in[.., x-1]
                    row,                                     # dx=1: in[.., x  ]
                    pltpu.roll(row, wp - 1, axis=1),         # dx=2: in[.., x+1]
                )
                for dx in range(3):
                    tap = taps[dx]
                    for co in range(cout):
                        widx = ((dy * 3 + dx) * cin + ci) * cout + co
                        accs[co] = accs[co] + tap * w_ref[widx]
        if relu:
            accs = [jnp.maximum(a, 0.0) for a in accs]
        return accs

    def refine_level(pad_in, pad_feat, w1, b1, w2, b2, cin, h, w, wp):
        """conv(cin->hidden)+relu -> conv(hidden->1); returns masked residual."""
        mask = lane_mask(h, wp, w)                           # hoisted per level
        feats = conv3x3(pad_in, cin, w1, b1, hidden, h, wp, relu=True)
        for c in range(hidden):
            pad_feat[c, 1:h + 1, :] = jnp.where(mask, feats[c], 0.0)
        res = conv3x3(pad_feat, hidden, w2, b2, 1, h, wp, relu=False)[0]
        return jnp.where(mask, res, 0.0)

    # ---- quarter-resolution refinement --------------------------------------
    pad_q_in[0, 1:H4 + 1, 0:W4] = x4_ref[0]
    if Wp4 > W4:
        pad_q_in[0, 1:H4 + 1, W4:Wp4] = jnp.zeros((H4, Wp4 - W4), f32)
    res4 = refine_level(pad_q_in, pad_q_f, wq1, bq1, wq2, bq2, 1, H4, W4, Wp4)
    x4_fw = pad_q_in[0, 1:H4 + 1, :]                         # zero beyond W4
    d4_fw = x4_fw + res4                                     # zero beyond W4
    out_q_ref[0] = d4_fw[:, 0:W4]

    # ---- half-resolution refinement (fused nearest-2x upsample via MXU) -----
    up2_fw = jnp.dot(uhq_ref[...],
                     jnp.dot(d4_fw, uwq_ref[...], preferred_element_type=f32),
                     preferred_element_type=f32)             # (H2, Wp2), 0 beyond W2
    pad_h_in[0, 1:H2 + 1, :] = up2_fw
    res2 = refine_level(pad_h_in, pad_h_f, wh1, bh1, wh2, bh2, 1, H2, W2, Wp2)
    d2_fw = up2_fw + res2                                    # zero beyond W2
    out_half_ref[0] = d2_fw[:, 0:W2]

    # ---- full-resolution refinement (fused upsample + guidance "concat") ----
    up1_fw = jnp.dot(uhh_ref[...],
                     jnp.dot(d2_fw, uwh_ref[...], preferred_element_type=f32),
                     preferred_element_type=f32)             # (H, Wp), 0 beyond W
    pad_f_in[0, 1:H + 1, :] = up1_fw                         # channel 0: upsampled
    pad_f_in[1, 1:H + 1, 0:W] = xA_ref[0]                    # channel 1: LQ guide
    if Wp > W:
        pad_f_in[1, 1:H + 1, W:Wp] = jnp.zeros((H, Wp - W), f32)
    resf = refine_level(pad_f_in, pad_f_f, wf1, bf1, wf2, bf2, 2, H, W, Wp)
    out_full_ref[0] = (up1_fw + resf)[:, 0:W]


# ----------------------------------------------------------------------------
# Host wrapper: NCHW in / NCHW out, single fused pallas_call over the batch.
# ----------------------------------------------------------------------------
def pyramid_forward(depth_A_nchw, depth_A4_nchw, params):
    N, C, H, W = depth_A_nchw.shape
    _, _, H4, W4 = depth_A4_nchw.shape
    H2, W2 = 2 * H4, 2 * W4
    assert C == 1 and H == 4 * H4 and W == 4 * W4

    # squeeze channel: (N, H, W) => H on sublanes, W on the 128-lane axis
    xA = depth_A_nchw.reshape(N, H, W)
    x4 = depth_A4_nchw.reshape(N, H4, W4)

    # lane-/sublane-rounded halo-plane sizes
    Wp4 = _round_up(W4 + 2, 128)
    Wp2 = _round_up(W2 + 2, 128)
    Wp = _round_up(W + 2, 128)
    Hp4 = _round_up(H4 + 2, 8)
    Hp2 = _round_up(H2 + 2, 8)
    Hp = _round_up(H + 2, 8)

    # nearest-2x upsample operators, built once on the host (hoisted constants).
    # uw is zero beyond the valid rows/cols, so the upsampled plane comes out
    # already lane-masked and the junk columns of d*_fw are ignored for free.
    def up_ops(h_in, w_in, wp_in, wp_out):
        h_out, w_out = 2 * h_in, 2 * w_in
        uh = (np.arange(h_out)[:, None] // 2 == np.arange(h_in)[None, :])
        uw = np.zeros((wp_in, wp_out), np.float32)
        r = np.arange(w_out)
        uw[r // 2, r] = 1.0
        return jnp.asarray(uh.astype(np.float32)), jnp.asarray(uw)

    uh_q, uw_q = up_ops(H4, W4, Wp4, Wp2)
    uh_h, uw_h = up_ops(H2, W2, Wp2, Wp)

    # flattened weights/biases -> scalar-prefetch (SMEM) operands
    flat_params = []
    for name in ("q1", "q2", "h1", "h2", "f1", "f2"):
        w, b = params[name]
        flat_params += [w.reshape(-1).astype(jnp.float32),
                        b.reshape(-1).astype(jnp.float32)]
    hidden = params["q1"][0].shape[-1]

    grid_spec = pltpu.PrefetchScalarGridSpec(
        num_scalar_prefetch=12,
        grid=(N,),
        in_specs=[
            pl.BlockSpec((1, H, W), lambda n, *_: (n, 0, 0)),
            pl.BlockSpec((1, H4, W4), lambda n, *_: (n, 0, 0)),
            pl.BlockSpec((H2, H4), lambda n, *_: (0, 0)),     # constant, stays resident
            pl.BlockSpec((Wp4, Wp2), lambda n, *_: (0, 0)),
            pl.BlockSpec((H, H2), lambda n, *_: (0, 0)),
            pl.BlockSpec((Wp2, Wp), lambda n, *_: (0, 0)),
        ],
        out_specs=(
            pl.BlockSpec((1, H, W), lambda n, *_: (n, 0, 0)),
            pl.BlockSpec((1, H2, W2), lambda n, *_: (n, 0, 0)),
            pl.BlockSpec((1, H4, W4), lambda n, *_: (n, 0, 0)),
        ),
        scratch_shapes=[
            pltpu.VMEM((1, Hp4, Wp4), jnp.float32),
            pltpu.VMEM((hidden, Hp4, Wp4), jnp.float32),
            pltpu.VMEM((1, Hp2, Wp2), jnp.float32),
            pltpu.VMEM((hidden, Hp2, Wp2), jnp.float32),
            pltpu.VMEM((2, Hp, Wp), jnp.float32),
            pltpu.VMEM((hidden, Hp, Wp), jnp.float32),
        ],
    )

    depth_A2B, d_2, d_4 = pl.pallas_call(
        _pyramid_kernel,
        out_shape=(
            jax.ShapeDtypeStruct((N, H, W), jnp.float32),
            jax.ShapeDtypeStruct((N, H2, W2), jnp.float32),
            jax.ShapeDtypeStruct((N, H4, W4), jnp.float32),
        ),
        grid_spec=grid_spec,
        compiler_params=pltpu.CompilerParams(
            dimension_semantics=("parallel",),          # megacore splits the batch
            vmem_limit_bytes=48 * 1024 * 1024,          # explicit budget (<= v7x 64MiB)
        ),
    )(*flat_params, xA, x4, uh_q, uw_q, uh_h, uw_h)

    return (depth_A2B.reshape(N, 1, H, W),
            d_2.reshape(N, 1, H2, W2),
            d_4.reshape(N, 1, H4, W4))


model_forward = jax.jit(pyramid_forward)


# ----------------------------------------------------------------------------
# Deterministic synthetic parameters (weights in HWIO layout).
# ----------------------------------------------------------------------------
def init_params(key, hidden=HIDDEN):
    def conv_init(k, cin, cout):
        kw, kb = jax.random.split(k)
        scale = 1.0 / jnp.sqrt(9.0 * cin)
        w = jax.random.uniform(kw, (3, 3, cin, cout), jnp.float32, -scale, scale)
        b = jax.random.uniform(kb, (cout,), jnp.float32, -scale, scale)
        return w, b

    ks = jax.random.split(key, 6)
    return {
        "q1": conv_init(ks[0], 1, hidden),       # quarter-res feature conv
        "q2": conv_init(ks[1], hidden, 1),       # quarter-res residual conv
        "h1": conv_init(ks[2], 1, hidden),       # half-res feature conv
        "h2": conv_init(ks[3], hidden, 1),       # half-res residual conv
        "f1": conv_init(ks[4], 2, hidden),       # full-res guided feature conv
        "f2": conv_init(ks[5], hidden, 1),       # full-res residual conv
    }


# ----------------------------------------------------------------------------
# Pure-JAX reference (XLA convs) for a numerical sanity check.
# ----------------------------------------------------------------------------
def _reference_forward(depth_A, depth_A_4, params):
    def conv(x, w, b):
        y = lax.conv_general_dilated(
            x, w, window_strides=(1, 1), padding="SAME",
            dimension_numbers=("NHWC", "HWIO", "NHWC"))
        return y + b

    def up2(x):
        return jnp.repeat(jnp.repeat(x, 2, axis=1), 2, axis=2)

    to_nhwc = lambda t: jnp.transpose(t, (0, 2, 3, 1))
    to_nchw = lambda t: jnp.transpose(t, (0, 3, 1, 2))

    xA = to_nhwc(depth_A)
    x4 = to_nhwc(depth_A_4)
    f4 = jax.nn.relu(conv(x4, *params["q1"]))
    d4 = x4 + conv(f4, *params["q2"])
    u2 = up2(d4)
    f2 = jax.nn.relu(conv(u2, *params["h1"]))
    d2 = u2 + conv(f2, *params["h2"])
    u1 = up2(d2)
    guided = jnp.concatenate([u1, xA], axis=-1)
    f1 = jax.nn.relu(conv(guided, *params["f1"]))
    dfull = u1 + conv(f1, *params["f2"])
    return to_nchw(dfull), to_nchw(d2), to_nchw(d4)


if __name__ == "__main__":
    key = jax.random.PRNGKey(0)
    k_in, k_in4, k_par = jax.random.split(key, 3)

    N, H, W = 2, 16, 16
    depth_A = jax.random.uniform(k_in, (N, 1, H, W), jnp.float32)            # NCHW
    depth_A_4 = jax.random.uniform(k_in4, (N, 1, H // 4, W // 4), jnp.float32)
    params = init_params(k_par, hidden=HIDDEN)

    depth_A2B, d_2, d_4 = model_forward(depth_A, depth_A_4, params)
    jax.block_until_ready((depth_A2B, d_2, d_4))

    assert depth_A2B.shape == (N, 1, H, W)
    assert d_2.shape == (N, 1, H // 2, W // 2)
    assert d_4.shape == (N, 1, H // 4, W // 4)

    ref_full, ref_2, ref_4 = _reference_forward(depth_A, depth_A_4, params)
    np.testing.assert_allclose(np.asarray(depth_A2B), np.asarray(ref_full),
                               rtol=1e-4, atol=1e-4)
    np.testing.assert_allclose(np.asarray(d_2), np.asarray(ref_2),
                               rtol=1e-4, atol=1e-4)
    np.testing.assert_allclose(np.asarray(d_4), np.asarray(ref_4),
                               rtol=1e-4, atol=1e-4)

    print("KERNEL_OK")
</pallas_src>

<mosaic_0001>
module attributes {stable_mosaic.version = 11 : i64} {
  func.func @_pyramid_kernel(%arg0: i32, %arg1: memref<72xf32, #tpu.memory_space<smem>>, %arg2: memref<8xf32, #tpu.memory_space<smem>>, %arg3: memref<72xf32, #tpu.memory_space<smem>>, %arg4: memref<1xf32, #tpu.memory_space<smem>>, %arg5: memref<72xf32, #tpu.memory_space<smem>>, %arg6: memref<8xf32, #tpu.memory_space<smem>>, %arg7: memref<72xf32, #tpu.memory_space<smem>>, %arg8: memref<1xf32, #tpu.memory_space<smem>>, %arg9: memref<144xf32, #tpu.memory_space<smem>>, %arg10: memref<8xf32, #tpu.memory_space<smem>>, %arg11: memref<72xf32, #tpu.memory_space<smem>>, %arg12: memref<1xf32, #tpu.memory_space<smem>>, %arg13: memref<1x16x16xf32, #tpu.memory_space<vmem>>, %arg14: memref<1x4x4xf32, #tpu.memory_space<vmem>>, %arg15: memref<8x4xf32, #tpu.memory_space<vmem>>, %arg16: memref<128x128xf32, #tpu.memory_space<vmem>>, %arg17: memref<16x8xf32, #tpu.memory_space<vmem>>, %arg18: memref<128x128xf32, #tpu.memory_space<vmem>>, %arg19: memref<1x16x16xf32, #tpu.memory_space<vmem>>, %arg20: memref<1x8x8xf32, #tpu.memory_space<vmem>>, %arg21: memref<1x4x4xf32, #tpu.memory_space<vmem>>, %arg22: memref<1x8x128xf32, #tpu.memory_space<vmem>>, %arg23: memref<8x8x128xf32, #tpu.memory_space<vmem>>, %arg24: memref<1x16x128xf32, #tpu.memory_space<vmem>>, %arg25: memref<8x16x128xf32, #tpu.memory_space<vmem>>, %arg26: memref<2x24x128xf32, #tpu.memory_space<vmem>>, %arg27: memref<8x24x128xf32, #tpu.memory_space<vmem>>) attributes {dimension_semantics = [#tpu.dimension_semantics<parallel>], iteration_bounds = array<i64: 2>, scalar_prefetch = 12 : i64, scratch_operands = 6 : i64, tpu.core_type = #tpu.core_type<tc>, window_params = [{transform_indices = @transform_0, window_bounds = array<i64: 1, 16, 16>}, {transform_indices = @transform_1, window_bounds = array<i64: 1, 4, 4>}, {pipeline_mode = #tpu.pipeline_mode<synchronous>, transform_indices = @transform_2, window_bounds = array<i64: 8, 4>}, {pipeline_mode = #tpu.pipeline_mode<synchronous>, transform_indices = @transform_3, window_bounds = array<i64: 128, 128>}, {pipeline_mode = #tpu.pipeline_mode<synchronous>, transform_indices = @transform_4, window_bounds = array<i64: 16, 8>}, {pipeline_mode = #tpu.pipeline_mode<synchronous>, transform_indices = @transform_5, window_bounds = array<i64: 128, 128>}, {transform_indices = @transform_6, window_bounds = array<i64: 1, 16, 16>}, {transform_indices = @transform_7, window_bounds = array<i64: 1, 8, 8>}, {transform_indices = @transform_8, window_bounds = array<i64: 1, 4, 4>}]} {
    %cst = arith.constant 0.000000e+00 : f32
    %0 = vector.broadcast %cst : f32 to vector<1x128xf32>
    %c0 = arith.constant 0 : index
    %c0_0 = arith.constant 0 : index
    %c0_1 = arith.constant 0 : index
    %1 = vector.load %arg22[%c0, %c0_0, %c0_1] : memref<1x8x128xf32, #tpu.memory_space<vmem>>, vector<1x1x128xf32>
    %2 = vector.shape_cast %1 : vector<1x1x128xf32> to vector<1x128xf32>
    %3 = vector.shape_cast %0 : vector<1x128xf32> to vector<1x1x128xf32>
    tpu.vector_store %arg22[%c0, %c0_0, %c0_1], %3 {strides = array<i32>} : memref<1x8x128xf32, #tpu.memory_space<vmem>>, vector<1x1x128xf32>,
    %c0_2 = arith.constant 0 : index
    %c5 = arith.constant 5 : index
    %c0_3 = arith.constant 0 : index
    %4 = vector.load %arg22[%c0_2, %c5, %c0_3] : memref<1x8x128xf32, #tpu.memory_space<vmem>>, vector<1x1x128xf32>
    %5 = vector.shape_cast %4 : vector<1x1x128xf32> to vector<1x128xf32>
    %6 = vector.shape_cast %0 : vector<1x128xf32> to vector<1x1x128xf32>
    tpu.vector_store %arg22[%c0_2, %c5, %c0_3], %6 {strides = array<i32>} : memref<1x8x128xf32, #tpu.memory_space<vmem>>, vector<1x1x128xf32>,
    %cst_4 = arith.constant 0.000000e+00 : f32
    %7 = vector.broadcast %cst_4 : f32 to vector<1x128xf32>
    %c0_5 = arith.constant 0 : index
    %c0_6 = arith.constant 0 : index
    %c0_7 = arith.constant 0 : index
    %8 = vector.load %arg23[%c0_5, %c0_6, %c0_7] : memref<8x8x128xf32, #tpu.memory_space<vmem>>, vector<1x1x128xf32>
    %9 = vector.shape_cast %8 : vector<1x1x128xf32> to vector<1x128xf32>
    %10 = vector.shape_cast %7 : vector<1x128xf32> to vector<1x1x128xf32>
    tpu.vector_store %arg23[%c0_5, %c0_6, %c0_7], %10 {strides = array<i32>} : memref<8x8x128xf32, #tpu.memory_space<vmem>>, vector<1x1x128xf32>,
    %c0_8 = arith.constant 0 : index
    %c5_9 = arith.constant 5 : index
    %c0_10 = arith.constant 0 : index
    %11 = vector.load %arg23[%c0_8, %c5_9, %c0_10] : memref<8x8x128xf32, #tpu.memory_space<vmem>>, vector<1x1x128xf32>
    %12 = vector.shape_cast %11 : vector<1x1x128xf32> to vector<1x128xf32>
    %13 = vector.shape_cast %7 : vector<1x128xf32> to vector<1x1x128xf32>
    tpu.vector_store %arg23[%c0_8, %c5_9, %c0_10], %13 {strides = array<i32>} : memref<8x8x128xf32, #tpu.memory_space<vmem>>, vector<1x1x128xf32>,
    %c1 = arith.constant 1 : index
    %c0_11 = arith.constant 0 : index
    %c0_12 = arith.constant 0 : index
    %14 = vector.load %arg23[%c1, %c0_11, %c0_12] : memref<8x8x128xf32, #tpu.memory_space<vmem>>, vector<1x1x128xf32>
    %15 = vector.shape_cast %14 : vector<1x1x128xf32> to vector<1x128xf32>
    %16 = vector.shape_cast %7 : vector<1x128xf32> to vector<1x1x128xf32>
    tpu.vector_store %arg23[%c1, %c0_11, %c0_12], %16 {strides = array<i32>} : memref<8x8x128xf32, #tpu.memory_space<vmem>>, vector<1x1x128xf32>,
    %c1_13 = arith.constant 1 : index
    %c5_14 = arith.constant 5 : index
    %c0_15 = arith.constant 0 : index
    %17 = vector.load %arg23[%c1_13, %c5_14, %c0_15] : memref<8x8x128xf32, #tpu.memory_space<vmem>>, vector<1x1x128xf32>
    %18 = vector.shape_cast %17 : vector<1x1x128xf32> to vector<1x128xf32>
    %19 = vector.shape_cast %7 : vector<1x128xf32> to vector<1x1x128xf32>
    tpu.vector_store %arg23[%c1_13, %c5_14, %c0_15], %19 {strides = array<i32>} : memref<8x8x128xf32, #tpu.memory_space<vmem>>, vector<1x1x128xf32>,
    %c2 = arith.constant 2 : index
    %c0_16 = arith.constant 0 : index
    %c0_17 = arith.constant 0 : index
    %20 = vector.load %arg23[%c2, %c0_16, %c0_17] : memref<8x8x128xf32, #tpu.memory_space<vmem>>, vector<1x1x128xf32>
    %21 = vector.shape_cast %20 : vector<1x1x128xf32> to vector<1x128xf32>
    %22 = vector.shape_cast %7 : vector<1x128xf32> to vector<1x1x128xf32>
    tpu.vector_store %arg23[%c2, %c0_16, %c0_17], %22 {strides = array<i32>} : memref<8x8x128xf32, #tpu.memory_space<vmem>>, vector<1x1x128xf32>,
    %c2_18 = arith.constant 2 : index
    %c5_19 = arith.constant 5 : index
    %c0_20 = arith.constant 0 : index
    %23 = vector.load %arg23[%c2_18, %c5_19, %c0_20] : memref<8x8x128xf32, #tpu.memory_space<vmem>>, vector<1x1x128xf32>
    %24 = vector.shape_cast %23 : vector<1x1x128xf32> to vector<1x128xf32>
    %25 = vector.shape_cast %7 : vector<1x128xf32> to vector<1x1x128xf32>
    tpu.vector_store %arg23[%c2_18, %c5_19, %c0_20], %25 {strides = array<i32>} : memref<8x8x128xf32, #tpu.memory_space<vmem>>, vector<1x1x128xf32>,
    %c3 = arith.constant 3 : index
    %c0_21 = arith.constant 0 : index
    %c0_22 = arith.constant 0 : index
    %26 = vector.load %arg23[%c3, %c0_21, %c0_22] : memref<8x8x128xf32, #tpu.memory_space<vmem>>, vector<1x1x128xf32>
    %27 = vector.shape_cast %26 : vector<1x1x128xf32> to vector<1x128xf32>
    %28 = vector.shape_cast %7 : vector<1x128xf32> to vector<1x1x128xf32>
    tpu.vector_store %arg23[%c3, %c0_21, %c0_22], %28 {strides = array<i32>} : memref<8x8x128xf32, #tpu.memory_space<vmem>>, vector<1x1x128xf32>,
    %c3_23 = arith.constant 3 : index
    %c5_24 = arith.constant 5 : index
    %c0_25 = arith.constant 0 : index
    %29 = vector.load %arg23[%c3_23, %c5_24, %c0_25] : memref<8x8x128xf32, #tpu.memory_space<vmem>>, vector<1x1x128xf32>
    %30 = vector.shape_cast %29 : vector<1x1x128xf32> to vector<1x128xf32>
    %31 = vector.shape_cast %7 : vector<1x128xf32> to vector<1x1x128xf32>
    tpu.vector_store %arg23[%c3_23, %c5_24, %c0_25], %31 {strides = array<i32>} : memref<8x8x128xf32, #tpu.memory_space<vmem>>, vector<1x1x128xf32>,
    %c4 = arith.constant 4 : index
    %c0_26 = arith.constant 0 : index
    %c0_27 = arith.constant 0 : index
    %32 = vector.load %arg23[%c4, %c0_26, %c0_27] : memref<8x8x128xf32, #tpu.memory_space<vmem>>, vector<1x1x128xf32>
    %33 = vector.shape_cast %32 : vector<1x1x128xf32> to vector<1x128xf32>
    %34 = vector.shape_cast %7 : vector<1x128xf32> to vector<1x1x128xf32>
    tpu.vector_store %arg23[%c4, %c0_26, %c0_27], %34 {strides = array<i32>} : memref<8x8x128xf32, #tpu.memory_space<vmem>>, vector<1x1x128xf32>,
    %c4_28 = arith.constant 4 : index
    %c5_29 = arith.constant 5 : index
    %c0_30 = arith.constant 0 : index
    %35 = vector.load %arg23[%c4_28, %c5_29, %c0_30] : memref<8x8x128xf32, #tpu.memory_space<vmem>>, vector<1x1x128xf32>
    %36 = vector.shape_cast %35 : vector<1x1x128xf32> to vector<1x128xf32>
    %37 = vector.shape_cast %7 : vector<1x128xf32> to vector<1x1x128xf32>
    tpu.vector_store %arg23[%c4_28, %c5_29, %c0_30], %37 {strides = array<i32>} : memref<8x8x128xf32, #tpu.memory_space<vmem>>, vector<1x1x128xf32>,
    %c5_31 = arith.constant 5 : index
    %c0_32 = arith.constant 0 : index
    %c0_33 = arith.constant 0 : index
    %38 = vector.load %arg23[%c5_31, %c0_32, %c0_33] : memref<8x8x128xf32, #tpu.memory_space<vmem>>, vector<1x1x128xf32>
    %39 = vector.shape_cast %38 : vector<1x1x128xf32> to vector<1x128xf32>
    %40 = vector.shape_cast %7 : vector<1x128xf32> to vector<1x1x128xf32>
    tpu.vector_store %arg23[%c5_31, %c0_32, %c0_33], %40 {strides = array<i32>} : memref<8x8x128xf32, #tpu.memory_space<vmem>>, vector<1x1x128xf32>,
    %c5_34 = arith.constant 5 : index
    %c5_35 = arith.constant 5 : index
    %c0_36 = arith.constant 0 : index
    %41 = vector.load %arg23[%c5_34, %c5_35, %c0_36] : memref<8x8x128xf32, #tpu.memory_space<vmem>>, vector<1x1x128xf32>
    %42 = vector.shape_cast %41 : vector<1x1x128xf32> to vector<1x128xf32>
    %43 = vector.shape_cast %7 : vector<1x128xf32> to vector<1x1x128xf32>
    tpu.vector_store %arg23[%c5_34, %c5_35, %c0_36], %43 {strides = array<i32>} : memref<8x8x128xf32, #tpu.memory_space<vmem>>, vector<1x1x128xf32>,
    %c6 = arith.constant 6 : index
    %c0_37 = arith.constant 0 : index
    %c0_38 = arith.constant 0 : index
    %44 = vector.load %arg23[%c6, %c0_37, %c0_38] : memref<8x8x128xf32, #tpu.memory_space<vmem>>, vector<1x1x128xf32>
    %45 = vector.shape_cast %44 : vector<1x1x128xf32> to vector<1x128xf32>
    %46 = vector.shape_cast %7 : vector<1x128xf32> to vector<1x1x128xf32>
    tpu.vector_store %arg23[%c6, %c0_37, %c0_38], %46 {strides = array<i32>} : memref<8x8x128xf32, #tpu.memory_space<vmem>>, vector<1x1x128xf32>,
    %c6_39 = arith.constant 6 : index
    %c5_40 = arith.constant 5 : index
    %c0_41 = arith.constant 0 : index
    %47 = vector.load %arg23[%c6_39, %c5_40, %c0_41] : memref<8x8x128xf32, #tpu.memory_space<vmem>>, vector<1x1x128xf32>
    %48 = vector.shape_cast %47 : vector<1x1x128xf32> to vector<1x128xf32>
    %49 = vector.shape_cast %7 : vector<1x128xf32> to vector<1x1x128xf32>
    tpu.vector_store %arg23[%c6_39, %c5_40, %c0_41], %49 {strides = array<i32>} : memref<8x8x128xf32, #tpu.memory_space<vmem>>, vector<1x1x128xf32>,
    %c7 = arith.constant 7 : index
    %c0_42 = arith.constant 0 : index
    %c0_43 = arith.constant 0 : index
    %50 = vector.load %arg23[%c7, %c0_42, %c0_43] : memref<8x8x128xf32, #tpu.memory_space<vmem>>, vector<1x1x128xf32>
    %51 = vector.shape_cast %50 : vector<1x1x128xf32> to vector<1x128xf32>
    %52 = vector.shape_cast %7 : vector<1x128xf32> to vector<1x1x128xf32>
    tpu.vector_store %arg23[%c7, %c0_42, %c0_43], %52 {strides = array<i32>} : memref<8x8x128xf32, #tpu.memory_space<vmem>>, vector<1x1x128xf32>,
    %c7_44 = arith.constant 7 : index
    %c5_45 = arith.constant 5 : index
    %c0_46 = arith.constant 0 : index
    %53 = vector.load %arg23[%c7_44, %c5_45, %c0_46] : memref<8x8x128xf32, #tpu.memory_space<vmem>>, vector<1x1x128xf32>
    %54 = vector.shape_cast %53 : vector<1x1x128xf32> to vector<1x128xf32>
    %55 = vector.shape_cast %7 : vector<1x128xf32> to vector<1x1x128xf32>
    tpu.vector_store %arg23[%c7_44, %c5_45, %c0_46], %55 {strides = array<i32>} : memref<8x8x128xf32, #tpu.memory_space<vmem>>, vector<1x1x128xf32>,
    %cst_47 = arith.constant 0.000000e+00 : f32
    %56 = vector.broadcast %cst_47 : f32 to vector<1x128xf32>
    %c0_48 = arith.constant 0 : index
    %c0_49 = arith.constant 0 : index
    %c0_50 = arith.constant 0 : index
    %57 = vector.load %arg24[%c0_48, %c0_49, %c0_50] : memref<1x16x128xf32, #tpu.memory_space<vmem>>, vector<1x1x128xf32>
    %58 = vector.shape_cast %57 : vector<1x1x128xf32> to vector<1x128xf32>
    %59 = vector.shape_cast %56 : vector<1x128xf32> to vector<1x1x128xf32>
    tpu.vector_store %arg24[%c0_48, %c0_49, %c0_50], %59 {strides = array<i32>} : memref<1x16x128xf32, #tpu.memory_space<vmem>>, vector<1x1x128xf32>,
    %c0_51 = arith.constant 0 : index
    %c9 = arith.constant 9 : index
    %c0_52 = arith.constant 0 : index
    %60 = vector.load %arg24[%c0_51, %c9, %c0_52] : memref<1x16x128xf32, #tpu.memory_space<vmem>>, vector<1x1x128xf32>
    %61 = vector.shape_cast %60 : vector<1x1x128xf32> to vector<1x128xf32>
    %62 = vector.shape_cast %56 : vector<1x128xf32> to vector<1x1x128xf32>
    tpu.vector_store %arg24[%c0_51, %c9, %c0_52], %62 {strides = array<i32>} : memref<1x16x128xf32, #tpu.memory_space<vmem>>, vector<1x1x128xf32>,
    %cst_53 = arith.constant 0.000000e+00 : f32
    %63 = vector.broadcast %cst_53 : f32 to vector<1x128xf32>
    %c0_54 = arith.constant 0 : index
    %c0_55 = arith.constant 0 : index
    %c0_56 = arith.constant 0 : index
    %64 = vector.load %arg25[%c0_54, %c0_55, %c0_56] : memref<8x16x128xf32, #tpu.memory_space<vmem>>, vector<1x1x128xf32>
    %65 = vector.shape_cast %64 : vector<1x1x128xf32> to vector<1x128xf32>
    %66 = vector.shape_cast %63 : vector<1x128xf32> to vector<1x1x128xf32>
    tpu.vector_store %arg25[%c0_54, %c0_55, %c0_56], %66 {strides = array<i32>} : memref<8x16x128xf32, #tpu.memory_space<vmem>>, vector<1x1x128xf32>,
    %c0_57 = arith.constant 0 : index
    %c9_58 = arith.constant 9 : index
    %c0_59 = arith.constant 0 : index
    %67 = vector.load %arg25[%c0_57, %c9_58, %c0_59] : memref<8x16x128xf32, #tpu.memory_space<vmem>>, vector<1x1x128xf32>
    %68 = vector.shape_cast %67 : vector<1x1x128xf32> to vector<1x128xf32>
    %69 = vector.shape_cast %63 : vector<1x128xf32> to vector<1x1x128xf32>
    tpu.vector_store %arg25[%c0_57, %c9_58, %c0_59], %69 {strides = array<i32>} : memref<8x16x128xf32, #tpu.memory_space<vmem>>, vector<1x1x128xf32>,
    %c1_60 = arith.constant 1 : index
    %c0_61 = arith.constant 0 : index
    %c0_62 = arith.constant 0 : index
    %70 = vector.load %arg25[%c1_60, %c0_61, %c0_62] : memref<8x16x128xf32, #tpu.memory_space<vmem>>, vector<1x1x128xf32>
    %71 = vector.shape_cast %70 : vector<1x1x128xf32> to vector<1x128xf32>
    %72 = vector.shape_cast %63 : vector<1x128xf32> to vector<1x1x128xf32>
    tpu.vector_store %arg25[%c1_60, %c0_61, %c0_62], %72 {strides = array<i32>} : memref<8x16x128xf32, #tpu.memory_space<vmem>>, vector<1x1x128xf32>,
    %c1_63 = arith.constant 1 : index
    %c9_64 = arith.constant 9 : index
    %c0_65 = arith.constant 0 : index
    %73 = vector.load %arg25[%c1_63, %c9_64, %c0_65] : memref<8x16x128xf32, #tpu.memory_space<vmem>>, vector<1x1x128xf32>
    %74 = vector.shape_cast %73 : vector<1x1x128xf32> to vector<1x128xf32>
    %75 = vector.shape_cast %63 : vector<1x128xf32> to vector<1x1x128xf32>
    tpu.vector_store %arg25[%c1_63, %c9_64, %c0_65], %75 {strides = array<i32>} : memref<8x16x128xf32, #tpu.memory_space<vmem>>, vector<1x1x128xf32>,
    %c2_66 = arith.constant 2 : index
    %c0_67 = arith.constant 0 : index
    %c0_68 = arith.constant 0 : index
    %76 = vector.load %arg25[%c2_66, %c0_67, %c0_68] : memref<8x16x128xf32, #tpu.memory_space<vmem>>, vector<1x1x128xf32>
    %77 = vector.shape_cast %76 : vector<1x1x128xf32> to vector<1x128xf32>
    %78 = vector.shape_cast %63 : vector<1x128xf32> to vector<1x1x128xf32>
    tpu.vector_store %arg25[%c2_66, %c0_67, %c0_68], %78 {strides = array<i32>} : memref<8x16x128xf32, #tpu.memory_space<vmem>>, vector<1x1x128xf32>,
    %c2_69 = arith.constant 2 : index
    %c9_70 = arith.constant 9 : index
    %c0_71 = arith.constant 0 : index
    %79 = vector.load %arg25[%c2_69, %c9_70, %c0_71] : memref<8x16x128xf32, #tpu.memory_space<vmem>>, vector<1x1x128xf32>
    %80 = vector.shape_cast %79 : vector<1x1x128xf32> to vector<1x128xf32>
    %81 = vector.shape_cast %63 : vector<1x128xf32> to vector<1x1x128xf32>
    tpu.vector_store %arg25[%c2_69, %c9_70, %c0_71], %81 {strides = array<i32>} : memref<8x16x128xf32, #tpu.memory_space<vmem>>, vector<1x1x128xf32>,
    %c3_72 = arith.constant 3 : index
    %c0_73 = arith.constant 0 : index
    %c0_74 = arith.constant 0 : index
    %82 = vector.load %arg25[%c3_72, %c0_73, %c0_74] : memref<8x16x128xf32, #tpu.memory_space<vmem>>, vector<1x1x128xf32>
    %83 = vector.shape_cast %82 : vector<1x1x128xf32> to vector<1x128xf32>
    %84 = vector.shape_cast %63 : vector<1x128xf32> to vector<1x1x128xf32>
    tpu.vector_store %arg25[%c3_72, %c0_73, %c0_74], %84 {strides = array<i32>} : memref<8x16x128xf32, #tpu.memory_space<vmem>>, vector<1x1x128xf32>,
    %c3_75 = arith.constant 3 : index
    %c9_76 = arith.constant 9 : index
    %c0_77 = arith.constant 0 : index
    %85 = vector.load %arg25[%c3_75, %c9_76, %c0_77] : memref<8x16x128xf32, #tpu.memory_space<vmem>>, vector<1x1x128xf32>
    %86 = vector.shape_cast %85 : vector<1x1x128xf32> to vector<1x128xf32>
    %87 = vector.shape_cast %63 : vector<1x128xf32> to vector<1x1x128xf32>
    tpu.vector_store %arg25[%c3_75, %c9_76, %c0_77], %87 {strides = array<i32>} : memref<8x16x128xf32, #tpu.memory_space<vmem>>, vector<1x1x128xf32>,
    %c4_78 = arith.constant 4 : index
    %c0_79 = arith.constant 0 : index
    %c0_80 = arith.constant 0 : index
    %88 = vector.load %arg25[%c4_78, %c0_79, %c0_80] : memref<8x16x128xf32, #tpu.memory_space<vmem>>, vector<1x1x128xf32>
    %89 = vector.shape_cast %88 : vector<1x1x128xf32> to vector<1x128xf32>
    %90 = vector.shape_cast %63 : vector<1x128xf32> to vector<1x1x128xf32>
    tpu.vector_store %arg25[%c4_78, %c0_79, %c0_80], %90 {strides = array<i32>} : memref<8x16x128xf32, #tpu.memory_space<vmem>>, vector<1x1x128xf32>,
    %c4_81 = arith.constant 4 : index
    %c9_82 = arith.constant 9 : index
    %c0_83 = arith.constant 0 : index
    %91 = vector.load %arg25[%c4_81, %c9_82, %c0_83] : memref<8x16x128xf32, #tpu.memory_space<vmem>>, vector<1x1x128xf32>
    %92 = vector.shape_cast %91 : vector<1x1x128xf32> to vector<1x128xf32>
    %93 = vector.shape_cast %63 : vector<1x128xf32> to vector<1x1x128xf32>
    tpu.vector_store %arg25[%c4_81, %c9_82, %c0_83], %93 {strides = array<i32>} : memref<8x16x128xf32, #tpu.memory_space<vmem>>, vector<1x1x128xf32>,
    %c5_84 = arith.constant 5 : index
    %c0_85 = arith.constant 0 : index
    %c0_86 = arith.constant 0 : index
    %94 = vector.load %arg25[%c5_84, %c0_85, %c0_86] : memref<8x16x128xf32, #tpu.memory_space<vmem>>, vector<1x1x128xf32>
    %95 = vector.shape_cast %94 : vector<1x1x128xf32> to vector<1x128xf32>
    %96 = vector.shape_cast %63 : vector<1x128xf32> to vector<1x1x128xf32>
    tpu.vector_store %arg25[%c5_84, %c0_85, %c0_86], %96 {strides = array<i32>} : memref<8x16x128xf32, #tpu.memory_space<vmem>>, vector<1x1x128xf32>,
    %c5_87 = arith.constant 5 : index
    %c9_88 = arith.constant 9 : index
    %c0_89 = arith.constant 0 : index
    %97 = vector.load %arg25[%c5_87, %c9_88, %c0_89] : memref<8x16x128xf32, #tpu.memory_space<vmem>>, vector<1x1x128xf32>
    %98 = vector.shape_cast %97 : vector<1x1x128xf32> to vector<1x128xf32>
    %99 = vector.shape_cast %63 : vector<1x128xf32> to vector<1x1x128xf32>
    tpu.vector_store %arg25[%c5_87, %c9_88, %c0_89], %99 {strides = array<i32>} : memref<8x16x128xf32, #tpu.memory_space<vmem>>, vector<1x1x128xf32>,
    %c6_90 = arith.constant 6 : index
    %c0_91 = arith.constant 0 : index
    %c0_92 = arith.constant 0 : index
    %100 = vector.load %arg25[%c6_90, %c0_91, %c0_92] : memref<8x16x128xf32, #tpu.memory_space<vmem>>, vector<1x1x128xf32>
    %101 = vector.shape_cast %100 : vector<1x1x128xf32> to vector<1x128xf32>
    %102 = vector.shape_cast %63 : vector<1x128xf32> to vector<1x1x128xf32>
    tpu.vector_store %arg25[%c6_90, %c0_91, %c0_92], %102 {strides = array<i32>} : memref<8x16x128xf32, #tpu.memory_space<vmem>>, vector<1x1x128xf32>,
    %c6_93 = arith.constant 6 : index
    %c9_94 = arith.constant 9 : index
    %c0_95 = arith.constant 0 : index
    %103 = vector.load %arg25[%c6_93, %c9_94, %c0_95] : memref<8x16x128xf32, #tpu.memory_space<vmem>>, vector<1x1x128xf32>
    %104 = vector.shape_cast %103 : vector<1x1x128xf32> to vector<1x128xf32>
    %105 = vector.shape_cast %63 : vector<1x128xf32> to vector<1x1x128xf32>
    tpu.vector_store %arg25[%c6_93, %c9_94, %c0_95], %105 {strides = array<i32>} : memref<8x16x128xf32, #tpu.memory_space<vmem>>, vector<1x1x128xf32>,
    %c7_96 = arith.constant 7 : index
    %c0_97 = arith.constant 0 : index
    %c0_98 = arith.constant 0 : index
    %106 = vector.load %arg25[%c7_96, %c0_97, %c0_98] : memref<8x16x128xf32, #tpu.memory_space<vmem>>, vector<1x1x128xf32>
    %107 = vector.shape_cast %106 : vector<1x1x128xf32> to vector<1x128xf32>
    %108 = vector.shape_cast %63 : vector<1x128xf32> to vector<1x1x128xf32>
    tpu.vector_store %arg25[%c7_96, %c0_97, %c0_98], %108 {strides = array<i32>} : memref<8x16x128xf32, #tpu.memory_space<vmem>>, vector<1x1x128xf32>,
    %c7_99 = arith.constant 7 : index
    %c9_100 = arith.constant 9 : index
    %c0_101 = arith.constant 0 : index
    %109 = vector.load %arg25[%c7_99, %c9_100, %c0_101] : memref<8x16x128xf32, #tpu.memory_space<vmem>>, vector<1x1x128xf32>
    %110 = vector.shape_cast %109 : vector<1x1x128xf32> to vector<1x128xf32>
    %111 = vector.shape_cast %63 : vector<1x128xf32> to vector<1x1x128xf32>
    tpu.vector_store %arg25[%c7_99, %c9_100, %c0_101], %111 {strides = array<i32>} : memref<8x16x128xf32, #tpu.memory_space<vmem>>, vector<1x1x128xf32>,
    %cst_102 = arith.constant 0.000000e+00 : f32
    %112 = vector.broadcast %cst_102 : f32 to vector<1x128xf32>
    %c0_103 = arith.constant 0 : index
    %c0_104 = arith.constant 0 : index
    %c0_105 = arith.constant 0 : index
    %113 = vector.load %arg26[%c0_103, %c0_104, %c0_105] : memref<2x24x128xf32, #tpu.memory_space<vmem>>, vector<1x1x128xf32>
    %114 = vector.shape_cast %113 : vector<1x1x128xf32> to vector<1x128xf32>
    %115 = vector.shape_cast %112 : vector<1x128xf32> to vector<1x1x128xf32>
    tpu.vector_store %arg26[%c0_103, %c0_104, %c0_105], %115 {strides = array<i32>} : memref<2x24x128xf32, #tpu.memory_space<vmem>>, vector<1x1x128xf32>,
    %c0_106 = arith.constant 0 : index
    %c17 = arith.constant 17 : index
    %c0_107 = arith.constant 0 : index
    %116 = vector.load %arg26[%c0_106, %c17, %c0_107] : memref<2x24x128xf32, #tpu.memory_space<vmem>>, vector<1x1x128xf32>
    %117 = vector.shape_cast %116 : vector<1x1x128xf32> to vector<1x128xf32>
    %118 = vector.shape_cast %112 : vector<1x128xf32> to vector<1x1x128xf32>
    tpu.vector_store %arg26[%c0_106, %c17, %c0_107], %118 {strides = array<i32>} : memref<2x24x128xf32, #tpu.memory_space<vmem>>, vector<1x1x128xf32>,
    %c1_108 = arith.constant 1 : index
    %c0_109 = arith.constant 0 : index
    %c0_110 = arith.constant 0 : index
    %119 = vector.load %arg26[%c1_108, %c0_109, %c0_110] : memref<2x24x128xf32, #tpu.memory_space<vmem>>, vector<1x1x128xf32>
    %120 = vector.shape_cast %119 : vector<1x1x128xf32> to vector<1x128xf32>
    %121 = vector.shape_cast %112 : vector<1x128xf32> to vector<1x1x128xf32>
    tpu.vector_store %arg26[%c1_108, %c0_109, %c0_110], %121 {strides = array<i32>} : memref<2x24x128xf32, #tpu.memory_space<vmem>>, vector<1x1x128xf32>,
    %c1_111 = arith.constant 1 : index
    %c17_112 = arith.constant 17 : index
    %c0_113 = arith.constant 0 : index
    %122 = vector.load %arg26[%c1_111, %c17_112, %c0_113] : memref<2x24x128xf32, #tpu.memory_space<vmem>>, vector<1x1x128xf32>
    %123 = vector.shape_cast %122 : vector<1x1x128xf32> to vector<1x128xf32>
    %124 = vector.shape_cast %112 : vector<1x128xf32> to vector<1x1x128xf32>
    tpu.vector_store %arg26[%c1_111, %c17_112, %c0_113], %124 {strides = array<i32>} : memref<2x24x128xf32, #tpu.memory_space<vmem>>, vector<1x1x128xf32>,
    %cst_114 = arith.constant 0.000000e+00 : f32
    %125 = vector.broadcast %cst_114 : f32 to vector<1x128xf32>
    %c0_115 = arith.constant 0 : index
    %c0_116 = arith.constant 0 : index
    %c0_117 = arith.constant 0 : index
    %126 = vector.load %arg27[%c0_115, %c0_116, %c0_117] : memref<8x24x128xf32, #tpu.memory_space<vmem>>, vector<1x1x128xf32>
    %127 = vector.shape_cast %126 : vector<1x1x128xf32> to vector<1x128xf32>
    %128 = vector.shape_cast %125 : vector<1x128xf32> to vector<1x1x128xf32>
    tpu.vector_store %arg27[%c0_115, %c0_116, %c0_117], %128 {strides = array<i32>} : memref<8x24x128xf32, #tpu.memory_space<vmem>>, vector<1x1x128xf32>,
    %c0_118 = arith.constant 0 : index
    %c17_119 = arith.constant 17 : index
    %c0_120 = arith.constant 0 : index
    %129 = vector.load %arg27[%c0_118, %c17_119, %c0_120] : memref<8x24x128xf32, #tpu.memory_space<vmem>>, vector<1x1x128xf32>
    %130 = vector.shape_cast %129 : vector<1x1x128xf32> to vector<1x128xf32>
    %131 = vector.shape_cast %125 : vector<1x128xf32> to vector<1x1x128xf32>
    tpu.vector_store %arg27[%c0_118, %c17_119, %c0_120], %131 {strides = array<i32>} : memref<8x24x128xf32, #tpu.memory_space<vmem>>, vector<1x1x128xf32>,
    %c1_121 = arith.constant 1 : index
    %c0_122 = arith.constant 0 : index
    %c0_123 = arith.constant 0 : index
    %132 = vector.load %arg27[%c1_121, %c0_122, %c0_123] : memref<8x24x128xf32, #tpu.memory_space<vmem>>, vector<1x1x128xf32>
    %133 = vector.shape_cast %132 : vector<1x1x128xf32> to vector<1x128xf32>
    %134 = vector.shape_cast %125 : vector<1x128xf32> to vector<1x1x128xf32>
    tpu.vector_store %arg27[%c1_121, %c0_122, %c0_123], %134 {strides = array<i32>} : memref<8x24x128xf32, #tpu.memory_space<vmem>>, vector<1x1x128xf32>,
    %c1_124 = arith.constant 1 : index
    %c17_125 = arith.constant 17 : index
    %c0_126 = arith.constant 0 : index
    %135 = vector.load %arg27[%c1_124, %c17_125, %c0_126] : memref<8x24x128xf32, #tpu.memory_space<vmem>>, vector<1x1x128xf32>
    %136 = vector.shape_cast %135 : vector<1x1x128xf32> to vector<1x128xf32>
    %137 = vector.shape_cast %125 : vector<1x128xf32> to vector<1x1x128xf32>
    tpu.vector_store %arg27[%c1_124, %c17_125, %c0_126], %137 {strides = array<i32>} : memref<8x24x128xf32, #tpu.memory_space<vmem>>, vector<1x1x128xf32>,
    %c2_127 = arith.constant 2 : index
    %c0_128 = arith.constant 0 : index
    %c0_129 = arith.constant 0 : index
    %138 = vector.load %arg27[%c2_127, %c0_128, %c0_129] : memref<8x24x128xf32, #tpu.memory_space<vmem>>, vector<1x1x128xf32>
    %139 = vector.shape_cast %138 : vector<1x1x128xf32> to vector<1x128xf32>
    %140 = vector.shape_cast %125 : vector<1x128xf32> to vector<1x1x128xf32>
    tpu.vector_store %arg27[%c2_127, %c0_128, %c0_129], %140 {strides = array<i32>} : memref<8x24x128xf32, #tpu.memory_space<vmem>>, vector<1x1x128xf32>,
    %c2_130 = arith.constant 2 : index
    %c17_131 = arith.constant 17 : index
    %c0_132 = arith.constant 0 : index
    %141 = vector.load %arg27[%c2_130, %c17_131, %c0_132] : memref<8x24x128xf32, #tpu.memory_space<vmem>>, vector<1x1x128xf32>
    %142 = vector.shape_cast %141 : vector<1x1x128xf32> to vector<1x128xf32>
    %143 = vector.shape_cast %125 : vector<1x128xf32> to vector<1x1x128xf32>
    tpu.vector_store %arg27[%c2_130, %c17_131, %c0_132], %143 {strides = array<i32>} : memref<8x24x128xf32, #tpu.memory_space<vmem>>, vector<1x1x128xf32>,
    %c3_133 = arith.constant 3 : index
    %c0_134 = arith.constant 0 : index
    %c0_135 = arith.constant 0 : index
    %144 = vector.load %arg27[%c3_133, %c0_134, %c0_135] : memref<8x24x128xf32, #tpu.memory_space<vmem>>, vector<1x1x128xf32>
    %145 = vector.shape_cast %144 : vector<1x1x128xf32> to vector<1x128xf32>
    %146 = vector.shape_cast %125 : vector<1x128xf32> to vector<1x1x128xf32>
    tpu.vector_store %arg27[%c3_133, %c0_134, %c0_135], %146 {strides = array<i32>} : memref<8x24x128xf32, #tpu.memory_space<vmem>>, vector<1x1x128xf32>,
    %c3_136 = arith.constant 3 : index
    %c17_137 = arith.constant 17 : index
    %c0_138 = arith.constant 0 : index
    %147 = vector.load %arg27[%c3_136, %c17_137, %c0_138] : memref<8x24x128xf32, #tpu.memory_space<vmem>>, vector<1x1x128xf32>
    %148 = vector.shape_cast %147 : vector<1x1x128xf32> to vector<1x128xf32>
    %149 = vector.shape_cast %125 : vector<1x128xf32> to vector<1x1x128xf32>
    tpu.vector_store %arg27[%c3_136, %c17_137, %c0_138], %149 {strides = array<i32>} : memref<8x24x128xf32, #tpu.memory_space<vmem>>, vector<1x1x128xf32>,
    %c4_139 = arith.constant 4 : index
    %c0_140 = arith.constant 0 : index
    %c0_141 = arith.constant 0 : index
    %150 = vector.load %arg27[%c4_139, %c0_140, %c0_141] : memref<8x24x128xf32, #tpu.memory_space<vmem>>, vector<1x1x128xf32>
    %151 = vector.shape_cast %150 : vector<1x1x128xf32> to vector<1x128xf32>
    %152 = vector.shape_cast %125 : vector<1x128xf32> to vector<1x1x128xf32>
    tpu.vector_store %arg27[%c4_139, %c0_140, %c0_141], %152 {strides = array<i32>} : memref<8x24x128xf32, #tpu.memory_space<vmem>>, vector<1x1x128xf32>,
    %c4_142 = arith.constant 4 : index
    %c17_143 = arith.constant 17 : index
    %c0_144 = arith.constant 0 : index
    %153 = vector.load %arg27[%c4_142, %c17_143, %c0_144] : memref<8x24x128xf32, #tpu.memory_space<vmem>>, vector<1x1x128xf32>
    %154 = vector.shape_cast %153 : vector<1x1x128xf32> to vector<1x128xf32>
    %155 = vector.shape_cast %125 : vector<1x128xf32> to vector<1x1x128xf32>
    tpu.vector_store %arg27[%c4_142, %c17_143, %c0_144], %155 {strides = array<i32>} : memref<8x24x128xf32, #tpu.memory_space<vmem>>, vector<1x1x128xf32>,
    %c5_145 = arith.constant 5 : index
    %c0_146 = arith.constant 0 : index
    %c0_147 = arith.constant 0 : index
    %156 = vector.load %arg27[%c5_145, %c0_146, %c0_147] : memref<8x24x128xf32, #tpu.memory_space<vmem>>, vector<1x1x128xf32>
    %157 = vector.shape_cast %156 : vector<1x1x128xf32> to vector<1x128xf32>
    %158 = vector.shape_cast %125 : vector<1x128xf32> to vector<1x1x128xf32>
    tpu.vector_store %arg27[%c5_145, %c0_146, %c0_147], %158 {strides = array<i32>} : memref<8x24x128xf32, #tpu.memory_space<vmem>>, vector<1x1x128xf32>,
    %c5_148 = arith.constant 5 : index
    %c17_149 = arith.constant 17 : index
    %c0_150 = arith.constant 0 : index
    %159 = vector.load %arg27[%c5_148, %c17_149, %c0_150] : memref<8x24x128xf32, #tpu.memory_space<vmem>>, vector<1x1x128xf32>
    %160 = vector.shape_cast %159 : vector<1x1x128xf32> to vector<1x128xf32>
    %161 = vector.shape_cast %125 : vector<1x128xf32> to vector<1x1x128xf32>
    tpu.vector_store %arg27[%c5_148, %c17_149, %c0_150], %161 {strides = array<i32>} : memref<8x24x128xf32, #tpu.memory_space<vmem>>, vector<1x1x128xf32>,
    %c6_151 = arith.constant 6 : index
    %c0_152 = arith.constant 0 : index
    %c0_153 = arith.constant 0 : index
    %162 = vector.load %arg27[%c6_151, %c0_152, %c0_153] : memref<8x24x128xf32, #tpu.memory_space<vmem>>, vector<1x1x128xf32>
    %163 = vector.shape_cast %162 : vector<1x1x128xf32> to vector<1x128xf32>
    %164 = vector.shape_cast %125 : vector<1x128xf32> to vector<1x1x128xf32>
    tpu.vector_store %arg27[%c6_151, %c0_152, %c0_153], %164 {strides = array<i32>} : memref<8x24x128xf32, #tpu.memory_space<vmem>>, vector<1x1x128xf32>,
    %c6_154 = arith.constant 6 : index
    %c17_155 = arith.constant 17 : index
    %c0_156 = arith.constant 0 : index
    %165 = vector.load %arg27[%c6_154, %c17_155, %c0_156] : memref<8x24x128xf32, #tpu.memory_space<vmem>>, vector<1x1x128xf32>
    %166 = vector.shape_cast %165 : vector<1x1x128xf32> to vector<1x128xf32>
    %167 = vector.shape_cast %125 : vector<1x128xf32> to vector<1x1x128xf32>
    tpu.vector_store %arg27[%c6_154, %c17_155, %c0_156], %167 {strides = array<i32>} : memref<8x24x128xf32, #tpu.memory_space<vmem>>, vector<1x1x128xf32>,
    %c7_157 = arith.constant 7 : index
    %c0_158 = arith.constant 0 : index
    %c0_159 = arith.constant 0 : index
    %168 = vector.load %arg27[%c7_157, %c0_158, %c0_159] : memref<8x24x128xf32, #tpu.memory_space<vmem>>, vector<1x1x128xf32>
    %169 = vector.shape_cast %168 : vector<1x1x128xf32> to vector<1x128xf32>
    %170 = vector.shape_cast %125 : vector<1x128xf32> to vector<1x1x128xf32>
    tpu.vector_store %arg27[%c7_157, %c0_158, %c0_159], %170 {strides = array<i32>} : memref<8x24x128xf32, #tpu.memory_space<vmem>>, vector<1x1x128xf32>,
    %c7_160 = arith.constant 7 : index
    %c17_161 = arith.constant 17 : index
    %c0_162 = arith.constant 0 : index
    %171 = vector.load %arg27[%c7_160, %c17_161, %c0_162] : memref<8x24x128xf32, #tpu.memory_space<vmem>>, vector<1x1x128xf32>
    %172 = vector.shape_cast %171 : vector<1x1x128xf32> to vector<1x128xf32>
    %173 = vector.shape_cast %125 : vector<1x128xf32> to vector<1x1x128xf32>
    tpu.vector_store %arg27[%c7_160, %c17_161, %c0_162], %173 {strides = array<i32>} : memref<8x24x128xf32, #tpu.memory_space<vmem>>, vector<1x1x128xf32>,
    %c0_163 = arith.constant 0 : index
    %c0_164 = arith.constant 0 : index
    %c0_165 = arith.constant 0 : index
    %174 = vector.load %arg14[%c0_163, %c0_164, %c0_165] : memref<1x4x4xf32, #tpu.memory_space<vmem>>, vector<1x4x4xf32>
    %175 = vector.shape_cast %174 : vector<1x4x4xf32> to vector<4x4xf32>
    %c0_166 = arith.constant 0 : index
    %c1_167 = arith.constant 1 : index
    %c0_168 = arith.constant 0 : index
    %176 = vector.load %arg22[%c0_166, %c1_167, %c0_168] : memref<1x8x128xf32, #tpu.memory_space<vmem>>, vector<1x4x4xf32>
    %177 = vector.shape_cast %176 : vector<1x4x4xf32> to vector<4x4xf32>
    %178 = vector.shape_cast %175 : vector<4x4xf32> to vector<1x4x4xf32>
    tpu.vector_store %arg22[%c0_166, %c1_167, %c0_168], %178 {strides = array<i32>} : memref<1x8x128xf32, #tpu.memory_space<vmem>>, vector<1x4x4xf32>,
    %cst_169 = arith.constant 0.000000e+00 : f32
    %179 = vector.broadcast %cst_169 : f32 to vector<4x124xf32>
    %c0_170 = arith.constant 0 : index
    %c1_171 = arith.constant 1 : index
    %c4_172 = arith.constant 4 : index
    %180 = vector.load %arg22[%c0_170, %c1_171, %c4_172] : memref<1x8x128xf32, #tpu.memory_space<vmem>>, vector<1x4x124xf32>
    %181 = vector.shape_cast %180 : vector<1x4x124xf32> to vector<4x124xf32>
    %182 = vector.shape_cast %179 : vector<4x124xf32> to vector<1x4x124xf32>
    tpu.vector_store %arg22[%c0_170, %c1_171, %c4_172], %182 {strides = array<i32>} : memref<1x8x128xf32, #tpu.memory_space<vmem>>, vector<1x4x124xf32>,
    %183 = tpu.iota {dimensions = array<i32: 1>} : vector<4x128xi32>
    %c4_i32 = arith.constant 4 : i32
    %184 = vector.broadcast %c4_i32 : i32 to vector<4x128xi32>
    %185 = arith.cmpi slt, %183, %184 : vector<4x128xi32>
    %cst_173 = arith.constant 0.000000e+00 : f32
    %186 = vector.broadcast %cst_173 : f32 to vector<4x128xf32>
    %c0_174 = arith.constant 0 : index
    %187 = memref.load %arg2[%c0_174] : memref<8xf32, #tpu.memory_space<smem>>
    %188 = vector.broadcast %187 : f32 to vector<4x128xf32>
    %189 = arith.addf %186, %188 : vector<4x128xf32>
    %cst_175 = arith.constant 0.000000e+00 : f32
    %190 = vector.broadcast %cst_175 : f32 to vector<4x128xf32>
    %c1_176 = arith.constant 1 : index
    %191 = memref.load %arg2[%c1_176] : memref<8xf32, #tpu.memory_space<smem>>
    %192 = vector.broadcast %191 : f32 to vector<4x128xf32>
    %193 = arith.addf %190, %192 : vector<4x128xf32>
    %cst_177 = arith.constant 0.000000e+00 : f32
    %194 = vector.broadcast %cst_177 : f32 to vector<4x128xf32>
    %c2_178 = arith.constant 2 : index
    %195 = memref.load %arg2[%c2_178] : memref<8xf32, #tpu.memory_space<smem>>
    %196 = vector.broadcast %195 : f32 to vector<4x128xf32>
    %197 = arith.addf %194, %196 : vector<4x128xf32>
    %cst_179 = arith.constant 0.000000e+00 : f32
    %198 = vector.broadcast %cst_179 : f32 to vector<4x128xf32>
    %c3_180 = arith.constant 3 : index
    %199 = memref.load %arg2[%c3_180] : memref<8xf32, #tpu.memory_space<smem>>
    %200 = vector.broadcast %199 : f32 to vector<4x128xf32>
    %201 = arith.addf %198, %200 : vector<4x128xf32>
    %cst_181 = arith.constant 0.000000e+00 : f32
    %202 = vector.broadcast %cst_181 : f32 to vector<4x128xf32>
    %c4_182 = arith.constant 4 : index
    %203 = memref.load %arg2[%c4_182] : memref<8xf32, #tpu.memory_space<smem>>
    %204 = vector.broadcast %203 : f32 to vector<4x128xf32>
    %205 = arith.addf %202, %204 : vector<4x128xf32>
    %cst_183 = arith.constant 0.000000e+00 : f32
    %206 = vector.broadcast %cst_183 : f32 to vector<4x128xf32>
    %c5_184 = arith.constant 5 : index
    %207 = memref.load %arg2[%c5_184] : memref<8xf32, #tpu.memory_space<smem>>
    %208 = vector.broadcast %207 : f32 to vector<4x128xf32>
    %209 = arith.addf %206, %208 : vector<4x128xf32>
    %cst_185 = arith.constant 0.000000e+00 : f32
    %210 = vector.broadcast %cst_185 : f32 to vector<4x128xf32>
    %c6_186 = arith.constant 6 : index
    %211 = memref.load %arg2[%c6_186] : memref<8xf32, #tpu.memory_space<smem>>
    %212 = vector.broadcast %211 : f32 to vector<4x128xf32>
    %213 = arith.addf %210, %212 : vector<4x128xf32>
    %cst_187 = arith.constant 0.000000e+00 : f32
    %214 = vector.broadcast %cst_187 : f32 to vector<4x128xf32>
    %c7_188 = arith.constant 7 : index
    %215 = memref.load %arg2[%c7_188] : memref<8xf32, #tpu.memory_space<smem>>
    %216 = vector.broadcast %215 : f32 to vector<4x128xf32>
    %217 = arith.addf %214, %216 : vector<4x128xf32>
    %c0_189 = arith.constant 0 : index
    %c0_190 = arith.constant 0 : index
    %c0_191 = arith.constant 0 : index
    %218 = vector.load %arg22[%c0_189, %c0_190, %c0_191] : memref<1x8x128xf32, #tpu.memory_space<vmem>>, vector<1x4x128xf32>
    %219 = vector.shape_cast %218 : vector<1x4x128xf32> to vector<4x128xf32>
    %c1_i32 = arith.constant 1 : i32
    %220 = tpu.dynamic_rotate %219 by %c1_i32 dim 1 : vector<4x128xf32>, i32 -> vector<4x128xf32>
    %c127_i32 = arith.constant 127 : i32
    %221 = tpu.dynamic_rotate %219 by %c127_i32 dim 1 : vector<4x128xf32>, i32 -> vector<4x128xf32>
    %c0_192 = arith.constant 0 : index
    %222 = memref.load %arg1[%c0_192] : memref<72xf32, #tpu.memory_space<smem>>
    %223 = vector.broadcast %222 : f32 to vector<4x128xf32>
    %224 = arith.mulf %220, %223 : vector<4x128xf32>
    %225 = arith.addf %189, %224 : vector<4x128xf32>
    %c1_193 = arith.constant 1 : index
    %226 = memref.load %arg1[%c1_193] : memref<72xf32, #tpu.memory_space<smem>>
    %227 = vector.broadcast %226 : f32 to vector<4x128xf32>
    %228 = arith.mulf %220, %227 : vector<4x128xf32>
    %229 = arith.addf %193, %228 : vector<4x128xf32>
    %c2_194 = arith.constant 2 : index
    %230 = memref.load %arg1[%c2_194] : memref<72xf32, #tpu.memory_space<smem>>
    %231 = vector.broadcast %230 : f32 to vector<4x128xf32>
    %232 = arith.mulf %220, %231 : vector<4x128xf32>
    %233 = arith.addf %197, %232 : vector<4x128xf32>
    %c3_195 = arith.constant 3 : index
    %234 = memref.load %arg1[%c3_195] : memref<72xf32, #tpu.memory_space<smem>>
    %235 = vector.broadcast %234 : f32 to vector<4x128xf32>
    %236 = arith.mulf %220, %235 : vector<4x128xf32>
    %237 = arith.addf %201, %236 : vector<4x128xf32>
    %c4_196 = arith.constant 4 : index
    %238 = memref.load %arg1[%c4_196] : memref<72xf32, #tpu.memory_space<smem>>
    %239 = vector.broadcast %238 : f32 to vector<4x128xf32>
    %240 = arith.mulf %220, %239 : vector<4x128xf32>
    %241 = arith.addf %205, %240 : vector<4x128xf32>
    %c5_197 = arith.constant 5 : index
    %242 = memref.load %arg1[%c5_197] : memref<72xf32, #tpu.memory_space<smem>>
    %243 = vector.broadcast %242 : f32 to vector<4x128xf32>
    %244 = arith.mulf %220, %243 : vector<4x128xf32>
    %245 = arith.addf %209, %244 : vector<4x128xf32>
    %c6_198 = arith.constant 6 : index
    %246 = memref.load %arg1[%c6_198] : memref<72xf32, #tpu.memory_space<smem>>
    %247 = vector.broadcast %246 : f32 to vector<4x128xf32>
    %248 = arith.mulf %220, %247 : vector<4x128xf32>
    %249 = arith.addf %213, %248 : vector<4x128xf32>
    %c7_199 = arith.constant 7 : index
    %250 = memref.load %arg1[%c7_199] : memref<72xf32, #tpu.memory_space<smem>>
    %251 = vector.broadcast %250 : f32 to vector<4x128xf32>
    %252 = arith.mulf %220, %251 : vector<4x128xf32>
    %253 = arith.addf %217, %252 : vector<4x128xf32>
    %c8 = arith.constant 8 : index
    %254 = memref.load %arg1[%c8] : memref<72xf32, #tpu.memory_space<smem>>
    %255 = vector.broadcast %254 : f32 to vector<4x128xf32>
    %256 = arith.mulf %219, %255 : vector<4x128xf32>
    %257 = arith.addf %225, %256 : vector<4x128xf32>
    %c9_200 = arith.constant 9 : index
    %258 = memref.load %arg1[%c9_200] : memref<72xf32, #tpu.memory_space<smem>>
    %259 = vector.broadcast %258 : f32 to vector<4x128xf32>
    %260 = arith.mulf %219, %259 : vector<4x128xf32>
    %261 = arith.addf %229, %260 : vector<4x128xf32>
    %c10 = arith.constant 10 : index
    %262 = memref.load %arg1[%c10] : memref<72xf32, #tpu.memory_space<smem>>
    %263 = vector.broadcast %262 : f32 to vector<4x128xf32>
    %264 = arith.mulf %219, %263 : vector<4x128xf32>
    %265 = arith.addf %233, %264 : vector<4x128xf32>
    %c11 = arith.constant 11 : index
    %266 = memref.load %arg1[%c11] : memref<72xf32, #tpu.memory_space<smem>>
    %267 = vector.broadcast %266 : f32 to vector<4x128xf32>
    %268 = arith.mulf %219, %267 : vector<4x128xf32>
    %269 = arith.addf %237, %268 : vector<4x128xf32>
    %c12 = arith.constant 12 : index
    %270 = memref.load %arg1[%c12] : memref<72xf32, #tpu.memory_space<smem>>
    %271 = vector.broadcast %270 : f32 to vector<4x128xf32>
    %272 = arith.mulf %219, %271 : vector<4x128xf32>
    %273 = arith.addf %241, %272 : vector<4x128xf32>
    %c13 = arith.constant 13 : index
    %274 = memref.load %arg1[%c13] : memref<72xf32, #tpu.memory_space<smem>>
    %275 = vector.broadcast %274 : f32 to vector<4x128xf32>
    %276 = arith.mulf %219, %275 : vector<4x128xf32>
    %277 = arith.addf %245, %276 : vector<4x128xf32>
    %c14 = arith.constant 14 : index
    %278 = memref.load %arg1[%c14] : memref<72xf32, #tpu.memory_space<smem>>
    %279 = vector.broadcast %278 : f32 to vector<4x128xf32>
    %280 = arith.mulf %219, %279 : vector<4x128xf32>
    %281 = arith.addf %249, %280 : vector<4x128xf32>
    %c15 = arith.constant 15 : index
    %282 = memref.load %arg1[%c15] : memref<72xf32, #tpu.memory_space<smem>>
    %283 = vector.broadcast %282 : f32 to vector<4x128xf32>
    %284 = arith.mulf %219, %283 : vector<4x128xf32>
    %285 = arith.addf %253, %284 : vector<4x128xf32>
    %c16 = arith.constant 16 : index
    %286 = memref.load %arg1[%c16] : memref<72xf32, #tpu.memory_space<smem>>
    %287 = vector.broadcast %286 : f32 to vector<4x128xf32>
    %288 = arith.mulf %221, %287 : vector<4x128xf32>
    %289 = arith.addf %257, %288 : vector<4x128xf32>
    %c17_201 = arith.constant 17 : index
    %290 = memref.load %arg1[%c17_201] : memref<72xf32, #tpu.memory_space<smem>>
    %291 = vector.broadcast %290 : f32 to vector<4x128xf32>
    %292 = arith.mulf %221, %291 : vector<4x128xf32>
    %293 = arith.addf %261, %292 : vector<4x128xf32>
    %c18 = arith.constant 18 : index
    %294 = memref.load %arg1[%c18] : memref<72xf32, #tpu.memory_space<smem>>
    %295 = vector.broadcast %294 : f32 to vector<4x128xf32>
    %296 = arith.mulf %221, %295 : vector<4x128xf32>
    %297 = arith.addf %265, %296 : vector<4x128xf32>
    %c19 = arith.constant 19 : index
    %298 = memref.load %arg1[%c19] : memref<72xf32, #tpu.memory_space<smem>>
    %299 = vector.broadcast %298 : f32 to vector<4x128xf32>
    %300 = arith.mulf %221, %299 : vector<4x128xf32>
    %301 = arith.addf %269, %300 : vector<4x128xf32>
    %c20 = arith.constant 20 : index
    %302 = memref.load %arg1[%c20] : memref<72xf32, #tpu.memory_space<smem>>
    %303 = vector.broadcast %302 : f32 to vector<4x128xf32>
    %304 = arith.mulf %221, %303 : vector<4x128xf32>
    %305 = arith.addf %273, %304 : vector<4x128xf32>
    %c21 = arith.constant 21 : index
    %306 = memref.load %arg1[%c21] : memref<72xf32, #tpu.memory_space<smem>>
    %307 = vector.broadcast %306 : f32 to vector<4x128xf32>
    %308 = arith.mulf %221, %307 : vector<4x128xf32>
    %309 = arith.addf %277, %308 : vector<4x128xf32>
    %c22 = arith.constant 22 : index
    %310 = memref.load %arg1[%c22] : memref<72xf32, #tpu.memory_space<smem>>
    %311 = vector.broadcast %310 : f32 to vector<4x128xf32>
    %312 = arith.mulf %221, %311 : vector<4x128xf32>
    %313 = arith.addf %281, %312 : vector<4x128xf32>
    %c23 = arith.constant 23 : index
    %314 = memref.load %arg1[%c23] : memref<72xf32, #tpu.memory_space<smem>>
    %315 = vector.broadcast %314 : f32 to vector<4x128xf32>
    %316 = arith.mulf %221, %315 : vector<4x128xf32>
    %317 = arith.addf %285, %316 : vector<4x128xf32>
    %c0_202 = arith.constant 0 : index
    %c1_203 = arith.constant 1 : index
    %c0_204 = arith.constant 0 : index
    %318 = vector.load %arg22[%c0_202, %c1_203, %c0_204] : memref<1x8x128xf32, #tpu.memory_space<vmem>>, vector<1x4x128xf32>
    %319 = vector.shape_cast %318 : vector<1x4x128xf32> to vector<4x128xf32>
    %c1_i32_205 = arith.constant 1 : i32
    %320 = tpu.dynamic_rotate %319 by %c1_i32_205 dim 1 : vector<4x128xf32>, i32 -> vector<4x128xf32>
    %c127_i32_206 = arith.constant 127 : i32
    %321 = tpu.dynamic_rotate %319 by %c127_i32_206 dim 1 : vector<4x128xf32>, i32 -> vector<4x128xf32>
    %c24 = arith.constant 24 : index
    %322 = memref.load %arg1[%c24] : memref<72xf32, #tpu.memory_space<smem>>
    %323 = vector.broadcast %322 : f32 to vector<4x128xf32>
    %324 = arith.mulf %320, %323 : vector<4x128xf32>
    %325 = arith.addf %289, %324 : vector<4x128xf32>
    %c25 = arith.constant 25 : index
    %326 = memref.load %arg1[%c25] : memref<72xf32, #tpu.memory_space<smem>>
    %327 = vector.broadcast %326 : f32 to vector<4x128xf32>
    %328 = arith.mulf %320, %327 : vector<4x128xf32>
    %329 = arith.addf %293, %328 : vector<4x128xf32>
    %c26 = arith.constant 26 : index
    %330 = memref.load %arg1[%c26] : memref<72xf32, #tpu.memory_space<smem>>
    %331 = vector.broadcast %330 : f32 to vector<4x128xf32>
    %332 = arith.mulf %320, %331 : vector<4x128xf32>
    %333 = arith.addf %297, %332 : vector<4x128xf32>
    %c27 = arith.constant 27 : index
    %334 = memref.load %arg1[%c27] : memref<72xf32, #tpu.memory_space<smem>>
    %335 = vector.broadcast %334 : f32 to vector<4x128xf32>
    %336 = arith.mulf %320, %335 : vector<4x128xf32>
    %337 = arith.addf %301, %336 : vector<4x128xf32>
    %c28 = arith.constant 28 : index
    %338 = memref.load %arg1[%c28] : memref<72xf32, #tpu.memory_space<smem>>
    %339 = vector.broadcast %338 : f32 to vector<4x128xf32>
    %340 = arith.mulf %320, %339 : vector<4x128xf32>
    %341 = arith.addf %305, %340 : vector<4x128xf32>
    %c29 = arith.constant 29 : index
    %342 = memref.load %arg1[%c29] : memref<72xf32, #tpu.memory_space<smem>>
    %343 = vector.broadcast %342 : f32 to vector<4x128xf32>
    %344 = arith.mulf %320, %343 : vector<4x128xf32>
    %345 = arith.addf %309, %344 : vector<4x128xf32>
    %c30 = arith.constant 30 : index
    %346 = memref.load %arg1[%c30] : memref<72xf32, #tpu.memory_space<smem>>
    %347 = vector.broadcast %346 : f32 to vector<4x128xf32>
    %348 = arith.mulf %320, %347 : vector<4x128xf32>
    %349 = arith.addf %313, %348 : vector<4x128xf32>
    %c31 = arith.constant 31 : index
    %350 = memref.load %arg1[%c31] : memref<72xf32, #tpu.memory_space<smem>>
    %351 = vector.broadcast %350 : f32 to vector<4x128xf32>
    %352 = arith.mulf %320, %351 : vector<4x128xf32>
    %353 = arith.addf %317, %352 : vector<4x128xf32>
    %c32 = arith.constant 32 : index
    %354 = memref.load %arg1[%c32] : memref<72xf32, #tpu.memory_space<smem>>
    %355 = vector.broadcast %354 : f32 to vector<4x128xf32>
    %356 = arith.mulf %319, %355 : vector<4x128xf32>
    %357 = arith.addf %325, %356 : vector<4x128xf32>
    %c33 = arith.constant 33 : index
    %358 = memref.load %arg1[%c33] : memref<72xf32, #tpu.memory_space<smem>>
    %359 = vector.broadcast %358 : f32 to vector<4x128xf32>
    %360 = arith.mulf %319, %359 : vector<4x128xf32>
    %361 = arith.addf %329, %360 : vector<4x128xf32>
    %c34 = arith.constant 34 : index
    %362 = memref.load %arg1[%c34] : memref<72xf32, #tpu.memory_space<smem>>
    %363 = vector.broadcast %362 : f32 to vector<4x128xf32>
    %364 = arith.mulf %319, %363 : vector<4x128xf32>
    %365 = arith.addf %333, %364 : vector<4x128xf32>
    %c35 = arith.constant 35 : index
    %366 = memref.load %arg1[%c35] : memref<72xf32, #tpu.memory_space<smem>>
    %367 = vector.broadcast %366 : f32 to vector<4x128xf32>
    %368 = arith.mulf %319, %367 : vector<4x128xf32>
    %369 = arith.addf %337, %368 : vector<4x128xf32>
    %c36 = arith.constant 36 : index
    %370 = memref.load %arg1[%c36] : memref<72xf32, #tpu.memory_space<smem>>
    %371 = vector.broadcast %370 : f32 to vector<4x128xf32>
    %372 = arith.mulf %319, %371 : vector<4x128xf32>
    %373 = arith.addf %341, %372 : vector<4x128xf32>
    %c37 = arith.constant 37 : index
    %374 = memref.load %arg1[%c37] : memref<72xf32, #tpu.memory_space<smem>>
    %375 = vector.broadcast %374 : f32 to vector<4x128xf32>
    %376 = arith.mulf %319, %375 : vector<4x128xf32>
    %377 = arith.addf %345, %376 : vector<4x128xf32>
    %c38 = arith.constant 38 : index
    %378 = memref.load %arg1[%c38] : memref<72xf32, #tpu.memory_space<smem>>
    %379 = vector.broadcast %378 : f32 to vector<4x128xf32>
    %380 = arith.mulf %319, %379 : vector<4x128xf32>
    %381 = arith.addf %349, %380 : vector<4x128xf32>
    %c39 = arith.constant 39 : index
    %382 = memref.load %arg1[%c39] : memref<72xf32, #tpu.memory_space<smem>>
    %383 = vector.broadcast %382 : f32 to vector<4x128xf32>
    %384 = arith.mulf %319, %383 : vector<4x128xf32>
    %385 = arith.addf %353, %384 : vector<4x128xf32>
    %c40 = arith.constant 40 : index
    %386 = memref.load %arg1[%c40] : memref<72xf32, #tpu.memory_space<smem>>
    %387 = vector.broadcast %386 : f32 to vector<4x128xf32>
    %388 = arith.mulf %321, %387 : vector<4x128xf32>
    %389 = arith.addf %357, %388 : vector<4x128xf32>
    %c41 = arith.constant 41 : index
    %390 = memref.load %arg1[%c41] : memref<72xf32, #tpu.memory_space<smem>>
    %391 = vector.broadcast %390 : f32 to vector<4x128xf32>
    %392 = arith.mulf %321, %391 : vector<4x128xf32>
    %393 = arith.addf %361, %392 : vector<4x128xf32>
    %c42 = arith.constant 42 : index
    %394 = memref.load %arg1[%c42] : memref<72xf32, #tpu.memory_space<smem>>
    %395 = vector.broadcast %394 : f32 to vector<4x128xf32>
    %396 = arith.mulf %321, %395 : vector<4x128xf32>
    %397 = arith.addf %365, %396 : vector<4x128xf32>
    %c43 = arith.constant 43 : index
    %398 = memref.load %arg1[%c43] : memref<72xf32, #tpu.memory_space<smem>>
    %399 = vector.broadcast %398 : f32 to vector<4x128xf32>
    %400 = arith.mulf %321, %399 : vector<4x128xf32>
    %401 = arith.addf %369, %400 : vector<4x128xf32>
    %c44 = arith.constant 44 : index
    %402 = memref.load %arg1[%c44] : memref<72xf32, #tpu.memory_space<smem>>
    %403 = vector.broadcast %402 : f32 to vector<4x128xf32>
    %404 = arith.mulf %321, %403 : vector<4x128xf32>
    %405 = arith.addf %373, %404 : vector<4x128xf32>
    %c45 = arith.constant 45 : index
    %406 = memref.load %arg1[%c45] : memref<72xf32, #tpu.memory_space<smem>>
    %407 = vector.broadcast %406 : f32 to vector<4x128xf32>
    %408 = arith.mulf %321, %407 : vector<4x128xf32>
    %409 = arith.addf %377, %408 : vector<4x128xf32>
    %c46 = arith.constant 46 : index
    %410 = memref.load %arg1[%c46] : memref<72xf32, #tpu.memory_space<smem>>
    %411 = vector.broadcast %410 : f32 to vector<4x128xf32>
    %412 = arith.mulf %321, %411 : vector<4x128xf32>
    %413 = arith.addf %381, %412 : vector<4x128xf32>
    %c47 = arith.constant 47 : index
    %414 = memref.load %arg1[%c47] : memref<72xf32, #tpu.memory_space<smem>>
    %415 = vector.broadcast %414 : f32 to vector<4x128xf32>
    %416 = arith.mulf %321, %415 : vector<4x128xf32>
    %417 = arith.addf %385, %416 : vector<4x128xf32>
    %c0_207 = arith.constant 0 : index
    %c2_208 = arith.constant 2 : index
    %c0_209 = arith.constant 0 : index
    %418 = vector.load %arg22[%c0_207, %c2_208, %c0_209] : memref<1x8x128xf32, #tpu.memory_space<vmem>>, vector<1x4x128xf32>
    %419 = vector.shape_cast %418 : vector<1x4x128xf32> to vector<4x128xf32>
    %c1_i32_210 = arith.constant 1 : i32
    %420 = tpu.dynamic_rotate %419 by %c1_i32_210 dim 1 : vector<4x128xf32>, i32 -> vector<4x128xf32>
    %c127_i32_211 = arith.constant 127 : i32
    %421 = tpu.dynamic_rotate %419 by %c127_i32_211 dim 1 : vector<4x128xf32>, i32 -> vector<4x128xf32>
    %c48 = arith.constant 48 : index
    %422 = memref.load %arg1[%c48] : memref<72xf32, #tpu.memory_space<smem>>
    %423 = vector.broadcast %422 : f32 to vector<4x128xf32>
    %424 = arith.mulf %420, %423 : vector<4x128xf32>
    %425 = arith.addf %389, %424 : vector<4x128xf32>
    %c49 = arith.constant 49 : index
    %426 = memref.load %arg1[%c49] : memref<72xf32, #tpu.memory_space<smem>>
    %427 = vector.broadcast %426 : f32 to vector<4x128xf32>
    %428 = arith.mulf %420, %427 : vector<4x128xf32>
    %429 = arith.addf %393, %428 : vector<4x128xf32>
    %c50 = arith.constant 50 : index
    %430 = memref.load %arg1[%c50] : memref<72xf32, #tpu.memory_space<smem>>
    %431 = vector.broadcast %430 : f32 to vector<4x128xf32>
    %432 = arith.mulf %420, %431 : vector<4x128xf32>
    %433 = arith.addf %397, %432 : vector<4x128xf32>
    %c51 = arith.constant 51 : index
    %434 = memref.load %arg1[%c51] : memref<72xf32, #tpu.memory_space<smem>>
    %435 = vector.broadcast %434 : f32 to vector<4x128xf32>
    %436 = arith.mulf %420, %435 : vector<4x128xf32>
    %437 = arith.addf %401, %436 : vector<4x128xf32>
    %c52 = arith.constant 52 : index
    %438 = memref.load %arg1[%c52] : memref<72xf32, #tpu.memory_space<smem>>
    %439 = vector.broadcast %438 : f32 to vector<4x128xf32>
    %440 = arith.mulf %420, %439 : vector<4x128xf32>
    %441 = arith.addf %405, %440 : vector<4x128xf32>
    %c53 = arith.constant 53 : index
    %442 = memref.load %arg1[%c53] : memref<72xf32, #tpu.memory_space<smem>>
    %443 = vector.broadcast %442 : f32 to vector<4x128xf32>
    %444 = arith.mulf %420, %443 : vector<4x128xf32>
    %445 = arith.addf %409, %444 : vector<4x128xf32>
    %c54 = arith.constant 54 : index
    %446 = memref.load %arg1[%c54] : memref<72xf32, #tpu.memory_space<smem>>
    %447 = vector.broadcast %446 : f32 to vector<4x128xf32>
    %448 = arith.mulf %420, %447 : vector<4x128xf32>
    %449 = arith.addf %413, %448 : vector<4x128xf32>
    %c55 = arith.constant 55 : index
    %450 = memref.load %arg1[%c55] : memref<72xf32, #tpu.memory_space<smem>>
    %451 = vector.broadcast %450 : f32 to vector<4x128xf32>
    %452 = arith.mulf %420, %451 : vector<4x128xf32>
    %453 = arith.addf %417, %452 : vector<4x128xf32>
    %c56 = arith.constant 56 : index
    %454 = memref.load %arg1[%c56] : memref<72xf32, #tpu.memory_space<smem>>
    %455 = vector.broadcast %454 : f32 to vector<4x128xf32>
    %456 = arith.mulf %419, %455 : vector<4x128xf32>
    %457 = arith.addf %425, %456 : vector<4x128xf32>
    %c57 = arith.constant 57 : index
    %458 = memref.load %arg1[%c57] : memref<72xf32, #tpu.memory_space<smem>>
    %459 = vector.broadcast %458 : f32 to vector<4x128xf32>
    %460 = arith.mulf %419, %459 : vector<4x128xf32>
    %461 = arith.addf %429, %460 : vector<4x128xf32>
    %c58 = arith.constant 58 : index
    %462 = memref.load %arg1[%c58] : memref<72xf32, #tpu.memory_space<smem>>
    %463 = vector.broadcast %462 : f32 to vector<4x128xf32>
    %464 = arith.mulf %419, %463 : vector<4x128xf32>
    %465 = arith.addf %433, %464 : vector<4x128xf32>
    %c59 = arith.constant 59 : index
    %466 = memref.load %arg1[%c59] : memref<72xf32, #tpu.memory_space<smem>>
    %467 = vector.broadcast %466 : f32 to vector<4x128xf32>
    %468 = arith.mulf %419, %467 : vector<4x128xf32>
    %469 = arith.addf %437, %468 : vector<4x128xf32>
    %c60 = arith.constant 60 : index
    %470 = memref.load %arg1[%c60] : memref<72xf32, #tpu.memory_space<smem>>
    %471 = vector.broadcast %470 : f32 to vector<4x128xf32>
    %472 = arith.mulf %419, %471 : vector<4x128xf32>
    %473 = arith.addf %441, %472 : vector<4x128xf32>
    %c61 = arith.constant 61 : index
    %474 = memref.load %arg1[%c61] : memref<72xf32, #tpu.memory_space<smem>>
    %475 = vector.broadcast %474 : f32 to vector<4x128xf32>
    %476 = arith.mulf %419, %475 : vector<4x128xf32>
    %477 = arith.addf %445, %476 : vector<4x128xf32>
    %c62 = arith.constant 62 : index
    %478 = memref.load %arg1[%c62] : memref<72xf32, #tpu.memory_space<smem>>
    %479 = vector.broadcast %478 : f32 to vector<4x128xf32>
    %480 = arith.mulf %419, %479 : vector<4x128xf32>
    %481 = arith.addf %449, %480 : vector<4x128xf32>
    %c63 = arith.constant 63 : index
    %482 = memref.load %arg1[%c63] : memref<72xf32, #tpu.memory_space<smem>>
    %483 = vector.broadcast %482 : f32 to vector<4x128xf32>
    %484 = arith.mulf %419, %483 : vector<4x128xf32>
    %485 = arith.addf %453, %484 : vector<4x128xf32>
    %c64 = arith.constant 64 : index
    %486 = memref.load %arg1[%c64] : memref<72xf32, #tpu.memory_space<smem>>
    %487 = vector.broadcast %486 : f32 to vector<4x128xf32>
    %488 = arith.mulf %421, %487 : vector<4x128xf32>
    %489 = arith.addf %457, %488 : vector<4x128xf32>
    %c65 = arith.constant 65 : index
    %490 = memref.load %arg1[%c65] : memref<72xf32, #tpu.memory_space<smem>>
    %491 = vector.broadcast %490 : f32 to vector<4x128xf32>
    %492 = arith.mulf %421, %491 : vector<4x128xf32>
    %493 = arith.addf %461, %492 : vector<4x128xf32>
    %c66 = arith.constant 66 : index
    %494 = memref.load %arg1[%c66] : memref<72xf32, #tpu.memory_space<smem>>
    %495 = vector.broadcast %494 : f32 to vector<4x128xf32>
    %496 = arith.mulf %421, %495 : vector<4x128xf32>
    %497 = arith.addf %465, %496 : vector<4x128xf32>
    %c67 = arith.constant 67 : index
    %498 = memref.load %arg1[%c67] : memref<72xf32, #tpu.memory_space<smem>>
    %499 = vector.broadcast %498 : f32 to vector<4x128xf32>
    %500 = arith.mulf %421, %499 : vector<4x128xf32>
    %501 = arith.addf %469, %500 : vector<4x128xf32>
    %c68 = arith.constant 68 : index
    %502 = memref.load %arg1[%c68] : memref<72xf32, #tpu.memory_space<smem>>
    %503 = vector.broadcast %502 : f32 to vector<4x128xf32>
    %504 = arith.mulf %421, %503 : vector<4x128xf32>
    %505 = arith.addf %473, %504 : vector<4x128xf32>
    %c69 = arith.constant 69 : index
    %506 = memref.load %arg1[%c69] : memref<72xf32, #tpu.memory_space<smem>>
    %507 = vector.broadcast %506 : f32 to vector<4x128xf32>
    %508 = arith.mulf %421, %507 : vector<4x128xf32>
    %509 = arith.addf %477, %508 : vector<4x128xf32>
    %c70 = arith.constant 70 : index
    %510 = memref.load %arg1[%c70] : memref<72xf32, #tpu.memory_space<smem>>
    %511 = vector.broadcast %510 : f32 to vector<4x128xf32>
    %512 = arith.mulf %421, %511 : vector<4x128xf32>
    %513 = arith.addf %481, %512 : vector<4x128xf32>
    %c71 = arith.constant 71 : index
    %514 = memref.load %arg1[%c71] : memref<72xf32, #tpu.memory_space<smem>>
    %515 = vector.broadcast %514 : f32 to vector<4x128xf32>
    %516 = arith.mulf %421, %515 : vector<4x128xf32>
    %517 = arith.addf %485, %516 : vector<4x128xf32>
    %cst_212 = arith.constant 0.000000e+00 : f32
    %518 = vector.broadcast %cst_212 : f32 to vector<4x128xf32>
    %519 = arith.maximumf %489, %518 : vector<4x128xf32>
    %cst_213 = arith.constant 0.000000e+00 : f32
    %520 = vector.broadcast %cst_213 : f32 to vector<4x128xf32>
    %521 = arith.maximumf %493, %520 : vector<4x128xf32>
    %cst_214 = arith.constant 0.000000e+00 : f32
    %522 = vector.broadcast %cst_214 : f32 to vector<4x128xf32>
    %523 = arith.maximumf %497, %522 : vector<4x128xf32>
    %cst_215 = arith.constant 0.000000e+00 : f32
    %524 = vector.broadcast %cst_215 : f32 to vector<4x128xf32>
    %525 = arith.maximumf %501, %524 : vector<4x128xf32>
    %cst_216 = arith.constant 0.000000e+00 : f32
    %526 = vector.broadcast %cst_216 : f32 to vector<4x128xf32>
    %527 = arith.maximumf %505, %526 : vector<4x128xf32>
    %cst_217 = arith.constant 0.000000e+00 : f32
    %528 = vector.broadcast %cst_217 : f32 to vector<4x128xf32>
    %529 = arith.maximumf %509, %528 : vector<4x128xf32>
    %cst_218 = arith.constant 0.000000e+00 : f32
    %530 = vector.broadcast %cst_218 : f32 to vector<4x128xf32>
    %531 = arith.maximumf %513, %530 : vector<4x128xf32>
    %cst_219 = arith.constant 0.000000e+00 : f32
    %532 = vector.broadcast %cst_219 : f32 to vector<4x128xf32>
    %533 = arith.maximumf %517, %532 : vector<4x128xf32>
    %cst_220 = arith.constant 0.000000e+00 : f32
    %534 = vector.broadcast %cst_220 : f32 to vector<4x128xf32>
    %535 = arith.select %185, %519, %534 : vector<4x128xi1>, vector<4x128xf32>
    %c0_221 = arith.constant 0 : index
    %c1_222 = arith.constant 1 : index
    %c0_223 = arith.constant 0 : index
    %536 = vector.load %arg23[%c0_221, %c1_222, %c0_223] : memref<8x8x128xf32, #tpu.memory_space<vmem>>, vector<1x4x128xf32>
    %537 = vector.shape_cast %536 : vector<1x4x128xf32> to vector<4x128xf32>
    %538 = vector.shape_cast %535 : vector<4x128xf32> to vector<1x4x128xf32>
    tpu.vector_store %arg23[%c0_221, %c1_222, %c0_223], %538 {strides = array<i32>} : memref<8x8x128xf32, #tpu.memory_space<vmem>>, vector<1x4x128xf32>,
    %cst_224 = arith.constant 0.000000e+00 : f32
    %539 = vector.broadcast %cst_224 : f32 to vector<4x128xf32>
    %540 = arith.select %185, %521, %539 : vector<4x128xi1>, vector<4x128xf32>
    %c1_225 = arith.constant 1 : index
    %c1_226 = arith.constant 1 : index
    %c0_227 = arith.constant 0 : index
    %541 = vector.load %arg23[%c1_225, %c1_226, %c0_227] : memref<8x8x128xf32, #tpu.memory_space<vmem>>, vector<1x4x128xf32>
    %542 = vector.shape_cast %541 : vector<1x4x128xf32> to vector<4x128xf32>
    %543 = vector.shape_cast %540 : vector<4x128xf32> to vector<1x4x128xf32>
    tpu.vector_store %arg23[%c1_225, %c1_226, %c0_227], %543 {strides = array<i32>} : memref<8x8x128xf32, #tpu.memory_space<vmem>>, vector<1x4x128xf32>,
    %cst_228 = arith.constant 0.000000e+00 : f32
    %544 = vector.broadcast %cst_228 : f32 to vector<4x128xf32>
    %545 = arith.select %185, %523, %544 : vector<4x128xi1>, vector<4x128xf32>
    %c2_229 = arith.constant 2 : index
    %c1_230 = arith.constant 1 : index
    %c0_231 = arith.constant 0 : index
    %546 = vector.load %arg23[%c2_229, %c1_230, %c0_231] : memref<8x8x128xf32, #tpu.memory_space<vmem>>, vector<1x4x128xf32>
    %547 = vector.shape_cast %546 : vector<1x4x128xf32> to vector<4x128xf32>
    %548 = vector.shape_cast %545 : vector<4x128xf32> to vector<1x4x128xf32>
    tpu.vector_store %arg23[%c2_229, %c1_230, %c0_231], %548 {strides = array<i32>} : memref<8x8x128xf32, #tpu.memory_space<vmem>>, vector<1x4x128xf32>,
    %cst_232 = arith.constant 0.000000e+00 : f32
    %549 = vector.broadcast %cst_232 : f32 to vector<4x128xf32>
    %550 = arith.select %185, %525, %549 : vector<4x128xi1>, vector<4x128xf32>
    %c3_233 = arith.constant 3 : index
    %c1_234 = arith.constant 1 : index
    %c0_235 = arith.constant 0 : index
    %551 = vector.load %arg23[%c3_233, %c1_234, %c0_235] : memref<8x8x128xf32, #tpu.memory_space<vmem>>, vector<1x4x128xf32>
    %552 = vector.shape_cast %551 : vector<1x4x128xf32> to vector<4x128xf32>
    %553 = vector.shape_cast %550 : vector<4x128xf32> to vector<1x4x128xf32>
    tpu.vector_store %arg23[%c3_233, %c1_234, %c0_235], %553 {strides = array<i32>} : memref<8x8x128xf32, #tpu.memory_space<vmem>>, vector<1x4x128xf32>,
    %cst_236 = arith.constant 0.000000e+00 : f32
    %554 = vector.broadcast %cst_236 : f32 to vector<4x128xf32>
    %555 = arith.select %185, %527, %554 : vector<4x128xi1>, vector<4x128xf32>
    %c4_237 = arith.constant 4 : index
    %c1_238 = arith.constant 1 : index
    %c0_239 = arith.constant 0 : index
    %556 = vector.load %arg23[%c4_237, %c1_238, %c0_239] : memref<8x8x128xf32, #tpu.memory_space<vmem>>, vector<1x4x128xf32>
    %557 = vector.shape_cast %556 : vector<1x4x128xf32> to vector<4x128xf32>
    %558 = vector.shape_cast %555 : vector<4x128xf32> to vector<1x4x128xf32>
    tpu.vector_store %arg23[%c4_237, %c1_238, %c0_239], %558 {strides = array<i32>} : memref<8x8x128xf32, #tpu.memory_space<vmem>>, vector<1x4x128xf32>,
    %cst_240 = arith.constant 0.000000e+00 : f32
    %559 = vector.broadcast %cst_240 : f32 to vector<4x128xf32>
    %560 = arith.select %185, %529, %559 : vector<4x128xi1>, vector<4x128xf32>
    %c5_241 = arith.constant 5 : index
    %c1_242 = arith.constant 1 : index
    %c0_243 = arith.constant 0 : index
    %561 = vector.load %arg23[%c5_241, %c1_242, %c0_243] : memref<8x8x128xf32, #tpu.memory_space<vmem>>, vector<1x4x128xf32>
    %562 = vector.shape_cast %561 : vector<1x4x128xf32> to vector<4x128xf32>
    %563 = vector.shape_cast %560 : vector<4x128xf32> to vector<1x4x128xf32>
    tpu.vector_store %arg23[%c5_241, %c1_242, %c0_243], %563 {strides = array<i32>} : memref<8x8x128xf32, #tpu.memory_space<vmem>>, vector<1x4x128xf32>,
    %cst_244 = arith.constant 0.000000e+00 : f32
    %564 = vector.broadcast %cst_244 : f32 to vector<4x128xf32>
    %565 = arith.select %185, %531, %564 : vector<4x128xi1>, vector<4x128xf32>
    %c6_245 = arith.constant 6 : index
    %c1_246 = arith.constant 1 : index
    %c0_247 = arith.constant 0 : index
    %566 = vector.load %arg23[%c6_245, %c1_246, %c0_247] : memref<8x8x128xf32, #tpu.memory_space<vmem>>, vector<1x4x128xf32>
    %567 = vector.shape_cast %566 : vector<1x4x128xf32> to vector<4x128xf32>
    %568 = vector.shape_cast %565 : vector<4x128xf32> to vector<1x4x128xf32>
    tpu.vector_store %arg23[%c6_245, %c1_246, %c0_247], %568 {strides = array<i32>} : memref<8x8x128xf32, #tpu.memory_space<vmem>>, vector<1x4x128xf32>,
    %cst_248 = arith.constant 0.000000e+00 : f32
    %569 = vector.broadcast %cst_248 : f32 to vector<4x128xf32>
    %570 = arith.select %185, %533, %569 : vector<4x128xi1>, vector<4x128xf32>
    %c7_249 = arith.constant 7 : index
    %c1_250 = arith.constant 1 : index
    %c0_251 = arith.constant 0 : index
    %571 = vector.load %arg23[%c7_249, %c1_250, %c0_251] : memref<8x8x128xf32, #tpu.memory_space<vmem>>, vector<1x4x128xf32>
    %572 = vector.shape_cast %571 : vector<1x4x128xf32> to vector<4x128xf32>
    %573 = vector.shape_cast %570 : vector<4x128xf32> to vector<1x4x128xf32>
    tpu.vector_store %arg23[%c7_249, %c1_250, %c0_251], %573 {strides = array<i32>} : memref<8x8x128xf32, #tpu.memory_space<vmem>>, vector<1x4x128xf32>,
    %cst_252 = arith.constant 0.000000e+00 : f32
    %574 = vector.broadcast %cst_252 : f32 to vector<4x128xf32>
    %c0_253 = arith.constant 0 : index
    %575 = memref.load %arg4[%c0_253] : memref<1xf32, #tpu.memory_space<smem>>
    %576 = vector.broadcast %575 : f32 to vector<4x128xf32>
    %577 = arith.addf %574, %576 : vector<4x128xf32>
    %c0_254 = arith.constant 0 : index
    %c0_255 = arith.constant 0 : index
    %c0_256 = arith.constant 0 : index
    %578 = vector.load %arg23[%c0_254, %c0_255, %c0_256] : memref<8x8x128xf32, #tpu.memory_space<vmem>>, vector<1x4x128xf32>
    %579 = vector.shape_cast %578 : vector<1x4x128xf32> to vector<4x128xf32>
    %c1_i32_257 = arith.constant 1 : i32
    %580 = tpu.dynamic_rotate %579 by %c1_i32_257 dim 1 : vector<4x128xf32>, i32 -> vector<4x128xf32>
    %c127_i32_258 = arith.constant 127 : i32
    %581 = tpu.dynamic_rotate %579 by %c127_i32_258 dim 1 : vector<4x128xf32>, i32 -> vector<4x128xf32>
    %c0_259 = arith.constant 0 : index
    %582 = memref.load %arg3[%c0_259] : memref<72xf32, #tpu.memory_space<smem>>
    %583 = vector.broadcast %582 : f32 to vector<4x128xf32>
    %584 = arith.mulf %580, %583 : vector<4x128xf32>
    %585 = arith.addf %577, %584 : vector<4x128xf32>
    %c8_260 = arith.constant 8 : index
    %586 = memref.load %arg3[%c8_260] : memref<72xf32, #tpu.memory_space<smem>>
    %587 = vector.broadcast %586 : f32 to vector<4x128xf32>
    %588 = arith.mulf %579, %587 : vector<4x128xf32>
    %589 = arith.addf %585, %588 : vector<4x128xf32>
    %c16_261 = arith.constant 16 : index
    %590 = memref.load %arg3[%c16_261] : memref<72xf32, #tpu.memory_space<smem>>
    %591 = vector.broadcast %590 : f32 to vector<4x128xf32>
    %592 = arith.mulf %581, %591 : vector<4x128xf32>
    %593 = arith.addf %589, %592 : vector<4x128xf32>
    %c0_262 = arith.constant 0 : index
    %c1_263 = arith.constant 1 : index
    %c0_264 = arith.constant 0 : index
    %594 = vector.load %arg23[%c0_262, %c1_263, %c0_264] : memref<8x8x128xf32, #tpu.memory_space<vmem>>, vector<1x4x128xf32>
    %595 = vector.shape_cast %594 : vector<1x4x128xf32> to vector<4x128xf32>
    %c1_i32_265 = arith.constant 1 : i32
    %596 = tpu.dynamic_rotate %595 by %c1_i32_265 dim 1 : vector<4x128xf32>, i32 -> vector<4x128xf32>
    %c127_i32_266 = arith.constant 127 : i32
    %597 = tpu.dynamic_rotate %595 by %c127_i32_266 dim 1 : vector<4x128xf32>, i32 -> vector<4x128xf32>
    %c24_267 = arith.constant 24 : index
    %598 = memref.load %arg3[%c24_267] : memref<72xf32, #tpu.memory_space<smem>>
    %599 = vector.broadcast %598 : f32 to vector<4x128xf32>
    %600 = arith.mulf %596, %599 : vector<4x128xf32>
    %601 = arith.addf %593, %600 : vector<4x128xf32>
    %c32_268 = arith.constant 32 : index
    %602 = memref.load %arg3[%c32_268] : memref<72xf32, #tpu.memory_space<smem>>
    %603 = vector.broadcast %602 : f32 to vector<4x128xf32>
    %604 = arith.mulf %595, %603 : vector<4x128xf32>
    %605 = arith.addf %601, %604 : vector<4x128xf32>
    %c40_269 = arith.constant 40 : index
    %606 = memref.load %arg3[%c40_269] : memref<72xf32, #tpu.memory_space<smem>>
    %607 = vector.broadcast %606 : f32 to vector<4x128xf32>
    %608 = arith.mulf %597, %607 : vector<4x128xf32>
    %609 = arith.addf %605, %608 : vector<4x128xf32>
    %c0_270 = arith.constant 0 : index
    %c2_271 = arith.constant 2 : index
    %c0_272 = arith.constant 0 : index
    %610 = vector.load %arg23[%c0_270, %c2_271, %c0_272] : memref<8x8x128xf32, #tpu.memory_space<vmem>>, vector<1x4x128xf32>
    %611 = vector.shape_cast %610 : vector<1x4x128xf32> to vector<4x128xf32>
    %c1_i32_273 = arith.constant 1 : i32
    %612 = tpu.dynamic_rotate %611 by %c1_i32_273 dim 1 : vector<4x128xf32>, i32 -> vector<4x128xf32>
    %c127_i32_274 = arith.constant 127 : i32
    %613 = tpu.dynamic_rotate %611 by %c127_i32_274 dim 1 : vector<4x128xf32>, i32 -> vector<4x128xf32>
    %c48_275 = arith.constant 48 : index
    %614 = memref.load %arg3[%c48_275] : memref<72xf32, #tpu.memory_space<smem>>
    %615 = vector.broadcast %614 : f32 to vector<4x128xf32>
    %616 = arith.mulf %612, %615 : vector<4x128xf32>
    %617 = arith.addf %609, %616 : vector<4x128xf32>
    %c56_276 = arith.constant 56 : index
    %618 = memref.load %arg3[%c56_276] : memref<72xf32, #tpu.memory_space<smem>>
    %619 = vector.broadcast %618 : f32 to vector<4x128xf32>
    %620 = arith.mulf %611, %619 : vector<4x128xf32>
    %621 = arith.addf %617, %620 : vector<4x128xf32>
    %c64_277 = arith.constant 64 : index
    %622 = memref.load %arg3[%c64_277] : memref<72xf32, #tpu.memory_space<smem>>
    %623 = vector.broadcast %622 : f32 to vector<4x128xf32>
    %624 = arith.mulf %613, %623 : vector<4x128xf32>
    %625 = arith.addf %621, %624 : vector<4x128xf32>
    %c1_278 = arith.constant 1 : index
    %c0_279 = arith.constant 0 : index
    %c0_280 = arith.constant 0 : index
    %626 = vector.load %arg23[%c1_278, %c0_279, %c0_280] : memref<8x8x128xf32, #tpu.memory_space<vmem>>, vector<1x4x128xf32>
    %627 = vector.shape_cast %626 : vector<1x4x128xf32> to vector<4x128xf32>
    %c1_i32_281 = arith.constant 1 : i32
    %628 = tpu.dynamic_rotate %627 by %c1_i32_281 dim 1 : vector<4x128xf32>, i32 -> vector<4x128xf32>
    %c127_i32_282 = arith.constant 127 : i32
    %629 = tpu.dynamic_rotate %627 by %c127_i32_282 dim 1 : vector<4x128xf32>, i32 -> vector<4x128xf32>
    %c1_283 = arith.constant 1 : index
    %630 = memref.load %arg3[%c1_283] : memref<72xf32, #tpu.memory_space<smem>>
    %631 = vector.broadcast %630 : f32 to vector<4x128xf32>
    %632 = arith.mulf %628, %631 : vector<4x128xf32>
    %633 = arith.addf %625, %632 : vector<4x128xf32>
    %c9_284 = arith.constant 9 : index
    %634 = memref.load %arg3[%c9_284] : memref<72xf32, #tpu.memory_space<smem>>
    %635 = vector.broadcast %634 : f32 to vector<4x128xf32>
    %636 = arith.mulf %627, %635 : vector<4x128xf32>
    %637 = arith.addf %633, %636 : vector<4x128xf32>
    %c17_285 = arith.constant 17 : index
    %638 = memref.load %arg3[%c17_285] : memref<72xf32, #tpu.memory_space<smem>>
    %639 = vector.broadcast %638 : f32 to vector<4x128xf32>
    %640 = arith.mulf %629, %639 : vector<4x128xf32>
    %641 = arith.addf %637, %640 : vector<4x128xf32>
    %c1_286 = arith.constant 1 : index
    %c1_287 = arith.constant 1 : index
    %c0_288 = arith.constant 0 : index
    %642 = vector.load %arg23[%c1_286, %c1_287, %c0_288] : memref<8x8x128xf32, #tpu.memory_space<vmem>>, vector<1x4x128xf32>
    %643 = vector.shape_cast %642 : vector<1x4x128xf32> to vector<4x128xf32>
    %c1_i32_289 = arith.constant 1 : i32
    %644 = tpu.dynamic_rotate %643 by %c1_i32_289 dim 1 : vector<4x128xf32>, i32 -> vector<4x128xf32>
    %c127_i32_290 = arith.constant 127 : i32
    %645 = tpu.dynamic_rotate %643 by %c127_i32_290 dim 1 : vector<4x128xf32>, i32 -> vector<4x128xf32>
    %c25_291 = arith.constant 25 : index
    %646 = memref.load %arg3[%c25_291] : memref<72xf32, #tpu.memory_space<smem>>
    %647 = vector.broadcast %646 : f32 to vector<4x128xf32>
    %648 = arith.mulf %644, %647 : vector<4x128xf32>
    %649 = arith.addf %641, %648 : vector<4x128xf32>
    %c33_292 = arith.constant 33 : index
    %650 = memref.load %arg3[%c33_292] : memref<72xf32, #tpu.memory_space<smem>>
    %651 = vector.broadcast %650 : f32 to vector<4x128xf32>
    %652 = arith.mulf %643, %651 : vector<4x128xf32>
    %653 = arith.addf %649, %652 : vector<4x128xf32>
    %c41_293 = arith.constant 41 : index
    %654 = memref.load %arg3[%c41_293] : memref<72xf32, #tpu.memory_space<smem>>
    %655 = vector.broadcast %654 : f32 to vector<4x128xf32>
    %656 = arith.mulf %645, %655 : vector<4x128xf32>
    %657 = arith.addf %653, %656 : vector<4x128xf32>
    %c1_294 = arith.constant 1 : index
    %c2_295 = arith.constant 2 : index
    %c0_296 = arith.constant 0 : index
    %658 = vector.load %arg23[%c1_294, %c2_295, %c0_296] : memref<8x8x128xf32, #tpu.memory_space<vmem>>, vector<1x4x128xf32>
    %659 = vector.shape_cast %658 : vector<1x4x128xf32> to vector<4x128xf32>
    %c1_i32_297 = arith.constant 1 : i32
    %660 = tpu.dynamic_rotate %659 by %c1_i32_297 dim 1 : vector<4x128xf32>, i32 -> vector<4x128xf32>
    %c127_i32_298 = arith.constant 127 : i32
    %661 = tpu.dynamic_rotate %659 by %c127_i32_298 dim 1 : vector<4x128xf32>, i32 -> vector<4x128xf32>
    %c49_299 = arith.constant 49 : index
    %662 = memref.load %arg3[%c49_299] : memref<72xf32, #tpu.memory_space<smem>>
    %663 = vector.broadcast %662 : f32 to vector<4x128xf32>
    %664 = arith.mulf %660, %663 : vector<4x128xf32>
    %665 = arith.addf %657, %664 : vector<4x128xf32>
    %c57_300 = arith.constant 57 : index
    %666 = memref.load %arg3[%c57_300] : memref<72xf32, #tpu.memory_space<smem>>
    %667 = vector.broadcast %666 : f32 to vector<4x128xf32>
    %668 = arith.mulf %659, %667 : vector<4x128xf32>
    %669 = arith.addf %665, %668 : vector<4x128xf32>
    %c65_301 = arith.constant 65 : index
    %670 = memref.load %arg3[%c65_301] : memref<72xf32, #tpu.memory_space<smem>>
    %671 = vector.broadcast %670 : f32 to vector<4x128xf32>
    %672 = arith.mulf %661, %671 : vector<4x128xf32>
    %673 = arith.addf %669, %672 : vector<4x128xf32>
    %c2_302 = arith.constant 2 : index
    %c0_303 = arith.constant 0 : index
    %c0_304 = arith.constant 0 : index
    %674 = vector.load %arg23[%c2_302, %c0_303, %c0_304] : memref<8x8x128xf32, #tpu.memory_space<vmem>>, vector<1x4x128xf32>
    %675 = vector.shape_cast %674 : vector<1x4x128xf32> to vector<4x128xf32>
    %c1_i32_305 = arith.constant 1 : i32
    %676 = tpu.dynamic_rotate %675 by %c1_i32_305 dim 1 : vector<4x128xf32>, i32 -> vector<4x128xf32>
    %c127_i32_306 = arith.constant 127 : i32
    %677 = tpu.dynamic_rotate %675 by %c127_i32_306 dim 1 : vector<4x128xf32>, i32 -> vector<4x128xf32>
    %c2_307 = arith.constant 2 : index
    %678 = memref.load %arg3[%c2_307] : memref<72xf32, #tpu.memory_space<smem>>
    %679 = vector.broadcast %678 : f32 to vector<4x128xf32>
    %680 = arith.mulf %676, %679 : vector<4x128xf32>
    %681 = arith.addf %673, %680 : vector<4x128xf32>
    %c10_308 = arith.constant 10 : index
    %682 = memref.load %arg3[%c10_308] : memref<72xf32, #tpu.memory_space<smem>>
    %683 = vector.broadcast %682 : f32 to vector<4x128xf32>
    %684 = arith.mulf %675, %683 : vector<4x128xf32>
    %685 = arith.addf %681, %684 : vector<4x128xf32>
    %c18_309 = arith.constant 18 : index
    %686 = memref.load %arg3[%c18_309] : memref<72xf32, #tpu.memory_space<smem>>
    %687 = vector.broadcast %686 : f32 to vector<4x128xf32>
    %688 = arith.mulf %677, %687 : vector<4x128xf32>
    %689 = arith.addf %685, %688 : vector<4x128xf32>
    %c2_310 = arith.constant 2 : index
    %c1_311 = arith.constant 1 : index
    %c0_312 = arith.constant 0 : index
    %690 = vector.load %arg23[%c2_310, %c1_311, %c0_312] : memref<8x8x128xf32, #tpu.memory_space<vmem>>, vector<1x4x128xf32>
    %691 = vector.shape_cast %690 : vector<1x4x128xf32> to vector<4x128xf32>
    %c1_i32_313 = arith.constant 1 : i32
    %692 = tpu.dynamic_rotate %691 by %c1_i32_313 dim 1 : vector<4x128xf32>, i32 -> vector<4x128xf32>
    %c127_i32_314 = arith.constant 127 : i32
    %693 = tpu.dynamic_rotate %691 by %c127_i32_314 dim 1 : vector<4x128xf32>, i32 -> vector<4x128xf32>
    %c26_315 = arith.constant 26 : index
    %694 = memref.load %arg3[%c26_315] : memref<72xf32, #tpu.memory_space<smem>>
    %695 = vector.broadcast %694 : f32 to vector<4x128xf32>
    %696 = arith.mulf %692, %695 : vector<4x128xf32>
    %697 = arith.addf %689, %696 : vector<4x128xf32>
    %c34_316 = arith.constant 34 : index
    %698 = memref.load %arg3[%c34_316] : memref<72xf32, #tpu.memory_space<smem>>
    %699 = vector.broadcast %698 : f32 to vector<4x128xf32>
    %700 = arith.mulf %691, %699 : vector<4x128xf32>
    %701 = arith.addf %697, %700 : vector<4x128xf32>
    %c42_317 = arith.constant 42 : index
    %702 = memref.load %arg3[%c42_317] : memref<72xf32, #tpu.memory_space<smem>>
    %703 = vector.broadcast %702 : f32 to vector<4x128xf32>
    %704 = arith.mulf %693, %703 : vector<4x128xf32>
    %705 = arith.addf %701, %704 : vector<4x128xf32>
    %c2_318 = arith.constant 2 : index
    %c2_319 = arith.constant 2 : index
    %c0_320 = arith.constant 0 : index
    %706 = vector.load %arg23[%c2_318, %c2_319, %c0_320] : memref<8x8x128xf32, #tpu.memory_space<vmem>>, vector<1x4x128xf32>
    %707 = vector.shape_cast %706 : vector<1x4x128xf32> to vector<4x128xf32>
    %c1_i32_321 = arith.constant 1 : i32
    %708 = tpu.dynamic_rotate %707 by %c1_i32_321 dim 1 : vector<4x128xf32>, i32 -> vector<4x128xf32>
    %c127_i32_322 = arith.constant 127 : i32
    %709 = tpu.dynamic_rotate %707 by %c127_i32_322 dim 1 : vector<4x128xf32>, i32 -> vector<4x128xf32>
    %c50_323 = arith.constant 50 : index
    %710 = memref.load %arg3[%c50_323] : memref<72xf32, #tpu.memory_space<smem>>
    %711 = vector.broadcast %710 : f32 to vector<4x128xf32>
    %712 = arith.mulf %708, %711 : vector<4x128xf32>
    %713 = arith.addf %705, %712 : vector<4x128xf32>
    %c58_324 = arith.constant 58 : index
    %714 = memref.load %arg3[%c58_324] : memref<72xf32, #tpu.memory_space<smem>>
    %715 = vector.broadcast %714 : f32 to vector<4x128xf32>
    %716 = arith.mulf %707, %715 : vector<4x128xf32>
    %717 = arith.addf %713, %716 : vector<4x128xf32>
    %c66_325 = arith.constant 66 : index
    %718 = memref.load %arg3[%c66_325] : memref<72xf32, #tpu.memory_space<smem>>
    %719 = vector.broadcast %718 : f32 to vector<4x128xf32>
    %720 = arith.mulf %709, %719 : vector<4x128xf32>
    %721 = arith.addf %717, %720 : vector<4x128xf32>
    %c3_326 = arith.constant 3 : index
    %c0_327 = arith.constant 0 : index
    %c0_328 = arith.constant 0 : index
    %722 = vector.load %arg23[%c3_326, %c0_327, %c0_328] : memref<8x8x128xf32, #tpu.memory_space<vmem>>, vector<1x4x128xf32>
    %723 = vector.shape_cast %722 : vector<1x4x128xf32> to vector<4x128xf32>
    %c1_i32_329 = arith.constant 1 : i32
    %724 = tpu.dynamic_rotate %723 by %c1_i32_329 dim 1 : vector<4x128xf32>, i32 -> vector<4x128xf32>
    %c127_i32_330 = arith.constant 127 : i32
    %725 = tpu.dynamic_rotate %723 by %c127_i32_330 dim 1 : vector<4x128xf32>, i32 -> vector<4x128xf32>
    %c3_331 = arith.constant 3 : index
    %726 = memref.load %arg3[%c3_331] : memref<72xf32, #tpu.memory_space<smem>>
    %727 = vector.broadcast %726 : f32 to vector<4x128xf32>
    %728 = arith.mulf %724, %727 : vector<4x128xf32>
    %729 = arith.addf %721, %728 : vector<4x128xf32>
    %c11_332 = arith.constant 11 : index
    %730 = memref.load %arg3[%c11_332] : memref<72xf32, #tpu.memory_space<smem>>
    %731 = vector.broadcast %730 : f32 to vector<4x128xf32>
    %732 = arith.mulf %723, %731 : vector<4x128xf32>
    %733 = arith.addf %729, %732 : vector<4x128xf32>
    %c19_333 = arith.constant 19 : index
    %734 = memref.load %arg3[%c19_333] : memref<72xf32, #tpu.memory_space<smem>>
    %735 = vector.broadcast %734 : f32 to vector<4x128xf32>
    %736 = arith.mulf %725, %735 : vector<4x128xf32>
    %737 = arith.addf %733, %736 : vector<4x128xf32>
    %c3_334 = arith.constant 3 : index
    %c1_335 = arith.constant 1 : index
    %c0_336 = arith.constant 0 : index
    %738 = vector.load %arg23[%c3_334, %c1_335, %c0_336] : memref<8x8x128xf32, #tpu.memory_space<vmem>>, vector<1x4x128xf32>
    %739 = vector.shape_cast %738 : vector<1x4x128xf32> to vector<4x128xf32>
    %c1_i32_337 = arith.constant 1 : i32
    %740 = tpu.dynamic_rotate %739 by %c1_i32_337 dim 1 : vector<4x128xf32>, i32 -> vector<4x128xf32>
    %c127_i32_338 = arith.constant 127 : i32
    %741 = tpu.dynamic_rotate %739 by %c127_i32_338 dim 1 : vector<4x128xf32>, i32 -> vector<4x128xf32>
    %c27_339 = arith.constant 27 : index
    %742 = memref.load %arg3[%c27_339] : memref<72xf32, #tpu.memory_space<smem>>
    %743 = vector.broadcast %742 : f32 to vector<4x128xf32>
    %744 = arith.mulf %740, %743 : vector<4x128xf32>
    %745 = arith.addf %737, %744 : vector<4x128xf32>
    %c35_340 = arith.constant 35 : index
    %746 = memref.load %arg3[%c35_340] : memref<72xf32, #tpu.memory_space<smem>>
    %747 = vector.broadcast %746 : f32 to vector<4x128xf32>
    %748 = arith.mulf %739, %747 : vector<4x128xf32>
    %749 = arith.addf %745, %748 : vector<4x128xf32>
    %c43_341 = arith.constant 43 : index
    %750 = memref.load %arg3[%c43_341] : memref<72xf32, #tpu.memory_space<smem>>
    %751 = vector.broadcast %750 : f32 to vector<4x128xf32>
    %752 = arith.mulf %741, %751 : vector<4x128xf32>
    %753 = arith.addf %749, %752 : vector<4x128xf32>
    %c3_342 = arith.constant 3 : index
    %c2_343 = arith.constant 2 : index
    %c0_344 = arith.constant 0 : index
    %754 = vector.load %arg23[%c3_342, %c2_343, %c0_344] : memref<8x8x128xf32, #tpu.memory_space<vmem>>, vector<1x4x128xf32>
    %755 = vector.shape_cast %754 : vector<1x4x128xf32> to vector<4x128xf32>
    %c1_i32_345 = arith.constant 1 : i32
    %756 = tpu.dynamic_rotate %755 by %c1_i32_345 dim 1 : vector<4x128xf32>, i32 -> vector<4x128xf32>
    %c127_i32_346 = arith.constant 127 : i32
    %757 = tpu.dynamic_rotate %755 by %c127_i32_346 dim 1 : vector<4x128xf32>, i32 -> vector<4x128xf32>
    %c51_347 = arith.constant 51 : index
    %758 = memref.load %arg3[%c51_347] : memref<72xf32, #tpu.memory_space<smem>>
    %759 = vector.broadcast %758 : f32 to vector<4x128xf32>
    %760 = arith.mulf %756, %759 : vector<4x128xf32>
    %761 = arith.addf %753, %760 : vector<4x128xf32>
    %c59_348 = arith.constant 59 : index
    %762 = memref.load %arg3[%c59_348] : memref<72xf32, #tpu.memory_space<smem>>
    %763 = vector.broadcast %762 : f32 to vector<4x128xf32>
    %764 = arith.mulf %755, %763 : vector<4x128xf32>
    %765 = arith.addf %761, %764 : vector<4x128xf32>
    %c67_349 = arith.constant 67 : index
    %766 = memref.load %arg3[%c67_349] : memref<72xf32, #tpu.memory_space<smem>>
    %767 = vector.broadcast %766 : f32 to vector<4x128xf32>
    %768 = arith.mulf %757, %767 : vector<4x128xf32>
    %769 = arith.addf %765, %768 : vector<4x128xf32>
    %c4_350 = arith.constant 4 : index
    %c0_351 = arith.constant 0 : index
    %c0_352 = arith.constant 0 : index
    %770 = vector.load %arg23[%c4_350, %c0_351, %c0_352] : memref<8x8x128xf32, #tpu.memory_space<vmem>>, vector<1x4x128xf32>
    %771 = vector.shape_cast %770 : vector<1x4x128xf32> to vector<4x128xf32>
    %c1_i32_353 = arith.constant 1 : i32
    %772 = tpu.dynamic_rotate %771 by %c1_i32_353 dim 1 : vector<4x128xf32>, i32 -> vector<4x128xf32>
    %c127_i32_354 = arith.constant 127 : i32
    %773 = tpu.dynamic_rotate %771 by %c127_i32_354 dim 1 : vector<4x128xf32>, i32 -> vector<4x128xf32>
    %c4_355 = arith.constant 4 : index
    %774 = memref.load %arg3[%c4_355] : memref<72xf32, #tpu.memory_space<smem>>
    %775 = vector.broadcast %774 : f32 to vector<4x128xf32>
    %776 = arith.mulf %772, %775 : vector<4x128xf32>
    %777 = arith.addf %769, %776 : vector<4x128xf32>
    %c12_356 = arith.constant 12 : index
    %778 = memref.load %arg3[%c12_356] : memref<72xf32, #tpu.memory_space<smem>>
    %779 = vector.broadcast %778 : f32 to vector<4x128xf32>
    %780 = arith.mulf %771, %779 : vector<4x128xf32>
    %781 = arith.addf %777, %780 : vector<4x128xf32>
    %c20_357 = arith.constant 20 : index
    %782 = memref.load %arg3[%c20_357] : memref<72xf32, #tpu.memory_space<smem>>
    %783 = vector.broadcast %782 : f32 to vector<4x128xf32>
    %784 = arith.mulf %773, %783 : vector<4x128xf32>
    %785 = arith.addf %781, %784 : vector<4x128xf32>
    %c4_358 = arith.constant 4 : index
    %c1_359 = arith.constant 1 : index
    %c0_360 = arith.constant 0 : index
    %786 = vector.load %arg23[%c4_358, %c1_359, %c0_360] : memref<8x8x128xf32, #tpu.memory_space<vmem>>, vector<1x4x128xf32>
    %787 = vector.shape_cast %786 : vector<1x4x128xf32> to vector<4x128xf32>
    %c1_i32_361 = arith.constant 1 : i32
    %788 = tpu.dynamic_rotate %787 by %c1_i32_361 dim 1 : vector<4x128xf32>, i32 -> vector<4x128xf32>
    %c127_i32_362 = arith.constant 127 : i32
    %789 = tpu.dynamic_rotate %787 by %c127_i32_362 dim 1 : vector<4x128xf32>, i32 -> vector<4x128xf32>
    %c28_363 = arith.constant 28 : index
    %790 = memref.load %arg3[%c28_363] : memref<72xf32, #tpu.memory_space<smem>>
    %791 = vector.broadcast %790 : f32 to vector<4x128xf32>
    %792 = arith.mulf %788, %791 : vector<4x128xf32>
    %793 = arith.addf %785, %792 : vector<4x128xf32>
    %c36_364 = arith.constant 36 : index
    %794 = memref.load %arg3[%c36_364] : memref<72xf32, #tpu.memory_space<smem>>
    %795 = vector.broadcast %794 : f32 to vector<4x128xf32>
    %796 = arith.mulf %787, %795 : vector<4x128xf32>
    %797 = arith.addf %793, %796 : vector<4x128xf32>
    %c44_365 = arith.constant 44 : index
    %798 = memref.load %arg3[%c44_365] : memref<72xf32, #tpu.memory_space<smem>>
    %799 = vector.broadcast %798 : f32 to vector<4x128xf32>
    %800 = arith.mulf %789, %799 : vector<4x128xf32>
    %801 = arith.addf %797, %800 : vector<4x128xf32>
    %c4_366 = arith.constant 4 : index
    %c2_367 = arith.constant 2 : index
    %c0_368 = arith.constant 0 : index
    %802 = vector.load %arg23[%c4_366, %c2_367, %c0_368] : memref<8x8x128xf32, #tpu.memory_space<vmem>>, vector<1x4x128xf32>
    %803 = vector.shape_cast %802 : vector<1x4x128xf32> to vector<4x128xf32>
    %c1_i32_369 = arith.constant 1 : i32
    %804 = tpu.dynamic_rotate %803 by %c1_i32_369 dim 1 : vector<4x128xf32>, i32 -> vector<4x128xf32>
    %c127_i32_370 = arith.constant 127 : i32
    %805 = tpu.dynamic_rotate %803 by %c127_i32_370 dim 1 : vector<4x128xf32>, i32 -> vector<4x128xf32>
    %c52_371 = arith.constant 52 : index
    %806 = memref.load %arg3[%c52_371] : memref<72xf32, #tpu.memory_space<smem>>
    %807 = vector.broadcast %806 : f32 to vector<4x128xf32>
    %808 = arith.mulf %804, %807 : vector<4x128xf32>
    %809 = arith.addf %801, %808 : vector<4x128xf32>
    %c60_372 = arith.constant 60 : index
    %810 = memref.load %arg3[%c60_372] : memref<72xf32, #tpu.memory_space<smem>>
    %811 = vector.broadcast %810 : f32 to vector<4x128xf32>
    %812 = arith.mulf %803, %811 : vector<4x128xf32>
    %813 = arith.addf %809, %812 : vector<4x128xf32>
    %c68_373 = arith.constant 68 : index
    %814 = memref.load %arg3[%c68_373] : memref<72xf32, #tpu.memory_space<smem>>
    %815 = vector.broadcast %814 : f32 to vector<4x128xf32>
    %816 = arith.mulf %805, %815 : vector<4x128xf32>
    %817 = arith.addf %813, %816 : vector<4x128xf32>
    %c5_374 = arith.constant 5 : index
    %c0_375 = arith.constant 0 : index
    %c0_376 = arith.constant 0 : index
    %818 = vector.load %arg23[%c5_374, %c0_375, %c0_376] : memref<8x8x128xf32, #tpu.memory_space<vmem>>, vector<1x4x128xf32>
    %819 = vector.shape_cast %818 : vector<1x4x128xf32> to vector<4x128xf32>
    %c1_i32_377 = arith.constant 1 : i32
    %820 = tpu.dynamic_rotate %819 by %c1_i32_377 dim 1 : vector<4x128xf32>, i32 -> vector<4x128xf32>
    %c127_i32_378 = arith.constant 127 : i32
    %821 = tpu.dynamic_rotate %819 by %c127_i32_378 dim 1 : vector<4x128xf32>, i32 -> vector<4x128xf32>
    %c5_379 = arith.constant 5 : index
    %822 = memref.load %arg3[%c5_379] : memref<72xf32, #tpu.memory_space<smem>>
    %823 = vector.broadcast %822 : f32 to vector<4x128xf32>
    %824 = arith.mulf %820, %823 : vector<4x128xf32>
    %825 = arith.addf %817, %824 : vector<4x128xf32>
    %c13_380 = arith.constant 13 : index
    %826 = memref.load %arg3[%c13_380] : memref<72xf32, #tpu.memory_space<smem>>
    %827 = vector.broadcast %826 : f32 to vector<4x128xf32>
    %828 = arith.mulf %819, %827 : vector<4x128xf32>
    %829 = arith.addf %825, %828 : vector<4x128xf32>
    %c21_381 = arith.constant 21 : index
    %830 = memref.load %arg3[%c21_381] : memref<72xf32, #tpu.memory_space<smem>>
    %831 = vector.broadcast %830 : f32 to vector<4x128xf32>
    %832 = arith.mulf %821, %831 : vector<4x128xf32>
    %833 = arith.addf %829, %832 : vector<4x128xf32>
    %c5_382 = arith.constant 5 : index
    %c1_383 = arith.constant 1 : index
    %c0_384 = arith.constant 0 : index
    %834 = vector.load %arg23[%c5_382, %c1_383, %c0_384] : memref<8x8x128xf32, #tpu.memory_space<vmem>>, vector<1x4x128xf32>
    %835 = vector.shape_cast %834 : vector<1x4x128xf32> to vector<4x128xf32>
    %c1_i32_385 = arith.constant 1 : i32
    %836 = tpu.dynamic_rotate %835 by %c1_i32_385 dim 1 : vector<4x128xf32>, i32 -> vector<4x128xf32>
    %c127_i32_386 = arith.constant 127 : i32
    %837 = tpu.dynamic_rotate %835 by %c127_i32_386 dim 1 : vector<4x128xf32>, i32 -> vector<4x128xf32>
    %c29_387 = arith.constant 29 : index
    %838 = memref.load %arg3[%c29_387] : memref<72xf32, #tpu.memory_space<smem>>
    %839 = vector.broadcast %838 : f32 to vector<4x128xf32>
    %840 = arith.mulf %836, %839 : vector<4x128xf32>
    %841 = arith.addf %833, %840 : vector<4x128xf32>
    %c37_388 = arith.constant 37 : index
    %842 = memref.load %arg3[%c37_388] : memref<72xf32, #tpu.memory_space<smem>>
    %843 = vector.broadcast %842 : f32 to vector<4x128xf32>
    %844 = arith.mulf %835, %843 : vector<4x128xf32>
    %845 = arith.addf %841, %844 : vector<4x128xf32>
    %c45_389 = arith.constant 45 : index
    %846 = memref.load %arg3[%c45_389] : memref<72xf32, #tpu.memory_space<smem>>
    %847 = vector.broadcast %846 : f32 to vector<4x128xf32>
    %848 = arith.mulf %837, %847 : vector<4x128xf32>
    %849 = arith.addf %845, %848 : vector<4x128xf32>
    %c5_390 = arith.constant 5 : index
    %c2_391 = arith.constant 2 : index
    %c0_392 = arith.constant 0 : index
    %850 = vector.load %arg23[%c5_390, %c2_391, %c0_392] : memref<8x8x128xf32, #tpu.memory_space<vmem>>, vector<1x4x128xf32>
    %851 = vector.shape_cast %850 : vector<1x4x128xf32> to vector<4x128xf32>
    %c1_i32_393 = arith.constant 1 : i32
    %852 = tpu.dynamic_rotate %851 by %c1_i32_393 dim 1 : vector<4x128xf32>, i32 -> vector<4x128xf32>
    %c127_i32_394 = arith.constant 127 : i32
    %853 = tpu.dynamic_rotate %851 by %c127_i32_394 dim 1 : vector<4x128xf32>, i32 -> vector<4x128xf32>
    %c53_395 = arith.constant 53 : index
    %854 = memref.load %arg3[%c53_395] : memref<72xf32, #tpu.memory_space<smem>>
    %855 = vector.broadcast %854 : f32 to vector<4x128xf32>
    %856 = arith.mulf %852, %855 : vector<4x128xf32>
    %857 = arith.addf %849, %856 : vector<4x128xf32>
    %c61_396 = arith.constant 61 : index
    %858 = memref.load %arg3[%c61_396] : memref<72xf32, #tpu.memory_space<smem>>
    %859 = vector.broadcast %858 : f32 to vector<4x128xf32>
    %860 = arith.mulf %851, %859 : vector<4x128xf32>
    %861 = arith.addf %857, %860 : vector<4x128xf32>
    %c69_397 = arith.constant 69 : index
    %862 = memref.load %arg3[%c69_397] : memref<72xf32, #tpu.memory_space<smem>>
    %863 = vector.broadcast %862 : f32 to vector<4x128xf32>
    %864 = arith.mulf %853, %863 : vector<4x128xf32>
    %865 = arith.addf %861, %864 : vector<4x128xf32>
    %c6_398 = arith.constant 6 : index
    %c0_399 = arith.constant 0 : index
    %c0_400 = arith.constant 0 : index
    %866 = vector.load %arg23[%c6_398, %c0_399, %c0_400] : memref<8x8x128xf32, #tpu.memory_space<vmem>>, vector<1x4x128xf32>
    %867 = vector.shape_cast %866 : vector<1x4x128xf32> to vector<4x128xf32>
    %c1_i32_401 = arith.constant 1 : i32
    %868 = tpu.dynamic_rotate %867 by %c1_i32_401 dim 1 : vector<4x128xf32>, i32 -> vector<4x128xf32>
    %c127_i32_402 = arith.constant 127 : i32
    %869 = tpu.dynamic_rotate %867 by %c127_i32_402 dim 1 : vector<4x128xf32>, i32 -> vector<4x128xf32>
    %c6_403 = arith.constant 6 : index
    %870 = memref.load %arg3[%c6_403] : memref<72xf32, #tpu.memory_space<smem>>
    %871 = vector.broadcast %870 : f32 to vector<4x128xf32>
    %872 = arith.mulf %868, %871 : vector<4x128xf32>
    %873 = arith.addf %865, %872 : vector<4x128xf32>
    %c14_404 = arith.constant 14 : index
    %874 = memref.load %arg3[%c14_404] : memref<72xf32, #tpu.memory_space<smem>>
    %875 = vector.broadcast %874 : f32 to vector<4x128xf32>
    %876 = arith.mulf %867, %875 : vector<4x128xf32>
    %877 = arith.addf %873, %876 : vector<4x128xf32>
    %c22_405 = arith.constant 22 : index
    %878 = memref.load %arg3[%c22_405] : memref<72xf32, #tpu.memory_space<smem>>
    %879 = vector.broadcast %878 : f32 to vector<4x128xf32>
    %880 = arith.mulf %869, %879 : vector<4x128xf32>
    %881 = arith.addf %877, %880 : vector<4x128xf32>
    %c6_406 = arith.constant 6 : index
    %c1_407 = arith.constant 1 : index
    %c0_408 = arith.constant 0 : index
    %882 = vector.load %arg23[%c6_406, %c1_407, %c0_408] : memref<8x8x128xf32, #tpu.memory_space<vmem>>, vector<1x4x128xf32>
    %883 = vector.shape_cast %882 : vector<1x4x128xf32> to vector<4x128xf32>
    %c1_i32_409 = arith.constant 1 : i32
    %884 = tpu.dynamic_rotate %883 by %c1_i32_409 dim 1 : vector<4x128xf32>, i32 -> vector<4x128xf32>
    %c127_i32_410 = arith.constant 127 : i32
    %885 = tpu.dynamic_rotate %883 by %c127_i32_410 dim 1 : vector<4x128xf32>, i32 -> vector<4x128xf32>
    %c30_411 = arith.constant 30 : index
    %886 = memref.load %arg3[%c30_411] : memref<72xf32, #tpu.memory_space<smem>>
    %887 = vector.broadcast %886 : f32 to vector<4x128xf32>
    %888 = arith.mulf %884, %887 : vector<4x128xf32>
    %889 = arith.addf %881, %888 : vector<4x128xf32>
    %c38_412 = arith.constant 38 : index
    %890 = memref.load %arg3[%c38_412] : memref<72xf32, #tpu.memory_space<smem>>
    %891 = vector.broadcast %890 : f32 to vector<4x128xf32>
    %892 = arith.mulf %883, %891 : vector<4x128xf32>
    %893 = arith.addf %889, %892 : vector<4x128xf32>
    %c46_413 = arith.constant 46 : index
    %894 = memref.load %arg3[%c46_413] : memref<72xf32, #tpu.memory_space<smem>>
    %895 = vector.broadcast %894 : f32 to vector<4x128xf32>
    %896 = arith.mulf %885, %895 : vector<4x128xf32>
    %897 = arith.addf %893, %896 : vector<4x128xf32>
    %c6_414 = arith.constant 6 : index
    %c2_415 = arith.constant 2 : index
    %c0_416 = arith.constant 0 : index
    %898 = vector.load %arg23[%c6_414, %c2_415, %c0_416] : memref<8x8x128xf32, #tpu.memory_space<vmem>>, vector<1x4x128xf32>
    %899 = vector.shape_cast %898 : vector<1x4x128xf32> to vector<4x128xf32>
    %c1_i32_417 = arith.constant 1 : i32
    %900 = tpu.dynamic_rotate %899 by %c1_i32_417 dim 1 : vector<4x128xf32>, i32 -> vector<4x128xf32>
    %c127_i32_418 = arith.constant 127 : i32
    %901 = tpu.dynamic_rotate %899 by %c127_i32_418 dim 1 : vector<4x128xf32>, i32 -> vector<4x128xf32>
    %c54_419 = arith.constant 54 : index
    %902 = memref.load %arg3[%c54_419] : memref<72xf32, #tpu.memory_space<smem>>
    %903 = vector.broadcast %902 : f32 to vector<4x128xf32>
    %904 = arith.mulf %900, %903 : vector<4x128xf32>
    %905 = arith.addf %897, %904 : vector<4x128xf32>
    %c62_420 = arith.constant 62 : index
    %906 = memref.load %arg3[%c62_420] : memref<72xf32, #tpu.memory_space<smem>>
    %907 = vector.broadcast %906 : f32 to vector<4x128xf32>
    %908 = arith.mulf %899, %907 : vector<4x128xf32>
    %909 = arith.addf %905, %908 : vector<4x128xf32>
    %c70_421 = arith.constant 70 : index
    %910 = memref.load %arg3[%c70_421] : memref<72xf32, #tpu.memory_space<smem>>
    %911 = vector.broadcast %910 : f32 to vector<4x128xf32>
    %912 = arith.mulf %901, %911 : vector<4x128xf32>
    %913 = arith.addf %909, %912 : vector<4x128xf32>
    %c7_422 = arith.constant 7 : index
    %c0_423 = arith.constant 0 : index
    %c0_424 = arith.constant 0 : index
    %914 = vector.load %arg23[%c7_422, %c0_423, %c0_424] : memref<8x8x128xf32, #tpu.memory_space<vmem>>, vector<1x4x128xf32>
    %915 = vector.shape_cast %914 : vector<1x4x128xf32> to vector<4x128xf32>
    %c1_i32_425 = arith.constant 1 : i32
    %916 = tpu.dynamic_rotate %915 by %c1_i32_425 dim 1 : vector<4x128xf32>, i32 -> vector<4x128xf32>
    %c127_i32_426 = arith.constant 127 : i32
    %917 = tpu.dynamic_rotate %915 by %c127_i32_426 dim 1 : vector<4x128xf32>, i32 -> vector<4x128xf32>
    %c7_427 = arith.constant 7 : index
    %918 = memref.load %arg3[%c7_427] : memref<72xf32, #tpu.memory_space<smem>>
    %919 = vector.broadcast %918 : f32 to vector<4x128xf32>
    %920 = arith.mulf %916, %919 : vector<4x128xf32>
    %921 = arith.addf %913, %920 : vector<4x128xf32>
    %c15_428 = arith.constant 15 : index
    %922 = memref.load %arg3[%c15_428] : memref<72xf32, #tpu.memory_space<smem>>
    %923 = vector.broadcast %922 : f32 to vector<4x128xf32>
    %924 = arith.mulf %915, %923 : vector<4x128xf32>
    %925 = arith.addf %921, %924 : vector<4x128xf32>
    %c23_429 = arith.constant 23 : index
    %926 = memref.load %arg3[%c23_429] : memref<72xf32, #tpu.memory_space<smem>>
    %927 = vector.broadcast %926 : f32 to vector<4x128xf32>
    %928 = arith.mulf %917, %927 : vector<4x128xf32>
    %929 = arith.addf %925, %928 : vector<4x128xf32>
    %c7_430 = arith.constant 7 : index
    %c1_431 = arith.constant 1 : index
    %c0_432 = arith.constant 0 : index
    %930 = vector.load %arg23[%c7_430, %c1_431, %c0_432] : memref<8x8x128xf32, #tpu.memory_space<vmem>>, vector<1x4x128xf32>
    %931 = vector.shape_cast %930 : vector<1x4x128xf32> to vector<4x128xf32>
    %c1_i32_433 = arith.constant 1 : i32
    %932 = tpu.dynamic_rotate %931 by %c1_i32_433 dim 1 : vector<4x128xf32>, i32 -> vector<4x128xf32>
    %c127_i32_434 = arith.constant 127 : i32
    %933 = tpu.dynamic_rotate %931 by %c127_i32_434 dim 1 : vector<4x128xf32>, i32 -> vector<4x128xf32>
    %c31_435 = arith.constant 31 : index
    %934 = memref.load %arg3[%c31_435] : memref<72xf32, #tpu.memory_space<smem>>
    %935 = vector.broadcast %934 : f32 to vector<4x128xf32>
    %936 = arith.mulf %932, %935 : vector<4x128xf32>
    %937 = arith.addf %929, %936 : vector<4x128xf32>
    %c39_436 = arith.constant 39 : index
    %938 = memref.load %arg3[%c39_436] : memref<72xf32, #tpu.memory_space<smem>>
    %939 = vector.broadcast %938 : f32 to vector<4x128xf32>
    %940 = arith.mulf %931, %939 : vector<4x128xf32>
    %941 = arith.addf %937, %940 : vector<4x128xf32>
    %c47_437 = arith.constant 47 : index
    %942 = memref.load %arg3[%c47_437] : memref<72xf32, #tpu.memory_space<smem>>
    %943 = vector.broadcast %942 : f32 to vector<4x128xf32>
    %944 = arith.mulf %933, %943 : vector<4x128xf32>
    %945 = arith.addf %941, %944 : vector<4x128xf32>
    %c7_438 = arith.constant 7 : index
    %c2_439 = arith.constant 2 : index
    %c0_440 = arith.constant 0 : index
    %946 = vector.load %arg23[%c7_438, %c2_439, %c0_440] : memref<8x8x128xf32, #tpu.memory_space<vmem>>, vector<1x4x128xf32>
    %947 = vector.shape_cast %946 : vector<1x4x128xf32> to vector<4x128xf32>
    %c1_i32_441 = arith.constant 1 : i32
    %948 = tpu.dynamic_rotate %947 by %c1_i32_441 dim 1 : vector<4x128xf32>, i32 -> vector<4x128xf32>
    %c127_i32_442 = arith.constant 127 : i32
    %949 = tpu.dynamic_rotate %947 by %c127_i32_442 dim 1 : vector<4x128xf32>, i32 -> vector<4x128xf32>
    %c55_443 = arith.constant 55 : index
    %950 = memref.load %arg3[%c55_443] : memref<72xf32, #tpu.memory_space<smem>>
    %951 = vector.broadcast %950 : f32 to vector<4x128xf32>
    %952 = arith.mulf %948, %951 : vector<4x128xf32>
    %953 = arith.addf %945, %952 : vector<4x128xf32>
    %c63_444 = arith.constant 63 : index
    %954 = memref.load %arg3[%c63_444] : memref<72xf32, #tpu.memory_space<smem>>
    %955 = vector.broadcast %954 : f32 to vector<4x128xf32>
    %956 = arith.mulf %947, %955 : vector<4x128xf32>
    %957 = arith.addf %953, %956 : vector<4x128xf32>
    %c71_445 = arith.constant 71 : index
    %958 = memref.load %arg3[%c71_445] : memref<72xf32, #tpu.memory_space<smem>>
    %959 = vector.broadcast %958 : f32 to vector<4x128xf32>
    %960 = arith.mulf %949, %959 : vector<4x128xf32>
    %961 = arith.addf %957, %960 : vector<4x128xf32>
    %cst_446 = arith.constant 0.000000e+00 : f32
    %962 = vector.broadcast %cst_446 : f32 to vector<4x128xf32>
    %963 = arith.select %185, %961, %962 : vector<4x128xi1>, vector<4x128xf32>
    %c0_447 = arith.constant 0 : index
    %c1_448 = arith.constant 1 : index
    %c0_449 = arith.constant 0 : index
    %964 = vector.load %arg22[%c0_447, %c1_448, %c0_449] : memref<1x8x128xf32, #tpu.memory_space<vmem>>, vector<1x4x128xf32>
    %965 = vector.shape_cast %964 : vector<1x4x128xf32> to vector<4x128xf32>
    %966 = arith.addf %965, %963 : vector<4x128xf32>
    %967 = vector.extract_strided_slice %966 {offsets = [0, 0], sizes = [4, 4], strides = [1, 1]} : vector<4x128xf32> to vector<4x4xf32>
    %c0_450 = arith.constant 0 : index
    %c0_451 = arith.constant 0 : index
    %c0_452 = arith.constant 0 : index
    %968 = vector.load %arg21[%c0_450, %c0_451, %c0_452] : memref<1x4x4xf32, #tpu.memory_space<vmem>>, vector<1x4x4xf32>
    %969 = vector.shape_cast %968 : vector<1x4x4xf32> to vector<4x4xf32>
    %970 = vector.shape_cast %967 : vector<4x4xf32> to vector<1x4x4xf32>
    tpu.vector_store %arg21[%c0_450, %c0_451, %c0_452], %970 {strides = array<i32>} : memref<1x4x4xf32, #tpu.memory_space<vmem>>, vector<1x4x4xf32>,
    %c0_453 = arith.constant 0 : index
    %c0_454 = arith.constant 0 : index
    %971 = vector.load %arg15[%c0_453, %c0_454] : memref<8x4xf32, #tpu.memory_space<vmem>>, vector<8x4xf32>
    %c0_455 = arith.constant 0 : index
    %c0_456 = arith.constant 0 : index
    %972 = vector.load %arg16[%c0_455, %c0_456] : memref<128x128xf32, #tpu.memory_space<vmem>>, vector<128x128xf32>
    %cst_457 = arith.constant dense<0.000000e+00> : vector<4x128xf32>
    %973 = tpu.matmul %966, %972, %cst_457 {dimension_numbers = #tpu.dot_dimension_numbers<[1], [0], [0], [1], [0, 0, 1, 1], [], []>} : vector<4x128xf32>, vector<128x128xf32>, vector<4x128xf32> -> vector<4x128xf32>
    %cst_458 = arith.constant dense<0.000000e+00> : vector<8x128xf32>
    %974 = tpu.matmul %971, %973, %cst_458 {dimension_numbers = #tpu.dot_dimension_numbers<[1], [0], [0], [1], [0, 0, 1, 1], [], []>} : vector<8x4xf32>, vector<4x128xf32>, vector<8x128xf32> -> vector<8x128xf32>
    %c0_459 = arith.constant 0 : index
    %c1_460 = arith.constant 1 : index
    %c0_461 = arith.constant 0 : index
    %975 = vector.load %arg24[%c0_459, %c1_460, %c0_461] : memref<1x16x128xf32, #tpu.memory_space<vmem>>, vector<1x8x128xf32>
    %976 = vector.shape_cast %975 : vector<1x8x128xf32> to vector<8x128xf32>
    %977 = vector.shape_cast %974 : vector<8x128xf32> to vector<1x8x128xf32>
    tpu.vector_store %arg24[%c0_459, %c1_460, %c0_461], %977 {strides = array<i32>} : memref<1x16x128xf32, #tpu.memory_space<vmem>>, vector<1x8x128xf32>,
    %978 = tpu.iota {dimensions = array<i32: 1>} : vector<8x128xi32>
    %c8_i32 = arith.constant 8 : i32
    %979 = vector.broadcast %c8_i32 : i32 to vector<8x128xi32>
    %980 = arith.cmpi slt, %978, %979 : vector<8x128xi32>
    %cst_462 = arith.constant 0.000000e+00 : f32
    %981 = vector.broadcast %cst_462 : f32 to vector<8x128xf32>
    %c0_463 = arith.constant 0 : index
    %982 = memref.load %arg6[%c0_463] : memref<8xf32, #tpu.memory_space<smem>>
    %983 = vector.broadcast %982 : f32 to vector<8x128xf32>
    %984 = arith.addf %981, %983 : vector<8x128xf32>
    %cst_464 = arith.constant 0.000000e+00 : f32
    %985 = vector.broadcast %cst_464 : f32 to vector<8x128xf32>
    %c1_465 = arith.constant 1 : index
    %986 = memref.load %arg6[%c1_465] : memref<8xf32, #tpu.memory_space<smem>>
    %987 = vector.broadcast %986 : f32 to vector<8x128xf32>
    %988 = arith.addf %985, %987 : vector<8x128xf32>
    %cst_466 = arith.constant 0.000000e+00 : f32
    %989 = vector.broadcast %cst_466 : f32 to vector<8x128xf32>
    %c2_467 = arith.constant 2 : index
    %990 = memref.load %arg6[%c2_467] : memref<8xf32, #tpu.memory_space<smem>>
    %991 = vector.broadcast %990 : f32 to vector<8x128xf32>
    %992 = arith.addf %989, %991 : vector<8x128xf32>
    %cst_468 = arith.constant 0.000000e+00 : f32
    %993 = vector.broadcast %cst_468 : f32 to vector<8x128xf32>
    %c3_469 = arith.constant 3 : index
    %994 = memref.load %arg6[%c3_469] : memref<8xf32, #tpu.memory_space<smem>>
    %995 = vector.broadcast %994 : f32 to vector<8x128xf32>
    %996 = arith.addf %993, %995 : vector<8x128xf32>
    %cst_470 = arith.constant 0.000000e+00 : f32
    %997 = vector.broadcast %cst_470 : f32 to vector<8x128xf32>
    %c4_471 = arith.constant 4 : index
    %998 = memref.load %arg6[%c4_471] : memref<8xf32, #tpu.memory_space<smem>>
    %999 = vector.broadcast %998 : f32 to vector<8x128xf32>
    %1000 = arith.addf %997, %999 : vector<8x128xf32>
    %cst_472 = arith.constant 0.000000e+00 : f32
    %1001 = vector.broadcast %cst_472 : f32 to vector<8x128xf32>
    %c5_473 = arith.constant 5 : index
    %1002 = memref.load %arg6[%c5_473] : memref<8xf32, #tpu.memory_space<smem>>
    %1003 = vector.broadcast %1002 : f32 to vector<8x128xf32>
    %1004 = arith.addf %1001, %1003 : vector<8x128xf32>
    %cst_474 = arith.constant 0.000000e+00 : f32
    %1005 = vector.broadcast %cst_474 : f32 to vector<8x128xf32>
    %c6_475 = arith.constant 6 : index
    %1006 = memref.load %arg6[%c6_475] : memref<8xf32, #tpu.memory_space<smem>>
    %1007 = vector.broadcast %1006 : f32 to vector<8x128xf32>
    %1008 = arith.addf %1005, %1007 : vector<8x128xf32>
    %cst_476 = arith.constant 0.000000e+00 : f32
    %1009 = vector.broadcast %cst_476 : f32 to vector<8x128xf32>
    %c7_477 = arith.constant 7 : index
    %1010 = memref.load %arg6[%c7_477] : memref<8xf32, #tpu.memory_space<smem>>
    %1011 = vector.broadcast %1010 : f32 to vector<8x128xf32>
    %1012 = arith.addf %1009, %1011 : vector<8x128xf32>
    %c0_478 = arith.constant 0 : index
    %c0_479 = arith.constant 0 : index
    %c0_480 = arith.constant 0 : index
    %1013 = vector.load %arg24[%c0_478, %c0_479, %c0_480] : memref<1x16x128xf32, #tpu.memory_space<vmem>>, vector<1x8x128xf32>
    %1014 = vector.shape_cast %1013 : vector<1x8x128xf32> to vector<8x128xf32>
    %c1_i32_481 = arith.constant 1 : i32
    %1015 = tpu.dynamic_rotate %1014 by %c1_i32_481 dim 1 : vector<8x128xf32>, i32 -> vector<8x128xf32>
    %c127_i32_482 = arith.constant 127 : i32
    %1016 = tpu.dynamic_rotate %1014 by %c127_i32_482 dim 1 : vector<8x128xf32>, i32 -> vector<8x128xf32>
    %c0_483 = arith.constant 0 : index
    %1017 = memref.load %arg5[%c0_483] : memref<72xf32, #tpu.memory_space<smem>>
    %1018 = vector.broadcast %1017 : f32 to vector<8x128xf32>
    %1019 = arith.mulf %1015, %1018 : vector<8x128xf32>
    %1020 = arith.addf %984, %1019 : vector<8x128xf32>
    %c1_484 = arith.constant 1 : index
    %1021 = memref.load %arg5[%c1_484] : memref<72xf32, #tpu.memory_space<smem>>
    %1022 = vector.broadcast %1021 : f32 to vector<8x128xf32>
    %1023 = arith.mulf %1015, %1022 : vector<8x128xf32>
    %1024 = arith.addf %988, %1023 : vector<8x128xf32>
    %c2_485 = arith.constant 2 : index
    %1025 = memref.load %arg5[%c2_485] : memref<72xf32, #tpu.memory_space<smem>>
    %1026 = vector.broadcast %1025 : f32 to vector<8x128xf32>
    %1027 = arith.mulf %1015, %1026 : vector<8x128xf32>
    %1028 = arith.addf %992, %1027 : vector<8x128xf32>
    %c3_486 = arith.constant 3 : index
    %1029 = memref.load %arg5[%c3_486] : memref<72xf32, #tpu.memory_space<smem>>
    %1030 = vector.broadcast %1029 : f32 to vector<8x128xf32>
    %1031 = arith.mulf %1015, %1030 : vector<8x128xf32>
    %1032 = arith.addf %996, %1031 : vector<8x128xf32>
    %c4_487 = arith.constant 4 : index
    %1033 = memref.load %arg5[%c4_487] : memref<72xf32, #tpu.memory_space<smem>>
    %1034 = vector.broadcast %1033 : f32 to vector<8x128xf32>
    %1035 = arith.mulf %1015, %1034 : vector<8x128xf32>
    %1036 = arith.addf %1000, %1035 : vector<8x128xf32>
    %c5_488 = arith.constant 5 : index
    %1037 = memref.load %arg5[%c5_488] : memref<72xf32, #tpu.memory_space<smem>>
    %1038 = vector.broadcast %1037 : f32 to vector<8x128xf32>
    %1039 = arith.mulf %1015, %1038 : vector<8x128xf32>
    %1040 = arith.addf %1004, %1039 : vector<8x128xf32>
    %c6_489 = arith.constant 6 : index
    %1041 = memref.load %arg5[%c6_489] : memref<72xf32, #tpu.memory_space<smem>>
    %1042 = vector.broadcast %1041 : f32 to vector<8x128xf32>
    %1043 = arith.mulf %1015, %1042 : vector<8x128xf32>
    %1044 = arith.addf %1008, %1043 : vector<8x128xf32>
    %c7_490 = arith.constant 7 : index
    %1045 = memref.load %arg5[%c7_490] : memref<72xf32, #tpu.memory_space<smem>>
    %1046 = vector.broadcast %1045 : f32 to vector<8x128xf32>
    %1047 = arith.mulf %1015, %1046 : vector<8x128xf32>
    %1048 = arith.addf %1012, %1047 : vector<8x128xf32>
    %c8_491 = arith.constant 8 : index
    %1049 = memref.load %arg5[%c8_491] : memref<72xf32, #tpu.memory_space<smem>>
    %1050 = vector.broadcast %1049 : f32 to vector<8x128xf32>
    %1051 = arith.mulf %1014, %1050 : vector<8x128xf32>
    %1052 = arith.addf %1020, %1051 : vector<8x128xf32>
    %c9_492 = arith.constant 9 : index
    %1053 = memref.load %arg5[%c9_492] : memref<72xf32, #tpu.memory_space<smem>>
    %1054 = vector.broadcast %1053 : f32 to vector<8x128xf32>
    %1055 = arith.mulf %1014, %1054 : vector<8x128xf32>
    %1056 = arith.addf %1024, %1055 : vector<8x128xf32>
    %c10_493 = arith.constant 10 : index
    %1057 = memref.load %arg5[%c10_493] : memref<72xf32, #tpu.memory_space<smem>>
    %1058 = vector.broadcast %1057 : f32 to vector<8x128xf32>
    %1059 = arith.mulf %1014, %1058 : vector<8x128xf32>
    %1060 = arith.addf %1028, %1059 : vector<8x128xf32>
    %c11_494 = arith.constant 11 : index
    %1061 = memref.load %arg5[%c11_494] : memref<72xf32, #tpu.memory_space<smem>>
    %1062 = vector.broadcast %1061 : f32 to vector<8x128xf32>
    %1063 = arith.mulf %1014, %1062 : vector<8x128xf32>
    %1064 = arith.addf %1032, %1063 : vector<8x128xf32>
    %c12_495 = arith.constant 12 : index
    %1065 = memref.load %arg5[%c12_495] : memref<72xf32, #tpu.memory_space<smem>>
    %1066 = vector.broadcast %1065 : f32 to vector<8x128xf32>
    %1067 = arith.mulf %1014, %1066 : vector<8x128xf32>
    %1068 = arith.addf %1036, %1067 : vector<8x128xf32>
    %c13_496 = arith.constant 13 : index
    %1069 = memref.load %arg5[%c13_496] : memref<72xf32, #tpu.memory_space<smem>>
    %1070 = vector.broadcast %1069 : f32 to vector<8x128xf32>
    %1071 = arith.mulf %1014, %1070 : vector<8x128xf32>
    %1072 = arith.addf %1040, %1071 : vector<8x128xf32>
    %c14_497 = arith.constant 14 : index
    %1073 = memref.load %arg5[%c14_497] : memref<72xf32, #tpu.memory_space<smem>>
    %1074 = vector.broadcast %1073 : f32 to vector<8x128xf32>
    %1075 = arith.mulf %1014, %1074 : vector<8x128xf32>
    %1076 = arith.addf %1044, %1075 : vector<8x128xf32>
    %c15_498 = arith.constant 15 : index
    %1077 = memref.load %arg5[%c15_498] : memref<72xf32, #tpu.memory_space<smem>>
    %1078 = vector.broadcast %1077 : f32 to vector<8x128xf32>
    %1079 = arith.mulf %1014, %1078 : vector<8x128xf32>
    %1080 = arith.addf %1048, %1079 : vector<8x128xf32>
    %c16_499 = arith.constant 16 : index
    %1081 = memref.load %arg5[%c16_499] : memref<72xf32, #tpu.memory_space<smem>>
    %1082 = vector.broadcast %1081 : f32 to vector<8x128xf32>
    %1083 = arith.mulf %1016, %1082 : vector<8x128xf32>
    %1084 = arith.addf %1052, %1083 : vector<8x128xf32>
    %c17_500 = arith.constant 17 : index
    %1085 = memref.load %arg5[%c17_500] : memref<72xf32, #tpu.memory_space<smem>>
    %1086 = vector.broadcast %1085 : f32 to vector<8x128xf32>
    %1087 = arith.mulf %1016, %1086 : vector<8x128xf32>
    %1088 = arith.addf %1056, %1087 : vector<8x128xf32>
    %c18_501 = arith.constant 18 : index
    %1089 = memref.load %arg5[%c18_501] : memref<72xf32, #tpu.memory_space<smem>>
    %1090 = vector.broadcast %1089 : f32 to vector<8x128xf32>
    %1091 = arith.mulf %1016, %1090 : vector<8x128xf32>
    %1092 = arith.addf %1060, %1091 : vector<8x128xf32>
    %c19_502 = arith.constant 19 : index
    %1093 = memref.load %arg5[%c19_502] : memref<72xf32, #tpu.memory_space<smem>>
    %1094 = vector.broadcast %1093 : f32 to vector<8x128xf32>
    %1095 = arith.mulf %1016, %1094 : vector<8x128xf32>
    %1096 = arith.addf %1064, %1095 : vector<8x128xf32>
    %c20_503 = arith.constant 20 : index
    %1097 = memref.load %arg5[%c20_503] : memref<72xf32, #tpu.memory_space<smem>>
    %1098 = vector.broadcast %1097 : f32 to vector<8x128xf32>
    %1099 = arith.mulf %1016, %1098 : vector<8x128xf32>
    %1100 = arith.addf %1068, %1099 : vector<8x128xf32>
    %c21_504 = arith.constant 21 : index
    %1101 = memref.load %arg5[%c21_504] : memref<72xf32, #tpu.memory_space<smem>>
    %1102 = vector.broadcast %1101 : f32 to vector<8x128xf32>
    %1103 = arith.mulf %1016, %1102 : vector<8x128xf32>
    %1104 = arith.addf %1072, %1103 : vector<8x128xf32>
    %c22_505 = arith.constant 22 : index
    %1105 = memref.load %arg5[%c22_505] : memref<72xf32, #tpu.memory_space<smem>>
    %1106 = vector.broadcast %1105 : f32 to vector<8x128xf32>
    %1107 = arith.mulf %1016, %1106 : vector<8x128xf32>
    %1108 = arith.addf %1076, %1107 : vector<8x128xf32>
    %c23_506 = arith.constant 23 : index
    %1109 = memref.load %arg5[%c23_506] : memref<72xf32, #tpu.memory_space<smem>>
    %1110 = vector.broadcast %1109 : f32 to vector<8x128xf32>
    %1111 = arith.mulf %1016, %1110 : vector<8x128xf32>
    %1112 = arith.addf %1080, %1111 : vector<8x128xf32>
    %c0_507 = arith.constant 0 : index
    %c1_508 = arith.constant 1 : index
    %c0_509 = arith.constant 0 : index
    %1113 = vector.load %arg24[%c0_507, %c1_508, %c0_509] : memref<1x16x128xf32, #tpu.memory_space<vmem>>, vector<1x8x128xf32>
    %1114 = vector.shape_cast %1113 : vector<1x8x128xf32> to vector<8x128xf32>
    %c1_i32_510 = arith.constant 1 : i32
    %1115 = tpu.dynamic_rotate %1114 by %c1_i32_510 dim 1 : vector<8x128xf32>, i32 -> vector<8x128xf32>
    %c127_i32_511 = arith.constant 127 : i32
    %1116 = tpu.dynamic_rotate %1114 by %c127_i32_511 dim 1 : vector<8x128xf32>, i32 -> vector<8x128xf32>
    %c24_512 = arith.constant 24 : index
    %1117 = memref.load %arg5[%c24_512] : memref<72xf32, #tpu.memory_space<smem>>
    %1118 = vector.broadcast %1117 : f32 to vector<8x128xf32>
    %1119 = arith.mulf %1115, %1118 : vector<8x128xf32>
    %1120 = arith.addf %1084, %1119 : vector<8x128xf32>
    %c25_513 = arith.constant 25 : index
    %1121 = memref.load %arg5[%c25_513] : memref<72xf32, #tpu.memory_space<smem>>
    %1122 = vector.broadcast %1121 : f32 to vector<8x128xf32>
    %1123 = arith.mulf %1115, %1122 : vector<8x128xf32>
    %1124 = arith.addf %1088, %1123 : vector<8x128xf32>
    %c26_514 = arith.constant 26 : index
    %1125 = memref.load %arg5[%c26_514] : memref<72xf32, #tpu.memory_space<smem>>
    %1126 = vector.broadcast %1125 : f32 to vector<8x128xf32>
    %1127 = arith.mulf %1115, %1126 : vector<8x128xf32>
    %1128 = arith.addf %1092, %1127 : vector<8x128xf32>
    %c27_515 = arith.constant 27 : index
    %1129 = memref.load %arg5[%c27_515] : memref<72xf32, #tpu.memory_space<smem>>
    %1130 = vector.broadcast %1129 : f32 to vector<8x128xf32>
    %1131 = arith.mulf %1115, %1130 : vector<8x128xf32>
    %1132 = arith.addf %1096, %1131 : vector<8x128xf32>
    %c28_516 = arith.constant 28 : index
    %1133 = memref.load %arg5[%c28_516] : memref<72xf32, #tpu.memory_space<smem>>
    %1134 = vector.broadcast %1133 : f32 to vector<8x128xf32>
    %1135 = arith.mulf %1115, %1134 : vector<8x128xf32>
    %1136 = arith.addf %1100, %1135 : vector<8x128xf32>
    %c29_517 = arith.constant 29 : index
    %1137 = memref.load %arg5[%c29_517] : memref<72xf32, #tpu.memory_space<smem>>
    %1138 = vector.broadcast %1137 : f32 to vector<8x128xf32>
    %1139 = arith.mulf %1115, %1138 : vector<8x128xf32>
    %1140 = arith.addf %1104, %1139 : vector<8x128xf32>
    %c30_518 = arith.constant 30 : index
    %1141 = memref.load %arg5[%c30_518] : memref<72xf32, #tpu.memory_space<smem>>
    %1142 = vector.broadcast %1141 : f32 to vector<8x128xf32>
    %1143 = arith.mulf %1115, %1142 : vector<8x128xf32>
    %1144 = arith.addf %1108, %1143 : vector<8x128xf32>
    %c31_519 = arith.constant 31 : index
    %1145 = memref.load %arg5[%c31_519] : memref<72xf32, #tpu.memory_space<smem>>
    %1146 = vector.broadcast %1145 : f32 to vector<8x128xf32>
    %1147 = arith.mulf %1115, %1146 : vector<8x128xf32>
    %1148 = arith.addf %1112, %1147 : vector<8x128xf32>
    %c32_520 = arith.constant 32 : index
    %1149 = memref.load %arg5[%c32_520] : memref<72xf32, #tpu.memory_space<smem>>
    %1150 = vector.broadcast %1149 : f32 to vector<8x128xf32>
    %1151 = arith.mulf %1114, %1150 : vector<8x128xf32>
    %1152 = arith.addf %1120, %1151 : vector<8x128xf32>
    %c33_521 = arith.constant 33 : index
    %1153 = memref.load %arg5[%c33_521] : memref<72xf32, #tpu.memory_space<smem>>
    %1154 = vector.broadcast %1153 : f32 to vector<8x128xf32>
    %1155 = arith.mulf %1114, %1154 : vector<8x128xf32>
    %1156 = arith.addf %1124, %1155 : vector<8x128xf32>
    %c34_522 = arith.constant 34 : index
    %1157 = memref.load %arg5[%c34_522] : memref<72xf32, #tpu.memory_space<smem>>
    %1158 = vector.broadcast %1157 : f32 to vector<8x128xf32>
    %1159 = arith.mulf %1114, %1158 : vector<8x128xf32>
    %1160 = arith.addf %1128, %1159 : vector<8x128xf32>
    %c35_523 = arith.constant 35 : index
    %1161 = memref.load %arg5[%c35_523] : memref<72xf32, #tpu.memory_space<smem>>
    %1162 = vector.broadcast %1161 : f32 to vector<8x128xf32>
    %1163 = arith.mulf %1114, %1162 : vector<8x128xf32>
    %1164 = arith.addf %1132, %1163 : vector<8x128xf32>
    %c36_524 = arith.constant 36 : index
    %1165 = memref.load %arg5[%c36_524] : memref<72xf32, #tpu.memory_space<smem>>
    %1166 = vector.broadcast %1165 : f32 to vector<8x128xf32>
    %1167 = arith.mulf %1114, %1166 : vector<8x128xf32>
    %1168 = arith.addf %1136, %1167 : vector<8x128xf32>
    %c37_525 = arith.constant 37 : index
    %1169 = memref.load %arg5[%c37_525] : memref<72xf32, #tpu.memory_space<smem>>
    %1170 = vector.broadcast %1169 : f32 to vector<8x128xf32>
    %1171 = arith.mulf %1114, %1170 : vector<8x128xf32>
    %1172 = arith.addf %1140, %1171 : vector<8x128xf32>
    %c38_526 = arith.constant 38 : index
    %1173 = memref.load %arg5[%c38_526] : memref<72xf32, #tpu.memory_space<smem>>
    %1174 = vector.broadcast %1173 : f32 to vector<8x128xf32>
    %1175 = arith.mulf %1114, %1174 : vector<8x128xf32>
    %1176 = arith.addf %1144, %1175 : vector<8x128xf32>
    %c39_527 = arith.constant 39 : index
    %1177 = memref.load %arg5[%c39_527] : memref<72xf32, #tpu.memory_space<smem>>
    %1178 = vector.broadcast %1177 : f32 to vector<8x128xf32>
    %1179 = arith.mulf %1114, %1178 : vector<8x128xf32>
    %1180 = arith.addf %1148, %1179 : vector<8x128xf32>
    %c40_528 = arith.constant 40 : index
    %1181 = memref.load %arg5[%c40_528] : memref<72xf32, #tpu.memory_space<smem>>
    %1182 = vector.broadcast %1181 : f32 to vector<8x128xf32>
    %1183 = arith.mulf %1116, %1182 : vector<8x128xf32>
    %1184 = arith.addf %1152, %1183 : vector<8x128xf32>
    %c41_529 = arith.constant 41 : index
    %1185 = memref.load %arg5[%c41_529] : memref<72xf32, #tpu.memory_space<smem>>
    %1186 = vector.broadcast %1185 : f32 to vector<8x128xf32>
    %1187 = arith.mulf %1116, %1186 : vector<8x128xf32>
    %1188 = arith.addf %1156, %1187 : vector<8x128xf32>
    %c42_530 = arith.constant 42 : index
    %1189 = memref.load %arg5[%c42_530] : memref<72xf32, #tpu.memory_space<smem>>
    %1190 = vector.broadcast %1189 : f32 to vector<8x128xf32>
    %1191 = arith.mulf %1116, %1190 : vector<8x128xf32>
    %1192 = arith.addf %1160, %1191 : vector<8x128xf32>
    %c43_531 = arith.constant 43 : index
    %1193 = memref.load %arg5[%c43_531] : memref<72xf32, #tpu.memory_space<smem>>
    %1194 = vector.broadcast %1193 : f32 to vector<8x128xf32>
    %1195 = arith.mulf %1116, %1194 : vector<8x128xf32>
    %1196 = arith.addf %1164, %1195 : vector<8x128xf32>
    %c44_532 = arith.constant 44 : index
    %1197 = memref.load %arg5[%c44_532] : memref<72xf32, #tpu.memory_space<smem>>
    %1198 = vector.broadcast %1197 : f32 to vector<8x128xf32>
    %1199 = arith.mulf %1116, %1198 : vector<8x128xf32>
    %1200 = arith.addf %1168, %1199 : vector<8x128xf32>
    %c45_533 = arith.constant 45 : index
    %1201 = memref.load %arg5[%c45_533] : memref<72xf32, #tpu.memory_space<smem>>
    %1202 = vector.broadcast %1201 : f32 to vector<8x128xf32>
    %1203 = arith.mulf %1116, %1202 : vector<8x128xf32>
    %1204 = arith.addf %1172, %1203 : vector<8x128xf32>
    %c46_534 = arith.constant 46 : index
    %1205 = memref.load %arg5[%c46_534] : memref<72xf32, #tpu.memory_space<smem>>
    %1206 = vector.broadcast %1205 : f32 to vector<8x128xf32>
    %1207 = arith.mulf %1116, %1206 : vector<8x128xf32>
    %1208 = arith.addf %1176, %1207 : vector<8x128xf32>
    %c47_535 = arith.constant 47 : index
    %1209 = memref.load %arg5[%c47_535] : memref<72xf32, #tpu.memory_space<smem>>
    %1210 = vector.broadcast %1209 : f32 to vector<8x128xf32>
    %1211 = arith.mulf %1116, %1210 : vector<8x128xf32>
    %1212 = arith.addf %1180, %1211 : vector<8x128xf32>
    %c0_536 = arith.constant 0 : index
    %c2_537 = arith.constant 2 : index
    %c0_538 = arith.constant 0 : index
    %1213 = vector.load %arg24[%c0_536, %c2_537, %c0_538] : memref<1x16x128xf32, #tpu.memory_space<vmem>>, vector<1x8x128xf32>
    %1214 = vector.shape_cast %1213 : vector<1x8x128xf32> to vector<8x128xf32>
    %c1_i32_539 = arith.constant 1 : i32
    %1215 = tpu.dynamic_rotate %1214 by %c1_i32_539 dim 1 : vector<8x128xf32>, i32 -> vector<8x128xf32>
    %c127_i32_540 = arith.constant 127 : i32
    %1216 = tpu.dynamic_rotate %1214 by %c127_i32_540 dim 1 : vector<8x128xf32>, i32 -> vector<8x128xf32>
    %c48_541 = arith.constant 48 : index
    %1217 = memref.load %arg5[%c48_541] : memref<72xf32, #tpu.memory_space<smem>>
    %1218 = vector.broadcast %1217 : f32 to vector<8x128xf32>
    %1219 = arith.mulf %1215, %1218 : vector<8x128xf32>
    %1220 = arith.addf %1184, %1219 : vector<8x128xf32>
    %c49_542 = arith.constant 49 : index
    %1221 = memref.load %arg5[%c49_542] : memref<72xf32, #tpu.memory_space<smem>>
    %1222 = vector.broadcast %1221 : f32 to vector<8x128xf32>
    %1223 = arith.mulf %1215, %1222 : vector<8x128xf32>
    %1224 = arith.addf %1188, %1223 : vector<8x128xf32>
    %c50_543 = arith.constant 50 : index
    %1225 = memref.load %arg5[%c50_543] : memref<72xf32, #tpu.memory_space<smem>>
    %1226 = vector.broadcast %1225 : f32 to vector<8x128xf32>
    %1227 = arith.mulf %1215, %1226 : vector<8x128xf32>
    %1228 = arith.addf %1192, %1227 : vector<8x128xf32>
    %c51_544 = arith.constant 51 : index
    %1229 = memref.load %arg5[%c51_544] : memref<72xf32, #tpu.memory_space<smem>>
    %1230 = vector.broadcast %1229 : f32 to vector<8x128xf32>
    %1231 = arith.mulf %1215, %1230 : vector<8x128xf32>
    %1232 = arith.addf %1196, %1231 : vector<8x128xf32>
    %c52_545 = arith.constant 52 : index
    %1233 = memref.load %arg5[%c52_545] : memref<72xf32, #tpu.memory_space<smem>>
    %1234 = vector.broadcast %1233 : f32 to vector<8x128xf32>
    %1235 = arith.mulf %1215, %1234 : vector<8x128xf32>
    %1236 = arith.addf %1200, %1235 : vector<8x128xf32>
    %c53_546 = arith.constant 53 : index
    %1237 = memref.load %arg5[%c53_546] : memref<72xf32, #tpu.memory_space<smem>>
    %1238 = vector.broadcast %1237 : f32 to vector<8x128xf32>
    %1239 = arith.mulf %1215, %1238 : vector<8x128xf32>
    %1240 = arith.addf %1204, %1239 : vector<8x128xf32>
    %c54_547 = arith.constant 54 : index
    %1241 = memref.load %arg5[%c54_547] : memref<72xf32, #tpu.memory_space<smem>>
    %1242 = vector.broadcast %1241 : f32 to vector<8x128xf32>
    %1243 = arith.mulf %1215, %1242 : vector<8x128xf32>
    %1244 = arith.addf %1208, %1243 : vector<8x128xf32>
    %c55_548 = arith.constant 55 : index
    %1245 = memref.load %arg5[%c55_548] : memref<72xf32, #tpu.memory_space<smem>>
    %1246 = vector.broadcast %1245 : f32 to vector<8x128xf32>
    %1247 = arith.mulf %1215, %1246 : vector<8x128xf32>
    %1248 = arith.addf %1212, %1247 : vector<8x128xf32>
    %c56_549 = arith.constant 56 : index
    %1249 = memref.load %arg5[%c56_549] : memref<72xf32, #tpu.memory_space<smem>>
    %1250 = vector.broadcast %1249 : f32 to vector<8x128xf32>
    %1251 = arith.mulf %1214, %1250 : vector<8x128xf32>
    %1252 = arith.addf %1220, %1251 : vector<8x128xf32>
    %c57_550 = arith.constant 57 : index
    %1253 = memref.load %arg5[%c57_550] : memref<72xf32, #tpu.memory_space<smem>>
    %1254 = vector.broadcast %1253 : f32 to vector<8x128xf32>
    %1255 = arith.mulf %1214, %1254 : vector<8x128xf32>
    %1256 = arith.addf %1224, %1255 : vector<8x128xf32>
    %c58_551 = arith.constant 58 : index
    %1257 = memref.load %arg5[%c58_551] : memref<72xf32, #tpu.memory_space<smem>>
    %1258 = vector.broadcast %1257 : f32 to vector<8x128xf32>
    %1259 = arith.mulf %1214, %1258 : vector<8x128xf32>
    %1260 = arith.addf %1228, %1259 : vector<8x128xf32>
    %c59_552 = arith.constant 59 : index
    %1261 = memref.load %arg5[%c59_552] : memref<72xf32, #tpu.memory_space<smem>>
    %1262 = vector.broadcast %1261 : f32 to vector<8x128xf32>
    %1263 = arith.mulf %1214, %1262 : vector<8x128xf32>
    %1264 = arith.addf %1232, %1263 : vector<8x128xf32>
    %c60_553 = arith.constant 60 : index
    %1265 = memref.load %arg5[%c60_553] : memref<72xf32, #tpu.memory_space<smem>>
    %1266 = vector.broadcast %1265 : f32 to vector<8x128xf32>
    %1267 = arith.mulf %1214, %1266 : vector<8x128xf32>
    %1268 = arith.addf %1236, %1267 : vector<8x128xf32>
    %c61_554 = arith.constant 61 : index
    %1269 = memref.load %arg5[%c61_554] : memref<72xf32, #tpu.memory_space<smem>>
    %1270 = vector.broadcast %1269 : f32 to vector<8x128xf32>
    %1271 = arith.mulf %1214, %1270 : vector<8x128xf32>
    %1272 = arith.addf %1240, %1271 : vector<8x128xf32>
    %c62_555 = arith.constant 62 : index
    %1273 = memref.load %arg5[%c62_555] : memref<72xf32, #tpu.memory_space<smem>>
    %1274 = vector.broadcast %1273 : f32 to vector<8x128xf32>
    %1275 = arith.mulf %1214, %1274 : vector<8x128xf32>
    %1276 = arith.addf %1244, %1275 : vector<8x128xf32>
    %c63_556 = arith.constant 63 : index
    %1277 = memref.load %arg5[%c63_556] : memref<72xf32, #tpu.memory_space<smem>>
    %1278 = vector.broadcast %1277 : f32 to vector<8x128xf32>
    %1279 = arith.mulf %1214, %1278 : vector<8x128xf32>
    %1280 = arith.addf %1248, %1279 : vector<8x128xf32>
    %c64_557 = arith.constant 64 : index
    %1281 = memref.load %arg5[%c64_557] : memref<72xf32, #tpu.memory_space<smem>>
    %1282 = vector.broadcast %1281 : f32 to vector<8x128xf32>
    %1283 = arith.mulf %1216, %1282 : vector<8x128xf32>
    %1284 = arith.addf %1252, %1283 : vector<8x128xf32>
    %c65_558 = arith.constant 65 : index
    %1285 = memref.load %arg5[%c65_558] : memref<72xf32, #tpu.memory_space<smem>>
    %1286 = vector.broadcast %1285 : f32 to vector<8x128xf32>
    %1287 = arith.mulf %1216, %1286 : vector<8x128xf32>
    %1288 = arith.addf %1256, %1287 : vector<8x128xf32>
    %c66_559 = arith.constant 66 : index
    %1289 = memref.load %arg5[%c66_559] : memref<72xf32, #tpu.memory_space<smem>>
    %1290 = vector.broadcast %1289 : f32 to vector<8x128xf32>
    %1291 = arith.mulf %1216, %1290 : vector<8x128xf32>
    %1292 = arith.addf %1260, %1291 : vector<8x128xf32>
    %c67_560 = arith.constant 67 : index
    %1293 = memref.load %arg5[%c67_560] : memref<72xf32, #tpu.memory_space<smem>>
    %1294 = vector.broadcast %1293 : f32 to vector<8x128xf32>
    %1295 = arith.mulf %1216, %1294 : vector<8x128xf32>
    %1296 = arith.addf %1264, %1295 : vector<8x128xf32>
    %c68_561 = arith.constant 68 : index
    %1297 = memref.load %arg5[%c68_561] : memref<72xf32, #tpu.memory_space<smem>>
    %1298 = vector.broadcast %1297 : f32 to vector<8x128xf32>
    %1299 = arith.mulf %1216, %1298 : vector<8x128xf32>
    %1300 = arith.addf %1268, %1299 : vector<8x128xf32>
    %c69_562 = arith.constant 69 : index
    %1301 = memref.load %arg5[%c69_562] : memref<72xf32, #tpu.memory_space<smem>>
    %1302 = vector.broadcast %1301 : f32 to vector<8x128xf32>
    %1303 = arith.mulf %1216, %1302 : vector<8x128xf32>
    %1304 = arith.addf %1272, %1303 : vector<8x128xf32>
    %c70_563 = arith.constant 70 : index
    %1305 = memref.load %arg5[%c70_563] : memref<72xf32, #tpu.memory_space<smem>>
    %1306 = vector.broadcast %1305 : f32 to vector<8x128xf32>
    %1307 = arith.mulf %1216, %1306 : vector<8x128xf32>
    %1308 = arith.addf %1276, %1307 : vector<8x128xf32>
    %c71_564 = arith.constant 71 : index
    %1309 = memref.load %arg5[%c71_564] : memref<72xf32, #tpu.memory_space<smem>>
    %1310 = vector.broadcast %1309 : f32 to vector<8x128xf32>
    %1311 = arith.mulf %1216, %1310 : vector<8x128xf32>
    %1312 = arith.addf %1280, %1311 : vector<8x128xf32>
    %cst_565 = arith.constant 0.000000e+00 : f32
    %1313 = vector.broadcast %cst_565 : f32 to vector<8x128xf32>
    %1314 = arith.maximumf %1284, %1313 : vector<8x128xf32>
    %cst_566 = arith.constant 0.000000e+00 : f32
    %1315 = vector.broadcast %cst_566 : f32 to vector<8x128xf32>
    %1316 = arith.maximumf %1288, %1315 : vector<8x128xf32>
    %cst_567 = arith.constant 0.000000e+00 : f32
    %1317 = vector.broadcast %cst_567 : f32 to vector<8x128xf32>
    %1318 = arith.maximumf %1292, %1317 : vector<8x128xf32>
    %cst_568 = arith.constant 0.000000e+00 : f32
    %1319 = vector.broadcast %cst_568 : f32 to vector<8x128xf32>
    %1320 = arith.maximumf %1296, %1319 : vector<8x128xf32>
    %cst_569 = arith.constant 0.000000e+00 : f32
    %1321 = vector.broadcast %cst_569 : f32 to vector<8x128xf32>
    %1322 = arith.maximumf %1300, %1321 : vector<8x128xf32>
    %cst_570 = arith.constant 0.000000e+00 : f32
    %1323 = vector.broadcast %cst_570 : f32 to vector<8x128xf32>
    %1324 = arith.maximumf %1304, %1323 : vector<8x128xf32>
    %cst_571 = arith.constant 0.000000e+00 : f32
    %1325 = vector.broadcast %cst_571 : f32 to vector<8x128xf32>
    %1326 = arith.maximumf %1308, %1325 : vector<8x128xf32>
    %cst_572 = arith.constant 0.000000e+00 : f32
    %1327 = vector.broadcast %cst_572 : f32 to vector<8x128xf32>
    %1328 = arith.maximumf %1312, %1327 : vector<8x128xf32>
    %cst_573 = arith.constant 0.000000e+00 : f32
    %1329 = vector.broadcast %cst_573 : f32 to vector<8x128xf32>
    %1330 = arith.select %980, %1314, %1329 : vector<8x128xi1>, vector<8x128xf32>
    %c0_574 = arith.constant 0 : index
    %c1_575 = arith.constant 1 : index
    %c0_576 = arith.constant 0 : index
    %1331 = vector.load %arg25[%c0_574, %c1_575, %c0_576] : memref<8x16x128xf32, #tpu.memory_space<vmem>>, vector<1x8x128xf32>
    %1332 = vector.shape_cast %1331 : vector<1x8x128xf32> to vector<8x128xf32>
    %1333 = vector.shape_cast %1330 : vector<8x128xf32> to vector<1x8x128xf32>
    tpu.vector_store %arg25[%c0_574, %c1_575, %c0_576], %1333 {strides = array<i32>} : memref<8x16x128xf32, #tpu.memory_space<vmem>>, vector<1x8x128xf32>,
    %cst_577 = arith.constant 0.000000e+00 : f32
    %1334 = vector.broadcast %cst_577 : f32 to vector<8x128xf32>
    %1335 = arith.select %980, %1316, %1334 : vector<8x128xi1>, vector<8x128xf32>
    %c1_578 = arith.constant 1 : index
    %c1_579 = arith.constant 1 : index
    %c0_580 = arith.constant 0 : index
    %1336 = vector.load %arg25[%c1_578, %c1_579, %c0_580] : memref<8x16x128xf32, #tpu.memory_space<vmem>>, vector<1x8x128xf32>
    %1337 = vector.shape_cast %1336 : vector<1x8x128xf32> to vector<8x128xf32>
    %1338 = vector.shape_cast %1335 : vector<8x128xf32> to vector<1x8x128xf32>
    tpu.vector_store %arg25[%c1_578, %c1_579, %c0_580], %1338 {strides = array<i32>} : memref<8x16x128xf32, #tpu.memory_space<vmem>>, vector<1x8x128xf32>,
    %cst_581 = arith.constant 0.000000e+00 : f32
    %1339 = vector.broadcast %cst_581 : f32 to vector<8x128xf32>
    %1340 = arith.select %980, %1318, %1339 : vector<8x128xi1>, vector<8x128xf32>
    %c2_582 = arith.constant 2 : index
    %c1_583 = arith.constant 1 : index
    %c0_584 = arith.constant 0 : index
    %1341 = vector.load %arg25[%c2_582, %c1_583, %c0_584] : memref<8x16x128xf32, #tpu.memory_space<vmem>>, vector<1x8x128xf32>
    %1342 = vector.shape_cast %1341 : vector<1x8x128xf32> to vector<8x128xf32>
    %1343 = vector.shape_cast %1340 : vector<8x128xf32> to vector<1x8x128xf32>
    tpu.vector_store %arg25[%c2_582, %c1_583, %c0_584], %1343 {strides = array<i32>} : memref<8x16x128xf32, #tpu.memory_space<vmem>>, vector<1x8x128xf32>,
    %cst_585 = arith.constant 0.000000e+00 : f32
    %1344 = vector.broadcast %cst_585 : f32 to vector<8x128xf32>
    %1345 = arith.select %980, %1320, %1344 : vector<8x128xi1>, vector<8x128xf32>
    %c3_586 = arith.constant 3 : index
    %c1_587 = arith.constant 1 : index
    %c0_588 = arith.constant 0 : index
    %1346 = vector.load %arg25[%c3_586, %c1_587, %c0_588] : memref<8x16x128xf32, #tpu.memory_space<vmem>>, vector<1x8x128xf32>
    %1347 = vector.shape_cast %1346 : vector<1x8x128xf32> to vector<8x128xf32>
    %1348 = vector.shape_cast %1345 : vector<8x128xf32> to vector<1x8x128xf32>
    tpu.vector_store %arg25[%c3_586, %c1_587, %c0_588], %1348 {strides = array<i32>} : memref<8x16x128xf32, #tpu.memory_space<vmem>>, vector<1x8x128xf32>,
    %cst_589 = arith.constant 0.000000e+00 : f32
    %1349 = vector.broadcast %cst_589 : f32 to vector<8x128xf32>
    %1350 = arith.select %980, %1322, %1349 : vector<8x128xi1>, vector<8x128xf32>
    %c4_590 = arith.constant 4 : index
    %c1_591 = arith.constant 1 : index
    %c0_592 = arith.constant 0 : index
    %1351 = vector.load %arg25[%c4_590, %c1_591, %c0_592] : memref<8x16x128xf32, #tpu.memory_space<vmem>>, vector<1x8x128xf32>
    %1352 = vector.shape_cast %1351 : vector<1x8x128xf32> to vector<8x128xf32>
    %1353 = vector.shape_cast %1350 : vector<8x128xf32> to vector<1x8x128xf32>
    tpu.vector_store %arg25[%c4_590, %c1_591, %c0_592], %1353 {strides = array<i32>} : memref<8x16x128xf32, #tpu.memory_space<vmem>>, vector<1x8x128xf32>,
    %cst_593 = arith.constant 0.000000e+00 : f32
    %1354 = vector.broadcast %cst_593 : f32 to vector<8x128xf32>
    %1355 = arith.select %980, %1324, %1354 : vector<8x128xi1>, vector<8x128xf32>
    %c5_594 = arith.constant 5 : index
    %c1_595 = arith.constant 1 : index
    %c0_596 = arith.constant 0 : index
    %1356 = vector.load %arg25[%c5_594, %c1_595, %c0_596] : memref<8x16x128xf32, #tpu.memory_space<vmem>>, vector<1x8x128xf32>
    %1357 = vector.shape_cast %1356 : vector<1x8x128xf32> to vector<8x128xf32>
    %1358 = vector.shape_cast %1355 : vector<8x128xf32> to vector<1x8x128xf32>
    tpu.vector_store %arg25[%c5_594, %c1_595, %c0_596], %1358 {strides = array<i32>} : memref<8x16x128xf32, #tpu.memory_space<vmem>>, vector<1x8x128xf32>,
    %cst_597 = arith.constant 0.000000e+00 : f32
    %1359 = vector.broadcast %cst_597 : f32 to vector<8x128xf32>
    %1360 = arith.select %980, %1326, %1359 : vector<8x128xi1>, vector<8x128xf32>
    %c6_598 = arith.constant 6 : index
    %c1_599 = arith.constant 1 : index
    %c0_600 = arith.constant 0 : index
    %1361 = vector.load %arg25[%c6_598, %c1_599, %c0_600] : memref<8x16x128xf32, #tpu.memory_space<vmem>>, vector<1x8x128xf32>
    %1362 = vector.shape_cast %1361 : vector<1x8x128xf32> to vector<8x128xf32>
    %1363 = vector.shape_cast %1360 : vector<8x128xf32> to vector<1x8x128xf32>
    tpu.vector_store %arg25[%c6_598, %c1_599, %c0_600], %1363 {strides = array<i32>} : memref<8x16x128xf32, #tpu.memory_space<vmem>>, vector<1x8x128xf32>,
    %cst_601 = arith.constant 0.000000e+00 : f32
    %1364 = vector.broadcast %cst_601 : f32 to vector<8x128xf32>
    %1365 = arith.select %980, %1328, %1364 : vector<8x128xi1>, vector<8x128xf32>
    %c7_602 = arith.constant 7 : index
    %c1_603 = arith.constant 1 : index
    %c0_604 = arith.constant 0 : index
    %1366 = vector.load %arg25[%c7_602, %c1_603, %c0_604] : memref<8x16x128xf32, #tpu.memory_space<vmem>>, vector<1x8x128xf32>
    %1367 = vector.shape_cast %1366 : vector<1x8x128xf32> to vector<8x128xf32>
    %1368 = vector.shape_cast %1365 : vector<8x128xf32> to vector<1x8x128xf32>
    tpu.vector_store %arg25[%c7_602, %c1_603, %c0_604], %1368 {strides = array<i32>} : memref<8x16x128xf32, #tpu.memory_space<vmem>>, vector<1x8x128xf32>,
    %cst_605 = arith.constant 0.000000e+00 : f32
    %1369 = vector.broadcast %cst_605 : f32 to vector<8x128xf32>
    %c0_606 = arith.constant 0 : index
    %1370 = memref.load %arg8[%c0_606] : memref<1xf32, #tpu.memory_space<smem>>
    %1371 = vector.broadcast %1370 : f32 to vector<8x128xf32>
    %1372 = arith.addf %1369, %1371 : vector<8x128xf32>
    %c0_607 = arith.constant 0 : index
    %c0_608 = arith.constant 0 : index
    %c0_609 = arith.constant 0 : index
    %1373 = vector.load %arg25[%c0_607, %c0_608, %c0_609] : memref<8x16x128xf32, #tpu.memory_space<vmem>>, vector<1x8x128xf32>
    %1374 = vector.shape_cast %1373 : vector<1x8x128xf32> to vector<8x128xf32>
    %c1_i32_610 = arith.constant 1 : i32
    %1375 = tpu.dynamic_rotate %1374 by %c1_i32_610 dim 1 : vector<8x128xf32>, i32 -> vector<8x128xf32>
    %c127_i32_611 = arith.constant 127 : i32
    %1376 = tpu.dynamic_rotate %1374 by %c127_i32_611 dim 1 : vector<8x128xf32>, i32 -> vector<8x128xf32>
    %c0_612 = arith.constant 0 : index
    %1377 = memref.load %arg7[%c0_612] : memref<72xf32, #tpu.memory_space<smem>>
    %1378 = vector.broadcast %1377 : f32 to vector<8x128xf32>
    %1379 = arith.mulf %1375, %1378 : vector<8x128xf32>
    %1380 = arith.addf %1372, %1379 : vector<8x128xf32>
    %c8_613 = arith.constant 8 : index
    %1381 = memref.load %arg7[%c8_613] : memref<72xf32, #tpu.memory_space<smem>>
    %1382 = vector.broadcast %1381 : f32 to vector<8x128xf32>
    %1383 = arith.mulf %1374, %1382 : vector<8x128xf32>
    %1384 = arith.addf %1380, %1383 : vector<8x128xf32>
    %c16_614 = arith.constant 16 : index
    %1385 = memref.load %arg7[%c16_614] : memref<72xf32, #tpu.memory_space<smem>>
    %1386 = vector.broadcast %1385 : f32 to vector<8x128xf32>
    %1387 = arith.mulf %1376, %1386 : vector<8x128xf32>
    %1388 = arith.addf %1384, %1387 : vector<8x128xf32>
    %c0_615 = arith.constant 0 : index
    %c1_616 = arith.constant 1 : index
    %c0_617 = arith.constant 0 : index
    %1389 = vector.load %arg25[%c0_615, %c1_616, %c0_617] : memref<8x16x128xf32, #tpu.memory_space<vmem>>, vector<1x8x128xf32>
    %1390 = vector.shape_cast %1389 : vector<1x8x128xf32> to vector<8x128xf32>
    %c1_i32_618 = arith.constant 1 : i32
    %1391 = tpu.dynamic_rotate %1390 by %c1_i32_618 dim 1 : vector<8x128xf32>, i32 -> vector<8x128xf32>
    %c127_i32_619 = arith.constant 127 : i32
    %1392 = tpu.dynamic_rotate %1390 by %c127_i32_619 dim 1 : vector<8x128xf32>, i32 -> vector<8x128xf32>
    %c24_620 = arith.constant 24 : index
    %1393 = memref.load %arg7[%c24_620] : memref<72xf32, #tpu.memory_space<smem>>
    %1394 = vector.broadcast %1393 : f32 to vector<8x128xf32>
    %1395 = arith.mulf %1391, %1394 : vector<8x128xf32>
    %1396 = arith.addf %1388, %1395 : vector<8x128xf32>
    %c32_621 = arith.constant 32 : index
    %1397 = memref.load %arg7[%c32_621] : memref<72xf32, #tpu.memory_space<smem>>
    %1398 = vector.broadcast %1397 : f32 to vector<8x128xf32>
    %1399 = arith.mulf %1390, %1398 : vector<8x128xf32>
    %1400 = arith.addf %1396, %1399 : vector<8x128xf32>
    %c40_622 = arith.constant 40 : index
    %1401 = memref.load %arg7[%c40_622] : memref<72xf32, #tpu.memory_space<smem>>
    %1402 = vector.broadcast %1401 : f32 to vector<8x128xf32>
    %1403 = arith.mulf %1392, %1402 : vector<8x128xf32>
    %1404 = arith.addf %1400, %1403 : vector<8x128xf32>
    %c0_623 = arith.constant 0 : index
    %c2_624 = arith.constant 2 : index
    %c0_625 = arith.constant 0 : index
    %1405 = vector.load %arg25[%c0_623, %c2_624, %c0_625] : memref<8x16x128xf32, #tpu.memory_space<vmem>>, vector<1x8x128xf32>
    %1406 = vector.shape_cast %1405 : vector<1x8x128xf32> to vector<8x128xf32>
    %c1_i32_626 = arith.constant 1 : i32
    %1407 = tpu.dynamic_rotate %1406 by %c1_i32_626 dim 1 : vector<8x128xf32>, i32 -> vector<8x128xf32>
    %c127_i32_627 = arith.constant 127 : i32
    %1408 = tpu.dynamic_rotate %1406 by %c127_i32_627 dim 1 : vector<8x128xf32>, i32 -> vector<8x128xf32>
    %c48_628 = arith.constant 48 : index
    %1409 = memref.load %arg7[%c48_628] : memref<72xf32, #tpu.memory_space<smem>>
    %1410 = vector.broadcast %1409 : f32 to vector<8x128xf32>
    %1411 = arith.mulf %1407, %1410 : vector<8x128xf32>
    %1412 = arith.addf %1404, %1411 : vector<8x128xf32>
    %c56_629 = arith.constant 56 : index
    %1413 = memref.load %arg7[%c56_629] : memref<72xf32, #tpu.memory_space<smem>>
    %1414 = vector.broadcast %1413 : f32 to vector<8x128xf32>
    %1415 = arith.mulf %1406, %1414 : vector<8x128xf32>
    %1416 = arith.addf %1412, %1415 : vector<8x128xf32>
    %c64_630 = arith.constant 64 : index
    %1417 = memref.load %arg7[%c64_630] : memref<72xf32, #tpu.memory_space<smem>>
    %1418 = vector.broadcast %1417 : f32 to vector<8x128xf32>
    %1419 = arith.mulf %1408, %1418 : vector<8x128xf32>
    %1420 = arith.addf %1416, %1419 : vector<8x128xf32>
    %c1_631 = arith.constant 1 : index
    %c0_632 = arith.constant 0 : index
    %c0_633 = arith.constant 0 : index
    %1421 = vector.load %arg25[%c1_631, %c0_632, %c0_633] : memref<8x16x128xf32, #tpu.memory_space<vmem>>, vector<1x8x128xf32>
    %1422 = vector.shape_cast %1421 : vector<1x8x128xf32> to vector<8x128xf32>
    %c1_i32_634 = arith.constant 1 : i32
    %1423 = tpu.dynamic_rotate %1422 by %c1_i32_634 dim 1 : vector<8x128xf32>, i32 -> vector<8x128xf32>
    %c127_i32_635 = arith.constant 127 : i32
    %1424 = tpu.dynamic_rotate %1422 by %c127_i32_635 dim 1 : vector<8x128xf32>, i32 -> vector<8x128xf32>
    %c1_636 = arith.constant 1 : index
    %1425 = memref.load %arg7[%c1_636] : memref<72xf32, #tpu.memory_space<smem>>
    %1426 = vector.broadcast %1425 : f32 to vector<8x128xf32>
    %1427 = arith.mulf %1423, %1426 : vector<8x128xf32>
    %1428 = arith.addf %1420, %1427 : vector<8x128xf32>
    %c9_637 = arith.constant 9 : index
    %1429 = memref.load %arg7[%c9_637] : memref<72xf32, #tpu.memory_space<smem>>
    %1430 = vector.broadcast %1429 : f32 to vector<8x128xf32>
    %1431 = arith.mulf %1422, %1430 : vector<8x128xf32>
    %1432 = arith.addf %1428, %1431 : vector<8x128xf32>
    %c17_638 = arith.constant 17 : index
    %1433 = memref.load %arg7[%c17_638] : memref<72xf32, #tpu.memory_space<smem>>
    %1434 = vector.broadcast %1433 : f32 to vector<8x128xf32>
    %1435 = arith.mulf %1424, %1434 : vector<8x128xf32>
    %1436 = arith.addf %1432, %1435 : vector<8x128xf32>
    %c1_639 = arith.constant 1 : index
    %c1_640 = arith.constant 1 : index
    %c0_641 = arith.constant 0 : index
    %1437 = vector.load %arg25[%c1_639, %c1_640, %c0_641] : memref<8x16x128xf32, #tpu.memory_space<vmem>>, vector<1x8x128xf32>
    %1438 = vector.shape_cast %1437 : vector<1x8x128xf32> to vector<8x128xf32>
    %c1_i32_642 = arith.constant 1 : i32
    %1439 = tpu.dynamic_rotate %1438 by %c1_i32_642 dim 1 : vector<8x128xf32>, i32 -> vector<8x128xf32>
    %c127_i32_643 = arith.constant 127 : i32
    %1440 = tpu.dynamic_rotate %1438 by %c127_i32_643 dim 1 : vector<8x128xf32>, i32 -> vector<8x128xf32>
    %c25_644 = arith.constant 25 : index
    %1441 = memref.load %arg7[%c25_644] : memref<72xf32, #tpu.memory_space<smem>>
    %1442 = vector.broadcast %1441 : f32 to vector<8x128xf32>
    %1443 = arith.mulf %1439, %1442 : vector<8x128xf32>
    %1444 = arith.addf %1436, %1443 : vector<8x128xf32>
    %c33_645 = arith.constant 33 : index
    %1445 = memref.load %arg7[%c33_645] : memref<72xf32, #tpu.memory_space<smem>>
    %1446 = vector.broadcast %1445 : f32 to vector<8x128xf32>
    %1447 = arith.mulf %1438, %1446 : vector<8x128xf32>
    %1448 = arith.addf %1444, %1447 : vector<8x128xf32>
    %c41_646 = arith.constant 41 : index
    %1449 = memref.load %arg7[%c41_646] : memref<72xf32, #tpu.memory_space<smem>>
    %1450 = vector.broadcast %1449 : f32 to vector<8x128xf32>
    %1451 = arith.mulf %1440, %1450 : vector<8x128xf32>
    %1452 = arith.addf %1448, %1451 : vector<8x128xf32>
    %c1_647 = arith.constant 1 : index
    %c2_648 = arith.constant 2 : index
    %c0_649 = arith.constant 0 : index
    %1453 = vector.load %arg25[%c1_647, %c2_648, %c0_649] : memref<8x16x128xf32, #tpu.memory_space<vmem>>, vector<1x8x128xf32>
    %1454 = vector.shape_cast %1453 : vector<1x8x128xf32> to vector<8x128xf32>
    %c1_i32_650 = arith.constant 1 : i32
    %1455 = tpu.dynamic_rotate %1454 by %c1_i32_650 dim 1 : vector<8x128xf32>, i32 -> vector<8x128xf32>
    %c127_i32_651 = arith.constant 127 : i32
    %1456 = tpu.dynamic_rotate %1454 by %c127_i32_651 dim 1 : vector<8x128xf32>, i32 -> vector<8x128xf32>
    %c49_652 = arith.constant 49 : index
    %1457 = memref.load %arg7[%c49_652] : memref<72xf32, #tpu.memory_space<smem>>
    %1458 = vector.broadcast %1457 : f32 to vector<8x128xf32>
    %1459 = arith.mulf %1455, %1458 : vector<8x128xf32>
    %1460 = arith.addf %1452, %1459 : vector<8x128xf32>
    %c57_653 = arith.constant 57 : index
    %1461 = memref.load %arg7[%c57_653] : memref<72xf32, #tpu.memory_space<smem>>
    %1462 = vector.broadcast %1461 : f32 to vector<8x128xf32>
    %1463 = arith.mulf %1454, %1462 : vector<8x128xf32>
    %1464 = arith.addf %1460, %1463 : vector<8x128xf32>
    %c65_654 = arith.constant 65 : index
    %1465 = memref.load %arg7[%c65_654] : memref<72xf32, #tpu.memory_space<smem>>
    %1466 = vector.broadcast %1465 : f32 to vector<8x128xf32>
    %1467 = arith.mulf %1456, %1466 : vector<8x128xf32>
    %1468 = arith.addf %1464, %1467 : vector<8x128xf32>
    %c2_655 = arith.constant 2 : index
    %c0_656 = arith.constant 0 : index
    %c0_657 = arith.constant 0 : index
    %1469 = vector.load %arg25[%c2_655, %c0_656, %c0_657] : memref<8x16x128xf32, #tpu.memory_space<vmem>>, vector<1x8x128xf32>
    %1470 = vector.shape_cast %1469 : vector<1x8x128xf32> to vector<8x128xf32>
    %c1_i32_658 = arith.constant 1 : i32
    %1471 = tpu.dynamic_rotate %1470 by %c1_i32_658 dim 1 : vector<8x128xf32>, i32 -> vector<8x128xf32>
    %c127_i32_659 = arith.constant 127 : i32
    %1472 = tpu.dynamic_rotate %1470 by %c127_i32_659 dim 1 : vector<8x128xf32>, i32 -> vector<8x128xf32>
    %c2_660 = arith.constant 2 : index
    %1473 = memref.load %arg7[%c2_660] : memref<72xf32, #tpu.memory_space<smem>>
    %1474 = vector.broadcast %1473 : f32 to vector<8x128xf32>
    %1475 = arith.mulf %1471, %1474 : vector<8x128xf32>
    %1476 = arith.addf %1468, %1475 : vector<8x128xf32>
    %c10_661 = arith.constant 10 : index
    %1477 = memref.load %arg7[%c10_661] : memref<72xf32, #tpu.memory_space<smem>>
    %1478 = vector.broadcast %1477 : f32 to vector<8x128xf32>
    %1479 = arith.mulf %1470, %1478 : vector<8x128xf32>
    %1480 = arith.addf %1476, %1479 : vector<8x128xf32>
    %c18_662 = arith.constant 18 : index
    %1481 = memref.load %arg7[%c18_662] : memref<72xf32, #tpu.memory_space<smem>>
    %1482 = vector.broadcast %1481 : f32 to vector<8x128xf32>
    %1483 = arith.mulf %1472, %1482 : vector<8x128xf32>
    %1484 = arith.addf %1480, %1483 : vector<8x128xf32>
    %c2_663 = arith.constant 2 : index
    %c1_664 = arith.constant 1 : index
    %c0_665 = arith.constant 0 : index
    %1485 = vector.load %arg25[%c2_663, %c1_664, %c0_665] : memref<8x16x128xf32, #tpu.memory_space<vmem>>, vector<1x8x128xf32>
    %1486 = vector.shape_cast %1485 : vector<1x8x128xf32> to vector<8x128xf32>
    %c1_i32_666 = arith.constant 1 : i32
    %1487 = tpu.dynamic_rotate %1486 by %c1_i32_666 dim 1 : vector<8x128xf32>, i32 -> vector<8x128xf32>
    %c127_i32_667 = arith.constant 127 : i32
    %1488 = tpu.dynamic_rotate %1486 by %c127_i32_667 dim 1 : vector<8x128xf32>, i32 -> vector<8x128xf32>
    %c26_668 = arith.constant 26 : index
    %1489 = memref.load %arg7[%c26_668] : memref<72xf32, #tpu.memory_space<smem>>
    %1490 = vector.broadcast %1489 : f32 to vector<8x128xf32>
    %1491 = arith.mulf %1487, %1490 : vector<8x128xf32>
    %1492 = arith.addf %1484, %1491 : vector<8x128xf32>
    %c34_669 = arith.constant 34 : index
    %1493 = memref.load %arg7[%c34_669] : memref<72xf32, #tpu.memory_space<smem>>
    %1494 = vector.broadcast %1493 : f32 to vector<8x128xf32>
    %1495 = arith.mulf %1486, %1494 : vector<8x128xf32>
    %1496 = arith.addf %1492, %1495 : vector<8x128xf32>
    %c42_670 = arith.constant 42 : index
    %1497 = memref.load %arg7[%c42_670] : memref<72xf32, #tpu.memory_space<smem>>
    %1498 = vector.broadcast %1497 : f32 to vector<8x128xf32>
    %1499 = arith.mulf %1488, %1498 : vector<8x128xf32>
    %1500 = arith.addf %1496, %1499 : vector<8x128xf32>
    %c2_671 = arith.constant 2 : index
    %c2_672 = arith.constant 2 : index
    %c0_673 = arith.constant 0 : index
    %1501 = vector.load %arg25[%c2_671, %c2_672, %c0_673] : memref<8x16x128xf32, #tpu.memory_space<vmem>>, vector<1x8x128xf32>
    %1502 = vector.shape_cast %1501 : vector<1x8x128xf32> to vector<8x128xf32>
    %c1_i32_674 = arith.constant 1 : i32
    %1503 = tpu.dynamic_rotate %1502 by %c1_i32_674 dim 1 : vector<8x128xf32>, i32 -> vector<8x128xf32>
    %c127_i32_675 = arith.constant 127 : i32
    %1504 = tpu.dynamic_rotate %1502 by %c127_i32_675 dim 1 : vector<8x128xf32>, i32 -> vector<8x128xf32>
    %c50_676 = arith.constant 50 : index
    %1505 = memref.load %arg7[%c50_676] : memref<72xf32, #tpu.memory_space<smem>>
    %1506 = vector.broadcast %1505 : f32 to vector<8x128xf32>
    %1507 = arith.mulf %1503, %1506 : vector<8x128xf32>
    %1508 = arith.addf %1500, %1507 : vector<8x128xf32>
    %c58_677 = arith.constant 58 : index
    %1509 = memref.load %arg7[%c58_677] : memref<72xf32, #tpu.memory_space<smem>>
    %1510 = vector.broadcast %1509 : f32 to vector<8x128xf32>
    %1511 = arith.mulf %1502, %1510 : vector<8x128xf32>
    %1512 = arith.addf %1508, %1511 : vector<8x128xf32>
    %c66_678 = arith.constant 66 : index
    %1513 = memref.load %arg7[%c66_678] : memref<72xf32, #tpu.memory_space<smem>>
    %1514 = vector.broadcast %1513 : f32 to vector<8x128xf32>
    %1515 = arith.mulf %1504, %1514 : vector<8x128xf32>
    %1516 = arith.addf %1512, %1515 : vector<8x128xf32>
    %c3_679 = arith.constant 3 : index
    %c0_680 = arith.constant 0 : index
    %c0_681 = arith.constant 0 : index
    %1517 = vector.load %arg25[%c3_679, %c0_680, %c0_681] : memref<8x16x128xf32, #tpu.memory_space<vmem>>, vector<1x8x128xf32>
    %1518 = vector.shape_cast %1517 : vector<1x8x128xf32> to vector<8x128xf32>
    %c1_i32_682 = arith.constant 1 : i32
    %1519 = tpu.dynamic_rotate %1518 by %c1_i32_682 dim 1 : vector<8x128xf32>, i32 -> vector<8x128xf32>
    %c127_i32_683 = arith.constant 127 : i32
    %1520 = tpu.dynamic_rotate %1518 by %c127_i32_683 dim 1 : vector<8x128xf32>, i32 -> vector<8x128xf32>
    %c3_684 = arith.constant 3 : index
    %1521 = memref.load %arg7[%c3_684] : memref<72xf32, #tpu.memory_space<smem>>
    %1522 = vector.broadcast %1521 : f32 to vector<8x128xf32>
    %1523 = arith.mulf %1519, %1522 : vector<8x128xf32>
    %1524 = arith.addf %1516, %1523 : vector<8x128xf32>
    %c11_685 = arith.constant 11 : index
    %1525 = memref.load %arg7[%c11_685] : memref<72xf32, #tpu.memory_space<smem>>
    %1526 = vector.broadcast %1525 : f32 to vector<8x128xf32>
    %1527 = arith.mulf %1518, %1526 : vector<8x128xf32>
    %1528 = arith.addf %1524, %1527 : vector<8x128xf32>
    %c19_686 = arith.constant 19 : index
    %1529 = memref.load %arg7[%c19_686] : memref<72xf32, #tpu.memory_space<smem>>
    %1530 = vector.broadcast %1529 : f32 to vector<8x128xf32>
    %1531 = arith.mulf %1520, %1530 : vector<8x128xf32>
    %1532 = arith.addf %1528, %1531 : vector<8x128xf32>
    %c3_687 = arith.constant 3 : index
    %c1_688 = arith.constant 1 : index
    %c0_689 = arith.constant 0 : index
    %1533 = vector.load %arg25[%c3_687, %c1_688, %c0_689] : memref<8x16x128xf32, #tpu.memory_space<vmem>>, vector<1x8x128xf32>
    %1534 = vector.shape_cast %1533 : vector<1x8x128xf32> to vector<8x128xf32>
    %c1_i32_690 = arith.constant 1 : i32
    %1535 = tpu.dynamic_rotate %1534 by %c1_i32_690 dim 1 : vector<8x128xf32>, i32 -> vector<8x128xf32>
    %c127_i32_691 = arith.constant 127 : i32
    %1536 = tpu.dynamic_rotate %1534 by %c127_i32_691 dim 1 : vector<8x128xf32>, i32 -> vector<8x128xf32>
    %c27_692 = arith.constant 27 : index
    %1537 = memref.load %arg7[%c27_692] : memref<72xf32, #tpu.memory_space<smem>>
    %1538 = vector.broadcast %1537 : f32 to vector<8x128xf32>
    %1539 = arith.mulf %1535, %1538 : vector<8x128xf32>
    %1540 = arith.addf %1532, %1539 : vector<8x128xf32>
    %c35_693 = arith.constant 35 : index
    %1541 = memref.load %arg7[%c35_693] : memref<72xf32, #tpu.memory_space<smem>>
    %1542 = vector.broadcast %1541 : f32 to vector<8x128xf32>
    %1543 = arith.mulf %1534, %1542 : vector<8x128xf32>
    %1544 = arith.addf %1540, %1543 : vector<8x128xf32>
    %c43_694 = arith.constant 43 : index
    %1545 = memref.load %arg7[%c43_694] : memref<72xf32, #tpu.memory_space<smem>>
    %1546 = vector.broadcast %1545 : f32 to vector<8x128xf32>
    %1547 = arith.mulf %1536, %1546 : vector<8x128xf32>
    %1548 = arith.addf %1544, %1547 : vector<8x128xf32>
    %c3_695 = arith.constant 3 : index
    %c2_696 = arith.constant 2 : index
    %c0_697 = arith.constant 0 : index
    %1549 = vector.load %arg25[%c3_695, %c2_696, %c0_697] : memref<8x16x128xf32, #tpu.memory_space<vmem>>, vector<1x8x128xf32>
    %1550 = vector.shape_cast %1549 : vector<1x8x128xf32> to vector<8x128xf32>
    %c1_i32_698 = arith.constant 1 : i32
    %1551 = tpu.dynamic_rotate %1550 by %c1_i32_698 dim 1 : vector<8x128xf32>, i32 -> vector<8x128xf32>
    %c127_i32_699 = arith.constant 127 : i32
    %1552 = tpu.dynamic_rotate %1550 by %c127_i32_699 dim 1 : vector<8x128xf32>, i32 -> vector<8x128xf32>
    %c51_700 = arith.constant 51 : index
    %1553 = memref.load %arg7[%c51_700] : memref<72xf32, #tpu.memory_space<smem>>
    %1554 = vector.broadcast %1553 : f32 to vector<8x128xf32>
    %1555 = arith.mulf %1551, %1554 : vector<8x128xf32>
    %1556 = arith.addf %1548, %1555 : vector<8x128xf32>
    %c59_701 = arith.constant 59 : index
    %1557 = memref.load %arg7[%c59_701] : memref<72xf32, #tpu.memory_space<smem>>
    %1558 = vector.broadcast %1557 : f32 to vector<8x128xf32>
    %1559 = arith.mulf %1550, %1558 : vector<8x128xf32>
    %1560 = arith.addf %1556, %1559 : vector<8x128xf32>
    %c67_702 = arith.constant 67 : index
    %1561 = memref.load %arg7[%c67_702] : memref<72xf32, #tpu.memory_space<smem>>
    %1562 = vector.broadcast %1561 : f32 to vector<8x128xf32>
    %1563 = arith.mulf %1552, %1562 : vector<8x128xf32>
    %1564 = arith.addf %1560, %1563 : vector<8x128xf32>
    %c4_703 = arith.constant 4 : index
    %c0_704 = arith.constant 0 : index
    %c0_705 = arith.constant 0 : index
    %1565 = vector.load %arg25[%c4_703, %c0_704, %c0_705] : memref<8x16x128xf32, #tpu.memory_space<vmem>>, vector<1x8x128xf32>
    %1566 = vector.shape_cast %1565 : vector<1x8x128xf32> to vector<8x128xf32>
    %c1_i32_706 = arith.constant 1 : i32
    %1567 = tpu.dynamic_rotate %1566 by %c1_i32_706 dim 1 : vector<8x128xf32>, i32 -> vector<8x128xf32>
    %c127_i32_707 = arith.constant 127 : i32
    %1568 = tpu.dynamic_rotate %1566 by %c127_i32_707 dim 1 : vector<8x128xf32>, i32 -> vector<8x128xf32>
    %c4_708 = arith.constant 4 : index
    %1569 = memref.load %arg7[%c4_708] : memref<72xf32, #tpu.memory_space<smem>>
    %1570 = vector.broadcast %1569 : f32 to vector<8x128xf32>
    %1571 = arith.mulf %1567, %1570 : vector<8x128xf32>
    %1572 = arith.addf %1564, %1571 : vector<8x128xf32>
    %c12_709 = arith.constant 12 : index
    %1573 = memref.load %arg7[%c12_709] : memref<72xf32, #tpu.memory_space<smem>>
    %1574 = vector.broadcast %1573 : f32 to vector<8x128xf32>
    %1575 = arith.mulf %1566, %1574 : vector<8x128xf32>
    %1576 = arith.addf %1572, %1575 : vector<8x128xf32>
    %c20_710 = arith.constant 20 : index
    %1577 = memref.load %arg7[%c20_710] : memref<72xf32, #tpu.memory_space<smem>>
    %1578 = vector.broadcast %1577 : f32 to vector<8x128xf32>
    %1579 = arith.mulf %1568, %1578 : vector<8x128xf32>
    %1580 = arith.addf %1576, %1579 : vector<8x128xf32>
    %c4_711 = arith.constant 4 : index
    %c1_712 = arith.constant 1 : index
    %c0_713 = arith.constant 0 : index
    %1581 = vector.load %arg25[%c4_711, %c1_712, %c0_713] : memref<8x16x128xf32, #tpu.memory_space<vmem>>, vector<1x8x128xf32>
    %1582 = vector.shape_cast %1581 : vector<1x8x128xf32> to vector<8x128xf32>
    %c1_i32_714 = arith.constant 1 : i32
    %1583 = tpu.dynamic_rotate %1582 by %c1_i32_714 dim 1 : vector<8x128xf32>, i32 -> vector<8x128xf32>
    %c127_i32_715 = arith.constant 127 : i32
    %1584 = tpu.dynamic_rotate %1582 by %c127_i32_715 dim 1 : vector<8x128xf32>, i32 -> vector<8x128xf32>
    %c28_716 = arith.constant 28 : index
    %1585 = memref.load %arg7[%c28_716] : memref<72xf32, #tpu.memory_space<smem>>
    %1586 = vector.broadcast %1585 : f32 to vector<8x128xf32>
    %1587 = arith.mulf %1583, %1586 : vector<8x128xf32>
    %1588 = arith.addf %1580, %1587 : vector<8x128xf32>
    %c36_717 = arith.constant 36 : index
    %1589 = memref.load %arg7[%c36_717] : memref<72xf32, #tpu.memory_space<smem>>
    %1590 = vector.broadcast %1589 : f32 to vector<8x128xf32>
    %1591 = arith.mulf %1582, %1590 : vector<8x128xf32>
    %1592 = arith.addf %1588, %1591 : vector<8x128xf32>
    %c44_718 = arith.constant 44 : index
    %1593 = memref.load %arg7[%c44_718] : memref<72xf32, #tpu.memory_space<smem>>
    %1594 = vector.broadcast %1593 : f32 to vector<8x128xf32>
    %1595 = arith.mulf %1584, %1594 : vector<8x128xf32>
    %1596 = arith.addf %1592, %1595 : vector<8x128xf32>
    %c4_719 = arith.constant 4 : index
    %c2_720 = arith.constant 2 : index
    %c0_721 = arith.constant 0 : index
    %1597 = vector.load %arg25[%c4_719, %c2_720, %c0_721] : memref<8x16x128xf32, #tpu.memory_space<vmem>>, vector<1x8x128xf32>
    %1598 = vector.shape_cast %1597 : vector<1x8x128xf32> to vector<8x128xf32>
    %c1_i32_722 = arith.constant 1 : i32
    %1599 = tpu.dynamic_rotate %1598 by %c1_i32_722 dim 1 : vector<8x128xf32>, i32 -> vector<8x128xf32>
    %c127_i32_723 = arith.constant 127 : i32
    %1600 = tpu.dynamic_rotate %1598 by %c127_i32_723 dim 1 : vector<8x128xf32>, i32 -> vector<8x128xf32>
    %c52_724 = arith.constant 52 : index
    %1601 = memref.load %arg7[%c52_724] : memref<72xf32, #tpu.memory_space<smem>>
    %1602 = vector.broadcast %1601 : f32 to vector<8x128xf32>
    %1603 = arith.mulf %1599, %1602 : vector<8x128xf32>
    %1604 = arith.addf %1596, %1603 : vector<8x128xf32>
    %c60_725 = arith.constant 60 : index
    %1605 = memref.load %arg7[%c60_725] : memref<72xf32, #tpu.memory_space<smem>>
    %1606 = vector.broadcast %1605 : f32 to vector<8x128xf32>
    %1607 = arith.mulf %1598, %1606 : vector<8x128xf32>
    %1608 = arith.addf %1604, %1607 : vector<8x128xf32>
    %c68_726 = arith.constant 68 : index
    %1609 = memref.load %arg7[%c68_726] : memref<72xf32, #tpu.memory_space<smem>>
    %1610 = vector.broadcast %1609 : f32 to vector<8x128xf32>
    %1611 = arith.mulf %1600, %1610 : vector<8x128xf32>
    %1612 = arith.addf %1608, %1611 : vector<8x128xf32>
    %c5_727 = arith.constant 5 : index
    %c0_728 = arith.constant 0 : index
    %c0_729 = arith.constant 0 : index
    %1613 = vector.load %arg25[%c5_727, %c0_728, %c0_729] : memref<8x16x128xf32, #tpu.memory_space<vmem>>, vector<1x8x128xf32>
    %1614 = vector.shape_cast %1613 : vector<1x8x128xf32> to vector<8x128xf32>
    %c1_i32_730 = arith.constant 1 : i32
    %1615 = tpu.dynamic_rotate %1614 by %c1_i32_730 dim 1 : vector<8x128xf32>, i32 -> vector<8x128xf32>
    %c127_i32_731 = arith.constant 127 : i32
    %1616 = tpu.dynamic_rotate %1614 by %c127_i32_731 dim 1 : vector<8x128xf32>, i32 -> vector<8x128xf32>
    %c5_732 = arith.constant 5 : index
    %1617 = memref.load %arg7[%c5_732] : memref<72xf32, #tpu.memory_space<smem>>
    %1618 = vector.broadcast %1617 : f32 to vector<8x128xf32>
    %1619 = arith.mulf %1615, %1618 : vector<8x128xf32>
    %1620 = arith.addf %1612, %1619 : vector<8x128xf32>
    %c13_733 = arith.constant 13 : index
    %1621 = memref.load %arg7[%c13_733] : memref<72xf32, #tpu.memory_space<smem>>
    %1622 = vector.broadcast %1621 : f32 to vector<8x128xf32>
    %1623 = arith.mulf %1614, %1622 : vector<8x128xf32>
    %1624 = arith.addf %1620, %1623 : vector<8x128xf32>
    %c21_734 = arith.constant 21 : index
    %1625 = memref.load %arg7[%c21_734] : memref<72xf32, #tpu.memory_space<smem>>
    %1626 = vector.broadcast %1625 : f32 to vector<8x128xf32>
    %1627 = arith.mulf %1616, %1626 : vector<8x128xf32>
    %1628 = arith.addf %1624, %1627 : vector<8x128xf32>
    %c5_735 = arith.constant 5 : index
    %c1_736 = arith.constant 1 : index
    %c0_737 = arith.constant 0 : index
    %1629 = vector.load %arg25[%c5_735, %c1_736, %c0_737] : memref<8x16x128xf32, #tpu.memory_space<vmem>>, vector<1x8x128xf32>
    %1630 = vector.shape_cast %1629 : vector<1x8x128xf32> to vector<8x128xf32>
    %c1_i32_738 = arith.constant 1 : i32
    %1631 = tpu.dynamic_rotate %1630 by %c1_i32_738 dim 1 : vector<8x128xf32>, i32 -> vector<8x128xf32>
    %c127_i32_739 = arith.constant 127 : i32
    %1632 = tpu.dynamic_rotate %1630 by %c127_i32_739 dim 1 : vector<8x128xf32>, i32 -> vector<8x128xf32>
    %c29_740 = arith.constant 29 : index
    %1633 = memref.load %arg7[%c29_740] : memref<72xf32, #tpu.memory_space<smem>>
    %1634 = vector.broadcast %1633 : f32 to vector<8x128xf32>
    %1635 = arith.mulf %1631, %1634 : vector<8x128xf32>
    %1636 = arith.addf %1628, %1635 : vector<8x128xf32>
    %c37_741 = arith.constant 37 : index
    %1637 = memref.load %arg7[%c37_741] : memref<72xf32, #tpu.memory_space<smem>>
    %1638 = vector.broadcast %1637 : f32 to vector<8x128xf32>
    %1639 = arith.mulf %1630, %1638 : vector<8x128xf32>
    %1640 = arith.addf %1636, %1639 : vector<8x128xf32>
    %c45_742 = arith.constant 45 : index
    %1641 = memref.load %arg7[%c45_742] : memref<72xf32, #tpu.memory_space<smem>>
    %1642 = vector.broadcast %1641 : f32 to vector<8x128xf32>
    %1643 = arith.mulf %1632, %1642 : vector<8x128xf32>
    %1644 = arith.addf %1640, %1643 : vector<8x128xf32>
    %c5_743 = arith.constant 5 : index
    %c2_744 = arith.constant 2 : index
    %c0_745 = arith.constant 0 : index
    %1645 = vector.load %arg25[%c5_743, %c2_744, %c0_745] : memref<8x16x128xf32, #tpu.memory_space<vmem>>, vector<1x8x128xf32>
    %1646 = vector.shape_cast %1645 : vector<1x8x128xf32> to vector<8x128xf32>
    %c1_i32_746 = arith.constant 1 : i32
    %1647 = tpu.dynamic_rotate %1646 by %c1_i32_746 dim 1 : vector<8x128xf32>, i32 -> vector<8x128xf32>
    %c127_i32_747 = arith.constant 127 : i32
    %1648 = tpu.dynamic_rotate %1646 by %c127_i32_747 dim 1 : vector<8x128xf32>, i32 -> vector<8x128xf32>
    %c53_748 = arith.constant 53 : index
    %1649 = memref.load %arg7[%c53_748] : memref<72xf32, #tpu.memory_space<smem>>
    %1650 = vector.broadcast %1649 : f32 to vector<8x128xf32>
    %1651 = arith.mulf %1647, %1650 : vector<8x128xf32>
    %1652 = arith.addf %1644, %1651 : vector<8x128xf32>
    %c61_749 = arith.constant 61 : index
    %1653 = memref.load %arg7[%c61_749] : memref<72xf32, #tpu.memory_space<smem>>
    %1654 = vector.broadcast %1653 : f32 to vector<8x128xf32>
    %1655 = arith.mulf %1646, %1654 : vector<8x128xf32>
    %1656 = arith.addf %1652, %1655 : vector<8x128xf32>
    %c69_750 = arith.constant 69 : index
    %1657 = memref.load %arg7[%c69_750] : memref<72xf32, #tpu.memory_space<smem>>
    %1658 = vector.broadcast %1657 : f32 to vector<8x128xf32>
    %1659 = arith.mulf %1648, %1658 : vector<8x128xf32>
    %1660 = arith.addf %1656, %1659 : vector<8x128xf32>
    %c6_751 = arith.constant 6 : index
    %c0_752 = arith.constant 0 : index
    %c0_753 = arith.constant 0 : index
    %1661 = vector.load %arg25[%c6_751, %c0_752, %c0_753] : memref<8x16x128xf32, #tpu.memory_space<vmem>>, vector<1x8x128xf32>
    %1662 = vector.shape_cast %1661 : vector<1x8x128xf32> to vector<8x128xf32>
    %c1_i32_754 = arith.constant 1 : i32
    %1663 = tpu.dynamic_rotate %1662 by %c1_i32_754 dim 1 : vector<8x128xf32>, i32 -> vector<8x128xf32>
    %c127_i32_755 = arith.constant 127 : i32
    %1664 = tpu.dynamic_rotate %1662 by %c127_i32_755 dim 1 : vector<8x128xf32>, i32 -> vector<8x128xf32>
    %c6_756 = arith.constant 6 : index
    %1665 = memref.load %arg7[%c6_756] : memref<72xf32, #tpu.memory_space<smem>>
    %1666 = vector.broadcast %1665 : f32 to vector<8x128xf32>
    %1667 = arith.mulf %1663, %1666 : vector<8x128xf32>
    %1668 = arith.addf %1660, %1667 : vector<8x128xf32>
    %c14_757 = arith.constant 14 : index
    %1669 = memref.load %arg7[%c14_757] : memref<72xf32, #tpu.memory_space<smem>>
    %1670 = vector.broadcast %1669 : f32 to vector<8x128xf32>
    %1671 = arith.mulf %1662, %1670 : vector<8x128xf32>
    %1672 = arith.addf %1668, %1671 : vector<8x128xf32>
    %c22_758 = arith.constant 22 : index
    %1673 = memref.load %arg7[%c22_758] : memref<72xf32, #tpu.memory_space<smem>>
    %1674 = vector.broadcast %1673 : f32 to vector<8x128xf32>
    %1675 = arith.mulf %1664, %1674 : vector<8x128xf32>
    %1676 = arith.addf %1672, %1675 : vector<8x128xf32>
    %c6_759 = arith.constant 6 : index
    %c1_760 = arith.constant 1 : index
    %c0_761 = arith.constant 0 : index
    %1677 = vector.load %arg25[%c6_759, %c1_760, %c0_761] : memref<8x16x128xf32, #tpu.memory_space<vmem>>, vector<1x8x128xf32>
    %1678 = vector.shape_cast %1677 : vector<1x8x128xf32> to vector<8x128xf32>
    %c1_i32_762 = arith.constant 1 : i32
    %1679 = tpu.dynamic_rotate %1678 by %c1_i32_762 dim 1 : vector<8x128xf32>, i32 -> vector<8x128xf32>
    %c127_i32_763 = arith.constant 127 : i32
    %1680 = tpu.dynamic_rotate %1678 by %c127_i32_763 dim 1 : vector<8x128xf32>, i32 -> vector<8x128xf32>
    %c30_764 = arith.constant 30 : index
    %1681 = memref.load %arg7[%c30_764] : memref<72xf32, #tpu.memory_space<smem>>
    %1682 = vector.broadcast %1681 : f32 to vector<8x128xf32>
    %1683 = arith.mulf %1679, %1682 : vector<8x128xf32>
    %1684 = arith.addf %1676, %1683 : vector<8x128xf32>
    %c38_765 = arith.constant 38 : index
    %1685 = memref.load %arg7[%c38_765] : memref<72xf32, #tpu.memory_space<smem>>
    %1686 = vector.broadcast %1685 : f32 to vector<8x128xf32>
    %1687 = arith.mulf %1678, %1686 : vector<8x128xf32>
    %1688 = arith.addf %1684, %1687 : vector<8x128xf32>
    %c46_766 = arith.constant 46 : index
    %1689 = memref.load %arg7[%c46_766] : memref<72xf32, #tpu.memory_space<smem>>
    %1690 = vector.broadcast %1689 : f32 to vector<8x128xf32>
    %1691 = arith.mulf %1680, %1690 : vector<8x128xf32>
    %1692 = arith.addf %1688, %1691 : vector<8x128xf32>
    %c6_767 = arith.constant 6 : index
    %c2_768 = arith.constant 2 : index
    %c0_769 = arith.constant 0 : index
    %1693 = vector.load %arg25[%c6_767, %c2_768, %c0_769] : memref<8x16x128xf32, #tpu.memory_space<vmem>>, vector<1x8x128xf32>
    %1694 = vector.shape_cast %1693 : vector<1x8x128xf32> to vector<8x128xf32>
    %c1_i32_770 = arith.constant 1 : i32
    %1695 = tpu.dynamic_rotate %1694 by %c1_i32_770 dim 1 : vector<8x128xf32>, i32 -> vector<8x128xf32>
    %c127_i32_771 = arith.constant 127 : i32
    %1696 = tpu.dynamic_rotate %1694 by %c127_i32_771 dim 1 : vector<8x128xf32>, i32 -> vector<8x128xf32>
    %c54_772 = arith.constant 54 : index
    %1697 = memref.load %arg7[%c54_772] : memref<72xf32, #tpu.memory_space<smem>>
    %1698 = vector.broadcast %1697 : f32 to vector<8x128xf32>
    %1699 = arith.mulf %1695, %1698 : vector<8x128xf32>
    %1700 = arith.addf %1692, %1699 : vector<8x128xf32>
    %c62_773 = arith.constant 62 : index
    %1701 = memref.load %arg7[%c62_773] : memref<72xf32, #tpu.memory_space<smem>>
    %1702 = vector.broadcast %1701 : f32 to vector<8x128xf32>
    %1703 = arith.mulf %1694, %1702 : vector<8x128xf32>
    %1704 = arith.addf %1700, %1703 : vector<8x128xf32>
    %c70_774 = arith.constant 70 : index
    %1705 = memref.load %arg7[%c70_774] : memref<72xf32, #tpu.memory_space<smem>>
    %1706 = vector.broadcast %1705 : f32 to vector<8x128xf32>
    %1707 = arith.mulf %1696, %1706 : vector<8x128xf32>
    %1708 = arith.addf %1704, %1707 : vector<8x128xf32>
    %c7_775 = arith.constant 7 : index
    %c0_776 = arith.constant 0 : index
    %c0_777 = arith.constant 0 : index
    %1709 = vector.load %arg25[%c7_775, %c0_776, %c0_777] : memref<8x16x128xf32, #tpu.memory_space<vmem>>, vector<1x8x128xf32>
    %1710 = vector.shape_cast %1709 : vector<1x8x128xf32> to vector<8x128xf32>
    %c1_i32_778 = arith.constant 1 : i32
    %1711 = tpu.dynamic_rotate %1710 by %c1_i32_778 dim 1 : vector<8x128xf32>, i32 -> vector<8x128xf32>
    %c127_i32_779 = arith.constant 127 : i32
    %1712 = tpu.dynamic_rotate %1710 by %c127_i32_779 dim 1 : vector<8x128xf32>, i32 -> vector<8x128xf32>
    %c7_780 = arith.constant 7 : index
    %1713 = memref.load %arg7[%c7_780] : memref<72xf32, #tpu.memory_space<smem>>
    %1714 = vector.broadcast %1713 : f32 to vector<8x128xf32>
    %1715 = arith.mulf %1711, %1714 : vector<8x128xf32>
    %1716 = arith.addf %1708, %1715 : vector<8x128xf32>
    %c15_781 = arith.constant 15 : index
    %1717 = memref.load %arg7[%c15_781] : memref<72xf32, #tpu.memory_space<smem>>
    %1718 = vector.broadcast %1717 : f32 to vector<8x128xf32>
    %1719 = arith.mulf %1710, %1718 : vector<8x128xf32>
    %1720 = arith.addf %1716, %1719 : vector<8x128xf32>
    %c23_782 = arith.constant 23 : index
    %1721 = memref.load %arg7[%c23_782] : memref<72xf32, #tpu.memory_space<smem>>
    %1722 = vector.broadcast %1721 : f32 to vector<8x128xf32>
    %1723 = arith.mulf %1712, %1722 : vector<8x128xf32>
    %1724 = arith.addf %1720, %1723 : vector<8x128xf32>
    %c7_783 = arith.constant 7 : index
    %c1_784 = arith.constant 1 : index
    %c0_785 = arith.constant 0 : index
    %1725 = vector.load %arg25[%c7_783, %c1_784, %c0_785] : memref<8x16x128xf32, #tpu.memory_space<vmem>>, vector<1x8x128xf32>
    %1726 = vector.shape_cast %1725 : vector<1x8x128xf32> to vector<8x128xf32>
    %c1_i32_786 = arith.constant 1 : i32
    %1727 = tpu.dynamic_rotate %1726 by %c1_i32_786 dim 1 : vector<8x128xf32>, i32 -> vector<8x128xf32>
    %c127_i32_787 = arith.constant 127 : i32
    %1728 = tpu.dynamic_rotate %1726 by %c127_i32_787 dim 1 : vector<8x128xf32>, i32 -> vector<8x128xf32>
    %c31_788 = arith.constant 31 : index
    %1729 = memref.load %arg7[%c31_788] : memref<72xf32, #tpu.memory_space<smem>>
    %1730 = vector.broadcast %1729 : f32 to vector<8x128xf32>
    %1731 = arith.mulf %1727, %1730 : vector<8x128xf32>
    %1732 = arith.addf %1724, %1731 : vector<8x128xf32>
    %c39_789 = arith.constant 39 : index
    %1733 = memref.load %arg7[%c39_789] : memref<72xf32, #tpu.memory_space<smem>>
    %1734 = vector.broadcast %1733 : f32 to vector<8x128xf32>
    %1735 = arith.mulf %1726, %1734 : vector<8x128xf32>
    %1736 = arith.addf %1732, %1735 : vector<8x128xf32>
    %c47_790 = arith.constant 47 : index
    %1737 = memref.load %arg7[%c47_790] : memref<72xf32, #tpu.memory_space<smem>>
    %1738 = vector.broadcast %1737 : f32 to vector<8x128xf32>
    %1739 = arith.mulf %1728, %1738 : vector<8x128xf32>
    %1740 = arith.addf %1736, %1739 : vector<8x128xf32>
    %c7_791 = arith.constant 7 : index
    %c2_792 = arith.constant 2 : index
    %c0_793 = arith.constant 0 : index
    %1741 = vector.load %arg25[%c7_791, %c2_792, %c0_793] : memref<8x16x128xf32, #tpu.memory_space<vmem>>, vector<1x8x128xf32>
    %1742 = vector.shape_cast %1741 : vector<1x8x128xf32> to vector<8x128xf32>
    %c1_i32_794 = arith.constant 1 : i32
    %1743 = tpu.dynamic_rotate %1742 by %c1_i32_794 dim 1 : vector<8x128xf32>, i32 -> vector<8x128xf32>
    %c127_i32_795 = arith.constant 127 : i32
    %1744 = tpu.dynamic_rotate %1742 by %c127_i32_795 dim 1 : vector<8x128xf32>, i32 -> vector<8x128xf32>
    %c55_796 = arith.constant 55 : index
    %1745 = memref.load %arg7[%c55_796] : memref<72xf32, #tpu.memory_space<smem>>
    %1746 = vector.broadcast %1745 : f32 to vector<8x128xf32>
    %1747 = arith.mulf %1743, %1746 : vector<8x128xf32>
    %1748 = arith.addf %1740, %1747 : vector<8x128xf32>
    %c63_797 = arith.constant 63 : index
    %1749 = memref.load %arg7[%c63_797] : memref<72xf32, #tpu.memory_space<smem>>
    %1750 = vector.broadcast %1749 : f32 to vector<8x128xf32>
    %1751 = arith.mulf %1742, %1750 : vector<8x128xf32>
    %1752 = arith.addf %1748, %1751 : vector<8x128xf32>
    %c71_798 = arith.constant 71 : index
    %1753 = memref.load %arg7[%c71_798] : memref<72xf32, #tpu.memory_space<smem>>
    %1754 = vector.broadcast %1753 : f32 to vector<8x128xf32>
    %1755 = arith.mulf %1744, %1754 : vector<8x128xf32>
    %1756 = arith.addf %1752, %1755 : vector<8x128xf32>
    %cst_799 = arith.constant 0.000000e+00 : f32
    %1757 = vector.broadcast %cst_799 : f32 to vector<8x128xf32>
    %1758 = arith.select %980, %1756, %1757 : vector<8x128xi1>, vector<8x128xf32>
    %1759 = arith.addf %974, %1758 : vector<8x128xf32>
    %1760 = vector.extract_strided_slice %1759 {offsets = [0, 0], sizes = [8, 8], strides = [1, 1]} : vector<8x128xf32> to vector<8x8xf32>
    %c0_800 = arith.constant 0 : index
    %c0_801 = arith.constant 0 : index
    %c0_802 = arith.constant 0 : index
    %1761 = vector.load %arg20[%c0_800, %c0_801, %c0_802] : memref<1x8x8xf32, #tpu.memory_space<vmem>>, vector<1x8x8xf32>
    %1762 = vector.shape_cast %1761 : vector<1x8x8xf32> to vector<8x8xf32>
    %1763 = vector.shape_cast %1760 : vector<8x8xf32> to vector<1x8x8xf32>
    tpu.vector_store %arg20[%c0_800, %c0_801, %c0_802], %1763 {strides = array<i32>} : memref<1x8x8xf32, #tpu.memory_space<vmem>>, vector<1x8x8xf32>,
    %c0_803 = arith.constant 0 : index
    %c0_804 = arith.constant 0 : index
    %1764 = vector.load %arg17[%c0_803, %c0_804] : memref<16x8xf32, #tpu.memory_space<vmem>>, vector<16x8xf32>
    %c0_805 = arith.constant 0 : index
    %c0_806 = arith.constant 0 : index
    %1765 = vector.load %arg18[%c0_805, %c0_806] : memref<128x128xf32, #tpu.memory_space<vmem>>, vector<128x128xf32>
    %cst_807 = arith.constant dense<0.000000e+00> : vector<8x128xf32>
    %1766 = tpu.matmul %1759, %1765, %cst_807 {dimension_numbers = #tpu.dot_dimension_numbers<[1], [0], [0], [1], [0, 0, 1, 1], [], []>} : vector<8x128xf32>, vector<128x128xf32>, vector<8x128xf32> -> vector<8x128xf32>
    %cst_808 = arith.constant dense<0.000000e+00> : vector<16x128xf32>
    %1767 = tpu.matmul %1764, %1766, %cst_808 {dimension_numbers = #tpu.dot_dimension_numbers<[1], [0], [0], [1], [0, 0, 1, 1], [], []>} : vector<16x8xf32>, vector<8x128xf32>, vector<16x128xf32> -> vector<16x128xf32>
    %c0_809 = arith.constant 0 : index
    %c1_810 = arith.constant 1 : index
    %c0_811 = arith.constant 0 : index
    %1768 = vector.load %arg26[%c0_809, %c1_810, %c0_811] : memref<2x24x128xf32, #tpu.memory_space<vmem>>, vector<1x16x128xf32>
    %1769 = vector.shape_cast %1768 : vector<1x16x128xf32> to vector<16x128xf32>
    %1770 = vector.shape_cast %1767 : vector<16x128xf32> to vector<1x16x128xf32>
    tpu.vector_store %arg26[%c0_809, %c1_810, %c0_811], %1770 {strides = array<i32>} : memref<2x24x128xf32, #tpu.memory_space<vmem>>, vector<1x16x128xf32>,
    %c0_812 = arith.constant 0 : index
    %c0_813 = arith.constant 0 : index
    %c0_814 = arith.constant 0 : index
    %1771 = vector.load %arg13[%c0_812, %c0_813, %c0_814] : memref<1x16x16xf32, #tpu.memory_space<vmem>>, vector<1x16x16xf32>
    %1772 = vector.shape_cast %1771 : vector<1x16x16xf32> to vector<16x16xf32>
    %c1_815 = arith.constant 1 : index
    %c1_816 = arith.constant 1 : index
    %c0_817 = arith.constant 0 : index
    %1773 = vector.load %arg26[%c1_815, %c1_816, %c0_817] : memref<2x24x128xf32, #tpu.memory_space<vmem>>, vector<1x16x16xf32>
    %1774 = vector.shape_cast %1773 : vector<1x16x16xf32> to vector<16x16xf32>
    %1775 = vector.shape_cast %1772 : vector<16x16xf32> to vector<1x16x16xf32>
    tpu.vector_store %arg26[%c1_815, %c1_816, %c0_817], %1775 {strides = array<i32>} : memref<2x24x128xf32, #tpu.memory_space<vmem>>, vector<1x16x16xf32>,
    %cst_818 = arith.constant 0.000000e+00 : f32
    %1776 = vector.broadcast %cst_818 : f32 to vector<16x112xf32>
    %c1_819 = arith.constant 1 : index
    %c1_820 = arith.constant 1 : index
    %c16_821 = arith.constant 16 : index
    %1777 = vector.load %arg26[%c1_819, %c1_820, %c16_821] : memref<2x24x128xf32, #tpu.memory_space<vmem>>, vector<1x16x112xf32>
    %1778 = vector.shape_cast %1777 : vector<1x16x112xf32> to vector<16x112xf32>
    %1779 = vector.shape_cast %1776 : vector<16x112xf32> to vector<1x16x112xf32>
    tpu.vector_store %arg26[%c1_819, %c1_820, %c16_821], %1779 {strides = array<i32>} : memref<2x24x128xf32, #tpu.memory_space<vmem>>, vector<1x16x112xf32>,
    %1780 = tpu.iota {dimensions = array<i32: 1>} : vector<16x128xi32>
    %c16_i32 = arith.constant 16 : i32
    %1781 = vector.broadcast %c16_i32 : i32 to vector<16x128xi32>
    %1782 = arith.cmpi slt, %1780, %1781 : vector<16x128xi32>
    %cst_822 = arith.constant 0.000000e+00 : f32
    %1783 = vector.broadcast %cst_822 : f32 to vector<16x128xf32>
    %c0_823 = arith.constant 0 : index
    %1784 = memref.load %arg10[%c0_823] : memref<8xf32, #tpu.memory_space<smem>>
    %1785 = vector.broadcast %1784 : f32 to vector<16x128xf32>
    %1786 = arith.addf %1783, %1785 : vector<16x128xf32>
    %cst_824 = arith.constant 0.000000e+00 : f32
    %1787 = vector.broadcast %cst_824 : f32 to vector<16x128xf32>
    %c1_825 = arith.constant 1 : index
    %1788 = memref.load %arg10[%c1_825] : memref<8xf32, #tpu.memory_space<smem>>
    %1789 = vector.broadcast %1788 : f32 to vector<16x128xf32>
    %1790 = arith.addf %1787, %1789 : vector<16x128xf32>
    %cst_826 = arith.constant 0.000000e+00 : f32
    %1791 = vector.broadcast %cst_826 : f32 to vector<16x128xf32>
    %c2_827 = arith.constant 2 : index
    %1792 = memref.load %arg10[%c2_827] : memref<8xf32, #tpu.memory_space<smem>>
    %1793 = vector.broadcast %1792 : f32 to vector<16x128xf32>
    %1794 = arith.addf %1791, %1793 : vector<16x128xf32>
    %cst_828 = arith.constant 0.000000e+00 : f32
    %1795 = vector.broadcast %cst_828 : f32 to vector<16x128xf32>
    %c3_829 = arith.constant 3 : index
    %1796 = memref.load %arg10[%c3_829] : memref<8xf32, #tpu.memory_space<smem>>
    %1797 = vector.broadcast %1796 : f32 to vector<16x128xf32>
    %1798 = arith.addf %1795, %1797 : vector<16x128xf32>
    %cst_830 = arith.constant 0.000000e+00 : f32
    %1799 = vector.broadcast %cst_830 : f32 to vector<16x128xf32>
    %c4_831 = arith.constant 4 : index
    %1800 = memref.load %arg10[%c4_831] : memref<8xf32, #tpu.memory_space<smem>>
    %1801 = vector.broadcast %1800 : f32 to vector<16x128xf32>
    %1802 = arith.addf %1799, %1801 : vector<16x128xf32>
    %cst_832 = arith.constant 0.000000e+00 : f32
    %1803 = vector.broadcast %cst_832 : f32 to vector<16x128xf32>
    %c5_833 = arith.constant 5 : index
    %1804 = memref.load %arg10[%c5_833] : memref<8xf32, #tpu.memory_space<smem>>
    %1805 = vector.broadcast %1804 : f32 to vector<16x128xf32>
    %1806 = arith.addf %1803, %1805 : vector<16x128xf32>
    %cst_834 = arith.constant 0.000000e+00 : f32
    %1807 = vector.broadcast %cst_834 : f32 to vector<16x128xf32>
    %c6_835 = arith.constant 6 : index
    %1808 = memref.load %arg10[%c6_835] : memref<8xf32, #tpu.memory_space<smem>>
    %1809 = vector.broadcast %1808 : f32 to vector<16x128xf32>
    %1810 = arith.addf %1807, %1809 : vector<16x128xf32>
    %cst_836 = arith.constant 0.000000e+00 : f32
    %1811 = vector.broadcast %cst_836 : f32 to vector<16x128xf32>
    %c7_837 = arith.constant 7 : index
    %1812 = memref.load %arg10[%c7_837] : memref<8xf32, #tpu.memory_space<smem>>
    %1813 = vector.broadcast %1812 : f32 to vector<16x128xf32>
    %1814 = arith.addf %1811, %1813 : vector<16x128xf32>
    %c0_838 = arith.constant 0 : index
    %c0_839 = arith.constant 0 : index
    %c0_840 = arith.constant 0 : index
    %1815 = vector.load %arg26[%c0_838, %c0_839, %c0_840] : memref<2x24x128xf32, #tpu.memory_space<vmem>>, vector<1x16x128xf32>
    %1816 = vector.shape_cast %1815 : vector<1x16x128xf32> to vector<16x128xf32>
    %c1_i32_841 = arith.constant 1 : i32
    %1817 = tpu.dynamic_rotate %1816 by %c1_i32_841 dim 1 : vector<16x128xf32>, i32 -> vector<16x128xf32>
    %c127_i32_842 = arith.constant 127 : i32
    %1818 = tpu.dynamic_rotate %1816 by %c127_i32_842 dim 1 : vector<16x128xf32>, i32 -> vector<16x128xf32>
    %c0_843 = arith.constant 0 : index
    %1819 = memref.load %arg9[%c0_843] : memref<144xf32, #tpu.memory_space<smem>>
    %1820 = vector.broadcast %1819 : f32 to vector<16x128xf32>
    %1821 = arith.mulf %1817, %1820 : vector<16x128xf32>
    %1822 = arith.addf %1786, %1821 : vector<16x128xf32>
    %c1_844 = arith.constant 1 : index
    %1823 = memref.load %arg9[%c1_844] : memref<144xf32, #tpu.memory_space<smem>>
    %1824 = vector.broadcast %1823 : f32 to vector<16x128xf32>
    %1825 = arith.mulf %1817, %1824 : vector<16x128xf32>
    %1826 = arith.addf %1790, %1825 : vector<16x128xf32>
    %c2_845 = arith.constant 2 : index
    %1827 = memref.load %arg9[%c2_845] : memref<144xf32, #tpu.memory_space<smem>>
    %1828 = vector.broadcast %1827 : f32 to vector<16x128xf32>
    %1829 = arith.mulf %1817, %1828 : vector<16x128xf32>
    %1830 = arith.addf %1794, %1829 : vector<16x128xf32>
    %c3_846 = arith.constant 3 : index
    %1831 = memref.load %arg9[%c3_846] : memref<144xf32, #tpu.memory_space<smem>>
    %1832 = vector.broadcast %1831 : f32 to vector<16x128xf32>
    %1833 = arith.mulf %1817, %1832 : vector<16x128xf32>
    %1834 = arith.addf %1798, %1833 : vector<16x128xf32>
    %c4_847 = arith.constant 4 : index
    %1835 = memref.load %arg9[%c4_847] : memref<144xf32, #tpu.memory_space<smem>>
    %1836 = vector.broadcast %1835 : f32 to vector<16x128xf32>
    %1837 = arith.mulf %1817, %1836 : vector<16x128xf32>
    %1838 = arith.addf %1802, %1837 : vector<16x128xf32>
    %c5_848 = arith.constant 5 : index
    %1839 = memref.load %arg9[%c5_848] : memref<144xf32, #tpu.memory_space<smem>>
    %1840 = vector.broadcast %1839 : f32 to vector<16x128xf32>
    %1841 = arith.mulf %1817, %1840 : vector<16x128xf32>
    %1842 = arith.addf %1806, %1841 : vector<16x128xf32>
    %c6_849 = arith.constant 6 : index
    %1843 = memref.load %arg9[%c6_849] : memref<144xf32, #tpu.memory_space<smem>>
    %1844 = vector.broadcast %1843 : f32 to vector<16x128xf32>
    %1845 = arith.mulf %1817, %1844 : vector<16x128xf32>
    %1846 = arith.addf %1810, %1845 : vector<16x128xf32>
    %c7_850 = arith.constant 7 : index
    %1847 = memref.load %arg9[%c7_850] : memref<144xf32, #tpu.memory_space<smem>>
    %1848 = vector.broadcast %1847 : f32 to vector<16x128xf32>
    %1849 = arith.mulf %1817, %1848 : vector<16x128xf32>
    %1850 = arith.addf %1814, %1849 : vector<16x128xf32>
    %c16_851 = arith.constant 16 : index
    %1851 = memref.load %arg9[%c16_851] : memref<144xf32, #tpu.memory_space<smem>>
    %1852 = vector.broadcast %1851 : f32 to vector<16x128xf32>
    %1853 = arith.mulf %1816, %1852 : vector<16x128xf32>
    %1854 = arith.addf %1822, %1853 : vector<16x128xf32>
    %c17_852 = arith.constant 17 : index
    %1855 = memref.load %arg9[%c17_852] : memref<144xf32, #tpu.memory_space<smem>>
    %1856 = vector.broadcast %1855 : f32 to vector<16x128xf32>
    %1857 = arith.mulf %1816, %1856 : vector<16x128xf32>
    %1858 = arith.addf %1826, %1857 : vector<16x128xf32>
    %c18_853 = arith.constant 18 : index
    %1859 = memref.load %arg9[%c18_853] : memref<144xf32, #tpu.memory_space<smem>>
    %1860 = vector.broadcast %1859 : f32 to vector<16x128xf32>
    %1861 = arith.mulf %1816, %1860 : vector<16x128xf32>
    %1862 = arith.addf %1830, %1861 : vector<16x128xf32>
    %c19_854 = arith.constant 19 : index
    %1863 = memref.load %arg9[%c19_854] : memref<144xf32, #tpu.memory_space<smem>>
    %1864 = vector.broadcast %1863 : f32 to vector<16x128xf32>
    %1865 = arith.mulf %1816, %1864 : vector<16x128xf32>
    %1866 = arith.addf %1834, %1865 : vector<16x128xf32>
    %c20_855 = arith.constant 20 : index
    %1867 = memref.load %arg9[%c20_855] : memref<144xf32, #tpu.memory_space<smem>>
    %1868 = vector.broadcast %1867 : f32 to vector<16x128xf32>
    %1869 = arith.mulf %1816, %1868 : vector<16x128xf32>
    %1870 = arith.addf %1838, %1869 : vector<16x128xf32>
    %c21_856 = arith.constant 21 : index
    %1871 = memref.load %arg9[%c21_856] : memref<144xf32, #tpu.memory_space<smem>>
    %1872 = vector.broadcast %1871 : f32 to vector<16x128xf32>
    %1873 = arith.mulf %1816, %1872 : vector<16x128xf32>
    %1874 = arith.addf %1842, %1873 : vector<16x128xf32>
    %c22_857 = arith.constant 22 : index
    %1875 = memref.load %arg9[%c22_857] : memref<144xf32, #tpu.memory_space<smem>>
    %1876 = vector.broadcast %1875 : f32 to vector<16x128xf32>
    %1877 = arith.mulf %1816, %1876 : vector<16x128xf32>
    %1878 = arith.addf %1846, %1877 : vector<16x128xf32>
    %c23_858 = arith.constant 23 : index
    %1879 = memref.load %arg9[%c23_858] : memref<144xf32, #tpu.memory_space<smem>>
    %1880 = vector.broadcast %1879 : f32 to vector<16x128xf32>
    %1881 = arith.mulf %1816, %1880 : vector<16x128xf32>
    %1882 = arith.addf %1850, %1881 : vector<16x128xf32>
    %c32_859 = arith.constant 32 : index
    %1883 = memref.load %arg9[%c32_859] : memref<144xf32, #tpu.memory_space<smem>>
    %1884 = vector.broadcast %1883 : f32 to vector<16x128xf32>
    %1885 = arith.mulf %1818, %1884 : vector<16x128xf32>
    %1886 = arith.addf %1854, %1885 : vector<16x128xf32>
    %c33_860 = arith.constant 33 : index
    %1887 = memref.load %arg9[%c33_860] : memref<144xf32, #tpu.memory_space<smem>>
    %1888 = vector.broadcast %1887 : f32 to vector<16x128xf32>
    %1889 = arith.mulf %1818, %1888 : vector<16x128xf32>
    %1890 = arith.addf %1858, %1889 : vector<16x128xf32>
    %c34_861 = arith.constant 34 : index
    %1891 = memref.load %arg9[%c34_861] : memref<144xf32, #tpu.memory_space<smem>>
    %1892 = vector.broadcast %1891 : f32 to vector<16x128xf32>
    %1893 = arith.mulf %1818, %1892 : vector<16x128xf32>
    %1894 = arith.addf %1862, %1893 : vector<16x128xf32>
    %c35_862 = arith.constant 35 : index
    %1895 = memref.load %arg9[%c35_862] : memref<144xf32, #tpu.memory_space<smem>>
    %1896 = vector.broadcast %1895 : f32 to vector<16x128xf32>
    %1897 = arith.mulf %1818, %1896 : vector<16x128xf32>
    %1898 = arith.addf %1866, %1897 : vector<16x128xf32>
    %c36_863 = arith.constant 36 : index
    %1899 = memref.load %arg9[%c36_863] : memref<144xf32, #tpu.memory_space<smem>>
    %1900 = vector.broadcast %1899 : f32 to vector<16x128xf32>
    %1901 = arith.mulf %1818, %1900 : vector<16x128xf32>
    %1902 = arith.addf %1870, %1901 : vector<16x128xf32>
    %c37_864 = arith.constant 37 : index
    %1903 = memref.load %arg9[%c37_864] : memref<144xf32, #tpu.memory_space<smem>>
    %1904 = vector.broadcast %1903 : f32 to vector<16x128xf32>
    %1905 = arith.mulf %1818, %1904 : vector<16x128xf32>
    %1906 = arith.addf %1874, %1905 : vector<16x128xf32>
    %c38_865 = arith.constant 38 : index
    %1907 = memref.load %arg9[%c38_865] : memref<144xf32, #tpu.memory_space<smem>>
    %1908 = vector.broadcast %1907 : f32 to vector<16x128xf32>
    %1909 = arith.mulf %1818, %1908 : vector<16x128xf32>
    %1910 = arith.addf %1878, %1909 : vector<16x128xf32>
    %c39_866 = arith.constant 39 : index
    %1911 = memref.load %arg9[%c39_866] : memref<144xf32, #tpu.memory_space<smem>>
    %1912 = vector.broadcast %1911 : f32 to vector<16x128xf32>
    %1913 = arith.mulf %1818, %1912 : vector<16x128xf32>
    %1914 = arith.addf %1882, %1913 : vector<16x128xf32>
    %c0_867 = arith.constant 0 : index
    %c1_868 = arith.constant 1 : index
    %c0_869 = arith.constant 0 : index
    %1915 = vector.load %arg26[%c0_867, %c1_868, %c0_869] : memref<2x24x128xf32, #tpu.memory_space<vmem>>, vector<1x16x128xf32>
    %1916 = vector.shape_cast %1915 : vector<1x16x128xf32> to vector<16x128xf32>
    %c1_i32_870 = arith.constant 1 : i32
    %1917 = tpu.dynamic_rotate %1916 by %c1_i32_870 dim 1 : vector<16x128xf32>, i32 -> vector<16x128xf32>
    %c127_i32_871 = arith.constant 127 : i32
    %1918 = tpu.dynamic_rotate %1916 by %c127_i32_871 dim 1 : vector<16x128xf32>, i32 -> vector<16x128xf32>
    %c48_872 = arith.constant 48 : index
    %1919 = memref.load %arg9[%c48_872] : memref<144xf32, #tpu.memory_space<smem>>
    %1920 = vector.broadcast %1919 : f32 to vector<16x128xf32>
    %1921 = arith.mulf %1917, %1920 : vector<16x128xf32>
    %1922 = arith.addf %1886, %1921 : vector<16x128xf32>
    %c49_873 = arith.constant 49 : index
    %1923 = memref.load %arg9[%c49_873] : memref<144xf32, #tpu.memory_space<smem>>
    %1924 = vector.broadcast %1923 : f32 to vector<16x128xf32>
    %1925 = arith.mulf %1917, %1924 : vector<16x128xf32>
    %1926 = arith.addf %1890, %1925 : vector<16x128xf32>
    %c50_874 = arith.constant 50 : index
    %1927 = memref.load %arg9[%c50_874] : memref<144xf32, #tpu.memory_space<smem>>
    %1928 = vector.broadcast %1927 : f32 to vector<16x128xf32>
    %1929 = arith.mulf %1917, %1928 : vector<16x128xf32>
    %1930 = arith.addf %1894, %1929 : vector<16x128xf32>
    %c51_875 = arith.constant 51 : index
    %1931 = memref.load %arg9[%c51_875] : memref<144xf32, #tpu.memory_space<smem>>
    %1932 = vector.broadcast %1931 : f32 to vector<16x128xf32>
    %1933 = arith.mulf %1917, %1932 : vector<16x128xf32>
    %1934 = arith.addf %1898, %1933 : vector<16x128xf32>
    %c52_876 = arith.constant 52 : index
    %1935 = memref.load %arg9[%c52_876] : memref<144xf32, #tpu.memory_space<smem>>
    %1936 = vector.broadcast %1935 : f32 to vector<16x128xf32>
    %1937 = arith.mulf %1917, %1936 : vector<16x128xf32>
    %1938 = arith.addf %1902, %1937 : vector<16x128xf32>
    %c53_877 = arith.constant 53 : index
    %1939 = memref.load %arg9[%c53_877] : memref<144xf32, #tpu.memory_space<smem>>
    %1940 = vector.broadcast %1939 : f32 to vector<16x128xf32>
    %1941 = arith.mulf %1917, %1940 : vector<16x128xf32>
    %1942 = arith.addf %1906, %1941 : vector<16x128xf32>
    %c54_878 = arith.constant 54 : index
    %1943 = memref.load %arg9[%c54_878] : memref<144xf32, #tpu.memory_space<smem>>
    %1944 = vector.broadcast %1943 : f32 to vector<16x128xf32>
    %1945 = arith.mulf %1917, %1944 : vector<16x128xf32>
    %1946 = arith.addf %1910, %1945 : vector<16x128xf32>
    %c55_879 = arith.constant 55 : index
    %1947 = memref.load %arg9[%c55_879] : memref<144xf32, #tpu.memory_space<smem>>
    %1948 = vector.broadcast %1947 : f32 to vector<16x128xf32>
    %1949 = arith.mulf %1917, %1948 : vector<16x128xf32>
    %1950 = arith.addf %1914, %1949 : vector<16x128xf32>
    %c64_880 = arith.constant 64 : index
    %1951 = memref.load %arg9[%c64_880] : memref<144xf32, #tpu.memory_space<smem>>
    %1952 = vector.broadcast %1951 : f32 to vector<16x128xf32>
    %1953 = arith.mulf %1916, %1952 : vector<16x128xf32>
    %1954 = arith.addf %1922, %1953 : vector<16x128xf32>
    %c65_881 = arith.constant 65 : index
    %1955 = memref.load %arg9[%c65_881] : memref<144xf32, #tpu.memory_space<smem>>
    %1956 = vector.broadcast %1955 : f32 to vector<16x128xf32>
    %1957 = arith.mulf %1916, %1956 : vector<16x128xf32>
    %1958 = arith.addf %1926, %1957 : vector<16x128xf32>
    %c66_882 = arith.constant 66 : index
    %1959 = memref.load %arg9[%c66_882] : memref<144xf32, #tpu.memory_space<smem>>
    %1960 = vector.broadcast %1959 : f32 to vector<16x128xf32>
    %1961 = arith.mulf %1916, %1960 : vector<16x128xf32>
    %1962 = arith.addf %1930, %1961 : vector<16x128xf32>
    %c67_883 = arith.constant 67 : index
    %1963 = memref.load %arg9[%c67_883] : memref<144xf32, #tpu.memory_space<smem>>
    %1964 = vector.broadcast %1963 : f32 to vector<16x128xf32>
    %1965 = arith.mulf %1916, %1964 : vector<16x128xf32>
    %1966 = arith.addf %1934, %1965 : vector<16x128xf32>
    %c68_884 = arith.constant 68 : index
    %1967 = memref.load %arg9[%c68_884] : memref<144xf32, #tpu.memory_space<smem>>
    %1968 = vector.broadcast %1967 : f32 to vector<16x128xf32>
    %1969 = arith.mulf %1916, %1968 : vector<16x128xf32>
    %1970 = arith.addf %1938, %1969 : vector<16x128xf32>
    %c69_885 = arith.constant 69 : index
    %1971 = memref.load %arg9[%c69_885] : memref<144xf32, #tpu.memory_space<smem>>
    %1972 = vector.broadcast %1971 : f32 to vector<16x128xf32>
    %1973 = arith.mulf %1916, %1972 : vector<16x128xf32>
    %1974 = arith.addf %1942, %1973 : vector<16x128xf32>
    %c70_886 = arith.constant 70 : index
    %1975 = memref.load %arg9[%c70_886] : memref<144xf32, #tpu.memory_space<smem>>
    %1976 = vector.broadcast %1975 : f32 to vector<16x128xf32>
    %1977 = arith.mulf %1916, %1976 : vector<16x128xf32>
    %1978 = arith.addf %1946, %1977 : vector<16x128xf32>
    %c71_887 = arith.constant 71 : index
    %1979 = memref.load %arg9[%c71_887] : memref<144xf32, #tpu.memory_space<smem>>
    %1980 = vector.broadcast %1979 : f32 to vector<16x128xf32>
    %1981 = arith.mulf %1916, %1980 : vector<16x128xf32>
    %1982 = arith.addf %1950, %1981 : vector<16x128xf32>
    %c80 = arith.constant 80 : index
    %1983 = memref.load %arg9[%c80] : memref<144xf32, #tpu.memory_space<smem>>
    %1984 = vector.broadcast %1983 : f32 to vector<16x128xf32>
    %1985 = arith.mulf %1918, %1984 : vector<16x128xf32>
    %1986 = arith.addf %1954, %1985 : vector<16x128xf32>
    %c81 = arith.constant 81 : index
    %1987 = memref.load %arg9[%c81] : memref<144xf32, #tpu.memory_space<smem>>
    %1988 = vector.broadcast %1987 : f32 to vector<16x128xf32>
    %1989 = arith.mulf %1918, %1988 : vector<16x128xf32>
    %1990 = arith.addf %1958, %1989 : vector<16x128xf32>
    %c82 = arith.constant 82 : index
    %1991 = memref.load %arg9[%c82] : memref<144xf32, #tpu.memory_space<smem>>
    %1992 = vector.broadcast %1991 : f32 to vector<16x128xf32>
    %1993 = arith.mulf %1918, %1992 : vector<16x128xf32>
    %1994 = arith.addf %1962, %1993 : vector<16x128xf32>
    %c83 = arith.constant 83 : index
    %1995 = memref.load %arg9[%c83] : memref<144xf32, #tpu.memory_space<smem>>
    %1996 = vector.broadcast %1995 : f32 to vector<16x128xf32>
    %1997 = arith.mulf %1918, %1996 : vector<16x128xf32>
    %1998 = arith.addf %1966, %1997 : vector<16x128xf32>
    %c84 = arith.constant 84 : index
    %1999 = memref.load %arg9[%c84] : memref<144xf32, #tpu.memory_space<smem>>
    %2000 = vector.broadcast %1999 : f32 to vector<16x128xf32>
    %2001 = arith.mulf %1918, %2000 : vector<16x128xf32>
    %2002 = arith.addf %1970, %2001 : vector<16x128xf32>
    %c85 = arith.constant 85 : index
    %2003 = memref.load %arg9[%c85] : memref<144xf32, #tpu.memory_space<smem>>
    %2004 = vector.broadcast %2003 : f32 to vector<16x128xf32>
    %2005 = arith.mulf %1918, %2004 : vector<16x128xf32>
    %2006 = arith.addf %1974, %2005 : vector<16x128xf32>
    %c86 = arith.constant 86 : index
    %2007 = memref.load %arg9[%c86] : memref<144xf32, #tpu.memory_space<smem>>
    %2008 = vector.broadcast %2007 : f32 to vector<16x128xf32>
    %2009 = arith.mulf %1918, %2008 : vector<16x128xf32>
    %2010 = arith.addf %1978, %2009 : vector<16x128xf32>
    %c87 = arith.constant 87 : index
    %2011 = memref.load %arg9[%c87] : memref<144xf32, #tpu.memory_space<smem>>
    %2012 = vector.broadcast %2011 : f32 to vector<16x128xf32>
    %2013 = arith.mulf %1918, %2012 : vector<16x128xf32>
    %2014 = arith.addf %1982, %2013 : vector<16x128xf32>
    %c0_888 = arith.constant 0 : index
    %c2_889 = arith.constant 2 : index
    %c0_890 = arith.constant 0 : index
    %2015 = vector.load %arg26[%c0_888, %c2_889, %c0_890] : memref<2x24x128xf32, #tpu.memory_space<vmem>>, vector<1x16x128xf32>
    %2016 = vector.shape_cast %2015 : vector<1x16x128xf32> to vector<16x128xf32>
    %c1_i32_891 = arith.constant 1 : i32
    %2017 = tpu.dynamic_rotate %2016 by %c1_i32_891 dim 1 : vector<16x128xf32>, i32 -> vector<16x128xf32>
    %c127_i32_892 = arith.constant 127 : i32
    %2018 = tpu.dynamic_rotate %2016 by %c127_i32_892 dim 1 : vector<16x128xf32>, i32 -> vector<16x128xf32>
    %c96 = arith.constant 96 : index
    %2019 = memref.load %arg9[%c96] : memref<144xf32, #tpu.memory_space<smem>>
    %2020 = vector.broadcast %2019 : f32 to vector<16x128xf32>
    %2021 = arith.mulf %2017, %2020 : vector<16x128xf32>
    %2022 = arith.addf %1986, %2021 : vector<16x128xf32>
    %c97 = arith.constant 97 : index
    %2023 = memref.load %arg9[%c97] : memref<144xf32, #tpu.memory_space<smem>>
    %2024 = vector.broadcast %2023 : f32 to vector<16x128xf32>
    %2025 = arith.mulf %2017, %2024 : vector<16x128xf32>
    %2026 = arith.addf %1990, %2025 : vector<16x128xf32>
    %c98 = arith.constant 98 : index
    %2027 = memref.load %arg9[%c98] : memref<144xf32, #tpu.memory_space<smem>>
    %2028 = vector.broadcast %2027 : f32 to vector<16x128xf32>
    %2029 = arith.mulf %2017, %2028 : vector<16x128xf32>
    %2030 = arith.addf %1994, %2029 : vector<16x128xf32>
    %c99 = arith.constant 99 : index
    %2031 = memref.load %arg9[%c99] : memref<144xf32, #tpu.memory_space<smem>>
    %2032 = vector.broadcast %2031 : f32 to vector<16x128xf32>
    %2033 = arith.mulf %2017, %2032 : vector<16x128xf32>
    %2034 = arith.addf %1998, %2033 : vector<16x128xf32>
    %c100 = arith.constant 100 : index
    %2035 = memref.load %arg9[%c100] : memref<144xf32, #tpu.memory_space<smem>>
    %2036 = vector.broadcast %2035 : f32 to vector<16x128xf32>
    %2037 = arith.mulf %2017, %2036 : vector<16x128xf32>
    %2038 = arith.addf %2002, %2037 : vector<16x128xf32>
    %c101 = arith.constant 101 : index
    %2039 = memref.load %arg9[%c101] : memref<144xf32, #tpu.memory_space<smem>>
    %2040 = vector.broadcast %2039 : f32 to vector<16x128xf32>
    %2041 = arith.mulf %2017, %2040 : vector<16x128xf32>
    %2042 = arith.addf %2006, %2041 : vector<16x128xf32>
    %c102 = arith.constant 102 : index
    %2043 = memref.load %arg9[%c102] : memref<144xf32, #tpu.memory_space<smem>>
    %2044 = vector.broadcast %2043 : f32 to vector<16x128xf32>
    %2045 = arith.mulf %2017, %2044 : vector<16x128xf32>
    %2046 = arith.addf %2010, %2045 : vector<16x128xf32>
    %c103 = arith.constant 103 : index
    %2047 = memref.load %arg9[%c103] : memref<144xf32, #tpu.memory_space<smem>>
    %2048 = vector.broadcast %2047 : f32 to vector<16x128xf32>
    %2049 = arith.mulf %2017, %2048 : vector<16x128xf32>
    %2050 = arith.addf %2014, %2049 : vector<16x128xf32>
    %c112 = arith.constant 112 : index
    %2051 = memref.load %arg9[%c112] : memref<144xf32, #tpu.memory_space<smem>>
    %2052 = vector.broadcast %2051 : f32 to vector<16x128xf32>
    %2053 = arith.mulf %2016, %2052 : vector<16x128xf32>
    %2054 = arith.addf %2022, %2053 : vector<16x128xf32>
    %c113 = arith.constant 113 : index
    %2055 = memref.load %arg9[%c113] : memref<144xf32, #tpu.memory_space<smem>>
    %2056 = vector.broadcast %2055 : f32 to vector<16x128xf32>
    %2057 = arith.mulf %2016, %2056 : vector<16x128xf32>
    %2058 = arith.addf %2026, %2057 : vector<16x128xf32>
    %c114 = arith.constant 114 : index
    %2059 = memref.load %arg9[%c114] : memref<144xf32, #tpu.memory_space<smem>>
    %2060 = vector.broadcast %2059 : f32 to vector<16x128xf32>
    %2061 = arith.mulf %2016, %2060 : vector<16x128xf32>
    %2062 = arith.addf %2030, %2061 : vector<16x128xf32>
    %c115 = arith.constant 115 : index
    %2063 = memref.load %arg9[%c115] : memref<144xf32, #tpu.memory_space<smem>>
    %2064 = vector.broadcast %2063 : f32 to vector<16x128xf32>
    %2065 = arith.mulf %2016, %2064 : vector<16x128xf32>
    %2066 = arith.addf %2034, %2065 : vector<16x128xf32>
    %c116 = arith.constant 116 : index
    %2067 = memref.load %arg9[%c116] : memref<144xf32, #tpu.memory_space<smem>>
    %2068 = vector.broadcast %2067 : f32 to vector<16x128xf32>
    %2069 = arith.mulf %2016, %2068 : vector<16x128xf32>
    %2070 = arith.addf %2038, %2069 : vector<16x128xf32>
    %c117 = arith.constant 117 : index
    %2071 = memref.load %arg9[%c117] : memref<144xf32, #tpu.memory_space<smem>>
    %2072 = vector.broadcast %2071 : f32 to vector<16x128xf32>
    %2073 = arith.mulf %2016, %2072 : vector<16x128xf32>
    %2074 = arith.addf %2042, %2073 : vector<16x128xf32>
    %c118 = arith.constant 118 : index
    %2075 = memref.load %arg9[%c118] : memref<144xf32, #tpu.memory_space<smem>>
    %2076 = vector.broadcast %2075 : f32 to vector<16x128xf32>
    %2077 = arith.mulf %2016, %2076 : vector<16x128xf32>
    %2078 = arith.addf %2046, %2077 : vector<16x128xf32>
    %c119 = arith.constant 119 : index
    %2079 = memref.load %arg9[%c119] : memref<144xf32, #tpu.memory_space<smem>>
    %2080 = vector.broadcast %2079 : f32 to vector<16x128xf32>
    %2081 = arith.mulf %2016, %2080 : vector<16x128xf32>
    %2082 = arith.addf %2050, %2081 : vector<16x128xf32>
    %c128 = arith.constant 128 : index
    %2083 = memref.load %arg9[%c128] : memref<144xf32, #tpu.memory_space<smem>>
    %2084 = vector.broadcast %2083 : f32 to vector<16x128xf32>
    %2085 = arith.mulf %2018, %2084 : vector<16x128xf32>
    %2086 = arith.addf %2054, %2085 : vector<16x128xf32>
    %c129 = arith.constant 129 : index
    %2087 = memref.load %arg9[%c129] : memref<144xf32, #tpu.memory_space<smem>>
    %2088 = vector.broadcast %2087 : f32 to vector<16x128xf32>
    %2089 = arith.mulf %2018, %2088 : vector<16x128xf32>
    %2090 = arith.addf %2058, %2089 : vector<16x128xf32>
    %c130 = arith.constant 130 : index
    %2091 = memref.load %arg9[%c130] : memref<144xf32, #tpu.memory_space<smem>>
    %2092 = vector.broadcast %2091 : f32 to vector<16x128xf32>
    %2093 = arith.mulf %2018, %2092 : vector<16x128xf32>
    %2094 = arith.addf %2062, %2093 : vector<16x128xf32>
    %c131 = arith.constant 131 : index
    %2095 = memref.load %arg9[%c131] : memref<144xf32, #tpu.memory_space<smem>>
    %2096 = vector.broadcast %2095 : f32 to vector<16x128xf32>
    %2097 = arith.mulf %2018, %2096 : vector<16x128xf32>
    %2098 = arith.addf %2066, %2097 : vector<16x128xf32>
    %c132 = arith.constant 132 : index
    %2099 = memref.load %arg9[%c132] : memref<144xf32, #tpu.memory_space<smem>>
    %2100 = vector.broadcast %2099 : f32 to vector<16x128xf32>
    %2101 = arith.mulf %2018, %2100 : vector<16x128xf32>
    %2102 = arith.addf %2070, %2101 : vector<16x128xf32>
    %c133 = arith.constant 133 : index
    %2103 = memref.load %arg9[%c133] : memref<144xf32, #tpu.memory_space<smem>>
    %2104 = vector.broadcast %2103 : f32 to vector<16x128xf32>
    %2105 = arith.mulf %2018, %2104 : vector<16x128xf32>
    %2106 = arith.addf %2074, %2105 : vector<16x128xf32>
    %c134 = arith.constant 134 : index
    %2107 = memref.load %arg9[%c134] : memref<144xf32, #tpu.memory_space<smem>>
    %2108 = vector.broadcast %2107 : f32 to vector<16x128xf32>
    %2109 = arith.mulf %2018, %2108 : vector<16x128xf32>
    %2110 = arith.addf %2078, %2109 : vector<16x128xf32>
    %c135 = arith.constant 135 : index
    %2111 = memref.load %arg9[%c135] : memref<144xf32, #tpu.memory_space<smem>>
    %2112 = vector.broadcast %2111 : f32 to vector<16x128xf32>
    %2113 = arith.mulf %2018, %2112 : vector<16x128xf32>
    %2114 = arith.addf %2082, %2113 : vector<16x128xf32>
    %c1_893 = arith.constant 1 : index
    %c0_894 = arith.constant 0 : index
    %c0_895 = arith.constant 0 : index
    %2115 = vector.load %arg26[%c1_893, %c0_894, %c0_895] : memref<2x24x128xf32, #tpu.memory_space<vmem>>, vector<1x16x128xf32>
    %2116 = vector.shape_cast %2115 : vector<1x16x128xf32> to vector<16x128xf32>
    %c1_i32_896 = arith.constant 1 : i32
    %2117 = tpu.dynamic_rotate %2116 by %c1_i32_896 dim 1 : vector<16x128xf32>, i32 -> vector<16x128xf32>
    %c127_i32_897 = arith.constant 127 : i32
    %2118 = tpu.dynamic_rotate %2116 by %c127_i32_897 dim 1 : vector<16x128xf32>, i32 -> vector<16x128xf32>
    %c8_898 = arith.constant 8 : index
    %2119 = memref.load %arg9[%c8_898] : memref<144xf32, #tpu.memory_space<smem>>
    %2120 = vector.broadcast %2119 : f32 to vector<16x128xf32>
    %2121 = arith.mulf %2117, %2120 : vector<16x128xf32>
    %2122 = arith.addf %2086, %2121 : vector<16x128xf32>
    %c9_899 = arith.constant 9 : index
    %2123 = memref.load %arg9[%c9_899] : memref<144xf32, #tpu.memory_space<smem>>
    %2124 = vector.broadcast %2123 : f32 to vector<16x128xf32>
    %2125 = arith.mulf %2117, %2124 : vector<16x128xf32>
    %2126 = arith.addf %2090, %2125 : vector<16x128xf32>
    %c10_900 = arith.constant 10 : index
    %2127 = memref.load %arg9[%c10_900] : memref<144xf32, #tpu.memory_space<smem>>
    %2128 = vector.broadcast %2127 : f32 to vector<16x128xf32>
    %2129 = arith.mulf %2117, %2128 : vector<16x128xf32>
    %2130 = arith.addf %2094, %2129 : vector<16x128xf32>
    %c11_901 = arith.constant 11 : index
    %2131 = memref.load %arg9[%c11_901] : memref<144xf32, #tpu.memory_space<smem>>
    %2132 = vector.broadcast %2131 : f32 to vector<16x128xf32>
    %2133 = arith.mulf %2117, %2132 : vector<16x128xf32>
    %2134 = arith.addf %2098, %2133 : vector<16x128xf32>
    %c12_902 = arith.constant 12 : index
    %2135 = memref.load %arg9[%c12_902] : memref<144xf32, #tpu.memory_space<smem>>
    %2136 = vector.broadcast %2135 : f32 to vector<16x128xf32>
    %2137 = arith.mulf %2117, %2136 : vector<16x128xf32>
    %2138 = arith.addf %2102, %2137 : vector<16x128xf32>
    %c13_903 = arith.constant 13 : index
    %2139 = memref.load %arg9[%c13_903] : memref<144xf32, #tpu.memory_space<smem>>
    %2140 = vector.broadcast %2139 : f32 to vector<16x128xf32>
    %2141 = arith.mulf %2117, %2140 : vector<16x128xf32>
    %2142 = arith.addf %2106, %2141 : vector<16x128xf32>
    %c14_904 = arith.constant 14 : index
    %2143 = memref.load %arg9[%c14_904] : memref<144xf32, #tpu.memory_space<smem>>
    %2144 = vector.broadcast %2143 : f32 to vector<16x128xf32>
    %2145 = arith.mulf %2117, %2144 : vector<16x128xf32>
    %2146 = arith.addf %2110, %2145 : vector<16x128xf32>
    %c15_905 = arith.constant 15 : index
    %2147 = memref.load %arg9[%c15_905] : memref<144xf32, #tpu.memory_space<smem>>
    %2148 = vector.broadcast %2147 : f32 to vector<16x128xf32>
    %2149 = arith.mulf %2117, %2148 : vector<16x128xf32>
    %2150 = arith.addf %2114, %2149 : vector<16x128xf32>
    %c24_906 = arith.constant 24 : index
    %2151 = memref.load %arg9[%c24_906] : memref<144xf32, #tpu.memory_space<smem>>
    %2152 = vector.broadcast %2151 : f32 to vector<16x128xf32>
    %2153 = arith.mulf %2116, %2152 : vector<16x128xf32>
    %2154 = arith.addf %2122, %2153 : vector<16x128xf32>
    %c25_907 = arith.constant 25 : index
    %2155 = memref.load %arg9[%c25_907] : memref<144xf32, #tpu.memory_space<smem>>
    %2156 = vector.broadcast %2155 : f32 to vector<16x128xf32>
    %2157 = arith.mulf %2116, %2156 : vector<16x128xf32>
    %2158 = arith.addf %2126, %2157 : vector<16x128xf32>
    %c26_908 = arith.constant 26 : index
    %2159 = memref.load %arg9[%c26_908] : memref<144xf32, #tpu.memory_space<smem>>
    %2160 = vector.broadcast %2159 : f32 to vector<16x128xf32>
    %2161 = arith.mulf %2116, %2160 : vector<16x128xf32>
    %2162 = arith.addf %2130, %2161 : vector<16x128xf32>
    %c27_909 = arith.constant 27 : index
    %2163 = memref.load %arg9[%c27_909] : memref<144xf32, #tpu.memory_space<smem>>
    %2164 = vector.broadcast %2163 : f32 to vector<16x128xf32>
    %2165 = arith.mulf %2116, %2164 : vector<16x128xf32>
    %2166 = arith.addf %2134, %2165 : vector<16x128xf32>
    %c28_910 = arith.constant 28 : index
    %2167 = memref.load %arg9[%c28_910] : memref<144xf32, #tpu.memory_space<smem>>
    %2168 = vector.broadcast %2167 : f32 to vector<16x128xf32>
    %2169 = arith.mulf %2116, %2168 : vector<16x128xf32>
    %2170 = arith.addf %2138, %2169 : vector<16x128xf32>
    %c29_911 = arith.constant 29 : index
    %2171 = memref.load %arg9[%c29_911] : memref<144xf32, #tpu.memory_space<smem>>
    %2172 = vector.broadcast %2171 : f32 to vector<16x128xf32>
    %2173 = arith.mulf %2116, %2172 : vector<16x128xf32>
    %2174 = arith.addf %2142, %2173 : vector<16x128xf32>
    %c30_912 = arith.constant 30 : index
    %2175 = memref.load %arg9[%c30_912] : memref<144xf32, #tpu.memory_space<smem>>
    %2176 = vector.broadcast %2175 : f32 to vector<16x128xf32>
    %2177 = arith.mulf %2116, %2176 : vector<16x128xf32>
    %2178 = arith.addf %2146, %2177 : vector<16x128xf32>
    %c31_913 = arith.constant 31 : index
    %2179 = memref.load %arg9[%c31_913] : memref<144xf32, #tpu.memory_space<smem>>
    %2180 = vector.broadcast %2179 : f32 to vector<16x128xf32>
    %2181 = arith.mulf %2116, %2180 : vector<16x128xf32>
    %2182 = arith.addf %2150, %2181 : vector<16x128xf32>
    %c40_914 = arith.constant 40 : index
    %2183 = memref.load %arg9[%c40_914] : memref<144xf32, #tpu.memory_space<smem>>
    %2184 = vector.broadcast %2183 : f32 to vector<16x128xf32>
    %2185 = arith.mulf %2118, %2184 : vector<16x128xf32>
    %2186 = arith.addf %2154, %2185 : vector<16x128xf32>
    %c41_915 = arith.constant 41 : index
    %2187 = memref.load %arg9[%c41_915] : memref<144xf32, #tpu.memory_space<smem>>
    %2188 = vector.broadcast %2187 : f32 to vector<16x128xf32>
    %2189 = arith.mulf %2118, %2188 : vector<16x128xf32>
    %2190 = arith.addf %2158, %2189 : vector<16x128xf32>
    %c42_916 = arith.constant 42 : index
    %2191 = memref.load %arg9[%c42_916] : memref<144xf32, #tpu.memory_space<smem>>
    %2192 = vector.broadcast %2191 : f32 to vector<16x128xf32>
    %2193 = arith.mulf %2118, %2192 : vector<16x128xf32>
    %2194 = arith.addf %2162, %2193 : vector<16x128xf32>
    %c43_917 = arith.constant 43 : index
    %2195 = memref.load %arg9[%c43_917] : memref<144xf32, #tpu.memory_space<smem>>
    %2196 = vector.broadcast %2195 : f32 to vector<16x128xf32>
    %2197 = arith.mulf %2118, %2196 : vector<16x128xf32>
    %2198 = arith.addf %2166, %2197 : vector<16x128xf32>
    %c44_918 = arith.constant 44 : index
    %2199 = memref.load %arg9[%c44_918] : memref<144xf32, #tpu.memory_space<smem>>
    %2200 = vector.broadcast %2199 : f32 to vector<16x128xf32>
    %2201 = arith.mulf %2118, %2200 : vector<16x128xf32>
    %2202 = arith.addf %2170, %2201 : vector<16x128xf32>
    %c45_919 = arith.constant 45 : index
    %2203 = memref.load %arg9[%c45_919] : memref<144xf32, #tpu.memory_space<smem>>
    %2204 = vector.broadcast %2203 : f32 to vector<16x128xf32>
    %2205 = arith.mulf %2118, %2204 : vector<16x128xf32>
    %2206 = arith.addf %2174, %2205 : vector<16x128xf32>
    %c46_920 = arith.constant 46 : index
    %2207 = memref.load %arg9[%c46_920] : memref<144xf32, #tpu.memory_space<smem>>
    %2208 = vector.broadcast %2207 : f32 to vector<16x128xf32>
    %2209 = arith.mulf %2118, %2208 : vector<16x128xf32>
    %2210 = arith.addf %2178, %2209 : vector<16x128xf32>
    %c47_921 = arith.constant 47 : index
    %2211 = memref.load %arg9[%c47_921] : memref<144xf32, #tpu.memory_space<smem>>
    %2212 = vector.broadcast %2211 : f32 to vector<16x128xf32>
    %2213 = arith.mulf %2118, %2212 : vector<16x128xf32>
    %2214 = arith.addf %2182, %2213 : vector<16x128xf32>
    %c1_922 = arith.constant 1 : index
    %c1_923 = arith.constant 1 : index
    %c0_924 = arith.constant 0 : index
    %2215 = vector.load %arg26[%c1_922, %c1_923, %c0_924] : memref<2x24x128xf32, #tpu.memory_space<vmem>>, vector<1x16x128xf32>
    %2216 = vector.shape_cast %2215 : vector<1x16x128xf32> to vector<16x128xf32>
    %c1_i32_925 = arith.constant 1 : i32
    %2217 = tpu.dynamic_rotate %2216 by %c1_i32_925 dim 1 : vector<16x128xf32>, i32 -> vector<16x128xf32>
    %c127_i32_926 = arith.constant 127 : i32
    %2218 = tpu.dynamic_rotate %2216 by %c127_i32_926 dim 1 : vector<16x128xf32>, i32 -> vector<16x128xf32>
    %c56_927 = arith.constant 56 : index
    %2219 = memref.load %arg9[%c56_927] : memref<144xf32, #tpu.memory_space<smem>>
    %2220 = vector.broadcast %2219 : f32 to vector<16x128xf32>
    %2221 = arith.mulf %2217, %2220 : vector<16x128xf32>
    %2222 = arith.addf %2186, %2221 : vector<16x128xf32>
    %c57_928 = arith.constant 57 : index
    %2223 = memref.load %arg9[%c57_928] : memref<144xf32, #tpu.memory_space<smem>>
    %2224 = vector.broadcast %2223 : f32 to vector<16x128xf32>
    %2225 = arith.mulf %2217, %2224 : vector<16x128xf32>
    %2226 = arith.addf %2190, %2225 : vector<16x128xf32>
    %c58_929 = arith.constant 58 : index
    %2227 = memref.load %arg9[%c58_929] : memref<144xf32, #tpu.memory_space<smem>>
    %2228 = vector.broadcast %2227 : f32 to vector<16x128xf32>
    %2229 = arith.mulf %2217, %2228 : vector<16x128xf32>
    %2230 = arith.addf %2194, %2229 : vector<16x128xf32>
    %c59_930 = arith.constant 59 : index
    %2231 = memref.load %arg9[%c59_930] : memref<144xf32, #tpu.memory_space<smem>>
    %2232 = vector.broadcast %2231 : f32 to vector<16x128xf32>
    %2233 = arith.mulf %2217, %2232 : vector<16x128xf32>
    %2234 = arith.addf %2198, %2233 : vector<16x128xf32>
    %c60_931 = arith.constant 60 : index
    %2235 = memref.load %arg9[%c60_931] : memref<144xf32, #tpu.memory_space<smem>>
    %2236 = vector.broadcast %2235 : f32 to vector<16x128xf32>
    %2237 = arith.mulf %2217, %2236 : vector<16x128xf32>
    %2238 = arith.addf %2202, %2237 : vector<16x128xf32>
    %c61_932 = arith.constant 61 : index
    %2239 = memref.load %arg9[%c61_932] : memref<144xf32, #tpu.memory_space<smem>>
    %2240 = vector.broadcast %2239 : f32 to vector<16x128xf32>
    %2241 = arith.mulf %2217, %2240 : vector<16x128xf32>
    %2242 = arith.addf %2206, %2241 : vector<16x128xf32>
    %c62_933 = arith.constant 62 : index
    %2243 = memref.load %arg9[%c62_933] : memref<144xf32, #tpu.memory_space<smem>>
    %2244 = vector.broadcast %2243 : f32 to vector<16x128xf32>
    %2245 = arith.mulf %2217, %2244 : vector<16x128xf32>
    %2246 = arith.addf %2210, %2245 : vector<16x128xf32>
    %c63_934 = arith.constant 63 : index
    %2247 = memref.load %arg9[%c63_934] : memref<144xf32, #tpu.memory_space<smem>>
    %2248 = vector.broadcast %2247 : f32 to vector<16x128xf32>
    %2249 = arith.mulf %2217, %2248 : vector<16x128xf32>
    %2250 = arith.addf %2214, %2249 : vector<16x128xf32>
    %c72 = arith.constant 72 : index
    %2251 = memref.load %arg9[%c72] : memref<144xf32, #tpu.memory_space<smem>>
    %2252 = vector.broadcast %2251 : f32 to vector<16x128xf32>
    %2253 = arith.mulf %2216, %2252 : vector<16x128xf32>
    %2254 = arith.addf %2222, %2253 : vector<16x128xf32>
    %c73 = arith.constant 73 : index
    %2255 = memref.load %arg9[%c73] : memref<144xf32, #tpu.memory_space<smem>>
    %2256 = vector.broadcast %2255 : f32 to vector<16x128xf32>
    %2257 = arith.mulf %2216, %2256 : vector<16x128xf32>
    %2258 = arith.addf %2226, %2257 : vector<16x128xf32>
    %c74 = arith.constant 74 : index
    %2259 = memref.load %arg9[%c74] : memref<144xf32, #tpu.memory_space<smem>>
    %2260 = vector.broadcast %2259 : f32 to vector<16x128xf32>
    %2261 = arith.mulf %2216, %2260 : vector<16x128xf32>
    %2262 = arith.addf %2230, %2261 : vector<16x128xf32>
    %c75 = arith.constant 75 : index
    %2263 = memref.load %arg9[%c75] : memref<144xf32, #tpu.memory_space<smem>>
    %2264 = vector.broadcast %2263 : f32 to vector<16x128xf32>
    %2265 = arith.mulf %2216, %2264 : vector<16x128xf32>
    %2266 = arith.addf %2234, %2265 : vector<16x128xf32>
    %c76 = arith.constant 76 : index
    %2267 = memref.load %arg9[%c76] : memref<144xf32, #tpu.memory_space<smem>>
    %2268 = vector.broadcast %2267 : f32 to vector<16x128xf32>
    %2269 = arith.mulf %2216, %2268 : vector<16x128xf32>
    %2270 = arith.addf %2238, %2269 : vector<16x128xf32>
    %c77 = arith.constant 77 : index
    %2271 = memref.load %arg9[%c77] : memref<144xf32, #tpu.memory_space<smem>>
    %2272 = vector.broadcast %2271 : f32 to vector<16x128xf32>
    %2273 = arith.mulf %2216, %2272 : vector<16x128xf32>
    %2274 = arith.addf %2242, %2273 : vector<16x128xf32>
    %c78 = arith.constant 78 : index
    %2275 = memref.load %arg9[%c78] : memref<144xf32, #tpu.memory_space<smem>>
    %2276 = vector.broadcast %2275 : f32 to vector<16x128xf32>
    %2277 = arith.mulf %2216, %2276 : vector<16x128xf32>
    %2278 = arith.addf %2246, %2277 : vector<16x128xf32>
    %c79 = arith.constant 79 : index
    %2279 = memref.load %arg9[%c79] : memref<144xf32, #tpu.memory_space<smem>>
    %2280 = vector.broadcast %2279 : f32 to vector<16x128xf32>
    %2281 = arith.mulf %2216, %2280 : vector<16x128xf32>
    %2282 = arith.addf %2250, %2281 : vector<16x128xf32>
    %c88 = arith.constant 88 : index
    %2283 = memref.load %arg9[%c88] : memref<144xf32, #tpu.memory_space<smem>>
    %2284 = vector.broadcast %2283 : f32 to vector<16x128xf32>
    %2285 = arith.mulf %2218, %2284 : vector<16x128xf32>
    %2286 = arith.addf %2254, %2285 : vector<16x128xf32>
    %c89 = arith.constant 89 : index
    %2287 = memref.load %arg9[%c89] : memref<144xf32, #tpu.memory_space<smem>>
    %2288 = vector.broadcast %2287 : f32 to vector<16x128xf32>
    %2289 = arith.mulf %2218, %2288 : vector<16x128xf32>
    %2290 = arith.addf %2258, %2289 : vector<16x128xf32>
    %c90 = arith.constant 90 : index
    %2291 = memref.load %arg9[%c90] : memref<144xf32, #tpu.memory_space<smem>>
    %2292 = vector.broadcast %2291 : f32 to vector<16x128xf32>
    %2293 = arith.mulf %2218, %2292 : vector<16x128xf32>
    %2294 = arith.addf %2262, %2293 : vector<16x128xf32>
    %c91 = arith.constant 91 : index
    %2295 = memref.load %arg9[%c91] : memref<144xf32, #tpu.memory_space<smem>>
    %2296 = vector.broadcast %2295 : f32 to vector<16x128xf32>
    %2297 = arith.mulf %2218, %2296 : vector<16x128xf32>
    %2298 = arith.addf %2266, %2297 : vector<16x128xf32>
    %c92 = arith.constant 92 : index
    %2299 = memref.load %arg9[%c92] : memref<144xf32, #tpu.memory_space<smem>>
    %2300 = vector.broadcast %2299 : f32 to vector<16x128xf32>
    %2301 = arith.mulf %2218, %2300 : vector<16x128xf32>
    %2302 = arith.addf %2270, %2301 : vector<16x128xf32>
    %c93 = arith.constant 93 : index
    %2303 = memref.load %arg9[%c93] : memref<144xf32, #tpu.memory_space<smem>>
    %2304 = vector.broadcast %2303 : f32 to vector<16x128xf32>
    %2305 = arith.mulf %2218, %2304 : vector<16x128xf32>
    %2306 = arith.addf %2274, %2305 : vector<16x128xf32>
    %c94 = arith.constant 94 : index
    %2307 = memref.load %arg9[%c94] : memref<144xf32, #tpu.memory_space<smem>>
    %2308 = vector.broadcast %2307 : f32 to vector<16x128xf32>
    %2309 = arith.mulf %2218, %2308 : vector<16x128xf32>
    %2310 = arith.addf %2278, %2309 : vector<16x128xf32>
    %c95 = arith.constant 95 : index
    %2311 = memref.load %arg9[%c95] : memref<144xf32, #tpu.memory_space<smem>>
    %2312 = vector.broadcast %2311 : f32 to vector<16x128xf32>
    %2313 = arith.mulf %2218, %2312 : vector<16x128xf32>
    %2314 = arith.addf %2282, %2313 : vector<16x128xf32>
    %c1_935 = arith.constant 1 : index
    %c2_936 = arith.constant 2 : index
    %c0_937 = arith.constant 0 : index
    %2315 = vector.load %arg26[%c1_935, %c2_936, %c0_937] : memref<2x24x128xf32, #tpu.memory_space<vmem>>, vector<1x16x128xf32>
    %2316 = vector.shape_cast %2315 : vector<1x16x128xf32> to vector<16x128xf32>
    %c1_i32_938 = arith.constant 1 : i32
    %2317 = tpu.dynamic_rotate %2316 by %c1_i32_938 dim 1 : vector<16x128xf32>, i32 -> vector<16x128xf32>
    %c127_i32_939 = arith.constant 127 : i32
    %2318 = tpu.dynamic_rotate %2316 by %c127_i32_939 dim 1 : vector<16x128xf32>, i32 -> vector<16x128xf32>
    %c104 = arith.constant 104 : index
    %2319 = memref.load %arg9[%c104] : memref<144xf32, #tpu.memory_space<smem>>
    %2320 = vector.broadcast %2319 : f32 to vector<16x128xf32>
    %2321 = arith.mulf %2317, %2320 : vector<16x128xf32>
    %2322 = arith.addf %2286, %2321 : vector<16x128xf32>
    %c105 = arith.constant 105 : index
    %2323 = memref.load %arg9[%c105] : memref<144xf32, #tpu.memory_space<smem>>
    %2324 = vector.broadcast %2323 : f32 to vector<16x128xf32>
    %2325 = arith.mulf %2317, %2324 : vector<16x128xf32>
    %2326 = arith.addf %2290, %2325 : vector<16x128xf32>
    %c106 = arith.constant 106 : index
    %2327 = memref.load %arg9[%c106] : memref<144xf32, #tpu.memory_space<smem>>
    %2328 = vector.broadcast %2327 : f32 to vector<16x128xf32>
    %2329 = arith.mulf %2317, %2328 : vector<16x128xf32>
    %2330 = arith.addf %2294, %2329 : vector<16x128xf32>
    %c107 = arith.constant 107 : index
    %2331 = memref.load %arg9[%c107] : memref<144xf32, #tpu.memory_space<smem>>
    %2332 = vector.broadcast %2331 : f32 to vector<16x128xf32>
    %2333 = arith.mulf %2317, %2332 : vector<16x128xf32>
    %2334 = arith.addf %2298, %2333 : vector<16x128xf32>
    %c108 = arith.constant 108 : index
    %2335 = memref.load %arg9[%c108] : memref<144xf32, #tpu.memory_space<smem>>
    %2336 = vector.broadcast %2335 : f32 to vector<16x128xf32>
    %2337 = arith.mulf %2317, %2336 : vector<16x128xf32>
    %2338 = arith.addf %2302, %2337 : vector<16x128xf32>
    %c109 = arith.constant 109 : index
    %2339 = memref.load %arg9[%c109] : memref<144xf32, #tpu.memory_space<smem>>
    %2340 = vector.broadcast %2339 : f32 to vector<16x128xf32>
    %2341 = arith.mulf %2317, %2340 : vector<16x128xf32>
    %2342 = arith.addf %2306, %2341 : vector<16x128xf32>
    %c110 = arith.constant 110 : index
    %2343 = memref.load %arg9[%c110] : memref<144xf32, #tpu.memory_space<smem>>
    %2344 = vector.broadcast %2343 : f32 to vector<16x128xf32>
    %2345 = arith.mulf %2317, %2344 : vector<16x128xf32>
    %2346 = arith.addf %2310, %2345 : vector<16x128xf32>
    %c111 = arith.constant 111 : index
    %2347 = memref.load %arg9[%c111] : memref<144xf32, #tpu.memory_space<smem>>
    %2348 = vector.broadcast %2347 : f32 to vector<16x128xf32>
    %2349 = arith.mulf %2317, %2348 : vector<16x128xf32>
    %2350 = arith.addf %2314, %2349 : vector<16x128xf32>
    %c120 = arith.constant 120 : index
    %2351 = memref.load %arg9[%c120] : memref<144xf32, #tpu.memory_space<smem>>
    %2352 = vector.broadcast %2351 : f32 to vector<16x128xf32>
    %2353 = arith.mulf %2316, %2352 : vector<16x128xf32>
    %2354 = arith.addf %2322, %2353 : vector<16x128xf32>
    %c121 = arith.constant 121 : index
    %2355 = memref.load %arg9[%c121] : memref<144xf32, #tpu.memory_space<smem>>
    %2356 = vector.broadcast %2355 : f32 to vector<16x128xf32>
    %2357 = arith.mulf %2316, %2356 : vector<16x128xf32>
    %2358 = arith.addf %2326, %2357 : vector<16x128xf32>
    %c122 = arith.constant 122 : index
    %2359 = memref.load %arg9[%c122] : memref<144xf32, #tpu.memory_space<smem>>
    %2360 = vector.broadcast %2359 : f32 to vector<16x128xf32>
    %2361 = arith.mulf %2316, %2360 : vector<16x128xf32>
    %2362 = arith.addf %2330, %2361 : vector<16x128xf32>
    %c123 = arith.constant 123 : index
    %2363 = memref.load %arg9[%c123] : memref<144xf32, #tpu.memory_space<smem>>
    %2364 = vector.broadcast %2363 : f32 to vector<16x128xf32>
    %2365 = arith.mulf %2316, %2364 : vector<16x128xf32>
    %2366 = arith.addf %2334, %2365 : vector<16x128xf32>
    %c124 = arith.constant 124 : index
    %2367 = memref.load %arg9[%c124] : memref<144xf32, #tpu.memory_space<smem>>
    %2368 = vector.broadcast %2367 : f32 to vector<16x128xf32>
    %2369 = arith.mulf %2316, %2368 : vector<16x128xf32>
    %2370 = arith.addf %2338, %2369 : vector<16x128xf32>
    %c125 = arith.constant 125 : index
    %2371 = memref.load %arg9[%c125] : memref<144xf32, #tpu.memory_space<smem>>
    %2372 = vector.broadcast %2371 : f32 to vector<16x128xf32>
    %2373 = arith.mulf %2316, %2372 : vector<16x128xf32>
    %2374 = arith.addf %2342, %2373 : vector<16x128xf32>
    %c126 = arith.constant 126 : index
    %2375 = memref.load %arg9[%c126] : memref<144xf32, #tpu.memory_space<smem>>
    %2376 = vector.broadcast %2375 : f32 to vector<16x128xf32>
    %2377 = arith.mulf %2316, %2376 : vector<16x128xf32>
    %2378 = arith.addf %2346, %2377 : vector<16x128xf32>
    %c127 = arith.constant 127 : index
    %2379 = memref.load %arg9[%c127] : memref<144xf32, #tpu.memory_space<smem>>
    %2380 = vector.broadcast %2379 : f32 to vector<16x128xf32>
    %2381 = arith.mulf %2316, %2380 : vector<16x128xf32>
    %2382 = arith.addf %2350, %2381 : vector<16x128xf32>
    %c136 = arith.constant 136 : index
    %2383 = memref.load %arg9[%c136] : memref<144xf32, #tpu.memory_space<smem>>
    %2384 = vector.broadcast %2383 : f32 to vector<16x128xf32>
    %2385 = arith.mulf %2318, %2384 : vector<16x128xf32>
    %2386 = arith.addf %2354, %2385 : vector<16x128xf32>
    %c137 = arith.constant 137 : index
    %2387 = memref.load %arg9[%c137] : memref<144xf32, #tpu.memory_space<smem>>
    %2388 = vector.broadcast %2387 : f32 to vector<16x128xf32>
    %2389 = arith.mulf %2318, %2388 : vector<16x128xf32>
    %2390 = arith.addf %2358, %2389 : vector<16x128xf32>
    %c138 = arith.constant 138 : index
    %2391 = memref.load %arg9[%c138] : memref<144xf32, #tpu.memory_space<smem>>
    %2392 = vector.broadcast %2391 : f32 to vector<16x128xf32>
    %2393 = arith.mulf %2318, %2392 : vector<16x128xf32>
    %2394 = arith.addf %2362, %2393 : vector<16x128xf32>
    %c139 = arith.constant 139 : index
    %2395 = memref.load %arg9[%c139] : memref<144xf32, #tpu.memory_space<smem>>
    %2396 = vector.broadcast %2395 : f32 to vector<16x128xf32>
    %2397 = arith.mulf %2318, %2396 : vector<16x128xf32>
    %2398 = arith.addf %2366, %2397 : vector<16x128xf32>
    %c140 = arith.constant 140 : index
    %2399 = memref.load %arg9[%c140] : memref<144xf32, #tpu.memory_space<smem>>
    %2400 = vector.broadcast %2399 : f32 to vector<16x128xf32>
    %2401 = arith.mulf %2318, %2400 : vector<16x128xf32>
    %2402 = arith.addf %2370, %2401 : vector<16x128xf32>
    %c141 = arith.constant 141 : index
    %2403 = memref.load %arg9[%c141] : memref<144xf32, #tpu.memory_space<smem>>
    %2404 = vector.broadcast %2403 : f32 to vector<16x128xf32>
    %2405 = arith.mulf %2318, %2404 : vector<16x128xf32>
    %2406 = arith.addf %2374, %2405 : vector<16x128xf32>
    %c142 = arith.constant 142 : index
    %2407 = memref.load %arg9[%c142] : memref<144xf32, #tpu.memory_space<smem>>
    %2408 = vector.broadcast %2407 : f32 to vector<16x128xf32>
    %2409 = arith.mulf %2318, %2408 : vector<16x128xf32>
    %2410 = arith.addf %2378, %2409 : vector<16x128xf32>
    %c143 = arith.constant 143 : index
    %2411 = memref.load %arg9[%c143] : memref<144xf32, #tpu.memory_space<smem>>
    %2412 = vector.broadcast %2411 : f32 to vector<16x128xf32>
    %2413 = arith.mulf %2318, %2412 : vector<16x128xf32>
    %2414 = arith.addf %2382, %2413 : vector<16x128xf32>
    %cst_940 = arith.constant 0.000000e+00 : f32
    %2415 = vector.broadcast %cst_940 : f32 to vector<16x128xf32>
    %2416 = arith.maximumf %2386, %2415 : vector<16x128xf32>
    %cst_941 = arith.constant 0.000000e+00 : f32
    %2417 = vector.broadcast %cst_941 : f32 to vector<16x128xf32>
    %2418 = arith.maximumf %2390, %2417 : vector<16x128xf32>
    %cst_942 = arith.constant 0.000000e+00 : f32
    %2419 = vector.broadcast %cst_942 : f32 to vector<16x128xf32>
    %2420 = arith.maximumf %2394, %2419 : vector<16x128xf32>
    %cst_943 = arith.constant 0.000000e+00 : f32
    %2421 = vector.broadcast %cst_943 : f32 to vector<16x128xf32>
    %2422 = arith.maximumf %2398, %2421 : vector<16x128xf32>
    %cst_944 = arith.constant 0.000000e+00 : f32
    %2423 = vector.broadcast %cst_944 : f32 to vector<16x128xf32>
    %2424 = arith.maximumf %2402, %2423 : vector<16x128xf32>
    %cst_945 = arith.constant 0.000000e+00 : f32
    %2425 = vector.broadcast %cst_945 : f32 to vector<16x128xf32>
    %2426 = arith.maximumf %2406, %2425 : vector<16x128xf32>
    %cst_946 = arith.constant 0.000000e+00 : f32
    %2427 = vector.broadcast %cst_946 : f32 to vector<16x128xf32>
    %2428 = arith.maximumf %2410, %2427 : vector<16x128xf32>
    %cst_947 = arith.constant 0.000000e+00 : f32
    %2429 = vector.broadcast %cst_947 : f32 to vector<16x128xf32>
    %2430 = arith.maximumf %2414, %2429 : vector<16x128xf32>
    %cst_948 = arith.constant 0.000000e+00 : f32
    %2431 = vector.broadcast %cst_948 : f32 to vector<16x128xf32>
    %2432 = arith.select %1782, %2416, %2431 : vector<16x128xi1>, vector<16x128xf32>
    %c0_949 = arith.constant 0 : index
    %c1_950 = arith.constant 1 : index
    %c0_951 = arith.constant 0 : index
    %2433 = vector.load %arg27[%c0_949, %c1_950, %c0_951] : memref<8x24x128xf32, #tpu.memory_space<vmem>>, vector<1x16x128xf32>
    %2434 = vector.shape_cast %2433 : vector<1x16x128xf32> to vector<16x128xf32>
    %2435 = vector.shape_cast %2432 : vector<16x128xf32> to vector<1x16x128xf32>
    tpu.vector_store %arg27[%c0_949, %c1_950, %c0_951], %2435 {strides = array<i32>} : memref<8x24x128xf32, #tpu.memory_space<vmem>>, vector<1x16x128xf32>,
    %cst_952 = arith.constant 0.000000e+00 : f32
    %2436 = vector.broadcast %cst_952 : f32 to vector<16x128xf32>
    %2437 = arith.select %1782, %2418, %2436 : vector<16x128xi1>, vector<16x128xf32>
    %c1_953 = arith.constant 1 : index
    %c1_954 = arith.constant 1 : index
    %c0_955 = arith.constant 0 : index
    %2438 = vector.load %arg27[%c1_953, %c1_954, %c0_955] : memref<8x24x128xf32, #tpu.memory_space<vmem>>, vector<1x16x128xf32>
    %2439 = vector.shape_cast %2438 : vector<1x16x128xf32> to vector<16x128xf32>
    %2440 = vector.shape_cast %2437 : vector<16x128xf32> to vector<1x16x128xf32>
    tpu.vector_store %arg27[%c1_953, %c1_954, %c0_955], %2440 {strides = array<i32>} : memref<8x24x128xf32, #tpu.memory_space<vmem>>, vector<1x16x128xf32>,
    %cst_956 = arith.constant 0.000000e+00 : f32
    %2441 = vector.broadcast %cst_956 : f32 to vector<16x128xf32>
    %2442 = arith.select %1782, %2420, %2441 : vector<16x128xi1>, vector<16x128xf32>
    %c2_957 = arith.constant 2 : index
    %c1_958 = arith.constant 1 : index
    %c0_959 = arith.constant 0 : index
    %2443 = vector.load %arg27[%c2_957, %c1_958, %c0_959] : memref<8x24x128xf32, #tpu.memory_space<vmem>>, vector<1x16x128xf32>
    %2444 = vector.shape_cast %2443 : vector<1x16x128xf32> to vector<16x128xf32>
    %2445 = vector.shape_cast %2442 : vector<16x128xf32> to vector<1x16x128xf32>
    tpu.vector_store %arg27[%c2_957, %c1_958, %c0_959], %2445 {strides = array<i32>} : memref<8x24x128xf32, #tpu.memory_space<vmem>>, vector<1x16x128xf32>,
    %cst_960 = arith.constant 0.000000e+00 : f32
    %2446 = vector.broadcast %cst_960 : f32 to vector<16x128xf32>
    %2447 = arith.select %1782, %2422, %2446 : vector<16x128xi1>, vector<16x128xf32>
    %c3_961 = arith.constant 3 : index
    %c1_962 = arith.constant 1 : index
    %c0_963 = arith.constant 0 : index
    %2448 = vector.load %arg27[%c3_961, %c1_962, %c0_963] : memref<8x24x128xf32, #tpu.memory_space<vmem>>, vector<1x16x128xf32>
    %2449 = vector.shape_cast %2448 : vector<1x16x128xf32> to vector<16x128xf32>
    %2450 = vector.shape_cast %2447 : vector<16x128xf32> to vector<1x16x128xf32>
    tpu.vector_store %arg27[%c3_961, %c1_962, %c0_963], %2450 {strides = array<i32>} : memref<8x24x128xf32, #tpu.memory_space<vmem>>, vector<1x16x128xf32>,
    %cst_964 = arith.constant 0.000000e+00 : f32
    %2451 = vector.broadcast %cst_964 : f32 to vector<16x128xf32>
    %2452 = arith.select %1782, %2424, %2451 : vector<16x128xi1>, vector<16x128xf32>
    %c4_965 = arith.constant 4 : index
    %c1_966 = arith.constant 1 : index
    %c0_967 = arith.constant 0 : index
    %2453 = vector.load %arg27[%c4_965, %c1_966, %c0_967] : memref<8x24x128xf32, #tpu.memory_space<vmem>>, vector<1x16x128xf32>
    %2454 = vector.shape_cast %2453 : vector<1x16x128xf32> to vector<16x128xf32>
    %2455 = vector.shape_cast %2452 : vector<16x128xf32> to vector<1x16x128xf32>
    tpu.vector_store %arg27[%c4_965, %c1_966, %c0_967], %2455 {strides = array<i32>} : memref<8x24x128xf32, #tpu.memory_space<vmem>>, vector<1x16x128xf32>,
    %cst_968 = arith.constant 0.000000e+00 : f32
    %2456 = vector.broadcast %cst_968 : f32 to vector<16x128xf32>
    %2457 = arith.select %1782, %2426, %2456 : vector<16x128xi1>, vector<16x128xf32>
    %c5_969 = arith.constant 5 : index
    %c1_970 = arith.constant 1 : index
    %c0_971 = arith.constant 0 : index
    %2458 = vector.load %arg27[%c5_969, %c1_970, %c0_971] : memref<8x24x128xf32, #tpu.memory_space<vmem>>, vector<1x16x128xf32>
    %2459 = vector.shape_cast %2458 : vector<1x16x128xf32> to vector<16x128xf32>
    %2460 = vector.shape_cast %2457 : vector<16x128xf32> to vector<1x16x128xf32>
    tpu.vector_store %arg27[%c5_969, %c1_970, %c0_971], %2460 {strides = array<i32>} : memref<8x24x128xf32, #tpu.memory_space<vmem>>, vector<1x16x128xf32>,
    %cst_972 = arith.constant 0.000000e+00 : f32
    %2461 = vector.broadcast %cst_972 : f32 to vector<16x128xf32>
    %2462 = arith.select %1782, %2428, %2461 : vector<16x128xi1>, vector<16x128xf32>
    %c6_973 = arith.constant 6 : index
    %c1_974 = arith.constant 1 : index
    %c0_975 = arith.constant 0 : index
    %2463 = vector.load %arg27[%c6_973, %c1_974, %c0_975] : memref<8x24x128xf32, #tpu.memory_space<vmem>>, vector<1x16x128xf32>
    %2464 = vector.shape_cast %2463 : vector<1x16x128xf32> to vector<16x128xf32>
    %2465 = vector.shape_cast %2462 : vector<16x128xf32> to vector<1x16x128xf32>
    tpu.vector_store %arg27[%c6_973, %c1_974, %c0_975], %2465 {strides = array<i32>} : memref<8x24x128xf32, #tpu.memory_space<vmem>>, vector<1x16x128xf32>,
    %cst_976 = arith.constant 0.000000e+00 : f32
    %2466 = vector.broadcast %cst_976 : f32 to vector<16x128xf32>
    %2467 = arith.select %1782, %2430, %2466 : vector<16x128xi1>, vector<16x128xf32>
    %c7_977 = arith.constant 7 : index
    %c1_978 = arith.constant 1 : index
    %c0_979 = arith.constant 0 : index
    %2468 = vector.load %arg27[%c7_977, %c1_978, %c0_979] : memref<8x24x128xf32, #tpu.memory_space<vmem>>, vector<1x16x128xf32>
    %2469 = vector.shape_cast %2468 : vector<1x16x128xf32> to vector<16x128xf32>
    %2470 = vector.shape_cast %2467 : vector<16x128xf32> to vector<1x16x128xf32>
    tpu.vector_store %arg27[%c7_977, %c1_978, %c0_979], %2470 {strides = array<i32>} : memref<8x24x128xf32, #tpu.memory_space<vmem>>, vector<1x16x128xf32>,
    %cst_980 = arith.constant 0.000000e+00 : f32
    %2471 = vector.broadcast %cst_980 : f32 to vector<16x128xf32>
    %c0_981 = arith.constant 0 : index
    %2472 = memref.load %arg12[%c0_981] : memref<1xf32, #tpu.memory_space<smem>>
    %2473 = vector.broadcast %2472 : f32 to vector<16x128xf32>
    %2474 = arith.addf %2471, %2473 : vector<16x128xf32>
    %c0_982 = arith.constant 0 : index
    %c0_983 = arith.constant 0 : index
    %c0_984 = arith.constant 0 : index
    %2475 = vector.load %arg27[%c0_982, %c0_983, %c0_984] : memref<8x24x128xf32, #tpu.memory_space<vmem>>, vector<1x16x128xf32>
    %2476 = vector.shape_cast %2475 : vector<1x16x128xf32> to vector<16x128xf32>
    %c1_i32_985 = arith.constant 1 : i32
    %2477 = tpu.dynamic_rotate %2476 by %c1_i32_985 dim 1 : vector<16x128xf32>, i32 -> vector<16x128xf32>
    %c127_i32_986 = arith.constant 127 : i32
    %2478 = tpu.dynamic_rotate %2476 by %c127_i32_986 dim 1 : vector<16x128xf32>, i32 -> vector<16x128xf32>
    %c0_987 = arith.constant 0 : index
    %2479 = memref.load %arg11[%c0_987] : memref<72xf32, #tpu.memory_space<smem>>
    %2480 = vector.broadcast %2479 : f32 to vector<16x128xf32>
    %2481 = arith.mulf %2477, %2480 : vector<16x128xf32>
    %2482 = arith.addf %2474, %2481 : vector<16x128xf32>
    %c8_988 = arith.constant 8 : index
    %2483 = memref.load %arg11[%c8_988] : memref<72xf32, #tpu.memory_space<smem>>
    %2484 = vector.broadcast %2483 : f32 to vector<16x128xf32>
    %2485 = arith.mulf %2476, %2484 : vector<16x128xf32>
    %2486 = arith.addf %2482, %2485 : vector<16x128xf32>
    %c16_989 = arith.constant 16 : index
    %2487 = memref.load %arg11[%c16_989] : memref<72xf32, #tpu.memory_space<smem>>
    %2488 = vector.broadcast %2487 : f32 to vector<16x128xf32>
    %2489 = arith.mulf %2478, %2488 : vector<16x128xf32>
    %2490 = arith.addf %2486, %2489 : vector<16x128xf32>
    %c0_990 = arith.constant 0 : index
    %c1_991 = arith.constant 1 : index
    %c0_992 = arith.constant 0 : index
    %2491 = vector.load %arg27[%c0_990, %c1_991, %c0_992] : memref<8x24x128xf32, #tpu.memory_space<vmem>>, vector<1x16x128xf32>
    %2492 = vector.shape_cast %2491 : vector<1x16x128xf32> to vector<16x128xf32>
    %c1_i32_993 = arith.constant 1 : i32
    %2493 = tpu.dynamic_rotate %2492 by %c1_i32_993 dim 1 : vector<16x128xf32>, i32 -> vector<16x128xf32>
    %c127_i32_994 = arith.constant 127 : i32
    %2494 = tpu.dynamic_rotate %2492 by %c127_i32_994 dim 1 : vector<16x128xf32>, i32 -> vector<16x128xf32>
    %c24_995 = arith.constant 24 : index
    %2495 = memref.load %arg11[%c24_995] : memref<72xf32, #tpu.memory_space<smem>>
    %2496 = vector.broadcast %2495 : f32 to vector<16x128xf32>
    %2497 = arith.mulf %2493, %2496 : vector<16x128xf32>
    %2498 = arith.addf %2490, %2497 : vector<16x128xf32>
    %c32_996 = arith.constant 32 : index
    %2499 = memref.load %arg11[%c32_996] : memref<72xf32, #tpu.memory_space<smem>>
    %2500 = vector.broadcast %2499 : f32 to vector<16x128xf32>
    %2501 = arith.mulf %2492, %2500 : vector<16x128xf32>
    %2502 = arith.addf %2498, %2501 : vector<16x128xf32>
    %c40_997 = arith.constant 40 : index
    %2503 = memref.load %arg11[%c40_997] : memref<72xf32, #tpu.memory_space<smem>>
    %2504 = vector.broadcast %2503 : f32 to vector<16x128xf32>
    %2505 = arith.mulf %2494, %2504 : vector<16x128xf32>
    %2506 = arith.addf %2502, %2505 : vector<16x128xf32>
    %c0_998 = arith.constant 0 : index
    %c2_999 = arith.constant 2 : index
    %c0_1000 = arith.constant 0 : index
    %2507 = vector.load %arg27[%c0_998, %c2_999, %c0_1000] : memref<8x24x128xf32, #tpu.memory_space<vmem>>, vector<1x16x128xf32>
    %2508 = vector.shape_cast %2507 : vector<1x16x128xf32> to vector<16x128xf32>
    %c1_i32_1001 = arith.constant 1 : i32
    %2509 = tpu.dynamic_rotate %2508 by %c1_i32_1001 dim 1 : vector<16x128xf32>, i32 -> vector<16x128xf32>
    %c127_i32_1002 = arith.constant 127 : i32
    %2510 = tpu.dynamic_rotate %2508 by %c127_i32_1002 dim 1 : vector<16x128xf32>, i32 -> vector<16x128xf32>
    %c48_1003 = arith.constant 48 : index
    %2511 = memref.load %arg11[%c48_1003] : memref<72xf32, #tpu.memory_space<smem>>
    %2512 = vector.broadcast %2511 : f32 to vector<16x128xf32>
    %2513 = arith.mulf %2509, %2512 : vector<16x128xf32>
    %2514 = arith.addf %2506, %2513 : vector<16x128xf32>
    %c56_1004 = arith.constant 56 : index
    %2515 = memref.load %arg11[%c56_1004] : memref<72xf32, #tpu.memory_space<smem>>
    %2516 = vector.broadcast %2515 : f32 to vector<16x128xf32>
    %2517 = arith.mulf %2508, %2516 : vector<16x128xf32>
    %2518 = arith.addf %2514, %2517 : vector<16x128xf32>
    %c64_1005 = arith.constant 64 : index
    %2519 = memref.load %arg11[%c64_1005] : memref<72xf32, #tpu.memory_space<smem>>
    %2520 = vector.broadcast %2519 : f32 to vector<16x128xf32>
    %2521 = arith.mulf %2510, %2520 : vector<16x128xf32>
    %2522 = arith.addf %2518, %2521 : vector<16x128xf32>
    %c1_1006 = arith.constant 1 : index
    %c0_1007 = arith.constant 0 : index
    %c0_1008 = arith.constant 0 : index
    %2523 = vector.load %arg27[%c1_1006, %c0_1007, %c0_1008] : memref<8x24x128xf32, #tpu.memory_space<vmem>>, vector<1x16x128xf32>
    %2524 = vector.shape_cast %2523 : vector<1x16x128xf32> to vector<16x128xf32>
    %c1_i32_1009 = arith.constant 1 : i32
    %2525 = tpu.dynamic_rotate %2524 by %c1_i32_1009 dim 1 : vector<16x128xf32>, i32 -> vector<16x128xf32>
    %c127_i32_1010 = arith.constant 127 : i32
    %2526 = tpu.dynamic_rotate %2524 by %c127_i32_1010 dim 1 : vector<16x128xf32>, i32 -> vector<16x128xf32>
    %c1_1011 = arith.constant 1 : index
    %2527 = memref.load %arg11[%c1_1011] : memref<72xf32, #tpu.memory_space<smem>>
    %2528 = vector.broadcast %2527 : f32 to vector<16x128xf32>
    %2529 = arith.mulf %2525, %2528 : vector<16x128xf32>
    %2530 = arith.addf %2522, %2529 : vector<16x128xf32>
    %c9_1012 = arith.constant 9 : index
    %2531 = memref.load %arg11[%c9_1012] : memref<72xf32, #tpu.memory_space<smem>>
    %2532 = vector.broadcast %2531 : f32 to vector<16x128xf32>
    %2533 = arith.mulf %2524, %2532 : vector<16x128xf32>
    %2534 = arith.addf %2530, %2533 : vector<16x128xf32>
    %c17_1013 = arith.constant 17 : index
    %2535 = memref.load %arg11[%c17_1013] : memref<72xf32, #tpu.memory_space<smem>>
    %2536 = vector.broadcast %2535 : f32 to vector<16x128xf32>
    %2537 = arith.mulf %2526, %2536 : vector<16x128xf32>
    %2538 = arith.addf %2534, %2537 : vector<16x128xf32>
    %c1_1014 = arith.constant 1 : index
    %c1_1015 = arith.constant 1 : index
    %c0_1016 = arith.constant 0 : index
    %2539 = vector.load %arg27[%c1_1014, %c1_1015, %c0_1016] : memref<8x24x128xf32, #tpu.memory_space<vmem>>, vector<1x16x128xf32>
    %2540 = vector.shape_cast %2539 : vector<1x16x128xf32> to vector<16x128xf32>
    %c1_i32_1017 = arith.constant 1 : i32
    %2541 = tpu.dynamic_rotate %2540 by %c1_i32_1017 dim 1 : vector<16x128xf32>, i32 -> vector<16x128xf32>
    %c127_i32_1018 = arith.constant 127 : i32
    %2542 = tpu.dynamic_rotate %2540 by %c127_i32_1018 dim 1 : vector<16x128xf32>, i32 -> vector<16x128xf32>
    %c25_1019 = arith.constant 25 : index
    %2543 = memref.load %arg11[%c25_1019] : memref<72xf32, #tpu.memory_space<smem>>
    %2544 = vector.broadcast %2543 : f32 to vector<16x128xf32>
    %2545 = arith.mulf %2541, %2544 : vector<16x128xf32>
    %2546 = arith.addf %2538, %2545 : vector<16x128xf32>
    %c33_1020 = arith.constant 33 : index
    %2547 = memref.load %arg11[%c33_1020] : memref<72xf32, #tpu.memory_space<smem>>
    %2548 = vector.broadcast %2547 : f32 to vector<16x128xf32>
    %2549 = arith.mulf %2540, %2548 : vector<16x128xf32>
    %2550 = arith.addf %2546, %2549 : vector<16x128xf32>
    %c41_1021 = arith.constant 41 : index
    %2551 = memref.load %arg11[%c41_1021] : memref<72xf32, #tpu.memory_space<smem>>
    %2552 = vector.broadcast %2551 : f32 to vector<16x128xf32>
    %2553 = arith.mulf %2542, %2552 : vector<16x128xf32>
    %2554 = arith.addf %2550, %2553 : vector<16x128xf32>
    %c1_1022 = arith.constant 1 : index
    %c2_1023 = arith.constant 2 : index
    %c0_1024 = arith.constant 0 : index
    %2555 = vector.load %arg27[%c1_1022, %c2_1023, %c0_1024] : memref<8x24x128xf32, #tpu.memory_space<vmem>>, vector<1x16x128xf32>
    %2556 = vector.shape_cast %2555 : vector<1x16x128xf32> to vector<16x128xf32>
    %c1_i32_1025 = arith.constant 1 : i32
    %2557 = tpu.dynamic_rotate %2556 by %c1_i32_1025 dim 1 : vector<16x128xf32>, i32 -> vector<16x128xf32>
    %c127_i32_1026 = arith.constant 127 : i32
    %2558 = tpu.dynamic_rotate %2556 by %c127_i32_1026 dim 1 : vector<16x128xf32>, i32 -> vector<16x128xf32>
    %c49_1027 = arith.constant 49 : index
    %2559 = memref.load %arg11[%c49_1027] : memref<72xf32, #tpu.memory_space<smem>>
    %2560 = vector.broadcast %2559 : f32 to vector<16x128xf32>
    %2561 = arith.mulf %2557, %2560 : vector<16x128xf32>
    %2562 = arith.addf %2554, %2561 : vector<16x128xf32>
    %c57_1028 = arith.constant 57 : index
    %2563 = memref.load %arg11[%c57_1028] : memref<72xf32, #tpu.memory_space<smem>>
    %2564 = vector.broadcast %2563 : f32 to vector<16x128xf32>
    %2565 = arith.mulf %2556, %2564 : vector<16x128xf32>
    %2566 = arith.addf %2562, %2565 : vector<16x128xf32>
    %c65_1029 = arith.constant 65 : index
    %2567 = memref.load %arg11[%c65_1029] : memref<72xf32, #tpu.memory_space<smem>>
    %2568 = vector.broadcast %2567 : f32 to vector<16x128xf32>
    %2569 = arith.mulf %2558, %2568 : vector<16x128xf32>
    %2570 = arith.addf %2566, %2569 : vector<16x128xf32>
    %c2_1030 = arith.constant 2 : index
    %c0_1031 = arith.constant 0 : index
    %c0_1032 = arith.constant 0 : index
    %2571 = vector.load %arg27[%c2_1030, %c0_1031, %c0_1032] : memref<8x24x128xf32, #tpu.memory_space<vmem>>, vector<1x16x128xf32>
    %2572 = vector.shape_cast %2571 : vector<1x16x128xf32> to vector<16x128xf32>
    %c1_i32_1033 = arith.constant 1 : i32
    %2573 = tpu.dynamic_rotate %2572 by %c1_i32_1033 dim 1 : vector<16x128xf32>, i32 -> vector<16x128xf32>
    %c127_i32_1034 = arith.constant 127 : i32
    %2574 = tpu.dynamic_rotate %2572 by %c127_i32_1034 dim 1 : vector<16x128xf32>, i32 -> vector<16x128xf32>
    %c2_1035 = arith.constant 2 : index
    %2575 = memref.load %arg11[%c2_1035] : memref<72xf32, #tpu.memory_space<smem>>
    %2576 = vector.broadcast %2575 : f32 to vector<16x128xf32>
    %2577 = arith.mulf %2573, %2576 : vector<16x128xf32>
    %2578 = arith.addf %2570, %2577 : vector<16x128xf32>
    %c10_1036 = arith.constant 10 : index
    %2579 = memref.load %arg11[%c10_1036] : memref<72xf32, #tpu.memory_space<smem>>
    %2580 = vector.broadcast %2579 : f32 to vector<16x128xf32>
    %2581 = arith.mulf %2572, %2580 : vector<16x128xf32>
    %2582 = arith.addf %2578, %2581 : vector<16x128xf32>
    %c18_1037 = arith.constant 18 : index
    %2583 = memref.load %arg11[%c18_1037] : memref<72xf32, #tpu.memory_space<smem>>
    %2584 = vector.broadcast %2583 : f32 to vector<16x128xf32>
    %2585 = arith.mulf %2574, %2584 : vector<16x128xf32>
    %2586 = arith.addf %2582, %2585 : vector<16x128xf32>
    %c2_1038 = arith.constant 2 : index
    %c1_1039 = arith.constant 1 : index
    %c0_1040 = arith.constant 0 : index
    %2587 = vector.load %arg27[%c2_1038, %c1_1039, %c0_1040] : memref<8x24x128xf32, #tpu.memory_space<vmem>>, vector<1x16x128xf32>
    %2588 = vector.shape_cast %2587 : vector<1x16x128xf32> to vector<16x128xf32>
    %c1_i32_1041 = arith.constant 1 : i32
    %2589 = tpu.dynamic_rotate %2588 by %c1_i32_1041 dim 1 : vector<16x128xf32>, i32 -> vector<16x128xf32>
    %c127_i32_1042 = arith.constant 127 : i32
    %2590 = tpu.dynamic_rotate %2588 by %c127_i32_1042 dim 1 : vector<16x128xf32>, i32 -> vector<16x128xf32>
    %c26_1043 = arith.constant 26 : index
    %2591 = memref.load %arg11[%c26_1043] : memref<72xf32, #tpu.memory_space<smem>>
    %2592 = vector.broadcast %2591 : f32 to vector<16x128xf32>
    %2593 = arith.mulf %2589, %2592 : vector<16x128xf32>
    %2594 = arith.addf %2586, %2593 : vector<16x128xf32>
    %c34_1044 = arith.constant 34 : index
    %2595 = memref.load %arg11[%c34_1044] : memref<72xf32, #tpu.memory_space<smem>>
    %2596 = vector.broadcast %2595 : f32 to vector<16x128xf32>
    %2597 = arith.mulf %2588, %2596 : vector<16x128xf32>
    %2598 = arith.addf %2594, %2597 : vector<16x128xf32>
    %c42_1045 = arith.constant 42 : index
    %2599 = memref.load %arg11[%c42_1045] : memref<72xf32, #tpu.memory_space<smem>>
    %2600 = vector.broadcast %2599 : f32 to vector<16x128xf32>
    %2601 = arith.mulf %2590, %2600 : vector<16x128xf32>
    %2602 = arith.addf %2598, %2601 : vector<16x128xf32>
    %c2_1046 = arith.constant 2 : index
    %c2_1047 = arith.constant 2 : index
    %c0_1048 = arith.constant 0 : index
    %2603 = vector.load %arg27[%c2_1046, %c2_1047, %c0_1048] : memref<8x24x128xf32, #tpu.memory_space<vmem>>, vector<1x16x128xf32>
    %2604 = vector.shape_cast %2603 : vector<1x16x128xf32> to vector<16x128xf32>
    %c1_i32_1049 = arith.constant 1 : i32
    %2605 = tpu.dynamic_rotate %2604 by %c1_i32_1049 dim 1 : vector<16x128xf32>, i32 -> vector<16x128xf32>
    %c127_i32_1050 = arith.constant 127 : i32
    %2606 = tpu.dynamic_rotate %2604 by %c127_i32_1050 dim 1 : vector<16x128xf32>, i32 -> vector<16x128xf32>
    %c50_1051 = arith.constant 50 : index
    %2607 = memref.load %arg11[%c50_1051] : memref<72xf32, #tpu.memory_space<smem>>
    %2608 = vector.broadcast %2607 : f32 to vector<16x128xf32>
    %2609 = arith.mulf %2605, %2608 : vector<16x128xf32>
    %2610 = arith.addf %2602, %2609 : vector<16x128xf32>
    %c58_1052 = arith.constant 58 : index
    %2611 = memref.load %arg11[%c58_1052] : memref<72xf32, #tpu.memory_space<smem>>
    %2612 = vector.broadcast %2611 : f32 to vector<16x128xf32>
    %2613 = arith.mulf %2604, %2612 : vector<16x128xf32>
    %2614 = arith.addf %2610, %2613 : vector<16x128xf32>
    %c66_1053 = arith.constant 66 : index
    %2615 = memref.load %arg11[%c66_1053] : memref<72xf32, #tpu.memory_space<smem>>
    %2616 = vector.broadcast %2615 : f32 to vector<16x128xf32>
    %2617 = arith.mulf %2606, %2616 : vector<16x128xf32>
    %2618 = arith.addf %2614, %2617 : vector<16x128xf32>
    %c3_1054 = arith.constant 3 : index
    %c0_1055 = arith.constant 0 : index
    %c0_1056 = arith.constant 0 : index
    %2619 = vector.load %arg27[%c3_1054, %c0_1055, %c0_1056] : memref<8x24x128xf32, #tpu.memory_space<vmem>>, vector<1x16x128xf32>
    %2620 = vector.shape_cast %2619 : vector<1x16x128xf32> to vector<16x128xf32>
    %c1_i32_1057 = arith.constant 1 : i32
    %2621 = tpu.dynamic_rotate %2620 by %c1_i32_1057 dim 1 : vector<16x128xf32>, i32 -> vector<16x128xf32>
    %c127_i32_1058 = arith.constant 127 : i32
    %2622 = tpu.dynamic_rotate %2620 by %c127_i32_1058 dim 1 : vector<16x128xf32>, i32 -> vector<16x128xf32>
    %c3_1059 = arith.constant 3 : index
    %2623 = memref.load %arg11[%c3_1059] : memref<72xf32, #tpu.memory_space<smem>>
    %2624 = vector.broadcast %2623 : f32 to vector<16x128xf32>
    %2625 = arith.mulf %2621, %2624 : vector<16x128xf32>
    %2626 = arith.addf %2618, %2625 : vector<16x128xf32>
    %c11_1060 = arith.constant 11 : index
    %2627 = memref.load %arg11[%c11_1060] : memref<72xf32, #tpu.memory_space<smem>>
    %2628 = vector.broadcast %2627 : f32 to vector<16x128xf32>
    %2629 = arith.mulf %2620, %2628 : vector<16x128xf32>
    %2630 = arith.addf %2626, %2629 : vector<16x128xf32>
    %c19_1061 = arith.constant 19 : index
    %2631 = memref.load %arg11[%c19_1061] : memref<72xf32, #tpu.memory_space<smem>>
    %2632 = vector.broadcast %2631 : f32 to vector<16x128xf32>
    %2633 = arith.mulf %2622, %2632 : vector<16x128xf32>
    %2634 = arith.addf %2630, %2633 : vector<16x128xf32>
    %c3_1062 = arith.constant 3 : index
    %c1_1063 = arith.constant 1 : index
    %c0_1064 = arith.constant 0 : index
    %2635 = vector.load %arg27[%c3_1062, %c1_1063, %c0_1064] : memref<8x24x128xf32, #tpu.memory_space<vmem>>, vector<1x16x128xf32>
    %2636 = vector.shape_cast %2635 : vector<1x16x128xf32> to vector<16x128xf32>
    %c1_i32_1065 = arith.constant 1 : i32
    %2637 = tpu.dynamic_rotate %2636 by %c1_i32_1065 dim 1 : vector<16x128xf32>, i32 -> vector<16x128xf32>
    %c127_i32_1066 = arith.constant 127 : i32
    %2638 = tpu.dynamic_rotate %2636 by %c127_i32_1066 dim 1 : vector<16x128xf32>, i32 -> vector<16x128xf32>
    %c27_1067 = arith.constant 27 : index
    %2639 = memref.load %arg11[%c27_1067] : memref<72xf32, #tpu.memory_space<smem>>
    %2640 = vector.broadcast %2639 : f32 to vector<16x128xf32>
    %2641 = arith.mulf %2637, %2640 : vector<16x128xf32>
    %2642 = arith.addf %2634, %2641 : vector<16x128xf32>
    %c35_1068 = arith.constant 35 : index
    %2643 = memref.load %arg11[%c35_1068] : memref<72xf32, #tpu.memory_space<smem>>
    %2644 = vector.broadcast %2643 : f32 to vector<16x128xf32>
    %2645 = arith.mulf %2636, %2644 : vector<16x128xf32>
    %2646 = arith.addf %2642, %2645 : vector<16x128xf32>
    %c43_1069 = arith.constant 43 : index
    %2647 = memref.load %arg11[%c43_1069] : memref<72xf32, #tpu.memory_space<smem>>
    %2648 = vector.broadcast %2647 : f32 to vector<16x128xf32>
    %2649 = arith.mulf %2638, %2648 : vector<16x128xf32>
    %2650 = arith.addf %2646, %2649 : vector<16x128xf32>
    %c3_1070 = arith.constant 3 : index
    %c2_1071 = arith.constant 2 : index
    %c0_1072 = arith.constant 0 : index
    %2651 = vector.load %arg27[%c3_1070, %c2_1071, %c0_1072] : memref<8x24x128xf32, #tpu.memory_space<vmem>>, vector<1x16x128xf32>
    %2652 = vector.shape_cast %2651 : vector<1x16x128xf32> to vector<16x128xf32>
    %c1_i32_1073 = arith.constant 1 : i32
    %2653 = tpu.dynamic_rotate %2652 by %c1_i32_1073 dim 1 : vector<16x128xf32>, i32 -> vector<16x128xf32>
    %c127_i32_1074 = arith.constant 127 : i32
    %2654 = tpu.dynamic_rotate %2652 by %c127_i32_1074 dim 1 : vector<16x128xf32>, i32 -> vector<16x128xf32>
    %c51_1075 = arith.constant 51 : index
    %2655 = memref.load %arg11[%c51_1075] : memref<72xf32, #tpu.memory_space<smem>>
    %2656 = vector.broadcast %2655 : f32 to vector<16x128xf32>
    %2657 = arith.mulf %2653, %2656 : vector<16x128xf32>
    %2658 = arith.addf %2650, %2657 : vector<16x128xf32>
    %c59_1076 = arith.constant 59 : index
    %2659 = memref.load %arg11[%c59_1076] : memref<72xf32, #tpu.memory_space<smem>>
    %2660 = vector.broadcast %2659 : f32 to vector<16x128xf32>
    %2661 = arith.mulf %2652, %2660 : vector<16x128xf32>
    %2662 = arith.addf %2658, %2661 : vector<16x128xf32>
    %c67_1077 = arith.constant 67 : index
    %2663 = memref.load %arg11[%c67_1077] : memref<72xf32, #tpu.memory_space<smem>>
    %2664 = vector.broadcast %2663 : f32 to vector<16x128xf32>
    %2665 = arith.mulf %2654, %2664 : vector<16x128xf32>
    %2666 = arith.addf %2662, %2665 : vector<16x128xf32>
    %c4_1078 = arith.constant 4 : index
    %c0_1079 = arith.constant 0 : index
    %c0_1080 = arith.constant 0 : index
    %2667 = vector.load %arg27[%c4_1078, %c0_1079, %c0_1080] : memref<8x24x128xf32, #tpu.memory_space<vmem>>, vector<1x16x128xf32>
    %2668 = vector.shape_cast %2667 : vector<1x16x128xf32> to vector<16x128xf32>
    %c1_i32_1081 = arith.constant 1 : i32
    %2669 = tpu.dynamic_rotate %2668 by %c1_i32_1081 dim 1 : vector<16x128xf32>, i32 -> vector<16x128xf32>
    %c127_i32_1082 = arith.constant 127 : i32
    %2670 = tpu.dynamic_rotate %2668 by %c127_i32_1082 dim 1 : vector<16x128xf32>, i32 -> vector<16x128xf32>
    %c4_1083 = arith.constant 4 : index
    %2671 = memref.load %arg11[%c4_1083] : memref<72xf32, #tpu.memory_space<smem>>
    %2672 = vector.broadcast %2671 : f32 to vector<16x128xf32>
    %2673 = arith.mulf %2669, %2672 : vector<16x128xf32>
    %2674 = arith.addf %2666, %2673 : vector<16x128xf32>
    %c12_1084 = arith.constant 12 : index
    %2675 = memref.load %arg11[%c12_1084] : memref<72xf32, #tpu.memory_space<smem>>
    %2676 = vector.broadcast %2675 : f32 to vector<16x128xf32>
    %2677 = arith.mulf %2668, %2676 : vector<16x128xf32>
    %2678 = arith.addf %2674, %2677 : vector<16x128xf32>
    %c20_1085 = arith.constant 20 : index
    %2679 = memref.load %arg11[%c20_1085] : memref<72xf32, #tpu.memory_space<smem>>
    %2680 = vector.broadcast %2679 : f32 to vector<16x128xf32>
    %2681 = arith.mulf %2670, %2680 : vector<16x128xf32>
    %2682 = arith.addf %2678, %2681 : vector<16x128xf32>
    %c4_1086 = arith.constant 4 : index
    %c1_1087 = arith.constant 1 : index
    %c0_1088 = arith.constant 0 : index
    %2683 = vector.load %arg27[%c4_1086, %c1_1087, %c0_1088] : memref<8x24x128xf32, #tpu.memory_space<vmem>>, vector<1x16x128xf32>
    %2684 = vector.shape_cast %2683 : vector<1x16x128xf32> to vector<16x128xf32>
    %c1_i32_1089 = arith.constant 1 : i32
    %2685 = tpu.dynamic_rotate %2684 by %c1_i32_1089 dim 1 : vector<16x128xf32>, i32 -> vector<16x128xf32>
    %c127_i32_1090 = arith.constant 127 : i32
    %2686 = tpu.dynamic_rotate %2684 by %c127_i32_1090 dim 1 : vector<16x128xf32>, i32 -> vector<16x128xf32>
    %c28_1091 = arith.constant 28 : index
    %2687 = memref.load %arg11[%c28_1091] : memref<72xf32, #tpu.memory_space<smem>>
    %2688 = vector.broadcast %2687 : f32 to vector<16x128xf32>
    %2689 = arith.mulf %2685, %2688 : vector<16x128xf32>
    %2690 = arith.addf %2682, %2689 : vector<16x128xf32>
    %c36_1092 = arith.constant 36 : index
    %2691 = memref.load %arg11[%c36_1092] : memref<72xf32, #tpu.memory_space<smem>>
    %2692 = vector.broadcast %2691 : f32 to vector<16x128xf32>
    %2693 = arith.mulf %2684, %2692 : vector<16x128xf32>
    %2694 = arith.addf %2690, %2693 : vector<16x128xf32>
    %c44_1093 = arith.constant 44 : index
    %2695 = memref.load %arg11[%c44_1093] : memref<72xf32, #tpu.memory_space<smem>>
    %2696 = vector.broadcast %2695 : f32 to vector<16x128xf32>
    %2697 = arith.mulf %2686, %2696 : vector<16x128xf32>
    %2698 = arith.addf %2694, %2697 : vector<16x128xf32>
    %c4_1094 = arith.constant 4 : index
    %c2_1095 = arith.constant 2 : index
    %c0_1096 = arith.constant 0 : index
    %2699 = vector.load %arg27[%c4_1094, %c2_1095, %c0_1096] : memref<8x24x128xf32, #tpu.memory_space<vmem>>, vector<1x16x128xf32>
    %2700 = vector.shape_cast %2699 : vector<1x16x128xf32> to vector<16x128xf32>
    %c1_i32_1097 = arith.constant 1 : i32
    %2701 = tpu.dynamic_rotate %2700 by %c1_i32_1097 dim 1 : vector<16x128xf32>, i32 -> vector<16x128xf32>
    %c127_i32_1098 = arith.constant 127 : i32
    %2702 = tpu.dynamic_rotate %2700 by %c127_i32_1098 dim 1 : vector<16x128xf32>, i32 -> vector<16x128xf32>
    %c52_1099 = arith.constant 52 : index
    %2703 = memref.load %arg11[%c52_1099] : memref<72xf32, #tpu.memory_space<smem>>
    %2704 = vector.broadcast %2703 : f32 to vector<16x128xf32>
    %2705 = arith.mulf %2701, %2704 : vector<16x128xf32>
    %2706 = arith.addf %2698, %2705 : vector<16x128xf32>
    %c60_1100 = arith.constant 60 : index
    %2707 = memref.load %arg11[%c60_1100] : memref<72xf32, #tpu.memory_space<smem>>
    %2708 = vector.broadcast %2707 : f32 to vector<16x128xf32>
    %2709 = arith.mulf %2700, %2708 : vector<16x128xf32>
    %2710 = arith.addf %2706, %2709 : vector<16x128xf32>
    %c68_1101 = arith.constant 68 : index
    %2711 = memref.load %arg11[%c68_1101] : memref<72xf32, #tpu.memory_space<smem>>
    %2712 = vector.broadcast %2711 : f32 to vector<16x128xf32>
    %2713 = arith.mulf %2702, %2712 : vector<16x128xf32>
    %2714 = arith.addf %2710, %2713 : vector<16x128xf32>
    %c5_1102 = arith.constant 5 : index
    %c0_1103 = arith.constant 0 : index
    %c0_1104 = arith.constant 0 : index
    %2715 = vector.load %arg27[%c5_1102, %c0_1103, %c0_1104] : memref<8x24x128xf32, #tpu.memory_space<vmem>>, vector<1x16x128xf32>
    %2716 = vector.shape_cast %2715 : vector<1x16x128xf32> to vector<16x128xf32>
    %c1_i32_1105 = arith.constant 1 : i32
    %2717 = tpu.dynamic_rotate %2716 by %c1_i32_1105 dim 1 : vector<16x128xf32>, i32 -> vector<16x128xf32>
    %c127_i32_1106 = arith.constant 127 : i32
    %2718 = tpu.dynamic_rotate %2716 by %c127_i32_1106 dim 1 : vector<16x128xf32>, i32 -> vector<16x128xf32>
    %c5_1107 = arith.constant 5 : index
    %2719 = memref.load %arg11[%c5_1107] : memref<72xf32, #tpu.memory_space<smem>>
    %2720 = vector.broadcast %2719 : f32 to vector<16x128xf32>
    %2721 = arith.mulf %2717, %2720 : vector<16x128xf32>
    %2722 = arith.addf %2714, %2721 : vector<16x128xf32>
    %c13_1108 = arith.constant 13 : index
    %2723 = memref.load %arg11[%c13_1108] : memref<72xf32, #tpu.memory_space<smem>>
    %2724 = vector.broadcast %2723 : f32 to vector<16x128xf32>
    %2725 = arith.mulf %2716, %2724 : vector<16x128xf32>
    %2726 = arith.addf %2722, %2725 : vector<16x128xf32>
    %c21_1109 = arith.constant 21 : index
    %2727 = memref.load %arg11[%c21_1109] : memref<72xf32, #tpu.memory_space<smem>>
    %2728 = vector.broadcast %2727 : f32 to vector<16x128xf32>
    %2729 = arith.mulf %2718, %2728 : vector<16x128xf32>
    %2730 = arith.addf %2726, %2729 : vector<16x128xf32>
    %c5_1110 = arith.constant 5 : index
    %c1_1111 = arith.constant 1 : index
    %c0_1112 = arith.constant 0 : index
    %2731 = vector.load %arg27[%c5_1110, %c1_1111, %c0_1112] : memref<8x24x128xf32, #tpu.memory_space<vmem>>, vector<1x16x128xf32>
    %2732 = vector.shape_cast %2731 : vector<1x16x128xf32> to vector<16x128xf32>
    %c1_i32_1113 = arith.constant 1 : i32
    %2733 = tpu.dynamic_rotate %2732 by %c1_i32_1113 dim 1 : vector<16x128xf32>, i32 -> vector<16x128xf32>
    %c127_i32_1114 = arith.constant 127 : i32
    %2734 = tpu.dynamic_rotate %2732 by %c127_i32_1114 dim 1 : vector<16x128xf32>, i32 -> vector<16x128xf32>
    %c29_1115 = arith.constant 29 : index
    %2735 = memref.load %arg11[%c29_1115] : memref<72xf32, #tpu.memory_space<smem>>
    %2736 = vector.broadcast %2735 : f32 to vector<16x128xf32>
    %2737 = arith.mulf %2733, %2736 : vector<16x128xf32>
    %2738 = arith.addf %2730, %2737 : vector<16x128xf32>
    %c37_1116 = arith.constant 37 : index
    %2739 = memref.load %arg11[%c37_1116] : memref<72xf32, #tpu.memory_space<smem>>
    %2740 = vector.broadcast %2739 : f32 to vector<16x128xf32>
    %2741 = arith.mulf %2732, %2740 : vector<16x128xf32>
    %2742 = arith.addf %2738, %2741 : vector<16x128xf32>
    %c45_1117 = arith.constant 45 : index
    %2743 = memref.load %arg11[%c45_1117] : memref<72xf32, #tpu.memory_space<smem>>
    %2744 = vector.broadcast %2743 : f32 to vector<16x128xf32>
    %2745 = arith.mulf %2734, %2744 : vector<16x128xf32>
    %2746 = arith.addf %2742, %2745 : vector<16x128xf32>
    %c5_1118 = arith.constant 5 : index
    %c2_1119 = arith.constant 2 : index
    %c0_1120 = arith.constant 0 : index
    %2747 = vector.load %arg27[%c5_1118, %c2_1119, %c0_1120] : memref<8x24x128xf32, #tpu.memory_space<vmem>>, vector<1x16x128xf32>
    %2748 = vector.shape_cast %2747 : vector<1x16x128xf32> to vector<16x128xf32>
    %c1_i32_1121 = arith.constant 1 : i32
    %2749 = tpu.dynamic_rotate %2748 by %c1_i32_1121 dim 1 : vector<16x128xf32>, i32 -> vector<16x128xf32>
    %c127_i32_1122 = arith.constant 127 : i32
    %2750 = tpu.dynamic_rotate %2748 by %c127_i32_1122 dim 1 : vector<16x128xf32>, i32 -> vector<16x128xf32>
    %c53_1123 = arith.constant 53 : index
    %2751 = memref.load %arg11[%c53_1123] : memref<72xf32, #tpu.memory_space<smem>>
    %2752 = vector.broadcast %2751 : f32 to vector<16x128xf32>
    %2753 = arith.mulf %2749, %2752 : vector<16x128xf32>
    %2754 = arith.addf %2746, %2753 : vector<16x128xf32>
    %c61_1124 = arith.constant 61 : index
    %2755 = memref.load %arg11[%c61_1124] : memref<72xf32, #tpu.memory_space<smem>>
    %2756 = vector.broadcast %2755 : f32 to vector<16x128xf32>
    %2757 = arith.mulf %2748, %2756 : vector<16x128xf32>
    %2758 = arith.addf %2754, %2757 : vector<16x128xf32>
    %c69_1125 = arith.constant 69 : index
    %2759 = memref.load %arg11[%c69_1125] : memref<72xf32, #tpu.memory_space<smem>>
    %2760 = vector.broadcast %2759 : f32 to vector<16x128xf32>
    %2761 = arith.mulf %2750, %2760 : vector<16x128xf32>
    %2762 = arith.addf %2758, %2761 : vector<16x128xf32>
    %c6_1126 = arith.constant 6 : index
    %c0_1127 = arith.constant 0 : index
    %c0_1128 = arith.constant 0 : index
    %2763 = vector.load %arg27[%c6_1126, %c0_1127, %c0_1128] : memref<8x24x128xf32, #tpu.memory_space<vmem>>, vector<1x16x128xf32>
    %2764 = vector.shape_cast %2763 : vector<1x16x128xf32> to vector<16x128xf32>
    %c1_i32_1129 = arith.constant 1 : i32
    %2765 = tpu.dynamic_rotate %2764 by %c1_i32_1129 dim 1 : vector<16x128xf32>, i32 -> vector<16x128xf32>
    %c127_i32_1130 = arith.constant 127 : i32
    %2766 = tpu.dynamic_rotate %2764 by %c127_i32_1130 dim 1 : vector<16x128xf32>, i32 -> vector<16x128xf32>
    %c6_1131 = arith.constant 6 : index
    %2767 = memref.load %arg11[%c6_1131] : memref<72xf32, #tpu.memory_space<smem>>
    %2768 = vector.broadcast %2767 : f32 to vector<16x128xf32>
    %2769 = arith.mulf %2765, %2768 : vector<16x128xf32>
    %2770 = arith.addf %2762, %2769 : vector<16x128xf32>
    %c14_1132 = arith.constant 14 : index
    %2771 = memref.load %arg11[%c14_1132] : memref<72xf32, #tpu.memory_space<smem>>
    %2772 = vector.broadcast %2771 : f32 to vector<16x128xf32>
    %2773 = arith.mulf %2764, %2772 : vector<16x128xf32>
    %2774 = arith.addf %2770, %2773 : vector<16x128xf32>
    %c22_1133 = arith.constant 22 : index
    %2775 = memref.load %arg11[%c22_1133] : memref<72xf32, #tpu.memory_space<smem>>
    %2776 = vector.broadcast %2775 : f32 to vector<16x128xf32>
    %2777 = arith.mulf %2766, %2776 : vector<16x128xf32>
    %2778 = arith.addf %2774, %2777 : vector<16x128xf32>
    %c6_1134 = arith.constant 6 : index
    %c1_1135 = arith.constant 1 : index
    %c0_1136 = arith.constant 0 : index
    %2779 = vector.load %arg27[%c6_1134, %c1_1135, %c0_1136] : memref<8x24x128xf32, #tpu.memory_space<vmem>>, vector<1x16x128xf32>
    %2780 = vector.shape_cast %2779 : vector<1x16x128xf32> to vector<16x128xf32>
    %c1_i32_1137 = arith.constant 1 : i32
    %2781 = tpu.dynamic_rotate %2780 by %c1_i32_1137 dim 1 : vector<16x128xf32>, i32 -> vector<16x128xf32>
    %c127_i32_1138 = arith.constant 127 : i32
    %2782 = tpu.dynamic_rotate %2780 by %c127_i32_1138 dim 1 : vector<16x128xf32>, i32 -> vector<16x128xf32>
    %c30_1139 = arith.constant 30 : index
    %2783 = memref.load %arg11[%c30_1139] : memref<72xf32, #tpu.memory_space<smem>>
    %2784 = vector.broadcast %2783 : f32 to vector<16x128xf32>
    %2785 = arith.mulf %2781, %2784 : vector<16x128xf32>
    %2786 = arith.addf %2778, %2785 : vector<16x128xf32>
    %c38_1140 = arith.constant 38 : index
    %2787 = memref.load %arg11[%c38_1140] : memref<72xf32, #tpu.memory_space<smem>>
    %2788 = vector.broadcast %2787 : f32 to vector<16x128xf32>
    %2789 = arith.mulf %2780, %2788 : vector<16x128xf32>
    %2790 = arith.addf %2786, %2789 : vector<16x128xf32>
    %c46_1141 = arith.constant 46 : index
    %2791 = memref.load %arg11[%c46_1141] : memref<72xf32, #tpu.memory_space<smem>>
    %2792 = vector.broadcast %2791 : f32 to vector<16x128xf32>
    %2793 = arith.mulf %2782, %2792 : vector<16x128xf32>
    %2794 = arith.addf %2790, %2793 : vector<16x128xf32>
    %c6_1142 = arith.constant 6 : index
    %c2_1143 = arith.constant 2 : index
    %c0_1144 = arith.constant 0 : index
    %2795 = vector.load %arg27[%c6_1142, %c2_1143, %c0_1144] : memref<8x24x128xf32, #tpu.memory_space<vmem>>, vector<1x16x128xf32>
    %2796 = vector.shape_cast %2795 : vector<1x16x128xf32> to vector<16x128xf32>
    %c1_i32_1145 = arith.constant 1 : i32
    %2797 = tpu.dynamic_rotate %2796 by %c1_i32_1145 dim 1 : vector<16x128xf32>, i32 -> vector<16x128xf32>
    %c127_i32_1146 = arith.constant 127 : i32
    %2798 = tpu.dynamic_rotate %2796 by %c127_i32_1146 dim 1 : vector<16x128xf32>, i32 -> vector<16x128xf32>
    %c54_1147 = arith.constant 54 : index
    %2799 = memref.load %arg11[%c54_1147] : memref<72xf32, #tpu.memory_space<smem>>
    %2800 = vector.broadcast %2799 : f32 to vector<16x128xf32>
    %2801 = arith.mulf %2797, %2800 : vector<16x128xf32>
    %2802 = arith.addf %2794, %2801 : vector<16x128xf32>
    %c62_1148 = arith.constant 62 : index
    %2803 = memref.load %arg11[%c62_1148] : memref<72xf32, #tpu.memory_space<smem>>
    %2804 = vector.broadcast %2803 : f32 to vector<16x128xf32>
    %2805 = arith.mulf %2796, %2804 : vector<16x128xf32>
    %2806 = arith.addf %2802, %2805 : vector<16x128xf32>
    %c70_1149 = arith.constant 70 : index
    %2807 = memref.load %arg11[%c70_1149] : memref<72xf32, #tpu.memory_space<smem>>
    %2808 = vector.broadcast %2807 : f32 to vector<16x128xf32>
    %2809 = arith.mulf %2798, %2808 : vector<16x128xf32>
    %2810 = arith.addf %2806, %2809 : vector<16x128xf32>
    %c7_1150 = arith.constant 7 : index
    %c0_1151 = arith.constant 0 : index
    %c0_1152 = arith.constant 0 : index
    %2811 = vector.load %arg27[%c7_1150, %c0_1151, %c0_1152] : memref<8x24x128xf32, #tpu.memory_space<vmem>>, vector<1x16x128xf32>
    %2812 = vector.shape_cast %2811 : vector<1x16x128xf32> to vector<16x128xf32>
    %c1_i32_1153 = arith.constant 1 : i32
    %2813 = tpu.dynamic_rotate %2812 by %c1_i32_1153 dim 1 : vector<16x128xf32>, i32 -> vector<16x128xf32>
    %c127_i32_1154 = arith.constant 127 : i32
    %2814 = tpu.dynamic_rotate %2812 by %c127_i32_1154 dim 1 : vector<16x128xf32>, i32 -> vector<16x128xf32>
    %c7_1155 = arith.constant 7 : index
    %2815 = memref.load %arg11[%c7_1155] : memref<72xf32, #tpu.memory_space<smem>>
    %2816 = vector.broadcast %2815 : f32 to vector<16x128xf32>
    %2817 = arith.mulf %2813, %2816 : vector<16x128xf32>
    %2818 = arith.addf %2810, %2817 : vector<16x128xf32>
    %c15_1156 = arith.constant 15 : index
    %2819 = memref.load %arg11[%c15_1156] : memref<72xf32, #tpu.memory_space<smem>>
    %2820 = vector.broadcast %2819 : f32 to vector<16x128xf32>
    %2821 = arith.mulf %2812, %2820 : vector<16x128xf32>
    %2822 = arith.addf %2818, %2821 : vector<16x128xf32>
    %c23_1157 = arith.constant 23 : index
    %2823 = memref.load %arg11[%c23_1157] : memref<72xf32, #tpu.memory_space<smem>>
    %2824 = vector.broadcast %2823 : f32 to vector<16x128xf32>
    %2825 = arith.mulf %2814, %2824 : vector<16x128xf32>
    %2826 = arith.addf %2822, %2825 : vector<16x128xf32>
    %c7_1158 = arith.constant 7 : index
    %c1_1159 = arith.constant 1 : index
    %c0_1160 = arith.constant 0 : index
    %2827 = vector.load %arg27[%c7_1158, %c1_1159, %c0_1160] : memref<8x24x128xf32, #tpu.memory_space<vmem>>, vector<1x16x128xf32>
    %2828 = vector.shape_cast %2827 : vector<1x16x128xf32> to vector<16x128xf32>
    %c1_i32_1161 = arith.constant 1 : i32
    %2829 = tpu.dynamic_rotate %2828 by %c1_i32_1161 dim 1 : vector<16x128xf32>, i32 -> vector<16x128xf32>
    %c127_i32_1162 = arith.constant 127 : i32
    %2830 = tpu.dynamic_rotate %2828 by %c127_i32_1162 dim 1 : vector<16x128xf32>, i32 -> vector<16x128xf32>
    %c31_1163 = arith.constant 31 : index
    %2831 = memref.load %arg11[%c31_1163] : memref<72xf32, #tpu.memory_space<smem>>
    %2832 = vector.broadcast %2831 : f32 to vector<16x128xf32>
    %2833 = arith.mulf %2829, %2832 : vector<16x128xf32>
    %2834 = arith.addf %2826, %2833 : vector<16x128xf32>
    %c39_1164 = arith.constant 39 : index
    %2835 = memref.load %arg11[%c39_1164] : memref<72xf32, #tpu.memory_space<smem>>
    %2836 = vector.broadcast %2835 : f32 to vector<16x128xf32>
    %2837 = arith.mulf %2828, %2836 : vector<16x128xf32>
    %2838 = arith.addf %2834, %2837 : vector<16x128xf32>
    %c47_1165 = arith.constant 47 : index
    %2839 = memref.load %arg11[%c47_1165] : memref<72xf32, #tpu.memory_space<smem>>
    %2840 = vector.broadcast %2839 : f32 to vector<16x128xf32>
    %2841 = arith.mulf %2830, %2840 : vector<16x128xf32>
    %2842 = arith.addf %2838, %2841 : vector<16x128xf32>
    %c7_1166 = arith.constant 7 : index
    %c2_1167 = arith.constant 2 : index
    %c0_1168 = arith.constant 0 : index
    %2843 = vector.load %arg27[%c7_1166, %c2_1167, %c0_1168] : memref<8x24x128xf32, #tpu.memory_space<vmem>>, vector<1x16x128xf32>
    %2844 = vector.shape_cast %2843 : vector<1x16x128xf32> to vector<16x128xf32>
    %c1_i32_1169 = arith.constant 1 : i32
    %2845 = tpu.dynamic_rotate %2844 by %c1_i32_1169 dim 1 : vector<16x128xf32>, i32 -> vector<16x128xf32>
    %c127_i32_1170 = arith.constant 127 : i32
    %2846 = tpu.dynamic_rotate %2844 by %c127_i32_1170 dim 1 : vector<16x128xf32>, i32 -> vector<16x128xf32>
    %c55_1171 = arith.constant 55 : index
    %2847 = memref.load %arg11[%c55_1171] : memref<72xf32, #tpu.memory_space<smem>>
    %2848 = vector.broadcast %2847 : f32 to vector<16x128xf32>
    %2849 = arith.mulf %2845, %2848 : vector<16x128xf32>
    %2850 = arith.addf %2842, %2849 : vector<16x128xf32>
    %c63_1172 = arith.constant 63 : index
    %2851 = memref.load %arg11[%c63_1172] : memref<72xf32, #tpu.memory_space<smem>>
    %2852 = vector.broadcast %2851 : f32 to vector<16x128xf32>
    %2853 = arith.mulf %2844, %2852 : vector<16x128xf32>
    %2854 = arith.addf %2850, %2853 : vector<16x128xf32>
    %c71_1173 = arith.constant 71 : index
    %2855 = memref.load %arg11[%c71_1173] : memref<72xf32, #tpu.memory_space<smem>>
    %2856 = vector.broadcast %2855 : f32 to vector<16x128xf32>
    %2857 = arith.mulf %2846, %2856 : vector<16x128xf32>
    %2858 = arith.addf %2854, %2857 : vector<16x128xf32>
    %cst_1174 = arith.constant 0.000000e+00 : f32
    %2859 = vector.broadcast %cst_1174 : f32 to vector<16x128xf32>
    %2860 = arith.select %1782, %2858, %2859 : vector<16x128xi1>, vector<16x128xf32>
    %2861 = arith.addf %1767, %2860 : vector<16x128xf32>
    %2862 = vector.extract_strided_slice %2861 {offsets = [0, 0], sizes = [16, 16], strides = [1, 1]} : vector<16x128xf32> to vector<16x16xf32>
    %c0_1175 = arith.constant 0 : index
    %c0_1176 = arith.constant 0 : index
    %c0_1177 = arith.constant 0 : index
    %2863 = vector.load %arg19[%c0_1175, %c0_1176, %c0_1177] : memref<1x16x16xf32, #tpu.memory_space<vmem>>, vector<1x16x16xf32>
    %2864 = vector.shape_cast %2863 : vector<1x16x16xf32> to vector<16x16xf32>
    %2865 = vector.shape_cast %2862 : vector<16x16xf32> to vector<1x16x16xf32>
    tpu.vector_store %arg19[%c0_1175, %c0_1176, %c0_1177], %2865 {strides = array<i32>} : memref<1x16x16xf32, #tpu.memory_space<vmem>>, vector<1x16x16xf32>,
    return
  }
  func.func @transform_0(%arg0: i32, %arg1: memref<72xf32, #tpu.memory_space<smem>>, %arg2: memref<8xf32, #tpu.memory_space<smem>>, %arg3: memref<72xf32, #tpu.memory_space<smem>>, %arg4: memref<1xf32, #tpu.memory_space<smem>>, %arg5: memref<72xf32, #tpu.memory_space<smem>>, %arg6: memref<8xf32, #tpu.memory_space<smem>>, %arg7: memref<72xf32, #tpu.memory_space<smem>>, %arg8: memref<1xf32, #tpu.memory_space<smem>>, %arg9: memref<144xf32, #tpu.memory_space<smem>>, %arg10: memref<8xf32, #tpu.memory_space<smem>>, %arg11: memref<72xf32, #tpu.memory_space<smem>>, %arg12: memref<1xf32, #tpu.memory_space<smem>>) -> (i32, i32, i32) {
    %c0_i32 = arith.constant 0 : i32
    %c0_i32_0 = arith.constant 0 : i32
    %c0_i32_1 = arith.constant 0 : i32
    return %arg0, %c0_i32, %c0_i32_0 : i32, i32, i32
  }
  func.func @transform_1(%arg0: i32, %arg1: memref<72xf32, #tpu.memory_space<smem>>, %arg2: memref<8xf32, #tpu.memory_space<smem>>, %arg3: memref<72xf32, #tpu.memory_space<smem>>, %arg4: memref<1xf32, #tpu.memory_space<smem>>, %arg5: memref<72xf32, #tpu.memory_space<smem>>, %arg6: memref<8xf32, #tpu.memory_space<smem>>, %arg7: memref<72xf32, #tpu.memory_space<smem>>, %arg8: memref<1xf32, #tpu.memory_space<smem>>, %arg9: memref<144xf32, #tpu.memory_space<smem>>, %arg10: memref<8xf32, #tpu.memory_space<smem>>, %arg11: memref<72xf32, #tpu.memory_space<smem>>, %arg12: memref<1xf32, #tpu.memory_space<smem>>) -> (i32, i32, i32) {
    %c0_i32 = arith.constant 0 : i32
    %c0_i32_0 = arith.constant 0 : i32
    %c0_i32_1 = arith.constant 0 : i32
    return %arg0, %c0_i32, %c0_i32_0 : i32, i32, i32
  }
  func.func @transform_2(%arg0: i32, %arg1: memref<72xf32, #tpu.memory_space<smem>>, %arg2: memref<8xf32, #tpu.memory_space<smem>>, %arg3: memref<72xf32, #tpu.memory_space<smem>>, %arg4: memref<1xf32, #tpu.memory_space<smem>>, %arg5: memref<72xf32, #tpu.memory_space<smem>>, %arg6: memref<8xf32, #tpu.memory_space<smem>>, %arg7: memref<72xf32, #tpu.memory_space<smem>>, %arg8: memref<1xf32, #tpu.memory_space<smem>>, %arg9: memref<144xf32, #tpu.memory_space<smem>>, %arg10: memref<8xf32, #tpu.memory_space<smem>>, %arg11: memref<72xf32, #tpu.memory_space<smem>>, %arg12: memref<1xf32, #tpu.memory_space<smem>>) -> (i32, i32) {
    %c0_i32 = arith.constant 0 : i32
    %c0_i32_0 = arith.constant 0 : i32
    %c0_i32_1 = arith.constant 0 : i32
    return %c0_i32, %c0_i32_0 : i32, i32
  }
  func.func @transform_3(%arg0: i32, %arg1: memref<72xf32, #tpu.memory_space<smem>>, %arg2: memref<8xf32, #tpu.memory_space<smem>>, %arg3: memref<72xf32, #tpu.memory_space<smem>>, %arg4: memref<1xf32, #tpu.memory_space<smem>>, %arg5: memref<72xf32, #tpu.memory_space<smem>>, %arg6: memref<8xf32, #tpu.memory_space<smem>>, %arg7: memref<72xf32, #tpu.memory_space<smem>>, %arg8: memref<1xf32, #tpu.memory_space<smem>>, %arg9: memref<144xf32, #tpu.memory_space<smem>>, %arg10: memref<8xf32, #tpu.memory_space<smem>>, %arg11: memref<72xf32, #tpu.memory_space<smem>>, %arg12: memref<1xf32, #tpu.memory_space<smem>>) -> (i32, i32) {
    %c0_i32 = arith.constant 0 : i32
    %c0_i32_0 = arith.constant 0 : i32
    %c0_i32_1 = arith.constant 0 : i32
    return %c0_i32, %c0_i32_0 : i32, i32
  }
  func.func @transform_4(%arg0: i32, %arg1: memref<72xf32, #tpu.memory_space<smem>>, %arg2: memref<8xf32, #tpu.memory_space<smem>>, %arg3: memref<72xf32, #tpu.memory_space<smem>>, %arg4: memref<1xf32, #tpu.memory_space<smem>>, %arg5: memref<72xf32, #tpu.memory_space<smem>>, %arg6: memref<8xf32, #tpu.memory_space<smem>>, %arg7: memref<72xf32, #tpu.memory_space<smem>>, %arg8: memref<1xf32, #tpu.memory_space<smem>>, %arg9: memref<144xf32, #tpu.memory_space<smem>>, %arg10: memref<8xf32, #tpu.memory_space<smem>>, %arg11: memref<72xf32, #tpu.memory_space<smem>>, %arg12: memref<1xf32, #tpu.memory_space<smem>>) -> (i32, i32) {
    %c0_i32 = arith.constant 0 : i32
    %c0_i32_0 = arith.constant 0 : i32
    %c0_i32_1 = arith.constant 0 : i32
    return %c0_i32, %c0_i32_0 : i32, i32
  }
  func.func @transform_5(%arg0: i32, %arg1: memref<72xf32, #tpu.memory_space<smem>>, %arg2: memref<8xf32, #tpu.memory_space<smem>>, %arg3: memref<72xf32, #tpu.memory_space<smem>>, %arg4: memref<1xf32, #tpu.memory_space<smem>>, %arg5: memref<72xf32, #tpu.memory_space<smem>>, %arg6: memref<8xf32, #tpu.memory_space<smem>>, %arg7: memref<72xf32, #tpu.memory_space<smem>>, %arg8: memref<1xf32, #tpu.memory_space<smem>>, %arg9: memref<144xf32, #tpu.memory_space<smem>>, %arg10: memref<8xf32, #tpu.memory_space<smem>>, %arg11: memref<72xf32, #tpu.memory_space<smem>>, %arg12: memref<1xf32, #tpu.memory_space<smem>>) -> (i32, i32) {
    %c0_i32 = arith.constant 0 : i32
    %c0_i32_0 = arith.constant 0 : i32
    %c0_i32_1 = arith.constant 0 : i32
    return %c0_i32, %c0_i32_0 : i32, i32
  }
  func.func @transform_6(%arg0: i32, %arg1: memref<72xf32, #tpu.memory_space<smem>>, %arg2: memref<8xf32, #tpu.memory_space<smem>>, %arg3: memref<72xf32, #tpu.memory_space<smem>>, %arg4: memref<1xf32, #tpu.memory_space<smem>>, %arg5: memref<72xf32, #tpu.memory_space<smem>>, %arg6: memref<8xf32, #tpu.memory_space<smem>>, %arg7: memref<72xf32, #tpu.memory_space<smem>>, %arg8: memref<1xf32, #tpu.memory_space<smem>>, %arg9: memref<144xf32, #tpu.memory_space<smem>>, %arg10: memref<8xf32, #tpu.memory_space<smem>>, %arg11: memref<72xf32, #tpu.memory_space<smem>>, %arg12: memref<1xf32, #tpu.memory_space<smem>>) -> (i32, i32, i32) {
    %c0_i32 = arith.constant 0 : i32
    %c0_i32_0 = arith.constant 0 : i32
    %c0_i32_1 = arith.constant 0 : i32
    return %arg0, %c0_i32, %c0_i32_0 : i32, i32, i32
  }
  func.func @transform_7(%arg0: i32, %arg1: memref<72xf32, #tpu.memory_space<smem>>, %arg2: memref<8xf32, #tpu.memory_space<smem>>, %arg3: memref<72xf32, #tpu.memory_space<smem>>, %arg4: memref<1xf32, #tpu.memory_space<smem>>, %arg5: memref<72xf32, #tpu.memory_space<smem>>, %arg6: memref<8xf32, #tpu.memory_space<smem>>, %arg7: memref<72xf32, #tpu.memory_space<smem>>, %arg8: memref<1xf32, #tpu.memory_space<smem>>, %arg9: memref<144xf32, #tpu.memory_space<smem>>, %arg10: memref<8xf32, #tpu.memory_space<smem>>, %arg11: memref<72xf32, #tpu.memory_space<smem>>, %arg12: memref<1xf32, #tpu.memory_space<smem>>) -> (i32, i32, i32) {
    %c0_i32 = arith.constant 0 : i32
    %c0_i32_0 = arith.constant 0 : i32
    %c0_i32_1 = arith.constant 0 : i32
    return %arg0, %c0_i32, %c0_i32_0 : i32, i32, i32
  }
  func.func @transform_8(%arg0: i32, %arg1: memref<72xf32, #tpu.memory_space<smem>>, %arg2: memref<8xf32, #tpu.memory_space<smem>>, %arg3: memref<72xf32, #tpu.memory_space<smem>>, %arg4: memref<1xf32, #tpu.memory_space<smem>>, %arg5: memref<72xf32, #tpu.memory_space<smem>>, %arg6: memref<8xf32, #tpu.memory_space<smem>>, %arg7: memref<72xf32, #tpu.memory_space<smem>>, %arg8: memref<1xf32, #tpu.memory_space<smem>>, %arg9: memref<144xf32, #tpu.memory_space<smem>>, %arg10: memref<8xf32, #tpu.memory_space<smem>>, %arg11: memref<72xf32, #tpu.memory_space<smem>>, %arg12: memref<1xf32, #tpu.memory_space<smem>>) -> (i32, i32, i32) {
    %c0_i32 = arith.constant 0 : i32
    %c0_i32_0 = arith.constant 0 : i32
    %c0_i32_1 = arith.constant 0 : i32
    return %arg0, %c0_i32, %c0_i32_0 : i32, i32, i32
  }
}

</mosaic_0001>

<llo_original>
// kernel: pyramid_forward.1
$region0: #{pyramid_forward.1}
  #allocation0 [shape = 'u32[]', space=smem, size = 0x4, offset = 0x4, fixed_abs, tag = 'smem constant byte address 0x4 - core index']
  #allocation1 [shape = 'u32[72,128]{1,0:T(1,128)}', space=vmem, size = 0x9000, scoped, tag = 'internal scratch']
  #allocation2 [shape = 'f32[1,8,128]{2,1,0:T(8,128)}', space=vmem, size = 0x1000, scoped, tag = 'scratch operand']
  #allocation3 [shape = 'f32[8,8,128]{2,1,0:T(8,128)}', space=vmem, size = 0x8000, scoped, tag = 'scratch operand']
  #allocation4 [shape = 'f32[1,16,128]{2,1,0:T(8,128)}', space=vmem, size = 0x2000, scoped, tag = 'scratch operand']
  #allocation5 [shape = 'f32[8,16,128]{2,1,0:T(8,128)}', space=vmem, size = 0x10000, scoped, tag = 'scratch operand']
  #allocation6 [shape = 'f32[2,24,128]{2,1,0:T(8,128)}', space=vmem, size = 0x6000, scoped, tag = 'scratch operand']
  #allocation7 [shape = 'f32[8,24,128]{2,1,0:T(8,128)}', space=vmem, size = 0x18000, scoped, tag = 'scratch operand']
  #allocation8 [shape = 's32[1]{0}', space=sflag, size = 0x4, scoped, tag = 'scoped memory for pyramid_forward.1']
  #allocation9 [shape = 'u8[512]{0}', space=smem, size = 0x200, scoped, tag = 'prefetched SMEM operand 0']
  #allocation10 [shape = 'u8[512]{0}', space=smem, size = 0x200, scoped, tag = 'prefetched SMEM operand 1']
  #allocation11 [shape = 'u8[512]{0}', space=smem, size = 0x200, scoped, tag = 'prefetched SMEM operand 2']
  #allocation12 [shape = 'f32[1]{0:T(128)S(6)}', space=smem, size = 0x200, scoped, tag = 'prefetched SMEM operand 3']
  #allocation13 [shape = 'u8[512]{0}', space=smem, size = 0x200, scoped, tag = 'prefetched SMEM operand 4']
  #allocation14 [shape = 'u8[512]{0}', space=smem, size = 0x200, scoped, tag = 'prefetched SMEM operand 5']
  #allocation15 [shape = 'u8[512]{0}', space=smem, size = 0x200, scoped, tag = 'prefetched SMEM operand 6']
  #allocation16 [shape = 'f32[1]{0:T(128)S(6)}', space=smem, size = 0x200, scoped, tag = 'prefetched SMEM operand 7']
  #allocation17 [shape = 'u8[1024]{0}', space=smem, size = 0x400, scoped, tag = 'prefetched SMEM operand 8']
  #allocation18 [shape = 'u8[512]{0}', space=smem, size = 0x200, scoped, tag = 'prefetched SMEM operand 9']
  #allocation19 [shape = 'u8[512]{0}', space=smem, size = 0x200, scoped, tag = 'prefetched SMEM operand 10']
  #allocation20 [shape = 'f32[1]{0:T(128)S(6)}', space=smem, size = 0x200, scoped, tag = 'prefetched SMEM operand 11']
  %s0 = inlined_call_operand.vmem [shape: f32[72], index: 0, kind: input, shape index: {}]
  %s1 = inlined_call_operand.vmem [shape: f32[8], index: 1, kind: input, shape index: {}]
  %s2 = inlined_call_operand.vmem [shape: f32[72], index: 2, kind: input, shape index: {}]
  %s3 = inlined_call_operand.<no memory space> [shape: f32[1], index: 3, kind: input, shape index: {}]
  %s4 = inlined_call_operand.vmem [shape: f32[72], index: 4, kind: input, shape index: {}]
  %s5 = inlined_call_operand.vmem [shape: f32[8], index: 5, kind: input, shape index: {}]
  %s6 = inlined_call_operand.vmem [shape: f32[72], index: 6, kind: input, shape index: {}]
  %s7 = inlined_call_operand.<no memory space> [shape: f32[1], index: 7, kind: input, shape index: {}]
  %s8 = inlined_call_operand.vmem [shape: f32[144], index: 8, kind: input, shape index: {}]
  %s9 = inlined_call_operand.vmem [shape: f32[8], index: 9, kind: input, shape index: {}]
  %s10 = inlined_call_operand.vmem [shape: f32[72], index: 10, kind: input, shape index: {}]
  %s11 = inlined_call_operand.<no memory space> [shape: f32[1], index: 11, kind: input, shape index: {}]
  %s12 = inlined_call_operand.vmem [shape: f32[2,16,16], index: 12, kind: input, shape index: {}]
  %s13 = inlined_call_operand.vmem [shape: f32[2,4,4], index: 13, kind: input, shape index: {}]
  %s14 = inlined_call_operand.vmem [shape: f32[8,4], index: 14, kind: input, shape index: {}]
  %s15 = inlined_call_operand.hbm [shape: f32[128,128], index: 15, kind: input, shape index: {}]
  %s16 = inlined_call_operand.vmem [shape: f32[16,8], index: 16, kind: input, shape index: {}]
  %s17 = inlined_call_operand.hbm [shape: f32[128,128], index: 17, kind: input, shape index: {}]
  %s18 = inlined_call_operand.hbm [shape: f32[2,16,16], index: 18, kind: output, shape index: {0}]
  %s19 = inlined_call_operand.hbm [shape: f32[2,8,8], index: 19, kind: output, shape index: {1}]
  %s20 = inlined_call_operand.hbm [shape: f32[2,4,4], index: 20, kind: output, shape index: {2}]
  %21 = xla_tuple %s18, %s19, %s20
  %s22 = sld [smem:[#allocation0]]
  $region81: #{pyramid_forward.1} parent=0
    _
  %s24 = ssub.s32 1, %s22
  %s25 = scalar_select 0, %s24, %s22
  %s27 = sshll.u32 %s0, 4
  %s28 = int_to_ptr.vmem [resolvable:$true] %s27
  %30 = dma.vmem_to_smem %s28, 16, [#allocation9], [#allocation8]
  %s32 = sshll.u32 %s1, 4
  %s33 = int_to_ptr.vmem [resolvable:$true] %s32
  %35 = dma.vmem_to_smem %s33, 16, [#allocation10], [#allocation8]
  %s37 = sshll.u32 %s2, 4
  %s38 = int_to_ptr.vmem [resolvable:$true] %s37
  %40 = dma.vmem_to_smem %s38, 16, [#allocation11], [#allocation8]
  %41 = sst [smem:[#allocation12]] %s3
  %s43 = sshll.u32 %s4, 4
  %s44 = int_to_ptr.vmem [resolvable:$true] %s43
  %46 = dma.vmem_to_smem %s44, 16, [#allocation13], [#allocation8]
  %s48 = sshll.u32 %s5, 4
  %s49 = int_to_ptr.vmem [resolvable:$true] %s48
  %51 = dma.vmem_to_smem %s49, 16, [#allocation14], [#allocation8]
  %s53 = sshll.u32 %s6, 4
  %s54 = int_to_ptr.vmem [resolvable:$true] %s53
  %56 = dma.vmem_to_smem %s54, 16, [#allocation15], [#allocation8]
  %57 = sst [smem:[#allocation16]] %s7
  %s59 = sshll.u32 %s8, 4
  %s60 = int_to_ptr.vmem [resolvable:$true] %s59
  %62 = dma.vmem_to_smem %s60, 32, [#allocation17], [#allocation8]
  %s64 = sshll.u32 %s9, 4
  %s65 = int_to_ptr.vmem [resolvable:$true] %s64
  %67 = dma.vmem_to_smem %s65, 16, [#allocation18], [#allocation8]
  %s69 = sshll.u32 %s10, 4
  %s70 = int_to_ptr.vmem [resolvable:$true] %s69
  %72 = dma.vmem_to_smem %s70, 16, [#allocation19], [#allocation8]
  %73 = sst [smem:[#allocation20]] %s11
  %75 = dma.done [#allocation8], 160
  %76 = sfence
  $region1: #{pyramid_forward.1} parent=0
    #allocation21 [shape = 'u8[65536]{0}', space=vmem, size = 0x10000, scoped, tag = 'input window, operand 15, single buffered']
    #allocation22 [shape = 's32[2]{0}', space=sflag, size = 0x8, scoped, tag = 'scoped memory for pyramid_forward.1']
    #allocation23 [shape = 's32[2]{0}', space=sflag, size = 0x8, scoped, tag = 'scoped memory for pyramid_forward.1']
    #allocation24 [shape = 'u8[65536]{0}', space=vmem, size = 0x10000, scoped, tag = 'input window, operand 17, single buffered']
    #allocation25 [shape = 's32[1]{0}', space=sflag, size = 0x4, scoped, tag = 'scoped memory for pyramid_forward.1']
    #allocation26 [shape = 'u8[16384]{0}', space=vmem, size = 0x4000, scoped, tag = 'output window, operand 0']
    #allocation27 [shape = 'u8[8192]{0}', space=vmem, size = 0x2000, scoped, tag = 'output window, operand 1']
    #allocation28 [shape = 's32[2]{0}', space=sflag, size = 0x8, scoped, tag = 'scoped memory for pyramid_forward.1']
    #allocation29 [shape = 'u8[4096]{0}', space=vmem, size = 0x1000, scoped, tag = 'output window, operand 2']
    %77 = vsyncpa [#allocation22], 0
    %78 = vsyncpa [#allocation25], 0
    %79 = vsyncpa [#allocation23], 0
    %s80 = scalar_lea.sflag [#allocation23], 1
    %81 = vsyncpa %s80, 0
    %82 = vsyncpa [#allocation28], 0
    %s83 = scalar_lea.sflag [#allocation28], 1
    %84 = vsyncpa %s83, 0
    loop: start=0, step=1, limit=4
    $region2: #{pyramid_forward.1} parent=1 // loop_pre_header
      _
    $region3: #{pyramid_forward.1} parent=1 // loop_header
      %s86 = sphi 0, %s90
      %p87 = scmp.ge.s32.totalorder %s86, 4
      %s96 = sphi 0, %s98
      %s99 = sphi 0, %s96
      %s100 = sphi 0, %s99
      %s116 = sphi 0, %s100
      %s122 = sphi 0, %s124
      %s125 = sphi 0, %s122
      %s126 = sphi 0, %s125
      %s142 = sphi 0, %s126
      %s146 = sphi 0, %s146
      %s148 = sphi 0, %s146
      %s149 = sphi 0, %s148
      %s163 = sphi 0, %s149
      %s167 = sphi 0, %s167
      %s169 = sphi 0, %s167
      %s170 = sphi 0, %s169
      %s184 = sphi 0, %s170
      %s188 = sphi 0, %s188
      %s190 = sphi 0, %s188
      %s191 = sphi 0, %s190
      %s205 = sphi 0, %s191
      %s209 = sphi 0, %s209
      %s211 = sphi 0, %s209
      %s212 = sphi 0, %s211
      %s226 = sphi 0, %s212
      %s232 = sphi 0, %s234
      %s235 = sphi 0, %s232
      %s236 = sphi 0, %s235
      %s252 = sphi 0, %s236
      %s258 = sphi 0, %s260
      %s261 = sphi 0, %s258
      %s262 = sphi 0, %s261
      %s278 = sphi 0, %s262
      %s284 = sphi 0, %s286
      %s287 = sphi 0, %s284
      %s288 = sphi 0, %s287
      %s304 = sphi 0, %s288
    $region4: #{pyramid_forward.1} parent=1 // loop_header_branch
      %89 = sbr.rel (%p87) target = $region8
    $region5: #{pyramid_forward.1} parent=1 // loop_body
      %s91 = ssub.s32 %s86, 1
      %s92 = ssub.s32 %s86, 2
      %s93 = sadd.s32 %s86, 1
      %s94 = ssub.s32 %s86, %s93
      %p95 = scmp.eq.s32.totalorder %s94, 0
      %s97 = sadd.s32 %s96, 1
      %s98 = scalar_select %p95, %s96, %s97
      %p101 = pneg %p95
      %p102 = scmp.eq.s32.totalorder %s86, 1
      %p103 = por %p101, %p102
      %p104 = scmp.ne.s32.totalorder %s96, %s99
      %p105 = scmp.eq.s32.totalorder %s86, 0
      %p106 = por %p104, %p105
      %p107 = scmp.ne.s32.totalorder %s96, %s99
      %p108 = scmp.eq.s32.totalorder %s91, 1
      %p109 = por %p107, %p108
      %p110 = scmp.ne.s32.totalorder %s99, %s100
      %p111 = scmp.eq.s32.totalorder %s91, 0
      %p112 = por %p110, %p111
      %p113 = scmp.ne.s32.totalorder %s99, %s100
      %p114 = scmp.eq.s32.totalorder %s92, 1
      %p115 = por %p113, %p114
      %p117 = scmp.ne.s32.totalorder %s100, %s116
      %p118 = scmp.eq.s32.totalorder %s92, 0
      %p119 = por %p117, %p118
      %s120 = ssub.s32 %s86, %s93
      %p121 = scmp.eq.s32.totalorder %s120, 0
      %s123 = sadd.s32 %s122, 1
      %s124 = scalar_select %p121, %s122, %s123
      %p127 = pneg %p121
      %p128 = scmp.eq.s32.totalorder %s86, 1
      %p129 = por %p127, %p128
      %p130 = scmp.ne.s32.totalorder %s122, %s125
      %p131 = scmp.eq.s32.totalorder %s86, 0
      %p132 = por %p130, %p131
      %p133 = scmp.ne.s32.totalorder %s122, %s125
      %p134 = scmp.eq.s32.totalorder %s91, 1
      %p135 = por %p133, %p134
      %p136 = scmp.ne.s32.totalorder %s125, %s126
      %p137 = scmp.eq.s32.totalorder %s91, 0
      %p138 = por %p136, %p137
      %p139 = scmp.ne.s32.totalorder %s125, %s126
      %p140 = scmp.eq.s32.totalorder %s92, 1
      %p141 = por %p139, %p140
      %p143 = scmp.ne.s32.totalorder %s126, %s142
      %p144 = scmp.eq.s32.totalorder %s92, 0
      %p145 = por %p143, %p144
      %s147 = sadd.s32 %s146, 1
      %p150 = scmp.eq.s32.totalorder %s86, 1
      %p151 = scmp.ne.s32.totalorder %s146, %s148
      %p152 = scmp.eq.s32.totalorder %s86, 0
      %p153 = por %p151, %p152
      %p154 = scmp.ne.s32.totalorder %s146, %s148
      %p155 = scmp.eq.s32.totalorder %s91, 1
      %p156 = por %p154, %p155
      %p157 = scmp.ne.s32.totalorder %s148, %s149
      %p158 = scmp.eq.s32.totalorder %s91, 0
      %p159 = por %p157, %p158
      %p160 = scmp.ne.s32.totalorder %s148, %s149
      %p161 = scmp.eq.s32.totalorder %s92, 1
      %p162 = por %p160, %p161
      %p164 = scmp.ne.s32.totalorder %s149, %s163
      %p165 = scmp.eq.s32.totalorder %s92, 0
      %p166 = por %p164, %p165
      %s168 = sadd.s32 %s167, 1
      %p171 = scmp.eq.s32.totalorder %s86, 1
      %p172 = scmp.ne.s32.totalorder %s167, %s169
      %p173 = scmp.eq.s32.totalorder %s86, 0
      %p174 = por %p172, %p173
      %p175 = scmp.ne.s32.totalorder %s167, %s169
      %p176 = scmp.eq.s32.totalorder %s91, 1
      %p177 = por %p175, %p176
      %p178 = scmp.ne.s32.totalorder %s169, %s170
      %p179 = scmp.eq.s32.totalorder %s91, 0
      %p180 = por %p178, %p179
      %p181 = scmp.ne.s32.totalorder %s169, %s170
      %p182 = scmp.eq.s32.totalorder %s92, 1
      %p183 = por %p181, %p182
      %p185 = scmp.ne.s32.totalorder %s170, %s184
      %p186 = scmp.eq.s32.totalorder %s92, 0
      %p187 = por %p185, %p186
      %s189 = sadd.s32 %s188, 1
      %p192 = scmp.eq.s32.totalorder %s86, 1
      %p193 = scmp.ne.s32.totalorder %s188, %s190
      %p194 = scmp.eq.s32.totalorder %s86, 0
      %p195 = por %p193, %p194
      %p196 = scmp.ne.s32.totalorder %s188, %s190
      %p197 = scmp.eq.s32.totalorder %s91, 1
      %p198 = por %p196, %p197
      %p199 = scmp.ne.s32.totalorder %s190, %s191
      %p200 = scmp.eq.s32.totalorder %s91, 0
      %p201 = por %p199, %p200
      %p202 = scmp.ne.s32.totalorder %s190, %s191
      %p203 = scmp.eq.s32.totalorder %s92, 1
      %p204 = por %p202, %p203
      %p206 = scmp.ne.s32.totalorder %s191, %s205
      %p207 = scmp.eq.s32.totalorder %s92, 0
      %p208 = por %p206, %p207
      %s210 = sadd.s32 %s209, 1
      %p213 = scmp.eq.s32.totalorder %s86, 1
      %p214 = scmp.ne.s32.totalorder %s209, %s211
      %p215 = scmp.eq.s32.totalorder %s86, 0
      %p216 = por %p214, %p215
      %p217 = scmp.ne.s32.totalorder %s209, %s211
      %p218 = scmp.eq.s32.totalorder %s91, 1
      %p219 = por %p217, %p218
      %p220 = scmp.ne.s32.totalorder %s211, %s212
      %p221 = scmp.eq.s32.totalorder %s91, 0
      %p222 = por %p220, %p221
      %p223 = scmp.ne.s32.totalorder %s211, %s212
      %p224 = scmp.eq.s32.totalorder %s92, 1
      %p225 = por %p223, %p224
      %p227 = scmp.ne.s32.totalorder %s212, %s226
      %p228 = scmp.eq.s32.totalorder %s92, 0
      %p229 = por %p227, %p228
      %s230 = ssub.s32 %s86, %s93
      %p231 = scmp.eq.s32.totalorder %s230, 0
      %s233 = sadd.s32 %s232, 1
      %s234 = scalar_select %p231, %s232, %s233
      %p237 = pneg %p231
      %p238 = scmp.eq.s32.totalorder %s86, 1
      %p239 = por %p237, %p238
      %p240 = scmp.ne.s32.totalorder %s232, %s235
      %p241 = scmp.eq.s32.totalorder %s86, 0
      %p242 = por %p240, %p241
      %p243 = scmp.ne.s32.totalorder %s232, %s235
      %p244 = scmp.eq.s32.totalorder %s91, 1
      %p245 = por %p243, %p244
      %p246 = scmp.ne.s32.totalorder %s235, %s236
      %p247 = scmp.eq.s32.totalorder %s91, 0
      %p248 = por %p246, %p247
      %p249 = scmp.ne.s32.totalorder %s235, %s236
      %p250 = scmp.eq.s32.totalorder %s92, 1
      %p251 = por %p249, %p250
      %p253 = scmp.ne.s32.totalorder %s236, %s252
      %p254 = scmp.eq.s32.totalorder %s92, 0
      %p255 = por %p253, %p254
      %s256 = ssub.s32 %s86, %s93
      %p257 = scmp.eq.s32.totalorder %s256, 0
      %s259 = sadd.s32 %s258, 1
      %s260 = scalar_select %p257, %s258, %s259
      %p263 = pneg %p257
      %p264 = scmp.eq.s32.totalorder %s86, 1
      %p265 = por %p263, %p264
      %p266 = scmp.ne.s32.totalorder %s258, %s261
      %p267 = scmp.eq.s32.totalorder %s86, 0
      %p268 = por %p266, %p267
      %p269 = scmp.ne.s32.totalorder %s258, %s261
      %p270 = scmp.eq.s32.totalorder %s91, 1
      %p271 = por %p269, %p270
      %p272 = scmp.ne.s32.totalorder %s261, %s262
      %p273 = scmp.eq.s32.totalorder %s91, 0
      %p274 = por %p272, %p273
      %p275 = scmp.ne.s32.totalorder %s261, %s262
      %p276 = scmp.eq.s32.totalorder %s92, 1
      %p277 = por %p275, %p276
      %p279 = scmp.ne.s32.totalorder %s262, %s278
      %p280 = scmp.eq.s32.totalorder %s92, 0
      %p281 = por %p279, %p280
      %s282 = ssub.s32 %s86, %s93
      %p283 = scmp.eq.s32.totalorder %s282, 0
      %s285 = sadd.s32 %s284, 1
      %s286 = scalar_select %p283, %s284, %s285
      %p289 = pneg %p283
      %p290 = scmp.eq.s32.totalorder %s86, 1
      %p291 = por %p289, %p290
      %p292 = scmp.ne.s32.totalorder %s284, %s287
      %p293 = scmp.eq.s32.totalorder %s86, 0
      %p294 = por %p292, %p293
      %p295 = scmp.ne.s32.totalorder %s284, %s287
      %p296 = scmp.eq.s32.totalorder %s91, 1
      %p297 = por %p295, %p296
      %p298 = scmp.ne.s32.totalorder %s287, %s288
      %p299 = scmp.eq.s32.totalorder %s91, 0
      %p300 = por %p298, %p299
      %p301 = scmp.ne.s32.totalorder %s287, %s288
      %p302 = scmp.eq.s32.totalorder %s92, 1
      %p303 = por %p301, %p302
      %p305 = scmp.ne.s32.totalorder %s288, %s304
      %p306 = scmp.eq.s32.totalorder %s92, 0
      %p307 = por %p305, %p306
      %p308 = scmp.le.s32.totalorder 1, %s86
      %p309 = scmp.lt.s32.totalorder %s86, 3
      %p310 = pnand %p308, %p309
      %p311 = pneg %p310
      // Predicated region
      $region9: #{pyramid_forward.1} parent=5 // pred_check
        _
      $region10: #{pyramid_forward.1} parent=5 // pred_check_branch
        %313 = sbr.rel (%p310) target = $region12
      $region11: #{pyramid_forward.1} parent=5 // pred_region
        %s314 = ssub.s32 %s86, 1
        // Predicated region
        $region13: #{pyramid_forward.1} parent=11 // pred_check
          %p315 = pneg %p159
        $region14: #{pyramid_forward.1} parent=11 // pred_check_branch
          %317 = sbr.rel (%p315) target = $region16
        $region15: #{pyramid_forward.1} parent=11 // pred_region
          _
        $region16: #{pyramid_forward.1} parent=11 // pred_fallthru
          _
        // Predicated region
        $region17: #{pyramid_forward.1} parent=11 // pred_check
          %p318 = pneg %p180
        $region18: #{pyramid_forward.1} parent=11 // pred_check_branch
          %320 = sbr.rel (%p318) target = $region20
        $region19: #{pyramid_forward.1} parent=11 // pred_region
          %322 = vsyncadd [#allocation22], 0
          %s323 = sshll.u32 %s15, 4
          %s324 = int_to_ptr.hbm [resolvable:$true] %s323
          %s325 = sshll.u32 [#allocation21], 4
          %s326 = int_to_ptr.vmem [resolvable:$true] %s325
          %331 = dma.hbm_to_vmem [thread:$0]  %s324, 2048, %s326, [#allocation22], 128, 128, 8
        $region20: #{pyramid_forward.1} parent=11 // pred_fallthru
          _
        // Predicated region
        $region21: #{pyramid_forward.1} parent=11 // pred_check
          %p332 = pneg %p201
        $region22: #{pyramid_forward.1} parent=11 // pred_check_branch
          %334 = sbr.rel (%p332) target = $region24
        $region23: #{pyramid_forward.1} parent=11 // pred_region
          _
        $region24: #{pyramid_forward.1} parent=11 // pred_fallthru
          _
        // Predicated region
        $region25: #{pyramid_forward.1} parent=11 // pred_check
          %p335 = pneg %p222
        $region26: #{pyramid_forward.1} parent=11 // pred_check_branch
          %337 = sbr.rel (%p335) target = $region28
        $region27: #{pyramid_forward.1} parent=11 // pred_region
          %339 = vsyncadd [#allocation25], 0
          %s340 = sshll.u32 %s17, 4
          %s341 = int_to_ptr.hbm [resolvable:$true] %s340
          %s342 = sshll.u32 [#allocation24], 4
          %s343 = int_to_ptr.vmem [resolvable:$true] %s342
          %348 = dma.hbm_to_vmem [thread:$0]  %s341, 2048, %s343, [#allocation25], 128, 128, 8
        $region28: #{pyramid_forward.1} parent=11 // pred_fallthru
          _
      $region12: #{pyramid_forward.1} parent=5 // pred_fallthru
        _
      %p349 = scmp.lt.s32.totalorder %s86, 2
      // Predicated region
      $region29: #{pyramid_forward.1} parent=5 // pred_check
        %p350 = pneg %p349
      $region30: #{pyramid_forward.1} parent=5 // pred_check_branch
        %352 = sbr.rel (%p350) target = $region32
      $region31: #{pyramid_forward.1} parent=5 // pred_region
        // Predicated region
        $region33: #{pyramid_forward.1} parent=31 // pred_check
          %p353 = pneg %p106
        $region34: #{pyramid_forward.1} parent=31 // pred_check_branch
          %355 = sbr.rel (%p353) target = $region36
        $region35: #{pyramid_forward.1} parent=31 // pred_region
          %p356 = scmp.lt.s32.totalorder %s86, 1
          %s357 = scalar_select %p356, %s86, 1
          %s358 = smul.addr %s357, 2
          %s359 = smul.addr %s358, 8
          %s360 = scalar_lea.vmem %s12, %s359
        $region36: #{pyramid_forward.1} parent=31 // pred_fallthru
          _
        // Predicated region
        $region37: #{pyramid_forward.1} parent=31 // pred_check
          %p361 = pneg %p132
        $region38: #{pyramid_forward.1} parent=31 // pred_check_branch
          %363 = sbr.rel (%p361) target = $region40
        $region39: #{pyramid_forward.1} parent=31 // pred_region
          %p364 = scmp.lt.s32.totalorder %s86, 1
          %s365 = scalar_select %p364, %s86, 1
          %s366 = smul.addr %s365, 4
          %s367 = scalar_lea.vmem %s13, %s366
        $region40: #{pyramid_forward.1} parent=31 // pred_fallthru
          _
      $region32: #{pyramid_forward.1} parent=5 // pred_fallthru
        _
      %p368 = scmp.le.s32.totalorder 1, %s86
      %p369 = scmp.lt.s32.totalorder %s86, 3
      %p370 = pnand %p368, %p369
      %p371 = pneg %p370
      // Predicated region
      $region41: #{pyramid_forward.1} parent=5 // pred_check
        _
      $region42: #{pyramid_forward.1} parent=5 // pred_check_branch
        %373 = sbr.rel (%p370) target = $region44
      $region43: #{pyramid_forward.1} parent=5 // pred_region
        %s374 = ssub.s32 %s86, 1
        // Predicated region
        $region45: #{pyramid_forward.1} parent=43 // pred_check
          %p375 = pneg %p180
        $region46: #{pyramid_forward.1} parent=43 // pred_check_branch
          %377 = sbr.rel (%p375) target = $region48
        $region47: #{pyramid_forward.1} parent=43 // pred_region
          %379 = dma.done [#allocation22], 2048
        $region48: #{pyramid_forward.1} parent=43 // pred_fallthru
          _
        // Predicated region
        $region49: #{pyramid_forward.1} parent=43 // pred_check
          %p380 = pneg %p222
        $region50: #{pyramid_forward.1} parent=43 // pred_check_branch
          %382 = sbr.rel (%p380) target = $region52
        $region51: #{pyramid_forward.1} parent=43 // pred_region
          %384 = dma.done [#allocation25], 2048
        $region52: #{pyramid_forward.1} parent=43 // pred_fallthru
          _
        %p385 = scmp.lt.s32.totalorder %s91, 1
        %s386 = scalar_select %p385, %s91, 1
        %s387 = smul.addr %s386, 2
        %s388 = smul.addr %s387, 8
        %s389 = scalar_lea.vmem %s12, %s388
        %p390 = pneg %p112
        %p391 = pneg %p109
        %p392 = scmp.lt.s32.totalorder %s91, 1
        %s393 = scalar_select %p392, %s91, 1
        %s394 = smul.addr %s393, 4
        %s395 = scalar_lea.vmem %s13, %s394
        %p396 = pneg %p138
        %p397 = pneg %p135
        %p398 = pneg %p159
        %p399 = pneg %p156
        %p400 = pneg %p180
        %p401 = pneg %p177
        %p402 = pneg %p201
        %p403 = pneg %p198
        %p404 = pneg %p222
        %p405 = pneg %p219
        %p406 = pneg %p248
        %p407 = pneg %p245
        %s408 = sand.u32 %s235, 1
        %s409 = scalar_lea.sflag [#allocation23], %s408
        %s410 = sand.u32 %s235, 1
        %s411 = smul.addr %s410, 16
        %s412 = scalar_lea.vmem [#allocation26], %s411
        %p413 = pneg %p274
        %p414 = pneg %p271
        %s415 = sand.u32 %s91, 1
        %s416 = scalar_lea.sflag [#allocation28], %s415
        %s417 = sand.u32 %s261, 1
        %s418 = smul.addr %s417, 8
        %s419 = scalar_lea.vmem [#allocation27], %s418
        %p420 = pneg %p300
        %p421 = pneg %p297
        %s422 = sand.u32 %s91, 1
        %s423 = scalar_lea.sflag [#allocation28], %s422
        %s424 = sand.u32 %s287, 1
        %s425 = smul.addr %s424, 4
        %s426 = scalar_lea.vmem [#allocation29], %s425
        %p427 = scmp.lt.s32.totalorder %s91, 1
        %s428 = scalar_select %p427, %s91, 1
        %s429 = smul.addr %s428, 2
        %s430 = smul.addr %s429, 8
        %s431 = scalar_lea.vmem %s12, %s430
        %p432 = scmp.lt.s32.totalorder %s91, 1
        %s433 = scalar_select %p432, %s91, 1
        %s434 = smul.addr %s433, 4
        %s435 = scalar_lea.vmem %s13, %s434
        %436 = vst [vmem:[#allocation2] sm:$0x1] 0.0
        %437 = vst [vmem:[#allocation2 + $0x5] sm:$0x1] 0.0
        %438 = vst [vmem:[#allocation3] sm:$0x1] 0.0
        %439 = vst [vmem:[#allocation3 + $0x5] sm:$0x1] 0.0
        %s440 = scalar_lea.vmem [#allocation3], 8
        %441 = vst [vmem:[%s440] sm:$0x1] 0.0
        %442 = vst [vmem:[%s440 + $0x5] sm:$0x1] 0.0
        %s443 = scalar_lea.vmem [#allocation3], 16
        %444 = vst [vmem:[%s443] sm:$0x1] 0.0
        %445 = vst [vmem:[%s443 + $0x5] sm:$0x1] 0.0
        %s446 = scalar_lea.vmem [#allocation3], 24
        %447 = vst [vmem:[%s446] sm:$0x1] 0.0
        %448 = vst [vmem:[%s446 + $0x5] sm:$0x1] 0.0
        %s449 = scalar_lea.vmem [#allocation3], 32
        %450 = vst [vmem:[%s449] sm:$0x1] 0.0
        %451 = vst [vmem:[%s449 + $0x5] sm:$0x1] 0.0
        %s452 = scalar_lea.vmem [#allocation3], 40
        %453 = vst [vmem:[%s452] sm:$0x1] 0.0
        %454 = vst [vmem:[%s452 + $0x5] sm:$0x1] 0.0
        %s455 = scalar_lea.vmem [#allocation3], 48
        %456 = vst [vmem:[%s455] sm:$0x1] 0.0
        %457 = vst [vmem:[%s455 + $0x5] sm:$0x1] 0.0
        %s458 = scalar_lea.vmem [#allocation3], 56
        %459 = vst [vmem:[%s458] sm:$0x1] 0.0
        %460 = vst [vmem:[%s458 + $0x5] sm:$0x1] 0.0
        %461 = vst [vmem:[#allocation4] sm:$0x1] 0.0
        %462 = vst [vmem:[#allocation4 + $0x9] sm:$0x1] 0.0
        %463 = vst [vmem:[#allocation5] sm:$0x1] 0.0
        %464 = vst [vmem:[#allocation5 + $0x9] sm:$0x1] 0.0
        %s465 = scalar_lea.vmem [#allocation5], 16
        %466 = vst [vmem:[%s465] sm:$0x1] 0.0
        %467 = vst [vmem:[%s465 + $0x9] sm:$0x1] 0.0
        %s468 = scalar_lea.vmem [#allocation5], 32
        %469 = vst [vmem:[%s468] sm:$0x1] 0.0
        %470 = vst [vmem:[%s468 + $0x9] sm:$0x1] 0.0
        %s471 = scalar_lea.vmem [#allocation5], 48
        %472 = vst [vmem:[%s471] sm:$0x1] 0.0
        %473 = vst [vmem:[%s471 + $0x9] sm:$0x1] 0.0
        %s474 = scalar_lea.vmem [#allocation5], 64
        %475 = vst [vmem:[%s474] sm:$0x1] 0.0
        %476 = vst [vmem:[%s474 + $0x9] sm:$0x1] 0.0
        %s477 = scalar_lea.vmem [#allocation5], 80
        %478 = vst [vmem:[%s477] sm:$0x1] 0.0
        %479 = vst [vmem:[%s477 + $0x9] sm:$0x1] 0.0
        %s480 = scalar_lea.vmem [#allocation5], 96
        %481 = vst [vmem:[%s480] sm:$0x1] 0.0
        %482 = vst [vmem:[%s480 + $0x9] sm:$0x1] 0.0
        %s483 = scalar_lea.vmem [#allocation5], 112
        %484 = vst [vmem:[%s483] sm:$0x1] 0.0
        %485 = vst [vmem:[%s483 + $0x9] sm:$0x1] 0.0
        %486 = vst [vmem:[#allocation6] sm:$0x1] 0.0
        %487 = vst [vmem:[#allocation6 + $0x11] sm:$0x1] 0.0
        %s488 = scalar_lea.vmem [#allocation6], 24
        %489 = vst [vmem:[%s488] sm:$0x1] 0.0
        %490 = vst [vmem:[%s488 + $0x11] sm:$0x1] 0.0
        %491 = vst [vmem:[#allocation7] sm:$0x1] 0.0
        %492 = vst [vmem:[#allocation7 + $0x11] sm:$0x1] 0.0
        %s493 = scalar_lea.vmem [#allocation7], 24
        %494 = vst [vmem:[%s493] sm:$0x1] 0.0
        %495 = vst [vmem:[%s493 + $0x11] sm:$0x1] 0.0
        %s496 = scalar_lea.vmem [#allocation7], 48
        %497 = vst [vmem:[%s496] sm:$0x1] 0.0
        %498 = vst [vmem:[%s496 + $0x11] sm:$0x1] 0.0
        %s499 = scalar_lea.vmem [#allocation7], 72
        %500 = vst [vmem:[%s499] sm:$0x1] 0.0
        %501 = vst [vmem:[%s499 + $0x11] sm:$0x1] 0.0
        %s502 = scalar_lea.vmem [#allocation7], 96
        %503 = vst [vmem:[%s502] sm:$0x1] 0.0
        %504 = vst [vmem:[%s502 + $0x11] sm:$0x1] 0.0
        %s505 = scalar_lea.vmem [#allocation7], 120
        %506 = vst [vmem:[%s505] sm:$0x1] 0.0
        %507 = vst [vmem:[%s505 + $0x11] sm:$0x1] 0.0
        %s508 = scalar_lea.vmem [#allocation7], 144
        %509 = vst [vmem:[%s508] sm:$0x1] 0.0
        %510 = vst [vmem:[%s508 + $0x11] sm:$0x1] 0.0
        %s511 = scalar_lea.vmem [#allocation7], 168
        %512 = vst [vmem:[%s511] sm:$0x1] 0.0
        %513 = vst [vmem:[%s511 + $0x11] sm:$0x1] 0.0
        %v514 = vld [vmem:[%s435] sm:$0xf]
        %vm515 = vcmask 27648
        %516 = vst.msk [vmem:[#allocation2 + $0x1] sm:$0xf] %vm515, %v514
        %vm517 = vcmask 1043488
        %518 = vst.msk [vmem:[#allocation2 + $0x1] sm:$0xf] %vm517, 0.0
        %v519 = vlaneseq
        %v520 = vand.u32 %v519, 127
        %vm521 = vcmp.lt.s32.totalorder %v520, 4
        %s522 = sld [smem:[#allocation10]]
        %v523 = vstv %s522
        %v524 = vadd.f32 %v523, 0.0
        %s525 = sld [smem:[#allocation10 + $0x1]]
        %v526 = vstv %s525
        %v527 = vadd.f32 %v526, 0.0
        %s528 = sld [smem:[#allocation10 + $0x2]]
        %v529 = vstv %s528
        %v530 = vadd.f32 %v529, 0.0
        %s531 = sld [smem:[#allocation10 + $0x3]]
        %v532 = vstv %s531
        %v533 = vadd.f32 %v532, 0.0
        %s534 = sld [smem:[#allocation10 + $0x4]]
        %v535 = vstv %s534
        %v536 = vadd.f32 %v535, 0.0
        %s537 = sld [smem:[#allocation10 + $0x5]]
        %v538 = vstv %s537
        %v539 = vadd.f32 %v538, 0.0
        %s540 = sld [smem:[#allocation10 + $0x6]]
        %v541 = vstv %s540
        %v542 = vadd.f32 %v541, 0.0
        %s543 = sld [smem:[#allocation10 + $0x7]]
        %v544 = vstv %s543
        %v545 = vadd.f32 %v544, 0.0
        %v546 = vld [vmem:[#allocation2] sm:$0xf]
        %547 = vrot.lane.b32.xlu0 %v546, 1
        %v548 = vpop.permute.xlu0 %547
        %549 = vrot.lane.b32.xlu0 %v546, 127
        %v550 = vpop.permute.xlu0 %549
        %s551 = sld [smem:[#allocation9]]
        %v552 = vstv %s551
        %v553 = vmul.f32 %v548, %v552
        %v554 = vadd.f32 %v524, %v553
        %s555 = sld [smem:[#allocation9 + $0x1]]
        %v556 = vstv %s555
        %v557 = vmul.f32 %v548, %v556
        %v558 = vadd.f32 %v527, %v557
        %s559 = sld [smem:[#allocation9 + $0x2]]
        %v560 = vstv %s559
        %v561 = vmul.f32 %v548, %v560
        %v562 = vadd.f32 %v530, %v561
        %s563 = sld [smem:[#allocation9 + $0x3]]
        %v564 = vstv %s563
        %v565 = vmul.f32 %v548, %v564
        %v566 = vadd.f32 %v533, %v565
        %s567 = sld [smem:[#allocation9 + $0x4]]
        %v568 = vstv %s567
        %v569 = vmul.f32 %v548, %v568
        %v570 = vadd.f32 %v536, %v569
        %s571 = sld [smem:[#allocation9 + $0x5]]
        %v572 = vstv %s571
        %v573 = vmul.f32 %v548, %v572
        %v574 = vadd.f32 %v539, %v573
        %s575 = sld [smem:[#allocation9 + $0x6]]
        %v576 = vstv %s575
        %v577 = vmul.f32 %v548, %v576
        %v578 = vadd.f32 %v542, %v577
        %s579 = sld [smem:[#allocation9 + $0x7]]
        %v580 = vstv %s579
        %v581 = vmul.f32 %v548, %v580
        %v582 = vadd.f32 %v545, %v581
        %s583 = sld [smem:[#allocation9 + $0x8]]
        %v584 = vstv %s583
        %v585 = vmul.f32 %v546, %v584
        %v586 = vadd.f32 %v554, %v585
        %s587 = sld [smem:[#allocation9 + $0x9]]
        %v588 = vstv %s587
        %v589 = vmul.f32 %v546, %v588
        %v590 = vadd.f32 %v558, %v589
        %s591 = sld [smem:[#allocation9 + $0xa]]
        %v592 = vstv %s591
        %v593 = vmul.f32 %v546, %v592
        %v594 = vadd.f32 %v562, %v593
        %s595 = sld [smem:[#allocation9 + $0xb]]
        %v596 = vstv %s595
        %v597 = vmul.f32 %v546, %v596
        %v598 = vadd.f32 %v566, %v597
        %s599 = sld [smem:[#allocation9 + $0xc]]
        %v600 = vstv %s599
        %v601 = vmul.f32 %v546, %v600
        %v602 = vadd.f32 %v570, %v601
        %s603 = sld [smem:[#allocation9 + $0xd]]
        %v604 = vstv %s603
        %v605 = vmul.f32 %v546, %v604
        %v606 = vadd.f32 %v574, %v605
        %s607 = sld [smem:[#allocation9 + $0xe]]
        %v608 = vstv %s607
        %v609 = vmul.f32 %v546, %v608
        %v610 = vadd.f32 %v578, %v609
        %s611 = sld [smem:[#allocation9 + $0xf]]
        %v612 = vstv %s611
        %v613 = vmul.f32 %v546, %v612
        %v614 = vadd.f32 %v582, %v613
        %s615 = sld [smem:[#allocation9 + $0x10]]
        %v616 = vstv %s615
        %v617 = vmul.f32 %v550, %v616
        %v618 = vadd.f32 %v586, %v617
        %s619 = sld [smem:[#allocation9 + $0x11]]
        %v620 = vstv %s619
        %v621 = vmul.f32 %v550, %v620
        %v622 = vadd.f32 %v590, %v621
        %s623 = sld [smem:[#allocation9 + $0x12]]
        %v624 = vstv %s623
        %v625 = vmul.f32 %v550, %v624
        %v626 = vadd.f32 %v594, %v625
        %s627 = sld [smem:[#allocation9 + $0x13]]
        %v628 = vstv %s627
        %v629 = vmul.f32 %v550, %v628
        %v630 = vadd.f32 %v598, %v629
        %s631 = sld [smem:[#allocation9 + $0x14]]
        %v632 = vstv %s631
        %v633 = vmul.f32 %v550, %v632
        %v634 = vadd.f32 %v602, %v633
        %s635 = sld [smem:[#allocation9 + $0x15]]
        %v636 = vstv %s635
        %v637 = vmul.f32 %v550, %v636
        %v638 = vadd.f32 %v606, %v637
        %s639 = sld [smem:[#allocation9 + $0x16]]
        %v640 = vstv %s639
        %v641 = vmul.f32 %v550, %v640
        %v642 = vadd.f32 %v610, %v641
        %s643 = sld [smem:[#allocation9 + $0x17]]
        %v644 = vstv %s643
        %v645 = vmul.f32 %v550, %v644
        %v646 = vadd.f32 %v614, %v645
        %v647 = vld [vmem:[#allocation2 + $0x1] sm:$0xf]
        %648 = vrot.lane.b32.xlu0 %v647, 1
        %v649 = vpop.permute.xlu0 %648
        %650 = vrot.lane.b32.xlu0 %v647, 127
        %v651 = vpop.permute.xlu0 %650
        %s652 = sld [smem:[#allocation9 + $0x18]]
        %v653 = vstv %s652
        %v654 = vmul.f32 %v649, %v653
        %v655 = vadd.f32 %v618, %v654
        %s656 = sld [smem:[#allocation9 + $0x19]]
        %v657 = vstv %s656
        %v658 = vmul.f32 %v649, %v657
        %v659 = vadd.f32 %v622, %v658
        %s660 = sld [smem:[#allocation9 + $0x1a]]
        %v661 = vstv %s660
        %v662 = vmul.f32 %v649, %v661
        %v663 = vadd.f32 %v626, %v662
        %s664 = sld [smem:[#allocation9 + $0x1b]]
        %v665 = vstv %s664
        %v666 = vmul.f32 %v649, %v665
        %v667 = vadd.f32 %v630, %v666
        %s668 = sld [smem:[#allocation9 + $0x1c]]
        %v669 = vstv %s668
        %v670 = vmul.f32 %v649, %v669
        %v671 = vadd.f32 %v634, %v670
        %s672 = sld [smem:[#allocation9 + $0x1d]]
        %v673 = vstv %s672
        %v674 = vmul.f32 %v649, %v673
        %v675 = vadd.f32 %v638, %v674
        %s676 = sld [smem:[#allocation9 + $0x1e]]
        %v677 = vstv %s676
        %v678 = vmul.f32 %v649, %v677
        %v679 = vadd.f32 %v642, %v678
        %s680 = sld [smem:[#allocation9 + $0x1f]]
        %v681 = vstv %s680
        %v682 = vmul.f32 %v649, %v681
        %v683 = vadd.f32 %v646, %v682
        %s684 = sld [smem:[#allocation9 + $0x20]]
        %v685 = vstv %s684
        %v686 = vmul.f32 %v647, %v685
        %v687 = vadd.f32 %v655, %v686
        %s688 = sld [smem:[#allocation9 + $0x21]]
        %v689 = vstv %s688
        %v690 = vmul.f32 %v647, %v689
        %v691 = vadd.f32 %v659, %v690
        %s692 = sld [smem:[#allocation9 + $0x22]]
        %v693 = vstv %s692
        %v694 = vmul.f32 %v647, %v693
        %v695 = vadd.f32 %v663, %v694
        %s696 = sld [smem:[#allocation9 + $0x23]]
        %v697 = vstv %s696
        %v698 = vmul.f32 %v647, %v697
        %v699 = vadd.f32 %v667, %v698
        %s700 = sld [smem:[#allocation9 + $0x24]]
        %v701 = vstv %s700
        %v702 = vmul.f32 %v647, %v701
        %v703 = vadd.f32 %v671, %v702
        %s704 = sld [smem:[#allocation9 + $0x25]]
        %v705 = vstv %s704
        %v706 = vmul.f32 %v647, %v705
        %v707 = vadd.f32 %v675, %v706
        %s708 = sld [smem:[#allocation9 + $0x26]]
        %v709 = vstv %s708
        %v710 = vmul.f32 %v647, %v709
        %v711 = vadd.f32 %v679, %v710
        %s712 = sld [smem:[#allocation9 + $0x27]]
        %v713 = vstv %s712
        %v714 = vmul.f32 %v647, %v713
        %v715 = vadd.f32 %v683, %v714
        %s716 = sld [smem:[#allocation9 + $0x28]]
        %v717 = vstv %s716
        %v718 = vmul.f32 %v651, %v717
        %v719 = vadd.f32 %v687, %v718
        %s720 = sld [smem:[#allocation9 + $0x29]]
        %v721 = vstv %s720
        %v722 = vmul.f32 %v651, %v721
        %v723 = vadd.f32 %v691, %v722
        %s724 = sld [smem:[#allocation9 + $0x2a]]
        %v725 = vstv %s724
        %v726 = vmul.f32 %v651, %v725
        %v727 = vadd.f32 %v695, %v726
        %s728 = sld [smem:[#allocation9 + $0x2b]]
        %v729 = vstv %s728
        %v730 = vmul.f32 %v651, %v729
        %v731 = vadd.f32 %v699, %v730
        %s732 = sld [smem:[#allocation9 + $0x2c]]
        %v733 = vstv %s732
        %v734 = vmul.f32 %v651, %v733
        %v735 = vadd.f32 %v703, %v734
        %s736 = sld [smem:[#allocation9 + $0x2d]]
        %v737 = vstv %s736
        %v738 = vmul.f32 %v651, %v737
        %v739 = vadd.f32 %v707, %v738
        %s740 = sld [smem:[#allocation9 + $0x2e]]
        %v741 = vstv %s740
        %v742 = vmul.f32 %v651, %v741
        %v743 = vadd.f32 %v711, %v742
        %s744 = sld [smem:[#allocation9 + $0x2f]]
        %v745 = vstv %s744
        %v746 = vmul.f32 %v651, %v745
        %v747 = vadd.f32 %v715, %v746
        %v748 = vld [vmem:[#allocation2 + $0x2] sm:$0xf]
        %749 = vrot.lane.b32.xlu0 %v748, 1
        %v750 = vpop.permute.xlu0 %749
        %751 = vrot.lane.b32.xlu0 %v748, 127
        %v752 = vpop.permute.xlu0 %751
        %s753 = sld [smem:[#allocation9 + $0x30]]
        %v754 = vstv %s753
        %v755 = vmul.f32 %v750, %v754
        %v756 = vadd.f32 %v719, %v755
        %s757 = sld [smem:[#allocation9 + $0x31]]
        %v758 = vstv %s757
        %v759 = vmul.f32 %v750, %v758
        %v760 = vadd.f32 %v723, %v759
        %s761 = sld [smem:[#allocation9 + $0x32]]
        %v762 = vstv %s761
        %v763 = vmul.f32 %v750, %v762
        %v764 = vadd.f32 %v727, %v763
        %s765 = sld [smem:[#allocation9 + $0x33]]
        %v766 = vstv %s765
        %v767 = vmul.f32 %v750, %v766
        %v768 = vadd.f32 %v731, %v767
        %s769 = sld [smem:[#allocation9 + $0x34]]
        %v770 = vstv %s769
        %v771 = vmul.f32 %v750, %v770
        %v772 = vadd.f32 %v735, %v771
        %s773 = sld [smem:[#allocation9 + $0x35]]
        %v774 = vstv %s773
        %v775 = vmul.f32 %v750, %v774
        %v776 = vadd.f32 %v739, %v775
        %s777 = sld [smem:[#allocation9 + $0x36]]
        %v778 = vstv %s777
        %v779 = vmul.f32 %v750, %v778
        %v780 = vadd.f32 %v743, %v779
        %s781 = sld [smem:[#allocation9 + $0x37]]
        %v782 = vstv %s781
        %v783 = vmul.f32 %v750, %v782
        %v784 = vadd.f32 %v747, %v783
        %s785 = sld [smem:[#allocation9 + $0x38]]
        %v786 = vstv %s785
        %v787 = vmul.f32 %v748, %v786
        %v788 = vadd.f32 %v756, %v787
        %s789 = sld [smem:[#allocation9 + $0x39]]
        %v790 = vstv %s789
        %v791 = vmul.f32 %v748, %v790
        %v792 = vadd.f32 %v760, %v791
        %s793 = sld [smem:[#allocation9 + $0x3a]]
        %v794 = vstv %s793
        %v795 = vmul.f32 %v748, %v794
        %v796 = vadd.f32 %v764, %v795
        %s797 = sld [smem:[#allocation9 + $0x3b]]
        %v798 = vstv %s797
        %v799 = vmul.f32 %v748, %v798
        %v800 = vadd.f32 %v768, %v799
        %s801 = sld [smem:[#allocation9 + $0x3c]]
        %v802 = vstv %s801
        %v803 = vmul.f32 %v748, %v802
        %v804 = vadd.f32 %v772, %v803
        %s805 = sld [smem:[#allocation9 + $0x3d]]
        %v806 = vstv %s805
        %v807 = vmul.f32 %v748, %v806
        %v808 = vadd.f32 %v776, %v807
        %s809 = sld [smem:[#allocation9 + $0x3e]]
        %v810 = vstv %s809
        %v811 = vmul.f32 %v748, %v810
        %v812 = vadd.f32 %v780, %v811
        %s813 = sld [smem:[#allocation9 + $0x3f]]
        %v814 = vstv %s813
        %v815 = vmul.f32 %v748, %v814
        %v816 = vadd.f32 %v784, %v815
        %s817 = sld [smem:[#allocation9 + $0x40]]
        %v818 = vstv %s817
        %v819 = vmul.f32 %v752, %v818
        %v820 = vadd.f32 %v788, %v819
        %s821 = sld [smem:[#allocation9 + $0x41]]
        %v822 = vstv %s821
        %v823 = vmul.f32 %v752, %v822
        %v824 = vadd.f32 %v792, %v823
        %s825 = sld [smem:[#allocation9 + $0x42]]
        %v826 = vstv %s825
        %v827 = vmul.f32 %v752, %v826
        %v828 = vadd.f32 %v796, %v827
        %s829 = sld [smem:[#allocation9 + $0x43]]
        %v830 = vstv %s829
        %v831 = vmul.f32 %v752, %v830
        %v832 = vadd.f32 %v800, %v831
        %s833 = sld [smem:[#allocation9 + $0x44]]
        %v834 = vstv %s833
        %v835 = vmul.f32 %v752, %v834
        %v836 = vadd.f32 %v804, %v835
        %s837 = sld [smem:[#allocation9 + $0x45]]
        %v838 = vstv %s837
        %v839 = vmul.f32 %v752, %v838
        %v840 = vadd.f32 %v808, %v839
        %s841 = sld [smem:[#allocation9 + $0x46]]
        %v842 = vstv %s841
        %v843 = vmul.f32 %v752, %v842
        %v844 = vadd.f32 %v812, %v843
        %s845 = sld [smem:[#allocation9 + $0x47]]
        %v846 = vstv %s845
        %v847 = vmul.f32 %v752, %v846
        %v848 = vadd.f32 %v816, %v847
        %v849 = vmax.f32 %v820, 0.0
        %v850 = vmax.f32 %v824, 0.0
        %v851 = vmax.f32 %v828, 0.0
        %v852 = vmax.f32 %v832, 0.0
        %v853 = vmax.f32 %v836, 0.0
        %v854 = vmax.f32 %v840, 0.0
        %v855 = vmax.f32 %v844, 0.0
        %v856 = vmax.f32 %v848, 0.0
        %v857 = vsel %vm521, %v849, 0.0
        %858 = vst [vmem:[#allocation3 + $0x1] sm:$0xf] %v857
        %v859 = vsel %vm521, %v850, 0.0
        %860 = vst [vmem:[%s440 + $0x1] sm:$0xf] %v859
        %v861 = vsel %vm521, %v851, 0.0
        %862 = vst [vmem:[%s443 + $0x1] sm:$0xf] %v861
        %v863 = vsel %vm521, %v852, 0.0
        %864 = vst [vmem:[%s446 + $0x1] sm:$0xf] %v863
        %v865 = vsel %vm521, %v853, 0.0
        %866 = vst [vmem:[%s449 + $0x1] sm:$0xf] %v865
        %v867 = vsel %vm521, %v854, 0.0
        %868 = vst [vmem:[%s452 + $0x1] sm:$0xf] %v867
        %v869 = vsel %vm521, %v855, 0.0
        %870 = vst [vmem:[%s455 + $0x1] sm:$0xf] %v869
        %v871 = vsel %vm521, %v856, 0.0
        %872 = vst [vmem:[%s458 + $0x1] sm:$0xf] %v871
        %s873 = sld [smem:[#allocation12]]
        %v874 = vstv %s873
        %v875 = vadd.f32 %v874, 0.0
        %v876 = vld [vmem:[#allocation3] sm:$0xf]
        %877 = vrot.lane.b32.xlu0 %v876, 1
        %v878 = vpop.permute.xlu0 %877
        %879 = vrot.lane.b32.xlu0 %v876, 127
        %v880 = vpop.permute.xlu0 %879
        %s881 = sld [smem:[#allocation11]]
        %v882 = vstv %s881
        %v883 = vmul.f32 %v878, %v882
        %v884 = vadd.f32 %v875, %v883
        %s885 = sld [smem:[#allocation11 + $0x8]]
        %v886 = vstv %s885
        %v887 = vmul.f32 %v876, %v886
        %v888 = vadd.f32 %v884, %v887
        %s889 = sld [smem:[#allocation11 + $0x10]]
        %v890 = vstv %s889
        %v891 = vmul.f32 %v880, %v890
        %v892 = vadd.f32 %v888, %v891
        %v893 = vld [vmem:[#allocation3 + $0x1] sm:$0xf]
        %894 = vrot.lane.b32.xlu0 %v893, 1
        %v895 = vpop.permute.xlu0 %894
        %896 = vrot.lane.b32.xlu0 %v893, 127
        %v897 = vpop.permute.xlu0 %896
        %s898 = sld [smem:[#allocation11 + $0x18]]
        %v899 = vstv %s898
        %v900 = vmul.f32 %v895, %v899
        %v901 = vadd.f32 %v892, %v900
        %s902 = sld [smem:[#allocation11 + $0x20]]
        %v903 = vstv %s902
        %v904 = vmul.f32 %v893, %v903
        %v905 = vadd.f32 %v901, %v904
        %s906 = sld [smem:[#allocation11 + $0x28]]
        %v907 = vstv %s906
        %v908 = vmul.f32 %v897, %v907
        %v909 = vadd.f32 %v905, %v908
        %v910 = vld [vmem:[#allocation3 + $0x2] sm:$0xf]
        %911 = vrot.lane.b32.xlu0 %v910, 1
        %v912 = vpop.permute.xlu0 %911
        %913 = vrot.lane.b32.xlu0 %v910, 127
        %v914 = vpop.permute.xlu0 %913
        %s915 = sld [smem:[#allocation11 + $0x30]]
        %v916 = vstv %s915
        %v917 = vmul.f32 %v912, %v916
        %v918 = vadd.f32 %v909, %v917
        %s919 = sld [smem:[#allocation11 + $0x38]]
        %v920 = vstv %s919
        %v921 = vmul.f32 %v910, %v920
        %v922 = vadd.f32 %v918, %v921
        %s923 = sld [smem:[#allocation11 + $0x40]]
        %v924 = vstv %s923
        %v925 = vmul.f32 %v914, %v924
        %v926 = vadd.f32 %v922, %v925
        %v927 = vld [vmem:[%s440] sm:$0xf]
        %928 = vrot.lane.b32.xlu0 %v927, 1
        %v929 = vpop.permute.xlu0 %928
        %930 = vrot.lane.b32.xlu0 %v927, 127
        %v931 = vpop.permute.xlu0 %930
        %s932 = sld [smem:[#allocation11 + $0x1]]
        %v933 = vstv %s932
        %v934 = vmul.f32 %v929, %v933
        %v935 = vadd.f32 %v926, %v934
        %s936 = sld [smem:[#allocation11 + $0x9]]
        %v937 = vstv %s936
        %v938 = vmul.f32 %v927, %v937
        %v939 = vadd.f32 %v935, %v938
        %s940 = sld [smem:[#allocation11 + $0x11]]
        %v941 = vstv %s940
        %v942 = vmul.f32 %v931, %v941
        %v943 = vadd.f32 %v939, %v942
        %v944 = vld [vmem:[%s440 + $0x1] sm:$0xf]
        %945 = vrot.lane.b32.xlu0 %v944, 1
        %v946 = vpop.permute.xlu0 %945
        %947 = vrot.lane.b32.xlu0 %v944, 127
        %v948 = vpop.permute.xlu0 %947
        %s949 = sld [smem:[#allocation11 + $0x19]]
        %v950 = vstv %s949
        %v951 = vmul.f32 %v946, %v950
        %v952 = vadd.f32 %v943, %v951
        %s953 = sld [smem:[#allocation11 + $0x21]]
        %v954 = vstv %s953
        %v955 = vmul.f32 %v944, %v954
        %v956 = vadd.f32 %v952, %v955
        %s957 = sld [smem:[#allocation11 + $0x29]]
        %v958 = vstv %s957
        %v959 = vmul.f32 %v948, %v958
        %v960 = vadd.f32 %v956, %v959
        %v961 = vld [vmem:[%s440 + $0x2] sm:$0xf]
        %962 = vrot.lane.b32.xlu0 %v961, 1
        %v963 = vpop.permute.xlu0 %962
        %964 = vrot.lane.b32.xlu0 %v961, 127
        %v965 = vpop.permute.xlu0 %964
        %s966 = sld [smem:[#allocation11 + $0x31]]
        %v967 = vstv %s966
        %v968 = vmul.f32 %v963, %v967
        %v969 = vadd.f32 %v960, %v968
        %s970 = sld [smem:[#allocation11 + $0x39]]
        %v971 = vstv %s970
        %v972 = vmul.f32 %v961, %v971
        %v973 = vadd.f32 %v969, %v972
        %s974 = sld [smem:[#allocation11 + $0x41]]
        %v975 = vstv %s974
        %v976 = vmul.f32 %v965, %v975
        %v977 = vadd.f32 %v973, %v976
        %v978 = vld [vmem:[%s443] sm:$0xf]
        %979 = vrot.lane.b32.xlu0 %v978, 1
        %v980 = vpop.permute.xlu0 %979
        %981 = vrot.lane.b32.xlu0 %v978, 127
        %v982 = vpop.permute.xlu0 %981
        %s983 = sld [smem:[#allocation11 + $0x2]]
        %v984 = vstv %s983
        %v985 = vmul.f32 %v980, %v984
        %v986 = vadd.f32 %v977, %v985
        %s987 = sld [smem:[#allocation11 + $0xa]]
        %v988 = vstv %s987
        %v989 = vmul.f32 %v978, %v988
        %v990 = vadd.f32 %v986, %v989
        %s991 = sld [smem:[#allocation11 + $0x12]]
        %v992 = vstv %s991
        %v993 = vmul.f32 %v982, %v992
        %v994 = vadd.f32 %v990, %v993
        %v995 = vld [vmem:[%s443 + $0x1] sm:$0xf]
        %996 = vrot.lane.b32.xlu0 %v995, 1
        %v997 = vpop.permute.xlu0 %996
        %998 = vrot.lane.b32.xlu0 %v995, 127
        %v999 = vpop.permute.xlu0 %998
        %s1000 = sld [smem:[#allocation11 + $0x1a]]
        %v1001 = vstv %s1000
        %v1002 = vmul.f32 %v997, %v1001
        %v1003 = vadd.f32 %v994, %v1002
        %s1004 = sld [smem:[#allocation11 + $0x22]]
        %v1005 = vstv %s1004
        %v1006 = vmul.f32 %v995, %v1005
        %v1007 = vadd.f32 %v1003, %v1006
        %s1008 = sld [smem:[#allocation11 + $0x2a]]
        %v1009 = vstv %s1008
        %v1010 = vmul.f32 %v999, %v1009
        %v1011 = vadd.f32 %v1007, %v1010
        %v1012 = vld [vmem:[%s443 + $0x2] sm:$0xf]
        %1013 = vrot.lane.b32.xlu0 %v1012, 1
        %v1014 = vpop.permute.xlu0 %1013
        %1015 = vrot.lane.b32.xlu0 %v1012, 127
        %v1016 = vpop.permute.xlu0 %1015
        %s1017 = sld [smem:[#allocation11 + $0x32]]
        %v1018 = vstv %s1017
        %v1019 = vmul.f32 %v1014, %v1018
        %v1020 = vadd.f32 %v1011, %v1019
        %s1021 = sld [smem:[#allocation11 + $0x3a]]
        %v1022 = vstv %s1021
        %v1023 = vmul.f32 %v1012, %v1022
        %v1024 = vadd.f32 %v1020, %v1023
        %s1025 = sld [smem:[#allocation11 + $0x42]]
        %v1026 = vstv %s1025
        %v1027 = vmul.f32 %v1016, %v1026
        %v1028 = vadd.f32 %v1024, %v1027
        %v1029 = vld [vmem:[%s446] sm:$0xf]
        %1030 = vrot.lane.b32.xlu0 %v1029, 1
        %v1031 = vpop.permute.xlu0 %1030
        %1032 = vrot.lane.b32.xlu0 %v1029, 127
        %v1033 = vpop.permute.xlu0 %1032
        %s1034 = sld [smem:[#allocation11 + $0x3]]
        %v1035 = vstv %s1034
        %v1036 = vmul.f32 %v1031, %v1035
        %v1037 = vadd.f32 %v1028, %v1036
        %s1038 = sld [smem:[#allocation11 + $0xb]]
        %v1039 = vstv %s1038
        %v1040 = vmul.f32 %v1029, %v1039
        %v1041 = vadd.f32 %v1037, %v1040
        %s1042 = sld [smem:[#allocation11 + $0x13]]
        %v1043 = vstv %s1042
        %v1044 = vmul.f32 %v1033, %v1043
        %v1045 = vadd.f32 %v1041, %v1044
        %v1046 = vld [vmem:[%s446 + $0x1] sm:$0xf]
        %1047 = vrot.lane.b32.xlu0 %v1046, 1
        %v1048 = vpop.permute.xlu0 %1047
        %1049 = vrot.lane.b32.xlu0 %v1046, 127
        %v1050 = vpop.permute.xlu0 %1049
        %s1051 = sld [smem:[#allocation11 + $0x1b]]
        %v1052 = vstv %s1051
        %v1053 = vmul.f32 %v1048, %v1052
        %v1054 = vadd.f32 %v1045, %v1053
        %s1055 = sld [smem:[#allocation11 + $0x23]]
        %v1056 = vstv %s1055
        %v1057 = vmul.f32 %v1046, %v1056
        %v1058 = vadd.f32 %v1054, %v1057
        %s1059 = sld [smem:[#allocation11 + $0x2b]]
        %v1060 = vstv %s1059
        %v1061 = vmul.f32 %v1050, %v1060
        %v1062 = vadd.f32 %v1058, %v1061
        %v1063 = vld [vmem:[%s446 + $0x2] sm:$0xf]
        %1064 = vrot.lane.b32.xlu0 %v1063, 1
        %v1065 = vpop.permute.xlu0 %1064
        %1066 = vrot.lane.b32.xlu0 %v1063, 127
        %v1067 = vpop.permute.xlu0 %1066
        %s1068 = sld [smem:[#allocation11 + $0x33]]
        %v1069 = vstv %s1068
        %v1070 = vmul.f32 %v1065, %v1069
        %v1071 = vadd.f32 %v1062, %v1070
        %s1072 = sld [smem:[#allocation11 + $0x3b]]
        %v1073 = vstv %s1072
        %v1074 = vmul.f32 %v1063, %v1073
        %v1075 = vadd.f32 %v1071, %v1074
        %s1076 = sld [smem:[#allocation11 + $0x43]]
        %v1077 = vstv %s1076
        %v1078 = vmul.f32 %v1067, %v1077
        %v1079 = vadd.f32 %v1075, %v1078
        %v1080 = vld [vmem:[%s449] sm:$0xf]
        %1081 = vrot.lane.b32.xlu0 %v1080, 1
        %v1082 = vpop.permute.xlu0 %1081
        %1083 = vrot.lane.b32.xlu0 %v1080, 127
        %v1084 = vpop.permute.xlu0 %1083
        %s1085 = sld [smem:[#allocation11 + $0x4]]
        %v1086 = vstv %s1085
        %v1087 = vmul.f32 %v1082, %v1086
        %v1088 = vadd.f32 %v1079, %v1087
        %s1089 = sld [smem:[#allocation11 + $0xc]]
        %v1090 = vstv %s1089
        %v1091 = vmul.f32 %v1080, %v1090
        %v1092 = vadd.f32 %v1088, %v1091
        %s1093 = sld [smem:[#allocation11 + $0x14]]
        %v1094 = vstv %s1093
        %v1095 = vmul.f32 %v1084, %v1094
        %v1096 = vadd.f32 %v1092, %v1095
        %v1097 = vld [vmem:[%s449 + $0x1] sm:$0xf]
        %1098 = vrot.lane.b32.xlu0 %v1097, 1
        %v1099 = vpop.permute.xlu0 %1098
        %1100 = vrot.lane.b32.xlu0 %v1097, 127
        %v1101 = vpop.permute.xlu0 %1100
        %s1102 = sld [smem:[#allocation11 + $0x1c]]
        %v1103 = vstv %s1102
        %v1104 = vmul.f32 %v1099, %v1103
        %v1105 = vadd.f32 %v1096, %v1104
        %s1106 = sld [smem:[#allocation11 + $0x24]]
        %v1107 = vstv %s1106
        %v1108 = vmul.f32 %v1097, %v1107
        %v1109 = vadd.f32 %v1105, %v1108
        %s1110 = sld [smem:[#allocation11 + $0x2c]]
        %v1111 = vstv %s1110
        %v1112 = vmul.f32 %v1101, %v1111
        %v1113 = vadd.f32 %v1109, %v1112
        %v1114 = vld [vmem:[%s449 + $0x2] sm:$0xf]
        %1115 = vrot.lane.b32.xlu0 %v1114, 1
        %v1116 = vpop.permute.xlu0 %1115
        %1117 = vrot.lane.b32.xlu0 %v1114, 127
        %v1118 = vpop.permute.xlu0 %1117
        %s1119 = sld [smem:[#allocation11 + $0x34]]
        %v1120 = vstv %s1119
        %v1121 = vmul.f32 %v1116, %v1120
        %v1122 = vadd.f32 %v1113, %v1121
        %s1123 = sld [smem:[#allocation11 + $0x3c]]
        %v1124 = vstv %s1123
        %v1125 = vmul.f32 %v1114, %v1124
        %v1126 = vadd.f32 %v1122, %v1125
        %s1127 = sld [smem:[#allocation11 + $0x44]]
        %v1128 = vstv %s1127
        %v1129 = vmul.f32 %v1118, %v1128
        %v1130 = vadd.f32 %v1126, %v1129
        %v1131 = vld [vmem:[%s452] sm:$0xf]
        %1132 = vrot.lane.b32.xlu0 %v1131, 1
        %v1133 = vpop.permute.xlu0 %1132
        %1134 = vrot.lane.b32.xlu0 %v1131, 127
        %v1135 = vpop.permute.xlu0 %1134
        %s1136 = sld [smem:[#allocation11 + $0x5]]
        %v1137 = vstv %s1136
        %v1138 = vmul.f32 %v1133, %v1137
        %v1139 = vadd.f32 %v1130, %v1138
        %s1140 = sld [smem:[#allocation11 + $0xd]]
        %v1141 = vstv %s1140
        %v1142 = vmul.f32 %v1131, %v1141
        %v1143 = vadd.f32 %v1139, %v1142
        %s1144 = sld [smem:[#allocation11 + $0x15]]
        %v1145 = vstv %s1144
        %v1146 = vmul.f32 %v1135, %v1145
        %v1147 = vadd.f32 %v1143, %v1146
        %v1148 = vld [vmem:[%s452 + $0x1] sm:$0xf]
        %1149 = vrot.lane.b32.xlu0 %v1148, 1
        %v1150 = vpop.permute.xlu0 %1149
        %1151 = vrot.lane.b32.xlu0 %v1148, 127
        %v1152 = vpop.permute.xlu0 %1151
        %s1153 = sld [smem:[#allocation11 + $0x1d]]
        %v1154 = vstv %s1153
        %v1155 = vmul.f32 %v1150, %v1154
        %v1156 = vadd.f32 %v1147, %v1155
        %s1157 = sld [smem:[#allocation11 + $0x25]]
        %v1158 = vstv %s1157
        %v1159 = vmul.f32 %v1148, %v1158
        %v1160 = vadd.f32 %v1156, %v1159
        %s1161 = sld [smem:[#allocation11 + $0x2d]]
        %v1162 = vstv %s1161
        %v1163 = vmul.f32 %v1152, %v1162
        %v1164 = vadd.f32 %v1160, %v1163
        %v1165 = vld [vmem:[%s452 + $0x2] sm:$0xf]
        %1166 = vrot.lane.b32.xlu0 %v1165, 1
        %v1167 = vpop.permute.xlu0 %1166
        %1168 = vrot.lane.b32.xlu0 %v1165, 127
        %v1169 = vpop.permute.xlu0 %1168
        %s1170 = sld [smem:[#allocation11 + $0x35]]
        %v1171 = vstv %s1170
        %v1172 = vmul.f32 %v1167, %v1171
        %v1173 = vadd.f32 %v1164, %v1172
        %s1174 = sld [smem:[#allocation11 + $0x3d]]
        %v1175 = vstv %s1174
        %v1176 = vmul.f32 %v1165, %v1175
        %v1177 = vadd.f32 %v1173, %v1176
        %s1178 = sld [smem:[#allocation11 + $0x45]]
        %v1179 = vstv %s1178
        %v1180 = vmul.f32 %v1169, %v1179
        %v1181 = vadd.f32 %v1177, %v1180
        %v1182 = vld [vmem:[%s455] sm:$0xf]
        %1183 = vrot.lane.b32.xlu0 %v1182, 1
        %v1184 = vpop.permute.xlu0 %1183
        %1185 = vrot.lane.b32.xlu0 %v1182, 127
        %v1186 = vpop.permute.xlu0 %1185
        %s1187 = sld [smem:[#allocation11 + $0x6]]
        %v1188 = vstv %s1187
        %v1189 = vmul.f32 %v1184, %v1188
        %v1190 = vadd.f32 %v1181, %v1189
        %s1191 = sld [smem:[#allocation11 + $0xe]]
        %v1192 = vstv %s1191
        %v1193 = vmul.f32 %v1182, %v1192
        %v1194 = vadd.f32 %v1190, %v1193
        %s1195 = sld [smem:[#allocation11 + $0x16]]
        %v1196 = vstv %s1195
        %v1197 = vmul.f32 %v1186, %v1196
        %v1198 = vadd.f32 %v1194, %v1197
        %v1199 = vld [vmem:[%s455 + $0x1] sm:$0xf]
        %1200 = vrot.lane.b32.xlu0 %v1199, 1
        %v1201 = vpop.permute.xlu0 %1200
        %1202 = vrot.lane.b32.xlu0 %v1199, 127
        %v1203 = vpop.permute.xlu0 %1202
        %s1204 = sld [smem:[#allocation11 + $0x1e]]
        %v1205 = vstv %s1204
        %v1206 = vmul.f32 %v1201, %v1205
        %v1207 = vadd.f32 %v1198, %v1206
        %s1208 = sld [smem:[#allocation11 + $0x26]]
        %v1209 = vstv %s1208
        %v1210 = vmul.f32 %v1199, %v1209
        %v1211 = vadd.f32 %v1207, %v1210
        %s1212 = sld [smem:[#allocation11 + $0x2e]]
        %v1213 = vstv %s1212
        %v1214 = vmul.f32 %v1203, %v1213
        %v1215 = vadd.f32 %v1211, %v1214
        %v1216 = vld [vmem:[%s455 + $0x2] sm:$0xf]
        %1217 = vrot.lane.b32.xlu0 %v1216, 1
        %v1218 = vpop.permute.xlu0 %1217
        %1219 = vrot.lane.b32.xlu0 %v1216, 127
        %v1220 = vpop.permute.xlu0 %1219
        %s1221 = sld [smem:[#allocation11 + $0x36]]
        %v1222 = vstv %s1221
        %v1223 = vmul.f32 %v1218, %v1222
        %v1224 = vadd.f32 %v1215, %v1223
        %s1225 = sld [smem:[#allocation11 + $0x3e]]
        %v1226 = vstv %s1225
        %v1227 = vmul.f32 %v1216, %v1226
        %v1228 = vadd.f32 %v1224, %v1227
        %s1229 = sld [smem:[#allocation11 + $0x46]]
        %v1230 = vstv %s1229
        %v1231 = vmul.f32 %v1220, %v1230
        %v1232 = vadd.f32 %v1228, %v1231
        %v1233 = vld [vmem:[%s458] sm:$0xf]
        %1234 = vrot.lane.b32.xlu0 %v1233, 1
        %v1235 = vpop.permute.xlu0 %1234
        %1236 = vrot.lane.b32.xlu0 %v1233, 127
        %v1237 = vpop.permute.xlu0 %1236
        %s1238 = sld [smem:[#allocation11 + $0x7]]
        %v1239 = vstv %s1238
        %v1240 = vmul.f32 %v1235, %v1239
        %v1241 = vadd.f32 %v1232, %v1240
        %s1242 = sld [smem:[#allocation11 + $0xf]]
        %v1243 = vstv %s1242
        %v1244 = vmul.f32 %v1233, %v1243
        %v1245 = vadd.f32 %v1241, %v1244
        %s1246 = sld [smem:[#allocation11 + $0x17]]
        %v1247 = vstv %s1246
        %v1248 = vmul.f32 %v1237, %v1247
        %v1249 = vadd.f32 %v1245, %v1248
        %v1250 = vld [vmem:[%s458 + $0x1] sm:$0xf]
        %1251 = vrot.lane.b32.xlu0 %v1250, 1
        %v1252 = vpop.permute.xlu0 %1251
        %1253 = vrot.lane.b32.xlu0 %v1250, 127
        %v1254 = vpop.permute.xlu0 %1253
        %s1255 = sld [smem:[#allocation11 + $0x1f]]
        %v1256 = vstv %s1255
        %v1257 = vmul.f32 %v1252, %v1256
        %v1258 = vadd.f32 %v1249, %v1257
        %s1259 = sld [smem:[#allocation11 + $0x27]]
        %v1260 = vstv %s1259
        %v1261 = vmul.f32 %v1250, %v1260
        %v1262 = vadd.f32 %v1258, %v1261
        %s1263 = sld [smem:[#allocation11 + $0x2f]]
        %v1264 = vstv %s1263
        %v1265 = vmul.f32 %v1254, %v1264
        %v1266 = vadd.f32 %v1262, %v1265
        %v1267 = vld [vmem:[%s458 + $0x2] sm:$0xf]
        %1268 = vrot.lane.b32.xlu0 %v1267, 1
        %v1269 = vpop.permute.xlu0 %1268
        %1270 = vrot.lane.b32.xlu0 %v1267, 127
        %v1271 = vpop.permute.xlu0 %1270
        %s1272 = sld [smem:[#allocation11 + $0x37]]
        %v1273 = vstv %s1272
        %v1274 = vmul.f32 %v1269, %v1273
        %v1275 = vadd.f32 %v1266, %v1274
        %s1276 = sld [smem:[#allocation11 + $0x3f]]
        %v1277 = vstv %s1276
        %v1278 = vmul.f32 %v1267, %v1277
        %v1279 = vadd.f32 %v1275, %v1278
        %s1280 = sld [smem:[#allocation11 + $0x47]]
        %v1281 = vstv %s1280
        %v1282 = vmul.f32 %v1271, %v1281
        %v1283 = vadd.f32 %v1279, %v1282
        %v1284 = vsel %vm521, %v1283, 0.0
        %v1285 = vld [vmem:[#allocation2 + $0x1] sm:$0xf]
        %v1286 = vadd.f32 %v1285, %v1284
        %1287 = vst.msk [vmem:[%s426] sm:$0xf] %vm515, %v1286
        %v1288 = vld [vmem:[%s14] sm:$0xff]
        %v1289 = vld [vmem:[#allocation21] sm:$0xff]
        %v1290 = vld [vmem:[#allocation21 + $0x8] sm:$0xff]
        %v1291 = vld [vmem:[#allocation21 + $0x10] sm:$0xff]
        %v1292 = vld [vmem:[#allocation21 + $0x18] sm:$0xff]
        %v1293 = vld [vmem:[#allocation21 + $0x20] sm:$0xff]
        %v1294 = vld [vmem:[#allocation21 + $0x28] sm:$0xff]
        %v1295 = vld [vmem:[#allocation21 + $0x30] sm:$0xff]
        %v1296 = vld [vmem:[#allocation21 + $0x38] sm:$0xff]
        %v1297 = vld [vmem:[#allocation21 + $0x40] sm:$0xff]
        %v1298 = vld [vmem:[#allocation21 + $0x48] sm:$0xff]
        %v1299 = vld [vmem:[#allocation21 + $0x50] sm:$0xff]
        %v1300 = vld [vmem:[#allocation21 + $0x58] sm:$0xff]
        %v1301 = vld [vmem:[#allocation21 + $0x60] sm:$0xff]
        %v1302 = vld [vmem:[#allocation21 + $0x68] sm:$0xff]
        %v1303 = vld [vmem:[#allocation21 + $0x70] sm:$0xff]
        %v1304 = vld [vmem:[#allocation21 + $0x78] sm:$0xff]
        %1305 = vmatpush.msra.mxu0 %v1304
        %1306 = vmatpush.msra.mxu0 %v1303
        %1307 = vmatpush.msra.mxu0 %v1302
        %1308 = vmatpush.msra.mxu0 %v1301
        %1309 = vmatpush.msra.mxu0 %v1300
        %1310 = vmatpush.msra.mxu0 %v1299
        %1311 = vmatpush.msra.mxu0 %v1298
        %1312 = vmatpush.msra.mxu0 %v1297
        %1313 = vmatpush.msra.mxu0 %v1296
        %1314 = vmatpush.msra.mxu0 %v1295
        %1315 = vmatpush.msra.mxu0 %v1294
        %1316 = vmatpush.msra.mxu0 %v1293
        %1317 = vmatpush.msra.mxu0 %v1292
        %1318 = vmatpush.msra.mxu0 %v1291
        %1319 = vmatpush.msra.mxu0 %v1290
        %1320 = vmatpush.msra.mxu0 %v1289
        %1321 = vmatmul.f32.gmra.mxu0 %v1286
        %v1322 = vpop.f32.mrf.mxu0
        %v1323 = vadd.f32 0.0, %v1322
        %1324 = vdwg.mxu0
        %vm1325 = vcmask 31744
        %v1327 = vsel %vm1325, %v1288, 0
        %vm1329 = vcmask 1043456
        %v1331 = vsel %vm1329, %v1323, 0
        %1333 = vmatpush.msra.mxu0 0.0
        %1334 = vmatpush.msra.mxu0 0.0
        %1335 = vmatpush.msra.mxu0 0.0
        %1336 = vmatpush.msra.mxu0 0.0
        %1337 = vmatpush.msra.mxu0 0.0
        %1338 = vmatpush.msra.mxu0 0.0
        %1339 = vmatpush.msra.mxu0 0.0
        %1340 = vmatpush.msra.mxu0 0.0
        %1341 = vmatpush.msra.mxu0 0.0
        %1342 = vmatpush.msra.mxu0 0.0
        %1343 = vmatpush.msra.mxu0 0.0
        %1344 = vmatpush.msra.mxu0 0.0
        %1345 = vmatpush.msra.mxu0 0.0
        %1346 = vmatpush.msra.mxu0 0.0
        %1347 = vmatpush.msra.mxu0 0.0
        %1348 = vmatpush.msra.mxu0 %v1331
        %1349 = vmatmul.f32.gmra.mxu0 %v1327
        %v1350 = vpop.f32.mrf.mxu0
        %v1351 = vadd.f32 0.0, %v1350
        %1352 = vdwg.mxu0
        %1353 = vst [vmem:[#allocation4 + $0x1] sm:$0xff] %v1351
        %vm1354 = vcmp.lt.s32.totalorder %v520, 8
        %s1355 = sld [smem:[#allocation14]]
        %v1356 = vstv %s1355
        %v1357 = vadd.f32 %v1356, 0.0
        %s1358 = sld [smem:[#allocation14 + $0x1]]
        %v1359 = vstv %s1358
        %v1360 = vadd.f32 %v1359, 0.0
        %s1361 = sld [smem:[#allocation14 + $0x2]]
        %v1362 = vstv %s1361
        %v1363 = vadd.f32 %v1362, 0.0
        %s1364 = sld [smem:[#allocation14 + $0x3]]
        %v1365 = vstv %s1364
        %v1366 = vadd.f32 %v1365, 0.0
        %s1367 = sld [smem:[#allocation14 + $0x4]]
        %v1368 = vstv %s1367
        %v1369 = vadd.f32 %v1368, 0.0
        %s1370 = sld [smem:[#allocation14 + $0x5]]
        %v1371 = vstv %s1370
        %v1372 = vadd.f32 %v1371, 0.0
        %s1373 = sld [smem:[#allocation14 + $0x6]]
        %v1374 = vstv %s1373
        %v1375 = vadd.f32 %v1374, 0.0
        %s1376 = sld [smem:[#allocation14 + $0x7]]
        %v1377 = vstv %s1376
        %v1378 = vadd.f32 %v1377, 0.0
        %v1379 = vld [vmem:[#allocation4] sm:$0xff]
        %1380 = vrot.lane.b32.xlu0 %v1379, 1
        %v1381 = vpop.permute.xlu0 %1380
        %1382 = vrot.lane.b32.xlu0 %v1379, 127
        %v1383 = vpop.permute.xlu0 %1382
        %s1384 = sld [smem:[#allocation13]]
        %v1385 = vstv %s1384
        %v1386 = vmul.f32 %v1381, %v1385
        %v1387 = vadd.f32 %v1357, %v1386
        %s1388 = sld [smem:[#allocation13 + $0x1]]
        %v1389 = vstv %s1388
        %v1390 = vmul.f32 %v1381, %v1389
        %v1391 = vadd.f32 %v1360, %v1390
        %s1392 = sld [smem:[#allocation13 + $0x2]]
        %v1393 = vstv %s1392
        %v1394 = vmul.f32 %v1381, %v1393
        %v1395 = vadd.f32 %v1363, %v1394
        %s1396 = sld [smem:[#allocation13 + $0x3]]
        %v1397 = vstv %s1396
        %v1398 = vmul.f32 %v1381, %v1397
        %v1399 = vadd.f32 %v1366, %v1398
        %s1400 = sld [smem:[#allocation13 + $0x4]]
        %v1401 = vstv %s1400
        %v1402 = vmul.f32 %v1381, %v1401
        %v1403 = vadd.f32 %v1369, %v1402
        %s1404 = sld [smem:[#allocation13 + $0x5]]
        %v1405 = vstv %s1404
        %v1406 = vmul.f32 %v1381, %v1405
        %v1407 = vadd.f32 %v1372, %v1406
        %s1408 = sld [smem:[#allocation13 + $0x6]]
        %v1409 = vstv %s1408
        %v1410 = vmul.f32 %v1381, %v1409
        %v1411 = vadd.f32 %v1375, %v1410
        %s1412 = sld [smem:[#allocation13 + $0x7]]
        %v1413 = vstv %s1412
        %v1414 = vmul.f32 %v1381, %v1413
        %v1415 = vadd.f32 %v1378, %v1414
        %s1416 = sld [smem:[#allocation13 + $0x8]]
        %v1417 = vstv %s1416
        %v1418 = vmul.f32 %v1379, %v1417
        %v1419 = vadd.f32 %v1387, %v1418
        %s1420 = sld [smem:[#allocation13 + $0x9]]
        %v1421 = vstv %s1420
        %v1422 = vmul.f32 %v1379, %v1421
        %v1423 = vadd.f32 %v1391, %v1422
        %s1424 = sld [smem:[#allocation13 + $0xa]]
        %v1425 = vstv %s1424
        %v1426 = vmul.f32 %v1379, %v1425
        %v1427 = vadd.f32 %v1395, %v1426
        %s1428 = sld [smem:[#allocation13 + $0xb]]
        %v1429 = vstv %s1428
        %v1430 = vmul.f32 %v1379, %v1429
        %v1431 = vadd.f32 %v1399, %v1430
        %s1432 = sld [smem:[#allocation13 + $0xc]]
        %v1433 = vstv %s1432
        %v1434 = vmul.f32 %v1379, %v1433
        %v1435 = vadd.f32 %v1403, %v1434
        %s1436 = sld [smem:[#allocation13 + $0xd]]
        %v1437 = vstv %s1436
        %v1438 = vmul.f32 %v1379, %v1437
        %v1439 = vadd.f32 %v1407, %v1438
        %s1440 = sld [smem:[#allocation13 + $0xe]]
        %v1441 = vstv %s1440
        %v1442 = vmul.f32 %v1379, %v1441
        %v1443 = vadd.f32 %v1411, %v1442
        %s1444 = sld [smem:[#allocation13 + $0xf]]
        %v1445 = vstv %s1444
        %v1446 = vmul.f32 %v1379, %v1445
        %v1447 = vadd.f32 %v1415, %v1446
        %s1448 = sld [smem:[#allocation13 + $0x10]]
        %v1449 = vstv %s1448
        %v1450 = vmul.f32 %v1383, %v1449
        %v1451 = vadd.f32 %v1419, %v1450
        %s1452 = sld [smem:[#allocation13 + $0x11]]
        %v1453 = vstv %s1452
        %v1454 = vmul.f32 %v1383, %v1453
        %v1455 = vadd.f32 %v1423, %v1454
        %s1456 = sld [smem:[#allocation13 + $0x12]]
        %v1457 = vstv %s1456
        %v1458 = vmul.f32 %v1383, %v1457
        %v1459 = vadd.f32 %v1427, %v1458
        %s1460 = sld [smem:[#allocation13 + $0x13]]
        %v1461 = vstv %s1460
        %v1462 = vmul.f32 %v1383, %v1461
        %v1463 = vadd.f32 %v1431, %v1462
        %s1464 = sld [smem:[#allocation13 + $0x14]]
        %v1465 = vstv %s1464
        %v1466 = vmul.f32 %v1383, %v1465
        %v1467 = vadd.f32 %v1435, %v1466
        %s1468 = sld [smem:[#allocation13 + $0x15]]
        %v1469 = vstv %s1468
        %v1470 = vmul.f32 %v1383, %v1469
        %v1471 = vadd.f32 %v1439, %v1470
        %s1472 = sld [smem:[#allocation13 + $0x16]]
        %v1473 = vstv %s1472
        %v1474 = vmul.f32 %v1383, %v1473
        %v1475 = vadd.f32 %v1443, %v1474
        %s1476 = sld [smem:[#allocation13 + $0x17]]
        %v1477 = vstv %s1476
        %v1478 = vmul.f32 %v1383, %v1477
        %v1479 = vadd.f32 %v1447, %v1478
        %v1480 = vld [vmem:[#allocation4 + $0x1] sm:$0xff]
        %1481 = vrot.lane.b32.xlu0 %v1480, 1
        %v1482 = vpop.permute.xlu0 %1481
        %1483 = vrot.lane.b32.xlu0 %v1480, 127
        %v1484 = vpop.permute.xlu0 %1483
        %s1485 = sld [smem:[#allocation13 + $0x18]]
        %v1486 = vstv %s1485
        %v1487 = vmul.f32 %v1482, %v1486
        %v1488 = vadd.f32 %v1451, %v1487
        %s1489 = sld [smem:[#allocation13 + $0x19]]
        %v1490 = vstv %s1489
        %v1491 = vmul.f32 %v1482, %v1490
        %v1492 = vadd.f32 %v1455, %v1491
        %s1493 = sld [smem:[#allocation13 + $0x1a]]
        %v1494 = vstv %s1493
        %v1495 = vmul.f32 %v1482, %v1494
        %v1496 = vadd.f32 %v1459, %v1495
        %s1497 = sld [smem:[#allocation13 + $0x1b]]
        %v1498 = vstv %s1497
        %v1499 = vmul.f32 %v1482, %v1498
        %v1500 = vadd.f32 %v1463, %v1499
        %s1501 = sld [smem:[#allocation13 + $0x1c]]
        %v1502 = vstv %s1501
        %v1503 = vmul.f32 %v1482, %v1502
        %v1504 = vadd.f32 %v1467, %v1503
        %s1505 = sld [smem:[#allocation13 + $0x1d]]
        %v1506 = vstv %s1505
        %v1507 = vmul.f32 %v1482, %v1506
        %v1508 = vadd.f32 %v1471, %v1507
        %s1509 = sld [smem:[#allocation13 + $0x1e]]
        %v1510 = vstv %s1509
        %v1511 = vmul.f32 %v1482, %v1510
        %v1512 = vadd.f32 %v1475, %v1511
        %s1513 = sld [smem:[#allocation13 + $0x1f]]
        %v1514 = vstv %s1513
        %v1515 = vmul.f32 %v1482, %v1514
        %v1516 = vadd.f32 %v1479, %v1515
        %s1517 = sld [smem:[#allocation13 + $0x20]]
        %v1518 = vstv %s1517
        %v1519 = vmul.f32 %v1480, %v1518
        %v1520 = vadd.f32 %v1488, %v1519
        %s1521 = sld [smem:[#allocation13 + $0x21]]
        %v1522 = vstv %s1521
        %v1523 = vmul.f32 %v1480, %v1522
        %v1524 = vadd.f32 %v1492, %v1523
        %s1525 = sld [smem:[#allocation13 + $0x22]]
        %v1526 = vstv %s1525
        %v1527 = vmul.f32 %v1480, %v1526
        %v1528 = vadd.f32 %v1496, %v1527
        %s1529 = sld [smem:[#allocation13 + $0x23]]
        %v1530 = vstv %s1529
        %v1531 = vmul.f32 %v1480, %v1530
        %v1532 = vadd.f32 %v1500, %v1531
        %s1533 = sld [smem:[#allocation13 + $0x24]]
        %v1534 = vstv %s1533
        %v1535 = vmul.f32 %v1480, %v1534
        %v1536 = vadd.f32 %v1504, %v1535
        %s1537 = sld [smem:[#allocation13 + $0x25]]
        %v1538 = vstv %s1537
        %v1539 = vmul.f32 %v1480, %v1538
        %v1540 = vadd.f32 %v1508, %v1539
        %s1541 = sld [smem:[#allocation13 + $0x26]]
        %v1542 = vstv %s1541
        %v1543 = vmul.f32 %v1480, %v1542
        %v1544 = vadd.f32 %v1512, %v1543
        %s1545 = sld [smem:[#allocation13 + $0x27]]
        %v1546 = vstv %s1545
        %v1547 = vmul.f32 %v1480, %v1546
        %v1548 = vadd.f32 %v1516, %v1547
        %s1549 = sld [smem:[#allocation13 + $0x28]]
        %v1550 = vstv %s1549
        %v1551 = vmul.f32 %v1484, %v1550
        %v1552 = vadd.f32 %v1520, %v1551
        %s1553 = sld [smem:[#allocation13 + $0x29]]
        %v1554 = vstv %s1553
        %v1555 = vmul.f32 %v1484, %v1554
        %v1556 = vadd.f32 %v1524, %v1555
        %s1557 = sld [smem:[#allocation13 + $0x2a]]
        %v1558 = vstv %s1557
        %v1559 = vmul.f32 %v1484, %v1558
        %v1560 = vadd.f32 %v1528, %v1559
        %s1561 = sld [smem:[#allocation13 + $0x2b]]
        %v1562 = vstv %s1561
        %v1563 = vmul.f32 %v1484, %v1562
        %v1564 = vadd.f32 %v1532, %v1563
        %s1565 = sld [smem:[#allocation13 + $0x2c]]
        %v1566 = vstv %s1565
        %v1567 = vmul.f32 %v1484, %v1566
        %v1568 = vadd.f32 %v1536, %v1567
        %s1569 = sld [smem:[#allocation13 + $0x2d]]
        %v1570 = vstv %s1569
        %v1571 = vmul.f32 %v1484, %v1570
        %v1572 = vadd.f32 %v1540, %v1571
        %s1573 = sld [smem:[#allocation13 + $0x2e]]
        %v1574 = vstv %s1573
        %v1575 = vmul.f32 %v1484, %v1574
        %v1576 = vadd.f32 %v1544, %v1575
        %s1577 = sld [smem:[#allocation13 + $0x2f]]
        %v1578 = vstv %s1577
        %v1579 = vmul.f32 %v1484, %v1578
        %v1580 = vadd.f32 %v1548, %v1579
        %v1581 = vld [vmem:[#allocation4 + $0x2] sm:$0xff]
        %1582 = vrot.lane.b32.xlu0 %v1581, 1
        %v1583 = vpop.permute.xlu0 %1582
        %1584 = vrot.lane.b32.xlu0 %v1581, 127
        %v1585 = vpop.permute.xlu0 %1584
        %s1586 = sld [smem:[#allocation13 + $0x30]]
        %v1587 = vstv %s1586
        %v1588 = vmul.f32 %v1583, %v1587
        %v1589 = vadd.f32 %v1552, %v1588
        %s1590 = sld [smem:[#allocation13 + $0x31]]
        %v1591 = vstv %s1590
        %v1592 = vmul.f32 %v1583, %v1591
        %v1593 = vadd.f32 %v1556, %v1592
        %s1594 = sld [smem:[#allocation13 + $0x32]]
        %v1595 = vstv %s1594
        %v1596 = vmul.f32 %v1583, %v1595
        %v1597 = vadd.f32 %v1560, %v1596
        %s1598 = sld [smem:[#allocation13 + $0x33]]
        %v1599 = vstv %s1598
        %v1600 = vmul.f32 %v1583, %v1599
        %v1601 = vadd.f32 %v1564, %v1600
        %s1602 = sld [smem:[#allocation13 + $0x34]]
        %v1603 = vstv %s1602
        %v1604 = vmul.f32 %v1583, %v1603
        %v1605 = vadd.f32 %v1568, %v1604
        %s1606 = sld [smem:[#allocation13 + $0x35]]
        %v1607 = vstv %s1606
        %v1608 = vmul.f32 %v1583, %v1607
        %v1609 = vadd.f32 %v1572, %v1608
        %s1610 = sld [smem:[#allocation13 + $0x36]]
        %v1611 = vstv %s1610
        %v1612 = vmul.f32 %v1583, %v1611
        %v1613 = vadd.f32 %v1576, %v1612
        %s1614 = sld [smem:[#allocation13 + $0x37]]
        %v1615 = vstv %s1614
        %v1616 = vmul.f32 %v1583, %v1615
        %v1617 = vadd.f32 %v1580, %v1616
        %s1618 = sld [smem:[#allocation13 + $0x38]]
        %v1619 = vstv %s1618
        %v1620 = vmul.f32 %v1581, %v1619
        %v1621 = vadd.f32 %v1589, %v1620
        %s1622 = sld [smem:[#allocation13 + $0x39]]
        %v1623 = vstv %s1622
        %v1624 = vmul.f32 %v1581, %v1623
        %v1625 = vadd.f32 %v1593, %v1624
        %s1626 = sld [smem:[#allocation13 + $0x3a]]
        %v1627 = vstv %s1626
        %v1628 = vmul.f32 %v1581, %v1627
        %v1629 = vadd.f32 %v1597, %v1628
        %s1630 = sld [smem:[#allocation13 + $0x3b]]
        %v1631 = vstv %s1630
        %v1632 = vmul.f32 %v1581, %v1631
        %v1633 = vadd.f32 %v1601, %v1632
        %s1634 = sld [smem:[#allocation13 + $0x3c]]
        %v1635 = vstv %s1634
        %v1636 = vmul.f32 %v1581, %v1635
        %v1637 = vadd.f32 %v1605, %v1636
        %s1638 = sld [smem:[#allocation13 + $0x3d]]
        %v1639 = vstv %s1638
        %v1640 = vmul.f32 %v1581, %v1639
        %v1641 = vadd.f32 %v1609, %v1640
        %s1642 = sld [smem:[#allocation13 + $0x3e]]
        %v1643 = vstv %s1642
        %v1644 = vmul.f32 %v1581, %v1643
        %v1645 = vadd.f32 %v1613, %v1644
        %s1646 = sld [smem:[#allocation13 + $0x3f]]
        %v1647 = vstv %s1646
        %v1648 = vmul.f32 %v1581, %v1647
        %v1649 = vadd.f32 %v1617, %v1648
        %s1650 = sld [smem:[#allocation13 + $0x40]]
        %v1651 = vstv %s1650
        %v1652 = vmul.f32 %v1585, %v1651
        %v1653 = vadd.f32 %v1621, %v1652
        %s1654 = sld [smem:[#allocation13 + $0x41]]
        %v1655 = vstv %s1654
        %v1656 = vmul.f32 %v1585, %v1655
        %v1657 = vadd.f32 %v1625, %v1656
        %s1658 = sld [smem:[#allocation13 + $0x42]]
        %v1659 = vstv %s1658
        %v1660 = vmul.f32 %v1585, %v1659
        %v1661 = vadd.f32 %v1629, %v1660
        %s1662 = sld [smem:[#allocation13 + $0x43]]
        %v1663 = vstv %s1662
        %v1664 = vmul.f32 %v1585, %v1663
        %v1665 = vadd.f32 %v1633, %v1664
        %s1666 = sld [smem:[#allocation13 + $0x44]]
        %v1667 = vstv %s1666
        %v1668 = vmul.f32 %v1585, %v1667
        %v1669 = vadd.f32 %v1637, %v1668
        %s1670 = sld [smem:[#allocation13 + $0x45]]
        %v1671 = vstv %s1670
        %v1672 = vmul.f32 %v1585, %v1671
        %v1673 = vadd.f32 %v1641, %v1672
        %s1674 = sld [smem:[#allocation13 + $0x46]]
        %v1675 = vstv %s1674
        %v1676 = vmul.f32 %v1585, %v1675
        %v1677 = vadd.f32 %v1645, %v1676
        %s1678 = sld [smem:[#allocation13 + $0x47]]
        %v1679 = vstv %s1678
        %v1680 = vmul.f32 %v1585, %v1679
        %v1681 = vadd.f32 %v1649, %v1680
        %v1682 = vmax.f32 %v1653, 0.0
        %v1683 = vmax.f32 %v1657, 0.0
        %v1684 = vmax.f32 %v1661, 0.0
        %v1685 = vmax.f32 %v1665, 0.0
        %v1686 = vmax.f32 %v1669, 0.0
        %v1687 = vmax.f32 %v1673, 0.0
        %v1688 = vmax.f32 %v1677, 0.0
        %v1689 = vmax.f32 %v1681, 0.0
        %v1690 = vsel %vm1354, %v1682, 0.0
        %1691 = vst [vmem:[#allocation5 + $0x1] sm:$0xff] %v1690
        %v1692 = vsel %vm1354, %v1683, 0.0
        %1693 = vst [vmem:[%s465 + $0x1] sm:$0xff] %v1692
        %v1694 = vsel %vm1354, %v1684, 0.0
        %1695 = vst [vmem:[%s468 + $0x1] sm:$0xff] %v1694
        %v1696 = vsel %vm1354, %v1685, 0.0
        %1697 = vst [vmem:[%s471 + $0x1] sm:$0xff] %v1696
        %v1698 = vsel %vm1354, %v1686, 0.0
        %1699 = vst [vmem:[%s474 + $0x1] sm:$0xff] %v1698
        %v1700 = vsel %vm1354, %v1687, 0.0
        %1701 = vst [vmem:[%s477 + $0x1] sm:$0xff] %v1700
        %v1702 = vsel %vm1354, %v1688, 0.0
        %1703 = vst [vmem:[%s480 + $0x1] sm:$0xff] %v1702
        %v1704 = vsel %vm1354, %v1689, 0.0
        %1705 = vst [vmem:[%s483 + $0x1] sm:$0xff] %v1704
        %s1706 = sld [smem:[#allocation16]]
        %v1707 = vstv %s1706
        %v1708 = vadd.f32 %v1707, 0.0
        %v1709 = vld [vmem:[#allocation5] sm:$0xff]
        %1710 = vrot.lane.b32.xlu0 %v1709, 1
        %v1711 = vpop.permute.xlu0 %1710
        %1712 = vrot.lane.b32.xlu0 %v1709, 127
        %v1713 = vpop.permute.xlu0 %1712
        %s1714 = sld [smem:[#allocation15]]
        %v1715 = vstv %s1714
        %v1716 = vmul.f32 %v1711, %v1715
        %v1717 = vadd.f32 %v1708, %v1716
        %s1718 = sld [smem:[#allocation15 + $0x8]]
        %v1719 = vstv %s1718
        %v1720 = vmul.f32 %v1709, %v1719
        %v1721 = vadd.f32 %v1717, %v1720
        %s1722 = sld [smem:[#allocation15 + $0x10]]
        %v1723 = vstv %s1722
        %v1724 = vmul.f32 %v1713, %v1723
        %v1725 = vadd.f32 %v1721, %v1724
        %v1726 = vld [vmem:[#allocation5 + $0x1] sm:$0xff]
        %1727 = vrot.lane.b32.xlu0 %v1726, 1
        %v1728 = vpop.permute.xlu0 %1727
        %1729 = vrot.lane.b32.xlu0 %v1726, 127
        %v1730 = vpop.permute.xlu0 %1729
        %s1731 = sld [smem:[#allocation15 + $0x18]]
        %v1732 = vstv %s1731
        %v1733 = vmul.f32 %v1728, %v1732
        %v1734 = vadd.f32 %v1725, %v1733
        %s1735 = sld [smem:[#allocation15 + $0x20]]
        %v1736 = vstv %s1735
        %v1737 = vmul.f32 %v1726, %v1736
        %v1738 = vadd.f32 %v1734, %v1737
        %s1739 = sld [smem:[#allocation15 + $0x28]]
        %v1740 = vstv %s1739
        %v1741 = vmul.f32 %v1730, %v1740
        %v1742 = vadd.f32 %v1738, %v1741
        %v1743 = vld [vmem:[#allocation5 + $0x2] sm:$0xff]
        %1744 = vrot.lane.b32.xlu0 %v1743, 1
        %v1745 = vpop.permute.xlu0 %1744
        %1746 = vrot.lane.b32.xlu0 %v1743, 127
        %v1747 = vpop.permute.xlu0 %1746
        %s1748 = sld [smem:[#allocation15 + $0x30]]
        %v1749 = vstv %s1748
        %v1750 = vmul.f32 %v1745, %v1749
        %v1751 = vadd.f32 %v1742, %v1750
        %s1752 = sld [smem:[#allocation15 + $0x38]]
        %v1753 = vstv %s1752
        %v1754 = vmul.f32 %v1743, %v1753
        %v1755 = vadd.f32 %v1751, %v1754
        %s1756 = sld [smem:[#allocation15 + $0x40]]
        %v1757 = vstv %s1756
        %v1758 = vmul.f32 %v1747, %v1757
        %v1759 = vadd.f32 %v1755, %v1758
        %v1760 = vld [vmem:[%s465] sm:$0xff]
        %1761 = vrot.lane.b32.xlu0 %v1760, 1
        %v1762 = vpop.permute.xlu0 %1761
        %1763 = vrot.lane.b32.xlu0 %v1760, 127
        %v1764 = vpop.permute.xlu0 %1763
        %s1765 = sld [smem:[#allocation15 + $0x1]]
        %v1766 = vstv %s1765
        %v1767 = vmul.f32 %v1762, %v1766
        %v1768 = vadd.f32 %v1759, %v1767
        %s1769 = sld [smem:[#allocation15 + $0x9]]
        %v1770 = vstv %s1769
        %v1771 = vmul.f32 %v1760, %v1770
        %v1772 = vadd.f32 %v1768, %v1771
        %s1773 = sld [smem:[#allocation15 + $0x11]]
        %v1774 = vstv %s1773
        %v1775 = vmul.f32 %v1764, %v1774
        %v1776 = vadd.f32 %v1772, %v1775
        %v1777 = vld [vmem:[%s465 + $0x1] sm:$0xff]
        %1778 = vrot.lane.b32.xlu0 %v1777, 1
        %v1779 = vpop.permute.xlu0 %1778
        %1780 = vrot.lane.b32.xlu0 %v1777, 127
        %v1781 = vpop.permute.xlu0 %1780
        %s1782 = sld [smem:[#allocation15 + $0x19]]
        %v1783 = vstv %s1782
        %v1784 = vmul.f32 %v1779, %v1783
        %v1785 = vadd.f32 %v1776, %v1784
        %s1786 = sld [smem:[#allocation15 + $0x21]]
        %v1787 = vstv %s1786
        %v1788 = vmul.f32 %v1777, %v1787
        %v1789 = vadd.f32 %v1785, %v1788
        %s1790 = sld [smem:[#allocation15 + $0x29]]
        %v1791 = vstv %s1790
        %v1792 = vmul.f32 %v1781, %v1791
        %v1793 = vadd.f32 %v1789, %v1792
        %v1794 = vld [vmem:[%s465 + $0x2] sm:$0xff]
        %1795 = vrot.lane.b32.xlu0 %v1794, 1
        %v1796 = vpop.permute.xlu0 %1795
        %1797 = vrot.lane.b32.xlu0 %v1794, 127
        %v1798 = vpop.permute.xlu0 %1797
        %s1799 = sld [smem:[#allocation15 + $0x31]]
        %v1800 = vstv %s1799
        %v1801 = vmul.f32 %v1796, %v1800
        %v1802 = vadd.f32 %v1793, %v1801
        %s1803 = sld [smem:[#allocation15 + $0x39]]
        %v1804 = vstv %s1803
        %v1805 = vmul.f32 %v1794, %v1804
        %v1806 = vadd.f32 %v1802, %v1805
        %s1807 = sld [smem:[#allocation15 + $0x41]]
        %v1808 = vstv %s1807
        %v1809 = vmul.f32 %v1798, %v1808
        %v1810 = vadd.f32 %v1806, %v1809
        %v1811 = vld [vmem:[%s468] sm:$0xff]
        %1812 = vrot.lane.b32.xlu0 %v1811, 1
        %v1813 = vpop.permute.xlu0 %1812
        %1814 = vrot.lane.b32.xlu0 %v1811, 127
        %v1815 = vpop.permute.xlu0 %1814
        %s1816 = sld [smem:[#allocation15 + $0x2]]
        %v1817 = vstv %s1816
        %v1818 = vmul.f32 %v1813, %v1817
        %v1819 = vadd.f32 %v1810, %v1818
        %s1820 = sld [smem:[#allocation15 + $0xa]]
        %v1821 = vstv %s1820
        %v1822 = vmul.f32 %v1811, %v1821
        %v1823 = vadd.f32 %v1819, %v1822
        %s1824 = sld [smem:[#allocation15 + $0x12]]
        %v1825 = vstv %s1824
        %v1826 = vmul.f32 %v1815, %v1825
        %v1827 = vadd.f32 %v1823, %v1826
        %v1828 = vld [vmem:[%s468 + $0x1] sm:$0xff]
        %1829 = vrot.lane.b32.xlu0 %v1828, 1
        %v1830 = vpop.permute.xlu0 %1829
        %1831 = vrot.lane.b32.xlu0 %v1828, 127
        %v1832 = vpop.permute.xlu0 %1831
        %s1833 = sld [smem:[#allocation15 + $0x1a]]
        %v1834 = vstv %s1833
        %v1835 = vmul.f32 %v1830, %v1834
        %v1836 = vadd.f32 %v1827, %v1835
        %s1837 = sld [smem:[#allocation15 + $0x22]]
        %v1838 = vstv %s1837
        %v1839 = vmul.f32 %v1828, %v1838
        %v1840 = vadd.f32 %v1836, %v1839
        %s1841 = sld [smem:[#allocation15 + $0x2a]]
        %v1842 = vstv %s1841
        %v1843 = vmul.f32 %v1832, %v1842
        %v1844 = vadd.f32 %v1840, %v1843
        %v1845 = vld [vmem:[%s468 + $0x2] sm:$0xff]
        %1846 = vrot.lane.b32.xlu0 %v1845, 1
        %v1847 = vpop.permute.xlu0 %1846
        %1848 = vrot.lane.b32.xlu0 %v1845, 127
        %v1849 = vpop.permute.xlu0 %1848
        %s1850 = sld [smem:[#allocation15 + $0x32]]
        %v1851 = vstv %s1850
        %v1852 = vmul.f32 %v1847, %v1851
        %v1853 = vadd.f32 %v1844, %v1852
        %s1854 = sld [smem:[#allocation15 + $0x3a]]
        %v1855 = vstv %s1854
        %v1856 = vmul.f32 %v1845, %v1855
        %v1857 = vadd.f32 %v1853, %v1856
        %s1858 = sld [smem:[#allocation15 + $0x42]]
        %v1859 = vstv %s1858
        %v1860 = vmul.f32 %v1849, %v1859
        %v1861 = vadd.f32 %v1857, %v1860
        %v1862 = vld [vmem:[%s471] sm:$0xff]
        %1863 = vrot.lane.b32.xlu0 %v1862, 1
        %v1864 = vpop.permute.xlu0 %1863
        %1865 = vrot.lane.b32.xlu0 %v1862, 127
        %v1866 = vpop.permute.xlu0 %1865
        %s1867 = sld [smem:[#allocation15 + $0x3]]
        %v1868 = vstv %s1867
        %v1869 = vmul.f32 %v1864, %v1868
        %v1870 = vadd.f32 %v1861, %v1869
        %s1871 = sld [smem:[#allocation15 + $0xb]]
        %v1872 = vstv %s1871
        %v1873 = vmul.f32 %v1862, %v1872
        %v1874 = vadd.f32 %v1870, %v1873
        %s1875 = sld [smem:[#allocation15 + $0x13]]
        %v1876 = vstv %s1875
        %v1877 = vmul.f32 %v1866, %v1876
        %v1878 = vadd.f32 %v1874, %v1877
        %v1879 = vld [vmem:[%s471 + $0x1] sm:$0xff]
        %1880 = vrot.lane.b32.xlu0 %v1879, 1
        %v1881 = vpop.permute.xlu0 %1880
        %1882 = vrot.lane.b32.xlu0 %v1879, 127
        %v1883 = vpop.permute.xlu0 %1882
        %s1884 = sld [smem:[#allocation15 + $0x1b]]
        %v1885 = vstv %s1884
        %v1886 = vmul.f32 %v1881, %v1885
        %v1887 = vadd.f32 %v1878, %v1886
        %s1888 = sld [smem:[#allocation15 + $0x23]]
        %v1889 = vstv %s1888
        %v1890 = vmul.f32 %v1879, %v1889
        %v1891 = vadd.f32 %v1887, %v1890
        %s1892 = sld [smem:[#allocation15 + $0x2b]]
        %v1893 = vstv %s1892
        %v1894 = vmul.f32 %v1883, %v1893
        %v1895 = vadd.f32 %v1891, %v1894
        %v1896 = vld [vmem:[%s471 + $0x2] sm:$0xff]
        %1897 = vrot.lane.b32.xlu0 %v1896, 1
        %v1898 = vpop.permute.xlu0 %1897
        %1899 = vrot.lane.b32.xlu0 %v1896, 127
        %v1900 = vpop.permute.xlu0 %1899
        %s1901 = sld [smem:[#allocation15 + $0x33]]
        %v1902 = vstv %s1901
        %v1903 = vmul.f32 %v1898, %v1902
        %v1904 = vadd.f32 %v1895, %v1903
        %s1905 = sld [smem:[#allocation15 + $0x3b]]
        %v1906 = vstv %s1905
        %v1907 = vmul.f32 %v1896, %v1906
        %v1908 = vadd.f32 %v1904, %v1907
        %s1909 = sld [smem:[#allocation15 + $0x43]]
        %v1910 = vstv %s1909
        %v1911 = vmul.f32 %v1900, %v1910
        %v1912 = vadd.f32 %v1908, %v1911
        %v1913 = vld [vmem:[%s474] sm:$0xff]
        %1914 = vrot.lane.b32.xlu0 %v1913, 1
        %v1915 = vpop.permute.xlu0 %1914
        %1916 = vrot.lane.b32.xlu0 %v1913, 127
        %v1917 = vpop.permute.xlu0 %1916
        %s1918 = sld [smem:[#allocation15 + $0x4]]
        %v1919 = vstv %s1918
        %v1920 = vmul.f32 %v1915, %v1919
        %v1921 = vadd.f32 %v1912, %v1920
        %s1922 = sld [smem:[#allocation15 + $0xc]]
        %v1923 = vstv %s1922
        %v1924 = vmul.f32 %v1913, %v1923
        %v1925 = vadd.f32 %v1921, %v1924
        %s1926 = sld [smem:[#allocation15 + $0x14]]
        %v1927 = vstv %s1926
        %v1928 = vmul.f32 %v1917, %v1927
        %v1929 = vadd.f32 %v1925, %v1928
        %v1930 = vld [vmem:[%s474 + $0x1] sm:$0xff]
        %1931 = vrot.lane.b32.xlu0 %v1930, 1
        %v1932 = vpop.permute.xlu0 %1931
        %1933 = vrot.lane.b32.xlu0 %v1930, 127
        %v1934 = vpop.permute.xlu0 %1933
        %s1935 = sld [smem:[#allocation15 + $0x1c]]
        %v1936 = vstv %s1935
        %v1937 = vmul.f32 %v1932, %v1936
        %v1938 = vadd.f32 %v1929, %v1937
        %s1939 = sld [smem:[#allocation15 + $0x24]]
        %v1940 = vstv %s1939
        %v1941 = vmul.f32 %v1930, %v1940
        %v1942 = vadd.f32 %v1938, %v1941
        %s1943 = sld [smem:[#allocation15 + $0x2c]]
        %v1944 = vstv %s1943
        %v1945 = vmul.f32 %v1934, %v1944
        %v1946 = vadd.f32 %v1942, %v1945
        %v1947 = vld [vmem:[%s474 + $0x2] sm:$0xff]
        %1948 = vrot.lane.b32.xlu0 %v1947, 1
        %v1949 = vpop.permute.xlu0 %1948
        %1950 = vrot.lane.b32.xlu0 %v1947, 127
        %v1951 = vpop.permute.xlu0 %1950
        %s1952 = sld [smem:[#allocation15 + $0x34]]
        %v1953 = vstv %s1952
        %v1954 = vmul.f32 %v1949, %v1953
        %v1955 = vadd.f32 %v1946, %v1954
        %s1956 = sld [smem:[#allocation15 + $0x3c]]
        %v1957 = vstv %s1956
        %v1958 = vmul.f32 %v1947, %v1957
        %v1959 = vadd.f32 %v1955, %v1958
        %s1960 = sld [smem:[#allocation15 + $0x44]]
        %v1961 = vstv %s1960
        %v1962 = vmul.f32 %v1951, %v1961
        %v1963 = vadd.f32 %v1959, %v1962
        %v1964 = vld [vmem:[%s477] sm:$0xff]
        %1965 = vrot.lane.b32.xlu0 %v1964, 1
        %v1966 = vpop.permute.xlu0 %1965
        %1967 = vrot.lane.b32.xlu0 %v1964, 127
        %v1968 = vpop.permute.xlu0 %1967
        %s1969 = sld [smem:[#allocation15 + $0x5]]
        %v1970 = vstv %s1969
        %v1971 = vmul.f32 %v1966, %v1970
        %v1972 = vadd.f32 %v1963, %v1971
        %s1973 = sld [smem:[#allocation15 + $0xd]]
        %v1974 = vstv %s1973
        %v1975 = vmul.f32 %v1964, %v1974
        %v1976 = vadd.f32 %v1972, %v1975
        %s1977 = sld [smem:[#allocation15 + $0x15]]
        %v1978 = vstv %s1977
        %v1979 = vmul.f32 %v1968, %v1978
        %v1980 = vadd.f32 %v1976, %v1979
        %v1981 = vld [vmem:[%s477 + $0x1] sm:$0xff]
        %1982 = vrot.lane.b32.xlu0 %v1981, 1
        %v1983 = vpop.permute.xlu0 %1982
        %1984 = vrot.lane.b32.xlu0 %v1981, 127
        %v1985 = vpop.permute.xlu0 %1984
        %s1986 = sld [smem:[#allocation15 + $0x1d]]
        %v1987 = vstv %s1986
        %v1988 = vmul.f32 %v1983, %v1987
        %v1989 = vadd.f32 %v1980, %v1988
        %s1990 = sld [smem:[#allocation15 + $0x25]]
        %v1991 = vstv %s1990
        %v1992 = vmul.f32 %v1981, %v1991
        %v1993 = vadd.f32 %v1989, %v1992
        %s1994 = sld [smem:[#allocation15 + $0x2d]]
        %v1995 = vstv %s1994
        %v1996 = vmul.f32 %v1985, %v1995
        %v1997 = vadd.f32 %v1993, %v1996
        %v1998 = vld [vmem:[%s477 + $0x2] sm:$0xff]
        %1999 = vrot.lane.b32.xlu0 %v1998, 1
        %v2000 = vpop.permute.xlu0 %1999
        %2001 = vrot.lane.b32.xlu0 %v1998, 127
        %v2002 = vpop.permute.xlu0 %2001
        %s2003 = sld [smem:[#allocation15 + $0x35]]
        %v2004 = vstv %s2003
        %v2005 = vmul.f32 %v2000, %v2004
        %v2006 = vadd.f32 %v1997, %v2005
        %s2007 = sld [smem:[#allocation15 + $0x3d]]
        %v2008 = vstv %s2007
        %v2009 = vmul.f32 %v1998, %v2008
        %v2010 = vadd.f32 %v2006, %v2009
        %s2011 = sld [smem:[#allocation15 + $0x45]]
        %v2012 = vstv %s2011
        %v2013 = vmul.f32 %v2002, %v2012
        %v2014 = vadd.f32 %v2010, %v2013
        %v2015 = vld [vmem:[%s480] sm:$0xff]
        %2016 = vrot.lane.b32.xlu0 %v2015, 1
        %v2017 = vpop.permute.xlu0 %2016
        %2018 = vrot.lane.b32.xlu0 %v2015, 127
        %v2019 = vpop.permute.xlu0 %2018
        %s2020 = sld [smem:[#allocation15 + $0x6]]
        %v2021 = vstv %s2020
        %v2022 = vmul.f32 %v2017, %v2021
        %v2023 = vadd.f32 %v2014, %v2022
        %s2024 = sld [smem:[#allocation15 + $0xe]]
        %v2025 = vstv %s2024
        %v2026 = vmul.f32 %v2015, %v2025
        %v2027 = vadd.f32 %v2023, %v2026
        %s2028 = sld [smem:[#allocation15 + $0x16]]
        %v2029 = vstv %s2028
        %v2030 = vmul.f32 %v2019, %v2029
        %v2031 = vadd.f32 %v2027, %v2030
        %v2032 = vld [vmem:[%s480 + $0x1] sm:$0xff]
        %2033 = vrot.lane.b32.xlu0 %v2032, 1
        %v2034 = vpop.permute.xlu0 %2033
        %2035 = vrot.lane.b32.xlu0 %v2032, 127
        %v2036 = vpop.permute.xlu0 %2035
        %s2037 = sld [smem:[#allocation15 + $0x1e]]
        %v2038 = vstv %s2037
        %v2039 = vmul.f32 %v2034, %v2038
        %v2040 = vadd.f32 %v2031, %v2039
        %s2041 = sld [smem:[#allocation15 + $0x26]]
        %v2042 = vstv %s2041
        %v2043 = vmul.f32 %v2032, %v2042
        %v2044 = vadd.f32 %v2040, %v2043
        %s2045 = sld [smem:[#allocation15 + $0x2e]]
        %v2046 = vstv %s2045
        %v2047 = vmul.f32 %v2036, %v2046
        %v2048 = vadd.f32 %v2044, %v2047
        %v2049 = vld [vmem:[%s480 + $0x2] sm:$0xff]
        %2050 = vrot.lane.b32.xlu0 %v2049, 1
        %v2051 = vpop.permute.xlu0 %2050
        %2052 = vrot.lane.b32.xlu0 %v2049, 127
        %v2053 = vpop.permute.xlu0 %2052
        %s2054 = sld [smem:[#allocation15 + $0x36]]
        %v2055 = vstv %s2054
        %v2056 = vmul.f32 %v2051, %v2055
        %v2057 = vadd.f32 %v2048, %v2056
        %s2058 = sld [smem:[#allocation15 + $0x3e]]
        %v2059 = vstv %s2058
        %v2060 = vmul.f32 %v2049, %v2059
        %v2061 = vadd.f32 %v2057, %v2060
        %s2062 = sld [smem:[#allocation15 + $0x46]]
        %v2063 = vstv %s2062
        %v2064 = vmul.f32 %v2053, %v2063
        %v2065 = vadd.f32 %v2061, %v2064
        %v2066 = vld [vmem:[%s483] sm:$0xff]
        %2067 = vrot.lane.b32.xlu0 %v2066, 1
        %v2068 = vpop.permute.xlu0 %2067
        %2069 = vrot.lane.b32.xlu0 %v2066, 127
        %v2070 = vpop.permute.xlu0 %2069
        %s2071 = sld [smem:[#allocation15 + $0x7]]
        %v2072 = vstv %s2071
        %v2073 = vmul.f32 %v2068, %v2072
        %v2074 = vadd.f32 %v2065, %v2073
        %s2075 = sld [smem:[#allocation15 + $0xf]]
        %v2076 = vstv %s2075
        %v2077 = vmul.f32 %v2066, %v2076
        %v2078 = vadd.f32 %v2074, %v2077
        %s2079 = sld [smem:[#allocation15 + $0x17]]
        %v2080 = vstv %s2079
        %v2081 = vmul.f32 %v2070, %v2080
        %v2082 = vadd.f32 %v2078, %v2081
        %v2083 = vld [vmem:[%s483 + $0x1] sm:$0xff]
        %2084 = vrot.lane.b32.xlu0 %v2083, 1
        %v2085 = vpop.permute.xlu0 %2084
        %2086 = vrot.lane.b32.xlu0 %v2083, 127
        %v2087 = vpop.permute.xlu0 %2086
        %s2088 = sld [smem:[#allocation15 + $0x1f]]
        %v2089 = vstv %s2088
        %v2090 = vmul.f32 %v2085, %v2089
        %v2091 = vadd.f32 %v2082, %v2090
        %s2092 = sld [smem:[#allocation15 + $0x27]]
        %v2093 = vstv %s2092
        %v2094 = vmul.f32 %v2083, %v2093
        %v2095 = vadd.f32 %v2091, %v2094
        %s2096 = sld [smem:[#allocation15 + $0x2f]]
        %v2097 = vstv %s2096
        %v2098 = vmul.f32 %v2087, %v2097
        %v2099 = vadd.f32 %v2095, %v2098
        %v2100 = vld [vmem:[%s483 + $0x2] sm:$0xff]
        %2101 = vrot.lane.b32.xlu0 %v2100, 1
        %v2102 = vpop.permute.xlu0 %2101
        %2103 = vrot.lane.b32.xlu0 %v2100, 127
        %v2104 = vpop.permute.xlu0 %2103
        %s2105 = sld [smem:[#allocation15 + $0x37]]
        %v2106 = vstv %s2105
        %v2107 = vmul.f32 %v2102, %v2106
        %v2108 = vadd.f32 %v2099, %v2107
        %s2109 = sld [smem:[#allocation15 + $0x3f]]
        %v2110 = vstv %s2109
        %v2111 = vmul.f32 %v2100, %v2110
        %v2112 = vadd.f32 %v2108, %v2111
        %s2113 = sld [smem:[#allocation15 + $0x47]]
        %v2114 = vstv %s2113
        %v2115 = vmul.f32 %v2104, %v2114
        %v2116 = vadd.f32 %v2112, %v2115
        %v2117 = vsel %vm1354, %v2116, 0.0
        %v2118 = vadd.f32 %v1351, %v2117
        %vm2119 = vcmask 64512
        %2120 = vst.msk [vmem:[%s419] sm:$0xff] %vm2119, %v2118
        %v2121 = vld [vmem:[%s16] sm:$0xff]
        %v2122 = vld [vmem:[%s16 + $0x8] sm:$0xff]
        %v2123 = vld [vmem:[#allocation24] sm:$0xff]
        %v2124 = vld [vmem:[#allocation24 + $0x8] sm:$0xff]
        %v2125 = vld [vmem:[#allocation24 + $0x10] sm:$0xff]
        %v2126 = vld [vmem:[#allocation24 + $0x18] sm:$0xff]
        %v2127 = vld [vmem:[#allocation24 + $0x20] sm:$0xff]
        %v2128 = vld [vmem:[#allocation24 + $0x28] sm:$0xff]
        %v2129 = vld [vmem:[#allocation24 + $0x30] sm:$0xff]
        %v2130 = vld [vmem:[#allocation24 + $0x38] sm:$0xff]
        %v2131 = vld [vmem:[#allocation24 + $0x40] sm:$0xff]
        %v2132 = vld [vmem:[#allocation24 + $0x48] sm:$0xff]
        %v2133 = vld [vmem:[#allocation24 + $0x50] sm:$0xff]
        %v2134 = vld [vmem:[#allocation24 + $0x58] sm:$0xff]
        %v2135 = vld [vmem:[#allocation24 + $0x60] sm:$0xff]
        %v2136 = vld [vmem:[#allocation24 + $0x68] sm:$0xff]
        %v2137 = vld [vmem:[#allocation24 + $0x70] sm:$0xff]
        %v2138 = vld [vmem:[#allocation24 + $0x78] sm:$0xff]
        %2139 = vmatpush.msra.mxu0 %v2138
        %2140 = vmatpush.msra.mxu0 %v2137
        %2141 = vmatpush.msra.mxu0 %v2136
        %2142 = vmatpush.msra.mxu0 %v2135
        %2143 = vmatpush.msra.mxu0 %v2134
        %2144 = vmatpush.msra.mxu0 %v2133
        %2145 = vmatpush.msra.mxu0 %v2132
        %2146 = vmatpush.msra.mxu0 %v2131
        %2147 = vmatpush.msra.mxu0 %v2130
        %2148 = vmatpush.msra.mxu0 %v2129
        %2149 = vmatpush.msra.mxu0 %v2128
        %2150 = vmatpush.msra.mxu0 %v2127
        %2151 = vmatpush.msra.mxu0 %v2126
        %2152 = vmatpush.msra.mxu0 %v2125
        %2153 = vmatpush.msra.mxu0 %v2124
        %2154 = vmatpush.msra.mxu0 %v2123
        %2155 = vmatmul.f32.gmra.mxu0 %v2118
        %v2156 = vpop.f32.mrf.mxu0
        %v2157 = vadd.f32 0.0, %v2156
        %2158 = vdwg.mxu0
        %v2160 = vsel %vm2119, %v2121, 0
        %v2163 = vsel %vm2119, %v2122, 0
        %2165 = vmatpush.msra.mxu0 0.0
        %2166 = vmatpush.msra.mxu0 0.0
        %2167 = vmatpush.msra.mxu0 0.0
        %2168 = vmatpush.msra.mxu0 0.0
        %2169 = vmatpush.msra.mxu0 0.0
        %2170 = vmatpush.msra.mxu0 0.0
        %2171 = vmatpush.msra.mxu0 0.0
        %2172 = vmatpush.msra.mxu0 0.0
        %2173 = vmatpush.msra.mxu0 0.0
        %2174 = vmatpush.msra.mxu0 0.0
        %2175 = vmatpush.msra.mxu0 0.0
        %2176 = vmatpush.msra.mxu0 0.0
        %2177 = vmatpush.msra.mxu0 0.0
        %2178 = vmatpush.msra.mxu0 0.0
        %2179 = vmatpush.msra.mxu0 0.0
        %2180 = vmatpush.msra.mxu0 %v2157
        %2181 = vmatmul.f32.gmra.mxu0 %v2160
        %v2182 = vpop.f32.mrf.mxu0
        %v2183 = vadd.f32 0.0, %v2182
        %2184 = vmatmul.f32.gmra.mxu0 %v2163
        %v2185 = vpop.f32.mrf.mxu0
        %v2186 = vadd.f32 0.0, %v2185
        %2187 = vdwg.mxu0
        %2188 = vst [vmem:[#allocation6 + $0x1] sm:$0xff] %v2183
        %2189 = vst [vmem:[#allocation6 + $0x9] sm:$0xff] %v2186
        %v2190 = vld [vmem:[%s431] sm:$0xff]
        %v2191 = vld [vmem:[%s431 + $0x8] sm:$0xff]
        %vm2192 = vcmask 130048
        %2193 = vst.msk [vmem:[%s488 + $0x1] sm:$0xff] %vm2192, %v2190
        %2194 = vst.msk [vmem:[%s488 + $0x9] sm:$0xff] %vm2192, %v2191
        %vm2195 = vcmask 1047680
        %2196 = vst.msk [vmem:[%s488 + $0x1] sm:$0xff] %vm2195, 0.0
        %2197 = vst.msk [vmem:[%s488 + $0x9] sm:$0xff] %vm2195, 0.0
        %vm2198 = vcmp.lt.s32.totalorder %v520, 16
        %s2199 = sld [smem:[#allocation18]]
        %v2200 = vstv %s2199
        %v2201 = vadd.f32 %v2200, 0.0
        %s2202 = sld [smem:[#allocation18 + $0x1]]
        %v2203 = vstv %s2202
        %v2204 = vadd.f32 %v2203, 0.0
        %s2205 = sld [smem:[#allocation18 + $0x2]]
        %v2206 = vstv %s2205
        %v2207 = vadd.f32 %v2206, 0.0
        %s2208 = sld [smem:[#allocation18 + $0x3]]
        %v2209 = vstv %s2208
        %v2210 = vadd.f32 %v2209, 0.0
        %s2211 = sld [smem:[#allocation18 + $0x4]]
        %v2212 = vstv %s2211
        %v2213 = vadd.f32 %v2212, 0.0
        %s2214 = sld [smem:[#allocation18 + $0x5]]
        %v2215 = vstv %s2214
        %v2216 = vadd.f32 %v2215, 0.0
        %s2217 = sld [smem:[#allocation18 + $0x6]]
        %v2218 = vstv %s2217
        %v2219 = vadd.f32 %v2218, 0.0
        %s2220 = sld [smem:[#allocation18 + $0x7]]
        %v2221 = vstv %s2220
        %v2222 = vadd.f32 %v2221, 0.0
        %v2223 = vld [vmem:[#allocation6] sm:$0xff]
        %v2224 = vld [vmem:[#allocation6 + $0x8] sm:$0xff]
        %2225 = vrot.lane.b32.xlu0 %v2223, 1
        %v2226 = vpop.permute.xlu0 %2225
        %2227 = vrot.lane.b32.xlu0 %v2224, 1
        %v2228 = vpop.permute.xlu0 %2227
        %2229 = vrot.lane.b32.xlu0 %v2223, 127
        %v2230 = vpop.permute.xlu0 %2229
        %2231 = vrot.lane.b32.xlu0 %v2224, 127
        %v2232 = vpop.permute.xlu0 %2231
        %s2233 = sld [smem:[#allocation17]]
        %v2234 = vstv %s2233
        %v2235 = vmul.f32 %v2226, %v2234
        %v2236 = vmul.f32 %v2228, %v2234
        %v2237 = vadd.f32 %v2201, %v2235
        %v2238 = vadd.f32 %v2201, %v2236
        %s2239 = sld [smem:[#allocation17 + $0x1]]
        %v2240 = vstv %s2239
        %v2241 = vmul.f32 %v2226, %v2240
        %v2242 = vmul.f32 %v2228, %v2240
        %v2243 = vadd.f32 %v2204, %v2241
        %v2244 = vadd.f32 %v2204, %v2242
        %s2245 = sld [smem:[#allocation17 + $0x2]]
        %v2246 = vstv %s2245
        %v2247 = vmul.f32 %v2226, %v2246
        %v2248 = vmul.f32 %v2228, %v2246
        %v2249 = vadd.f32 %v2207, %v2247
        %v2250 = vadd.f32 %v2207, %v2248
        %s2251 = sld [smem:[#allocation17 + $0x3]]
        %v2252 = vstv %s2251
        %v2253 = vmul.f32 %v2226, %v2252
        %v2254 = vmul.f32 %v2228, %v2252
        %v2255 = vadd.f32 %v2210, %v2253
        %v2256 = vadd.f32 %v2210, %v2254
        %s2257 = sld [smem:[#allocation17 + $0x4]]
        %v2258 = vstv %s2257
        %v2259 = vmul.f32 %v2226, %v2258
        %v2260 = vmul.f32 %v2228, %v2258
        %v2261 = vadd.f32 %v2213, %v2259
        %v2262 = vadd.f32 %v2213, %v2260
        %s2263 = sld [smem:[#allocation17 + $0x5]]
        %v2264 = vstv %s2263
        %v2265 = vmul.f32 %v2226, %v2264
        %v2266 = vmul.f32 %v2228, %v2264
        %v2267 = vadd.f32 %v2216, %v2265
        %v2268 = vadd.f32 %v2216, %v2266
        %s2269 = sld [smem:[#allocation17 + $0x6]]
        %v2270 = vstv %s2269
        %v2271 = vmul.f32 %v2226, %v2270
        %v2272 = vmul.f32 %v2228, %v2270
        %v2273 = vadd.f32 %v2219, %v2271
        %v2274 = vadd.f32 %v2219, %v2272
        %s2275 = sld [smem:[#allocation17 + $0x7]]
        %v2276 = vstv %s2275
        %v2277 = vmul.f32 %v2226, %v2276
        %v2278 = vmul.f32 %v2228, %v2276
        %v2279 = vadd.f32 %v2222, %v2277
        %v2280 = vadd.f32 %v2222, %v2278
        %s2281 = sld [smem:[#allocation17 + $0x10]]
        %v2282 = vstv %s2281
        %v2283 = vmul.f32 %v2223, %v2282
        %v2284 = vmul.f32 %v2224, %v2282
        %v2285 = vadd.f32 %v2237, %v2283
        %v2286 = vadd.f32 %v2238, %v2284
        %s2287 = sld [smem:[#allocation17 + $0x11]]
        %v2288 = vstv %s2287
        %v2289 = vmul.f32 %v2223, %v2288
        %v2290 = vmul.f32 %v2224, %v2288
        %v2291 = vadd.f32 %v2243, %v2289
        %v2292 = vadd.f32 %v2244, %v2290
        %s2293 = sld [smem:[#allocation17 + $0x12]]
        %v2294 = vstv %s2293
        %v2295 = vmul.f32 %v2223, %v2294
        %v2296 = vmul.f32 %v2224, %v2294
        %v2297 = vadd.f32 %v2249, %v2295
        %v2298 = vadd.f32 %v2250, %v2296
        %s2299 = sld [smem:[#allocation17 + $0x13]]
        %v2300 = vstv %s2299
        %v2301 = vmul.f32 %v2223, %v2300
        %v2302 = vmul.f32 %v2224, %v2300
        %v2303 = vadd.f32 %v2255, %v2301
        %v2304 = vadd.f32 %v2256, %v2302
        %s2305 = sld [smem:[#allocation17 + $0x14]]
        %v2306 = vstv %s2305
        %v2307 = vmul.f32 %v2223, %v2306
        %v2308 = vmul.f32 %v2224, %v2306
        %v2309 = vadd.f32 %v2261, %v2307
        %v2310 = vadd.f32 %v2262, %v2308
        %s2311 = sld [smem:[#allocation17 + $0x15]]
        %v2312 = vstv %s2311
        %v2313 = vmul.f32 %v2223, %v2312
        %v2314 = vmul.f32 %v2224, %v2312
        %v2315 = vadd.f32 %v2267, %v2313
        %v2316 = vadd.f32 %v2268, %v2314
        %s2317 = sld [smem:[#allocation17 + $0x16]]
        %v2318 = vstv %s2317
        %v2319 = vmul.f32 %v2223, %v2318
        %v2320 = vmul.f32 %v2224, %v2318
        %v2321 = vadd.f32 %v2273, %v2319
        %v2322 = vadd.f32 %v2274, %v2320
        %s2323 = sld [smem:[#allocation17 + $0x17]]
        %v2324 = vstv %s2323
        %v2325 = vmul.f32 %v2223, %v2324
        %v2326 = vmul.f32 %v2224, %v2324
        %v2327 = vadd.f32 %v2279, %v2325
        %v2328 = vadd.f32 %v2280, %v2326
        %s2329 = sld [smem:[#allocation17 + $0x20]]
        %v2330 = vstv %s2329
        %v2331 = vmul.f32 %v2230, %v2330
        %v2332 = vmul.f32 %v2232, %v2330
        %v2333 = vadd.f32 %v2285, %v2331
        %v2334 = vadd.f32 %v2286, %v2332
        %s2335 = sld [smem:[#allocation17 + $0x21]]
        %v2336 = vstv %s2335
        %v2337 = vmul.f32 %v2230, %v2336
        %v2338 = vmul.f32 %v2232, %v2336
        %v2339 = vadd.f32 %v2291, %v2337
        %v2340 = vadd.f32 %v2292, %v2338
        %s2341 = sld [smem:[#allocation17 + $0x22]]
        %v2342 = vstv %s2341
        %v2343 = vmul.f32 %v2230, %v2342
        %v2344 = vmul.f32 %v2232, %v2342
        %v2345 = vadd.f32 %v2297, %v2343
        %v2346 = vadd.f32 %v2298, %v2344
        %s2347 = sld [smem:[#allocation17 + $0x23]]
        %v2348 = vstv %s2347
        %v2349 = vmul.f32 %v2230, %v2348
        %v2350 = vmul.f32 %v2232, %v2348
        %v2351 = vadd.f32 %v2303, %v2349
        %v2352 = vadd.f32 %v2304, %v2350
        %s2353 = sld [smem:[#allocation17 + $0x24]]
        %v2354 = vstv %s2353
        %v2355 = vmul.f32 %v2230, %v2354
        %v2356 = vmul.f32 %v2232, %v2354
        %v2357 = vadd.f32 %v2309, %v2355
        %v2358 = vadd.f32 %v2310, %v2356
        %s2359 = sld [smem:[#allocation17 + $0x25]]
        %v2360 = vstv %s2359
        %v2361 = vmul.f32 %v2230, %v2360
        %v2362 = vmul.f32 %v2232, %v2360
        %v2363 = vadd.f32 %v2315, %v2361
        %v2364 = vadd.f32 %v2316, %v2362
        %s2365 = sld [smem:[#allocation17 + $0x26]]
        %v2366 = vstv %s2365
        %v2367 = vmul.f32 %v2230, %v2366
        %v2368 = vmul.f32 %v2232, %v2366
        %v2369 = vadd.f32 %v2321, %v2367
        %v2370 = vadd.f32 %v2322, %v2368
        %s2371 = sld [smem:[#allocation17 + $0x27]]
        %v2372 = vstv %s2371
        %v2373 = vmul.f32 %v2230, %v2372
        %v2374 = vmul.f32 %v2232, %v2372
        %v2375 = vadd.f32 %v2327, %v2373
        %v2376 = vadd.f32 %v2328, %v2374
        %v2377 = vld [vmem:[#allocation6 + $0x1] sm:$0xff]
        %v2378 = vld [vmem:[#allocation6 + $0x9] sm:$0xff]
        %2379 = vrot.lane.b32.xlu0 %v2377, 1
        %v2380 = vpop.permute.xlu0 %2379
        %2381 = vrot.lane.b32.xlu0 %v2378, 1
        %v2382 = vpop.permute.xlu0 %2381
        %2383 = vrot.lane.b32.xlu0 %v2377, 127
        %v2384 = vpop.permute.xlu0 %2383
        %2385 = vrot.lane.b32.xlu0 %v2378, 127
        %v2386 = vpop.permute.xlu0 %2385
        %s2387 = sld [smem:[#allocation17 + $0x30]]
        %v2388 = vstv %s2387
        %v2389 = vmul.f32 %v2380, %v2388
        %v2390 = vmul.f32 %v2382, %v2388
        %v2391 = vadd.f32 %v2333, %v2389
        %v2392 = vadd.f32 %v2334, %v2390
        %s2393 = sld [smem:[#allocation17 + $0x31]]
        %v2394 = vstv %s2393
        %v2395 = vmul.f32 %v2380, %v2394
        %v2396 = vmul.f32 %v2382, %v2394
        %v2397 = vadd.f32 %v2339, %v2395
        %v2398 = vadd.f32 %v2340, %v2396
        %s2399 = sld [smem:[#allocation17 + $0x32]]
        %v2400 = vstv %s2399
        %v2401 = vmul.f32 %v2380, %v2400
        %v2402 = vmul.f32 %v2382, %v2400
        %v2403 = vadd.f32 %v2345, %v2401
        %v2404 = vadd.f32 %v2346, %v2402
        %s2405 = sld [smem:[#allocation17 + $0x33]]
        %v2406 = vstv %s2405
        %v2407 = vmul.f32 %v2380, %v2406
        %v2408 = vmul.f32 %v2382, %v2406
        %v2409 = vadd.f32 %v2351, %v2407
        %v2410 = vadd.f32 %v2352, %v2408
        %s2411 = sld [smem:[#allocation17 + $0x34]]
        %v2412 = vstv %s2411
        %v2413 = vmul.f32 %v2380, %v2412
        %v2414 = vmul.f32 %v2382, %v2412
        %v2415 = vadd.f32 %v2357, %v2413
        %v2416 = vadd.f32 %v2358, %v2414
        %s2417 = sld [smem:[#allocation17 + $0x35]]
        %v2418 = vstv %s2417
        %v2419 = vmul.f32 %v2380, %v2418
        %v2420 = vmul.f32 %v2382, %v2418
        %v2421 = vadd.f32 %v2363, %v2419
        %v2422 = vadd.f32 %v2364, %v2420
        %s2423 = sld [smem:[#allocation17 + $0x36]]
        %v2424 = vstv %s2423
        %v2425 = vmul.f32 %v2380, %v2424
        %v2426 = vmul.f32 %v2382, %v2424
        %v2427 = vadd.f32 %v2369, %v2425
        %v2428 = vadd.f32 %v2370, %v2426
        %s2429 = sld [smem:[#allocation17 + $0x37]]
        %v2430 = vstv %s2429
        %v2431 = vmul.f32 %v2380, %v2430
        %v2432 = vmul.f32 %v2382, %v2430
        %v2433 = vadd.f32 %v2375, %v2431
        %v2434 = vadd.f32 %v2376, %v2432
        %s2435 = sld [smem:[#allocation17 + $0x40]]
        %v2436 = vstv %s2435
        %v2437 = vmul.f32 %v2377, %v2436
        %v2438 = vmul.f32 %v2378, %v2436
        %v2439 = vadd.f32 %v2391, %v2437
        %v2440 = vadd.f32 %v2392, %v2438
        %s2441 = sld [smem:[#allocation17 + $0x41]]
        %v2442 = vstv %s2441
        %v2443 = vmul.f32 %v2377, %v2442
        %v2444 = vmul.f32 %v2378, %v2442
        %v2445 = vadd.f32 %v2397, %v2443
        %v2446 = vadd.f32 %v2398, %v2444
        %s2447 = sld [smem:[#allocation17 + $0x42]]
        %v2448 = vstv %s2447
        %v2449 = vmul.f32 %v2377, %v2448
        %v2450 = vmul.f32 %v2378, %v2448
        %v2451 = vadd.f32 %v2403, %v2449
        %v2452 = vadd.f32 %v2404, %v2450
        %s2453 = sld [smem:[#allocation17 + $0x43]]
        %v2454 = vstv %s2453
        %v2455 = vmul.f32 %v2377, %v2454
        %v2456 = vmul.f32 %v2378, %v2454
        %v2457 = vadd.f32 %v2409, %v2455
        %v2458 = vadd.f32 %v2410, %v2456
        %s2459 = sld [smem:[#allocation17 + $0x44]]
        %v2460 = vstv %s2459
        %v2461 = vmul.f32 %v2377, %v2460
        %v2462 = vmul.f32 %v2378, %v2460
        %v2463 = vadd.f32 %v2415, %v2461
        %v2464 = vadd.f32 %v2416, %v2462
        %s2465 = sld [smem:[#allocation17 + $0x45]]
        %v2466 = vstv %s2465
        %v2467 = vmul.f32 %v2377, %v2466
        %v2468 = vmul.f32 %v2378, %v2466
        %v2469 = vadd.f32 %v2421, %v2467
        %v2470 = vadd.f32 %v2422, %v2468
        %s2471 = sld [smem:[#allocation17 + $0x46]]
        %v2472 = vstv %s2471
        %v2473 = vmul.f32 %v2377, %v2472
        %v2474 = vmul.f32 %v2378, %v2472
        %v2475 = vadd.f32 %v2427, %v2473
        %v2476 = vadd.f32 %v2428, %v2474
        %s2477 = sld [smem:[#allocation17 + $0x47]]
        %v2478 = vstv %s2477
        %v2479 = vmul.f32 %v2377, %v2478
        %v2480 = vmul.f32 %v2378, %v2478
        %v2481 = vadd.f32 %v2433, %v2479
        %v2482 = vadd.f32 %v2434, %v2480
        %s2483 = sld [smem:[#allocation17 + $0x50]]
        %v2484 = vstv %s2483
        %v2485 = vmul.f32 %v2384, %v2484
        %v2486 = vmul.f32 %v2386, %v2484
        %v2487 = vadd.f32 %v2439, %v2485
        %v2488 = vadd.f32 %v2440, %v2486
        %s2489 = sld [smem:[#allocation17 + $0x51]]
        %v2490 = vstv %s2489
        %v2491 = vmul.f32 %v2384, %v2490
        %v2492 = vmul.f32 %v2386, %v2490
        %v2493 = vadd.f32 %v2445, %v2491
        %v2494 = vadd.f32 %v2446, %v2492
        %s2495 = sld [smem:[#allocation17 + $0x52]]
        %v2496 = vstv %s2495
        %v2497 = vmul.f32 %v2384, %v2496
        %v2498 = vmul.f32 %v2386, %v2496
        %v2499 = vadd.f32 %v2451, %v2497
        %v2500 = vadd.f32 %v2452, %v2498
        %s2501 = sld [smem:[#allocation17 + $0x53]]
        %v2502 = vstv %s2501
        %v2503 = vmul.f32 %v2384, %v2502
        %v2504 = vmul.f32 %v2386, %v2502
        %v2505 = vadd.f32 %v2457, %v2503
        %v2506 = vadd.f32 %v2458, %v2504
        %s2507 = sld [smem:[#allocation17 + $0x54]]
        %v2508 = vstv %s2507
        %v2509 = vmul.f32 %v2384, %v2508
        %v2510 = vmul.f32 %v2386, %v2508
        %v2511 = vadd.f32 %v2463, %v2509
        %v2512 = vadd.f32 %v2464, %v2510
        %s2513 = sld [smem:[#allocation17 + $0x55]]
        %v2514 = vstv %s2513
        %v2515 = vmul.f32 %v2384, %v2514
        %v2516 = vmul.f32 %v2386, %v2514
        %v2517 = vadd.f32 %v2469, %v2515
        %v2518 = vadd.f32 %v2470, %v2516
        %s2519 = sld [smem:[#allocation17 + $0x56]]
        %v2520 = vstv %s2519
        %v2521 = vmul.f32 %v2384, %v2520
        %v2522 = vmul.f32 %v2386, %v2520
        %v2523 = vadd.f32 %v2475, %v2521
        %v2524 = vadd.f32 %v2476, %v2522
        %s2525 = sld [smem:[#allocation17 + $0x57]]
        %v2526 = vstv %s2525
        %v2527 = vmul.f32 %v2384, %v2526
        %v2528 = vmul.f32 %v2386, %v2526
        %v2529 = vadd.f32 %v2481, %v2527
        %v2530 = vadd.f32 %v2482, %v2528
        %v2531 = vld [vmem:[#allocation6 + $0x2] sm:$0xff]
        %v2532 = vld [vmem:[#allocation6 + $0xa] sm:$0xff]
        %2533 = vrot.lane.b32.xlu0 %v2531, 1
        %v2534 = vpop.permute.xlu0 %2533
        %2535 = vrot.lane.b32.xlu0 %v2532, 1
        %v2536 = vpop.permute.xlu0 %2535
        %2537 = vrot.lane.b32.xlu0 %v2531, 127
        %v2538 = vpop.permute.xlu0 %2537
        %2539 = vrot.lane.b32.xlu0 %v2532, 127
        %v2540 = vpop.permute.xlu0 %2539
        %s2541 = sld [smem:[#allocation17 + $0x60]]
        %v2542 = vstv %s2541
        %v2543 = vmul.f32 %v2534, %v2542
        %v2544 = vmul.f32 %v2536, %v2542
        %v2545 = vadd.f32 %v2487, %v2543
        %v2546 = vadd.f32 %v2488, %v2544
        %s2547 = sld [smem:[#allocation17 + $0x61]]
        %v2548 = vstv %s2547
        %v2549 = vmul.f32 %v2534, %v2548
        %v2550 = vmul.f32 %v2536, %v2548
        %v2551 = vadd.f32 %v2493, %v2549
        %v2552 = vadd.f32 %v2494, %v2550
        %s2553 = sld [smem:[#allocation17 + $0x62]]
        %v2554 = vstv %s2553
        %v2555 = vmul.f32 %v2534, %v2554
        %v2556 = vmul.f32 %v2536, %v2554
        %v2557 = vadd.f32 %v2499, %v2555
        %v2558 = vadd.f32 %v2500, %v2556
        %s2559 = sld [smem:[#allocation17 + $0x63]]
        %v2560 = vstv %s2559
        %v2561 = vmul.f32 %v2534, %v2560
        %v2562 = vmul.f32 %v2536, %v2560
        %v2563 = vadd.f32 %v2505, %v2561
        %v2564 = vadd.f32 %v2506, %v2562
        %s2565 = sld [smem:[#allocation17 + $0x64]]
        %v2566 = vstv %s2565
        %v2567 = vmul.f32 %v2534, %v2566
        %v2568 = vmul.f32 %v2536, %v2566
        %v2569 = vadd.f32 %v2511, %v2567
        %v2570 = vadd.f32 %v2512, %v2568
        %s2571 = sld [smem:[#allocation17 + $0x65]]
        %v2572 = vstv %s2571
        %v2573 = vmul.f32 %v2534, %v2572
        %v2574 = vmul.f32 %v2536, %v2572
        %v2575 = vadd.f32 %v2517, %v2573
        %v2576 = vadd.f32 %v2518, %v2574
        %s2577 = sld [smem:[#allocation17 + $0x66]]
        %v2578 = vstv %s2577
        %v2579 = vmul.f32 %v2534, %v2578
        %v2580 = vmul.f32 %v2536, %v2578
        %v2581 = vadd.f32 %v2523, %v2579
        %v2582 = vadd.f32 %v2524, %v2580
        %s2583 = sld [smem:[#allocation17 + $0x67]]
        %v2584 = vstv %s2583
        %v2585 = vmul.f32 %v2534, %v2584
        %v2586 = vmul.f32 %v2536, %v2584
        %v2587 = vadd.f32 %v2529, %v2585
        %v2588 = vadd.f32 %v2530, %v2586
        %s2589 = sld [smem:[#allocation17 + $0x70]]
        %v2590 = vstv %s2589
        %v2591 = vmul.f32 %v2531, %v2590
        %v2592 = vmul.f32 %v2532, %v2590
        %v2593 = vadd.f32 %v2545, %v2591
        %v2594 = vadd.f32 %v2546, %v2592
        %s2595 = sld [smem:[#allocation17 + $0x71]]
        %v2596 = vstv %s2595
        %v2597 = vmul.f32 %v2531, %v2596
        %v2598 = vmul.f32 %v2532, %v2596
        %v2599 = vadd.f32 %v2551, %v2597
        %v2600 = vadd.f32 %v2552, %v2598
        %s2601 = sld [smem:[#allocation17 + $0x72]]
        %v2602 = vstv %s2601
        %v2603 = vmul.f32 %v2531, %v2602
        %v2604 = vmul.f32 %v2532, %v2602
        %v2605 = vadd.f32 %v2557, %v2603
        %v2606 = vadd.f32 %v2558, %v2604
        %s2607 = sld [smem:[#allocation17 + $0x73]]
        %v2608 = vstv %s2607
        %v2609 = vmul.f32 %v2531, %v2608
        %v2610 = vmul.f32 %v2532, %v2608
        %v2611 = vadd.f32 %v2563, %v2609
        %v2612 = vadd.f32 %v2564, %v2610
        %s2613 = sld [smem:[#allocation17 + $0x74]]
        %v2614 = vstv %s2613
        %v2615 = vmul.f32 %v2531, %v2614
        %v2616 = vmul.f32 %v2532, %v2614
        %v2617 = vadd.f32 %v2569, %v2615
        %v2618 = vadd.f32 %v2570, %v2616
        %s2619 = sld [smem:[#allocation17 + $0x75]]
        %v2620 = vstv %s2619
        %v2621 = vmul.f32 %v2531, %v2620
        %v2622 = vmul.f32 %v2532, %v2620
        %v2623 = vadd.f32 %v2575, %v2621
        %v2624 = vadd.f32 %v2576, %v2622
        %s2625 = sld [smem:[#allocation17 + $0x76]]
        %v2626 = vstv %s2625
        %v2627 = vmul.f32 %v2531, %v2626
        %v2628 = vmul.f32 %v2532, %v2626
        %v2629 = vadd.f32 %v2581, %v2627
        %v2630 = vadd.f32 %v2582, %v2628
        %s2631 = sld [smem:[#allocation17 + $0x77]]
        %v2632 = vstv %s2631
        %v2633 = vmul.f32 %v2531, %v2632
        %v2634 = vmul.f32 %v2532, %v2632
        %v2635 = vadd.f32 %v2587, %v2633
        %v2636 = vadd.f32 %v2588, %v2634
        %s2637 = sld [smem:[#allocation17 + $0x80]]
        %v2638 = vstv %s2637
        %v2639 = vmul.f32 %v2538, %v2638
        %v2640 = vmul.f32 %v2540, %v2638
        %v2641 = vadd.f32 %v2593, %v2639
        %v2642 = vadd.f32 %v2594, %v2640
        %s2643 = sld [smem:[#allocation17 + $0x81]]
        %v2644 = vstv %s2643
        %v2645 = vmul.f32 %v2538, %v2644
        %v2646 = vmul.f32 %v2540, %v2644
        %v2647 = vadd.f32 %v2599, %v2645
        %v2648 = vadd.f32 %v2600, %v2646
        %s2649 = sld [smem:[#allocation17 + $0x82]]
        %v2650 = vstv %s2649
        %v2651 = vmul.f32 %v2538, %v2650
        %v2652 = vmul.f32 %v2540, %v2650
        %v2653 = vadd.f32 %v2605, %v2651
        %v2654 = vadd.f32 %v2606, %v2652
        %s2655 = sld [smem:[#allocation17 + $0x83]]
        %v2656 = vstv %s2655
        %v2657 = vmul.f32 %v2538, %v2656
        %v2658 = vmul.f32 %v2540, %v2656
        %v2659 = vadd.f32 %v2611, %v2657
        %v2660 = vadd.f32 %v2612, %v2658
        %s2661 = sld [smem:[#allocation17 + $0x84]]
        %v2662 = vstv %s2661
        %v2663 = vmul.f32 %v2538, %v2662
        %v2664 = vmul.f32 %v2540, %v2662
        %v2665 = vadd.f32 %v2617, %v2663
        %v2666 = vadd.f32 %v2618, %v2664
        %s2667 = sld [smem:[#allocation17 + $0x85]]
        %v2668 = vstv %s2667
        %v2669 = vmul.f32 %v2538, %v2668
        %v2670 = vmul.f32 %v2540, %v2668
        %v2671 = vadd.f32 %v2623, %v2669
        %v2672 = vadd.f32 %v2624, %v2670
        %s2673 = sld [smem:[#allocation17 + $0x86]]
        %v2674 = vstv %s2673
        %v2675 = vmul.f32 %v2538, %v2674
        %v2676 = vmul.f32 %v2540, %v2674
        %v2677 = vadd.f32 %v2629, %v2675
        %v2678 = vadd.f32 %v2630, %v2676
        %s2679 = sld [smem:[#allocation17 + $0x87]]
        %v2680 = vstv %s2679
        %v2681 = vmul.f32 %v2538, %v2680
        %v2682 = vmul.f32 %v2540, %v2680
        %v2683 = vadd.f32 %v2635, %v2681
        %v2684 = vadd.f32 %v2636, %v2682
        %v2685 = vld [vmem:[%s488] sm:$0xff]
        %v2686 = vld [vmem:[%s488 + $0x8] sm:$0xff]
        %2687 = vrot.lane.b32.xlu0 %v2685, 1
        %v2688 = vpop.permute.xlu0 %2687
        %2689 = vrot.lane.b32.xlu0 %v2686, 1
        %v2690 = vpop.permute.xlu0 %2689
        %2691 = vrot.lane.b32.xlu0 %v2685, 127
        %v2692 = vpop.permute.xlu0 %2691
        %2693 = vrot.lane.b32.xlu0 %v2686, 127
        %v2694 = vpop.permute.xlu0 %2693
        %s2695 = sld [smem:[#allocation17 + $0x8]]
        %v2696 = vstv %s2695
        %v2697 = vmul.f32 %v2688, %v2696
        %v2698 = vmul.f32 %v2690, %v2696
        %v2699 = vadd.f32 %v2641, %v2697
        %v2700 = vadd.f32 %v2642, %v2698
        %s2701 = sld [smem:[#allocation17 + $0x9]]
        %v2702 = vstv %s2701
        %v2703 = vmul.f32 %v2688, %v2702
        %v2704 = vmul.f32 %v2690, %v2702
        %v2705 = vadd.f32 %v2647, %v2703
        %v2706 = vadd.f32 %v2648, %v2704
        %s2707 = sld [smem:[#allocation17 + $0xa]]
        %v2708 = vstv %s2707
        %v2709 = vmul.f32 %v2688, %v2708
        %v2710 = vmul.f32 %v2690, %v2708
        %v2711 = vadd.f32 %v2653, %v2709
        %v2712 = vadd.f32 %v2654, %v2710
        %s2713 = sld [smem:[#allocation17 + $0xb]]
        %v2714 = vstv %s2713
        %v2715 = vmul.f32 %v2688, %v2714
        %v2716 = vmul.f32 %v2690, %v2714
        %v2717 = vadd.f32 %v2659, %v2715
        %v2718 = vadd.f32 %v2660, %v2716
        %s2719 = sld [smem:[#allocation17 + $0xc]]
        %v2720 = vstv %s2719
        %v2721 = vmul.f32 %v2688, %v2720
        %v2722 = vmul.f32 %v2690, %v2720
        %v2723 = vadd.f32 %v2665, %v2721
        %v2724 = vadd.f32 %v2666, %v2722
        %s2725 = sld [smem:[#allocation17 + $0xd]]
        %v2726 = vstv %s2725
        %v2727 = vmul.f32 %v2688, %v2726
        %v2728 = vmul.f32 %v2690, %v2726
        %v2729 = vadd.f32 %v2671, %v2727
        %v2730 = vadd.f32 %v2672, %v2728
        %s2731 = sld [smem:[#allocation17 + $0xe]]
        %v2732 = vstv %s2731
        %v2733 = vmul.f32 %v2688, %v2732
        %v2734 = vmul.f32 %v2690, %v2732
        %v2735 = vadd.f32 %v2677, %v2733
        %v2736 = vadd.f32 %v2678, %v2734
        %s2737 = sld [smem:[#allocation17 + $0xf]]
        %v2738 = vstv %s2737
        %v2739 = vmul.f32 %v2688, %v2738
        %v2740 = vmul.f32 %v2690, %v2738
        %v2741 = vadd.f32 %v2683, %v2739
        %v2742 = vadd.f32 %v2684, %v2740
        %s2743 = sld [smem:[#allocation17 + $0x18]]
        %v2744 = vstv %s2743
        %v2745 = vmul.f32 %v2685, %v2744
        %v2746 = vmul.f32 %v2686, %v2744
        %v2747 = vadd.f32 %v2699, %v2745
        %v2748 = vadd.f32 %v2700, %v2746
        %s2749 = sld [smem:[#allocation17 + $0x19]]
        %v2750 = vstv %s2749
        %v2751 = vmul.f32 %v2685, %v2750
        %v2752 = vmul.f32 %v2686, %v2750
        %v2753 = vadd.f32 %v2705, %v2751
        %v2754 = vadd.f32 %v2706, %v2752
        %s2755 = sld [smem:[#allocation17 + $0x1a]]
        %v2756 = vstv %s2755
        %v2757 = vmul.f32 %v2685, %v2756
        %v2758 = vmul.f32 %v2686, %v2756
        %v2759 = vadd.f32 %v2711, %v2757
        %v2760 = vadd.f32 %v2712, %v2758
        %s2761 = sld [smem:[#allocation17 + $0x1b]]
        %v2762 = vstv %s2761
        %v2763 = vmul.f32 %v2685, %v2762
        %v2764 = vmul.f32 %v2686, %v2762
        %v2765 = vadd.f32 %v2717, %v2763
        %v2766 = vadd.f32 %v2718, %v2764
        %s2767 = sld [smem:[#allocation17 + $0x1c]]
        %v2768 = vstv %s2767
        %v2769 = vmul.f32 %v2685, %v2768
        %v2770 = vmul.f32 %v2686, %v2768
        %v2771 = vadd.f32 %v2723, %v2769
        %v2772 = vadd.f32 %v2724, %v2770
        %s2773 = sld [smem:[#allocation17 + $0x1d]]
        %v2774 = vstv %s2773
        %v2775 = vmul.f32 %v2685, %v2774
        %v2776 = vmul.f32 %v2686, %v2774
        %v2777 = vadd.f32 %v2729, %v2775
        %v2778 = vadd.f32 %v2730, %v2776
        %s2779 = sld [smem:[#allocation17 + $0x1e]]
        %v2780 = vstv %s2779
        %v2781 = vmul.f32 %v2685, %v2780
        %v2782 = vmul.f32 %v2686, %v2780
        %v2783 = vadd.f32 %v2735, %v2781
        %v2784 = vadd.f32 %v2736, %v2782
        %s2785 = sld [smem:[#allocation17 + $0x1f]]
        %v2786 = vstv %s2785
        %v2787 = vmul.f32 %v2685, %v2786
        %v2788 = vmul.f32 %v2686, %v2786
        %v2789 = vadd.f32 %v2741, %v2787
        %v2790 = vadd.f32 %v2742, %v2788
        %s2791 = sld [smem:[#allocation17 + $0x28]]
        %v2792 = vstv %s2791
        %v2793 = vmul.f32 %v2692, %v2792
        %v2794 = vmul.f32 %v2694, %v2792
        %v2795 = vadd.f32 %v2747, %v2793
        %v2796 = vadd.f32 %v2748, %v2794
        %s2797 = sld [smem:[#allocation17 + $0x29]]
        %v2798 = vstv %s2797
        %v2799 = vmul.f32 %v2692, %v2798
        %v2800 = vmul.f32 %v2694, %v2798
        %v2801 = vadd.f32 %v2753, %v2799
        %v2802 = vadd.f32 %v2754, %v2800
        %s2803 = sld [smem:[#allocation17 + $0x2a]]
        %v2804 = vstv %s2803
        %v2805 = vmul.f32 %v2692, %v2804
        %v2806 = vmul.f32 %v2694, %v2804
        %v2807 = vadd.f32 %v2759, %v2805
        %v2808 = vadd.f32 %v2760, %v2806
        %s2809 = sld [smem:[#allocation17 + $0x2b]]
        %v2810 = vstv %s2809
        %v2811 = vmul.f32 %v2692, %v2810
        %v2812 = vmul.f32 %v2694, %v2810
        %v2813 = vadd.f32 %v2765, %v2811
        %v2814 = vadd.f32 %v2766, %v2812
        %s2815 = sld [smem:[#allocation17 + $0x2c]]
        %v2816 = vstv %s2815
        %v2817 = vmul.f32 %v2692, %v2816
        %v2818 = vmul.f32 %v2694, %v2816
        %v2819 = vadd.f32 %v2771, %v2817
        %v2820 = vadd.f32 %v2772, %v2818
        %s2821 = sld [smem:[#allocation17 + $0x2d]]
        %v2822 = vstv %s2821
        %v2823 = vmul.f32 %v2692, %v2822
        %v2824 = vmul.f32 %v2694, %v2822
        %v2825 = vadd.f32 %v2777, %v2823
        %v2826 = vadd.f32 %v2778, %v2824
        %s2827 = sld [smem:[#allocation17 + $0x2e]]
        %v2828 = vstv %s2827
        %v2829 = vmul.f32 %v2692, %v2828
        %v2830 = vmul.f32 %v2694, %v2828
        %v2831 = vadd.f32 %v2783, %v2829
        %v2832 = vadd.f32 %v2784, %v2830
        %s2833 = sld [smem:[#allocation17 + $0x2f]]
        %v2834 = vstv %s2833
        %v2835 = vmul.f32 %v2692, %v2834
        %v2836 = vmul.f32 %v2694, %v2834
        %v2837 = vadd.f32 %v2789, %v2835
        %v2838 = vadd.f32 %v2790, %v2836
        %v2839 = vld [vmem:[%s488 + $0x1] sm:$0xff]
        %v2840 = vld [vmem:[%s488 + $0x9] sm:$0xff]
        %2841 = vrot.lane.b32.xlu0 %v2839, 1
        %v2842 = vpop.permute.xlu0 %2841
        %2843 = vrot.lane.b32.xlu0 %v2840, 1
        %v2844 = vpop.permute.xlu0 %2843
        %2845 = vrot.lane.b32.xlu0 %v2839, 127
        %v2846 = vpop.permute.xlu0 %2845
        %2847 = vrot.lane.b32.xlu0 %v2840, 127
        %v2848 = vpop.permute.xlu0 %2847
        %s2849 = sld [smem:[#allocation17 + $0x38]]
        %v2850 = vstv %s2849
        %v2851 = vmul.f32 %v2842, %v2850
        %v2852 = vmul.f32 %v2844, %v2850
        %v2853 = vadd.f32 %v2795, %v2851
        %v2854 = vadd.f32 %v2796, %v2852
        %s2855 = sld [smem:[#allocation17 + $0x39]]
        %v2856 = vstv %s2855
        %v2857 = vmul.f32 %v2842, %v2856
        %v2858 = vmul.f32 %v2844, %v2856
        %v2859 = vadd.f32 %v2801, %v2857
        %v2860 = vadd.f32 %v2802, %v2858
        %s2861 = sld [smem:[#allocation17 + $0x3a]]
        %v2862 = vstv %s2861
        %v2863 = vmul.f32 %v2842, %v2862
        %v2864 = vmul.f32 %v2844, %v2862
        %v2865 = vadd.f32 %v2807, %v2863
        %v2866 = vadd.f32 %v2808, %v2864
        %s2867 = sld [smem:[#allocation17 + $0x3b]]
        %v2868 = vstv %s2867
        %v2869 = vmul.f32 %v2842, %v2868
        %v2870 = vmul.f32 %v2844, %v2868
        %v2871 = vadd.f32 %v2813, %v2869
        %v2872 = vadd.f32 %v2814, %v2870
        %s2873 = sld [smem:[#allocation17 + $0x3c]]
        %v2874 = vstv %s2873
        %v2875 = vmul.f32 %v2842, %v2874
        %v2876 = vmul.f32 %v2844, %v2874
        %v2877 = vadd.f32 %v2819, %v2875
        %v2878 = vadd.f32 %v2820, %v2876
        %s2879 = sld [smem:[#allocation17 + $0x3d]]
        %v2880 = vstv %s2879
        %v2881 = vmul.f32 %v2842, %v2880
        %v2882 = vmul.f32 %v2844, %v2880
        %v2883 = vadd.f32 %v2825, %v2881
        %v2884 = vadd.f32 %v2826, %v2882
        %s2885 = sld [smem:[#allocation17 + $0x3e]]
        %v2886 = vstv %s2885
        %v2887 = vmul.f32 %v2842, %v2886
        %v2888 = vmul.f32 %v2844, %v2886
        %v2889 = vadd.f32 %v2831, %v2887
        %v2890 = vadd.f32 %v2832, %v2888
        %s2891 = sld [smem:[#allocation17 + $0x3f]]
        %v2892 = vstv %s2891
        %v2893 = vmul.f32 %v2842, %v2892
        %v2894 = vmul.f32 %v2844, %v2892
        %v2895 = vadd.f32 %v2837, %v2893
        %v2896 = vadd.f32 %v2838, %v2894
        %s2897 = sld [smem:[#allocation17 + $0x48]]
        %v2898 = vstv %s2897
        %v2899 = vmul.f32 %v2839, %v2898
        %v2900 = vmul.f32 %v2840, %v2898
        %v2901 = vadd.f32 %v2853, %v2899
        %v2902 = vadd.f32 %v2854, %v2900
        %s2903 = sld [smem:[#allocation17 + $0x49]]
        %v2904 = vstv %s2903
        %v2905 = vmul.f32 %v2839, %v2904
        %v2906 = vmul.f32 %v2840, %v2904
        %v2907 = vadd.f32 %v2859, %v2905
        %v2908 = vadd.f32 %v2860, %v2906
        %s2909 = sld [smem:[#allocation17 + $0x4a]]
        %v2910 = vstv %s2909
        %v2911 = vmul.f32 %v2839, %v2910
        %v2912 = vmul.f32 %v2840, %v2910
        %v2913 = vadd.f32 %v2865, %v2911
        %v2914 = vadd.f32 %v2866, %v2912
        %s2915 = sld [smem:[#allocation17 + $0x4b]]
        %v2916 = vstv %s2915
        %v2917 = vmul.f32 %v2839, %v2916
        %v2918 = vmul.f32 %v2840, %v2916
        %v2919 = vadd.f32 %v2871, %v2917
        %v2920 = vadd.f32 %v2872, %v2918
        %s2921 = sld [smem:[#allocation17 + $0x4c]]
        %v2922 = vstv %s2921
        %v2923 = vmul.f32 %v2839, %v2922
        %v2924 = vmul.f32 %v2840, %v2922
        %v2925 = vadd.f32 %v2877, %v2923
        %v2926 = vadd.f32 %v2878, %v2924
        %s2927 = sld [smem:[#allocation17 + $0x4d]]
        %v2928 = vstv %s2927
        %v2929 = vmul.f32 %v2839, %v2928
        %v2930 = vmul.f32 %v2840, %v2928
        %v2931 = vadd.f32 %v2883, %v2929
        %v2932 = vadd.f32 %v2884, %v2930
        %s2933 = sld [smem:[#allocation17 + $0x4e]]
        %v2934 = vstv %s2933
        %v2935 = vmul.f32 %v2839, %v2934
        %v2936 = vmul.f32 %v2840, %v2934
        %v2937 = vadd.f32 %v2889, %v2935
        %v2938 = vadd.f32 %v2890, %v2936
        %s2939 = sld [smem:[#allocation17 + $0x4f]]
        %v2940 = vstv %s2939
        %v2941 = vmul.f32 %v2839, %v2940
        %v2942 = vmul.f32 %v2840, %v2940
        %v2943 = vadd.f32 %v2895, %v2941
        %v2944 = vadd.f32 %v2896, %v2942
        %s2945 = sld [smem:[#allocation17 + $0x58]]
        %v2946 = vstv %s2945
        %v2947 = vmul.f32 %v2846, %v2946
        %v2948 = vmul.f32 %v2848, %v2946
        %v2949 = vadd.f32 %v2901, %v2947
        %v2950 = vadd.f32 %v2902, %v2948
        %s2951 = sld [smem:[#allocation17 + $0x59]]
        %v2952 = vstv %s2951
        %v2953 = vmul.f32 %v2846, %v2952
        %v2954 = vmul.f32 %v2848, %v2952
        %v2955 = vadd.f32 %v2907, %v2953
        %v2956 = vadd.f32 %v2908, %v2954
        %s2957 = sld [smem:[#allocation17 + $0x5a]]
        %v2958 = vstv %s2957
        %v2959 = vmul.f32 %v2846, %v2958
        %v2960 = vmul.f32 %v2848, %v2958
        %v2961 = vadd.f32 %v2913, %v2959
        %v2962 = vadd.f32 %v2914, %v2960
        %s2963 = sld [smem:[#allocation17 + $0x5b]]
        %v2964 = vstv %s2963
        %v2965 = vmul.f32 %v2846, %v2964
        %v2966 = vmul.f32 %v2848, %v2964
        %v2967 = vadd.f32 %v2919, %v2965
        %v2968 = vadd.f32 %v2920, %v2966
        %s2969 = sld [smem:[#allocation17 + $0x5c]]
        %v2970 = vstv %s2969
        %v2971 = vmul.f32 %v2846, %v2970
        %v2972 = vmul.f32 %v2848, %v2970
        %v2973 = vadd.f32 %v2925, %v2971
        %v2974 = vadd.f32 %v2926, %v2972
        %s2975 = sld [smem:[#allocation17 + $0x5d]]
        %v2976 = vstv %s2975
        %v2977 = vmul.f32 %v2846, %v2976
        %v2978 = vmul.f32 %v2848, %v2976
        %v2979 = vadd.f32 %v2931, %v2977
        %v2980 = vadd.f32 %v2932, %v2978
        %s2981 = sld [smem:[#allocation17 + $0x5e]]
        %v2982 = vstv %s2981
        %v2983 = vmul.f32 %v2846, %v2982
        %v2984 = vmul.f32 %v2848, %v2982
        %v2985 = vadd.f32 %v2937, %v2983
        %v2986 = vadd.f32 %v2938, %v2984
        %s2987 = sld [smem:[#allocation17 + $0x5f]]
        %v2988 = vstv %s2987
        %v2989 = vmul.f32 %v2846, %v2988
        %v2990 = vmul.f32 %v2848, %v2988
        %v2991 = vadd.f32 %v2943, %v2989
        %v2992 = vadd.f32 %v2944, %v2990
        %v2993 = vld [vmem:[%s488 + $0x2] sm:$0xff]
        %v2994 = vld [vmem:[%s488 + $0xa] sm:$0xff]
        %2995 = vrot.lane.b32.xlu0 %v2993, 1
        %v2996 = vpop.permute.xlu0 %2995
        %2997 = vrot.lane.b32.xlu0 %v2994, 1
        %v2998 = vpop.permute.xlu0 %2997
        %2999 = vrot.lane.b32.xlu0 %v2993, 127
        %v3000 = vpop.permute.xlu0 %2999
        %3001 = vrot.lane.b32.xlu0 %v2994, 127
        %v3002 = vpop.permute.xlu0 %3001
        %s3003 = sld [smem:[#allocation17 + $0x68]]
        %v3004 = vstv %s3003
        %v3005 = vmul.f32 %v2996, %v3004
        %v3006 = vmul.f32 %v2998, %v3004
        %v3007 = vadd.f32 %v2949, %v3005
        %v3008 = vadd.f32 %v2950, %v3006
        %s3009 = sld [smem:[#allocation17 + $0x69]]
        %v3010 = vstv %s3009
        %v3011 = vmul.f32 %v2996, %v3010
        %v3012 = vmul.f32 %v2998, %v3010
        %v3013 = vadd.f32 %v2955, %v3011
        %v3014 = vadd.f32 %v2956, %v3012
        %s3015 = sld [smem:[#allocation17 + $0x6a]]
        %v3016 = vstv %s3015
        %v3017 = vmul.f32 %v2996, %v3016
        %v3018 = vmul.f32 %v2998, %v3016
        %v3019 = vadd.f32 %v2961, %v3017
        %v3020 = vadd.f32 %v2962, %v3018
        %s3021 = sld [smem:[#allocation17 + $0x6b]]
        %v3022 = vstv %s3021
        %v3023 = vmul.f32 %v2996, %v3022
        %v3024 = vmul.f32 %v2998, %v3022
        %v3025 = vadd.f32 %v2967, %v3023
        %v3026 = vadd.f32 %v2968, %v3024
        %s3027 = sld [smem:[#allocation17 + $0x6c]]
        %v3028 = vstv %s3027
        %v3029 = vmul.f32 %v2996, %v3028
        %v3030 = vmul.f32 %v2998, %v3028
        %v3031 = vadd.f32 %v2973, %v3029
        %v3032 = vadd.f32 %v2974, %v3030
        %s3033 = sld [smem:[#allocation17 + $0x6d]]
        %v3034 = vstv %s3033
        %v3035 = vmul.f32 %v2996, %v3034
        %v3036 = vmul.f32 %v2998, %v3034
        %v3037 = vadd.f32 %v2979, %v3035
        %v3038 = vadd.f32 %v2980, %v3036
        %s3039 = sld [smem:[#allocation17 + $0x6e]]
        %v3040 = vstv %s3039
        %v3041 = vmul.f32 %v2996, %v3040
        %v3042 = vmul.f32 %v2998, %v3040
        %v3043 = vadd.f32 %v2985, %v3041
        %v3044 = vadd.f32 %v2986, %v3042
        %s3045 = sld [smem:[#allocation17 + $0x6f]]
        %v3046 = vstv %s3045
        %v3047 = vmul.f32 %v2996, %v3046
        %v3048 = vmul.f32 %v2998, %v3046
        %v3049 = vadd.f32 %v2991, %v3047
        %v3050 = vadd.f32 %v2992, %v3048
        %s3051 = sld [smem:[#allocation17 + $0x78]]
        %v3052 = vstv %s3051
        %v3053 = vmul.f32 %v2993, %v3052
        %v3054 = vmul.f32 %v2994, %v3052
        %v3055 = vadd.f32 %v3007, %v3053
        %v3056 = vadd.f32 %v3008, %v3054
        %s3057 = sld [smem:[#allocation17 + $0x79]]
        %v3058 = vstv %s3057
        %v3059 = vmul.f32 %v2993, %v3058
        %v3060 = vmul.f32 %v2994, %v3058
        %v3061 = vadd.f32 %v3013, %v3059
        %v3062 = vadd.f32 %v3014, %v3060
        %s3063 = sld [smem:[#allocation17 + $0x7a]]
        %v3064 = vstv %s3063
        %v3065 = vmul.f32 %v2993, %v3064
        %v3066 = vmul.f32 %v2994, %v3064
        %v3067 = vadd.f32 %v3019, %v3065
        %v3068 = vadd.f32 %v3020, %v3066
        %s3069 = sld [smem:[#allocation17 + $0x7b]]
        %v3070 = vstv %s3069
        %v3071 = vmul.f32 %v2993, %v3070
        %v3072 = vmul.f32 %v2994, %v3070
        %v3073 = vadd.f32 %v3025, %v3071
        %v3074 = vadd.f32 %v3026, %v3072
        %s3075 = sld [smem:[#allocation17 + $0x7c]]
        %v3076 = vstv %s3075
        %v3077 = vmul.f32 %v2993, %v3076
        %v3078 = vmul.f32 %v2994, %v3076
        %v3079 = vadd.f32 %v3031, %v3077
        %v3080 = vadd.f32 %v3032, %v3078
        %s3081 = sld [smem:[#allocation17 + $0x7d]]
        %v3082 = vstv %s3081
        %v3083 = vmul.f32 %v2993, %v3082
        %v3084 = vmul.f32 %v2994, %v3082
        %v3085 = vadd.f32 %v3037, %v3083
        %v3086 = vadd.f32 %v3038, %v3084
        %s3087 = sld [smem:[#allocation17 + $0x7e]]
        %v3088 = vstv %s3087
        %v3089 = vmul.f32 %v2993, %v3088
        %v3090 = vmul.f32 %v2994, %v3088
        %v3091 = vadd.f32 %v3043, %v3089
        %v3092 = vadd.f32 %v3044, %v3090
        %s3093 = sld [smem:[#allocation17 + $0x7f]]
        %v3094 = vstv %s3093
        %v3095 = vmul.f32 %v2993, %v3094
        %v3096 = vmul.f32 %v2994, %v3094
        %v3097 = vadd.f32 %v3049, %v3095
        %v3098 = vadd.f32 %v3050, %v3096
        %s3099 = sld [smem:[#allocation17 + $0x88]]
        %v3100 = vstv %s3099
        %v3101 = vmul.f32 %v3000, %v3100
        %v3102 = vmul.f32 %v3002, %v3100
        %v3103 = vadd.f32 %v3055, %v3101
        %v3104 = vadd.f32 %v3056, %v3102
        %s3105 = sld [smem:[#allocation17 + $0x89]]
        %v3106 = vstv %s3105
        %v3107 = vmul.f32 %v3000, %v3106
        %v3108 = vmul.f32 %v3002, %v3106
        %v3109 = vadd.f32 %v3061, %v3107
        %v3110 = vadd.f32 %v3062, %v3108
        %s3111 = sld [smem:[#allocation17 + $0x8a]]
        %v3112 = vstv %s3111
        %v3113 = vmul.f32 %v3000, %v3112
        %v3114 = vmul.f32 %v3002, %v3112
        %v3115 = vadd.f32 %v3067, %v3113
        %v3116 = vadd.f32 %v3068, %v3114
        %s3117 = sld [smem:[#allocation17 + $0x8b]]
        %v3118 = vstv %s3117
        %v3119 = vmul.f32 %v3000, %v3118
        %v3120 = vmul.f32 %v3002, %v3118
        %v3121 = vadd.f32 %v3073, %v3119
        %v3122 = vadd.f32 %v3074, %v3120
        %s3123 = sld [smem:[#allocation17 + $0x8c]]
        %v3124 = vstv %s3123
        %v3125 = vmul.f32 %v3000, %v3124
        %v3126 = vmul.f32 %v3002, %v3124
        %v3127 = vadd.f32 %v3079, %v3125
        %v3128 = vadd.f32 %v3080, %v3126
        %s3129 = sld [smem:[#allocation17 + $0x8d]]
        %v3130 = vstv %s3129
        %v3131 = vmul.f32 %v3000, %v3130
        %v3132 = vmul.f32 %v3002, %v3130
        %v3133 = vadd.f32 %v3085, %v3131
        %v3134 = vadd.f32 %v3086, %v3132
        %s3135 = sld [smem:[#allocation17 + $0x8e]]
        %v3136 = vstv %s3135
        %v3137 = vmul.f32 %v3000, %v3136
        %v3138 = vmul.f32 %v3002, %v3136
        %v3139 = vadd.f32 %v3091, %v3137
        %v3140 = vadd.f32 %v3092, %v3138
        %s3141 = sld [smem:[#allocation17 + $0x8f]]
        %v3142 = vstv %s3141
        %v3143 = vmul.f32 %v3000, %v3142
        %v3144 = vmul.f32 %v3002, %v3142
        %v3145 = vadd.f32 %v3097, %v3143
        %v3146 = vadd.f32 %v3098, %v3144
        %v3147 = vmax.f32 %v3103, 0.0
        %v3148 = vmax.f32 %v3104, 0.0
        %v3149 = vmax.f32 %v3109, 0.0
        %v3150 = vmax.f32 %v3110, 0.0
        %v3151 = vmax.f32 %v3115, 0.0
        %v3152 = vmax.f32 %v3116, 0.0
        %v3153 = vmax.f32 %v3121, 0.0
        %v3154 = vmax.f32 %v3122, 0.0
        %v3155 = vmax.f32 %v3127, 0.0
        %v3156 = vmax.f32 %v3128, 0.0
        %v3157 = vmax.f32 %v3133, 0.0
        %v3158 = vmax.f32 %v3134, 0.0
        %v3159 = vmax.f32 %v3139, 0.0
        %v3160 = vmax.f32 %v3140, 0.0
        %v3161 = vmax.f32 %v3145, 0.0
        %v3162 = vmax.f32 %v3146, 0.0
        %v3163 = vsel %vm2198, %v3147, 0.0
        %v3164 = vsel %vm2198, %v3148, 0.0
        %3165 = vst [vmem:[#allocation7 + $0x1] sm:$0xff] %v3163
        %3166 = vst [vmem:[#allocation7 + $0x9] sm:$0xff] %v3164
        %v3167 = vsel %vm2198, %v3149, 0.0
        %v3168 = vsel %vm2198, %v3150, 0.0
        %3169 = vst [vmem:[%s493 + $0x1] sm:$0xff] %v3167
        %3170 = vst [vmem:[%s493 + $0x9] sm:$0xff] %v3168
        %v3171 = vsel %vm2198, %v3151, 0.0
        %v3172 = vsel %vm2198, %v3152, 0.0
        %3173 = vst [vmem:[%s496 + $0x1] sm:$0xff] %v3171
        %3174 = vst [vmem:[%s496 + $0x9] sm:$0xff] %v3172
        %v3175 = vsel %vm2198, %v3153, 0.0
        %v3176 = vsel %vm2198, %v3154, 0.0
        %3177 = vst [vmem:[%s499 + $0x1] sm:$0xff] %v3175
        %3178 = vst [vmem:[%s499 + $0x9] sm:$0xff] %v3176
        %v3179 = vsel %vm2198, %v3155, 0.0
        %v3180 = vsel %vm2198, %v3156, 0.0
        %3181 = vst [vmem:[%s502 + $0x1] sm:$0xff] %v3179
        %3182 = vst [vmem:[%s502 + $0x9] sm:$0xff] %v3180
        %v3183 = vsel %vm2198, %v3157, 0.0
        %v3184 = vsel %vm2198, %v3158, 0.0
        %3185 = vst [vmem:[%s505 + $0x1] sm:$0xff] %v3183
        %3186 = vst [vmem:[%s505 + $0x9] sm:$0xff] %v3184
        %v3187 = vsel %vm2198, %v3159, 0.0
        %v3188 = vsel %vm2198, %v3160, 0.0
        %3189 = vst [vmem:[%s508 + $0x1] sm:$0xff] %v3187
        %3190 = vst [vmem:[%s508 + $0x9] sm:$0xff] %v3188
        %v3191 = vsel %vm2198, %v3161, 0.0
        %v3192 = vsel %vm2198, %v3162, 0.0
        %3193 = vst [vmem:[%s511 + $0x1] sm:$0xff] %v3191
        %3194 = vst [vmem:[%s511 + $0x9] sm:$0xff] %v3192
        %s3195 = sld [smem:[#allocation20]]
        %v3196 = vstv %s3195
        %v3197 = vadd.f32 %v3196, 0.0
        %v3198 = vld [vmem:[#allocation7] sm:$0xff]
        %v3199 = vld [vmem:[#allocation7 + $0x8] sm:$0xff]
        %3200 = vrot.lane.b32.xlu0 %v3198, 1
        %v3201 = vpop.permute.xlu0 %3200
        %3202 = vrot.lane.b32.xlu0 %v3199, 1
        %v3203 = vpop.permute.xlu0 %3202
        %3204 = vrot.lane.b32.xlu0 %v3198, 127
        %v3205 = vpop.permute.xlu0 %3204
        %3206 = vrot.lane.b32.xlu0 %v3199, 127
        %v3207 = vpop.permute.xlu0 %3206
        %s3208 = sld [smem:[#allocation19]]
        %v3209 = vstv %s3208
        %v3210 = vmul.f32 %v3201, %v3209
        %v3211 = vmul.f32 %v3203, %v3209
        %v3212 = vadd.f32 %v3197, %v3210
        %v3213 = vadd.f32 %v3197, %v3211
        %s3214 = sld [smem:[#allocation19 + $0x8]]
        %v3215 = vstv %s3214
        %v3216 = vmul.f32 %v3198, %v3215
        %v3217 = vmul.f32 %v3199, %v3215
        %v3218 = vadd.f32 %v3212, %v3216
        %v3219 = vadd.f32 %v3213, %v3217
        %s3220 = sld [smem:[#allocation19 + $0x10]]
        %v3221 = vstv %s3220
        %v3222 = vmul.f32 %v3205, %v3221
        %v3223 = vmul.f32 %v3207, %v3221
        %v3224 = vadd.f32 %v3218, %v3222
        %v3225 = vadd.f32 %v3219, %v3223
        %v3226 = vld [vmem:[#allocation7 + $0x1] sm:$0xff]
        %v3227 = vld [vmem:[#allocation7 + $0x9] sm:$0xff]
        %3228 = vrot.lane.b32.xlu0 %v3226, 1
        %v3229 = vpop.permute.xlu0 %3228
        %3230 = vrot.lane.b32.xlu0 %v3227, 1
        %v3231 = vpop.permute.xlu0 %3230
        %3232 = vrot.lane.b32.xlu0 %v3226, 127
        %v3233 = vpop.permute.xlu0 %3232
        %3234 = vrot.lane.b32.xlu0 %v3227, 127
        %v3235 = vpop.permute.xlu0 %3234
        %s3236 = sld [smem:[#allocation19 + $0x18]]
        %v3237 = vstv %s3236
        %v3238 = vmul.f32 %v3229, %v3237
        %v3239 = vmul.f32 %v3231, %v3237
        %v3240 = vadd.f32 %v3224, %v3238
        %v3241 = vadd.f32 %v3225, %v3239
        %s3242 = sld [smem:[#allocation19 + $0x20]]
        %v3243 = vstv %s3242
        %v3244 = vmul.f32 %v3226, %v3243
        %v3245 = vmul.f32 %v3227, %v3243
        %v3246 = vadd.f32 %v3240, %v3244
        %v3247 = vadd.f32 %v3241, %v3245
        %s3248 = sld [smem:[#allocation19 + $0x28]]
        %v3249 = vstv %s3248
        %v3250 = vmul.f32 %v3233, %v3249
        %v3251 = vmul.f32 %v3235, %v3249
        %v3252 = vadd.f32 %v3246, %v3250
        %v3253 = vadd.f32 %v3247, %v3251
        %v3254 = vld [vmem:[#allocation7 + $0x2] sm:$0xff]
        %v3255 = vld [vmem:[#allocation7 + $0xa] sm:$0xff]
        %3256 = vrot.lane.b32.xlu0 %v3254, 1
        %v3257 = vpop.permute.xlu0 %3256
        %3258 = vrot.lane.b32.xlu0 %v3255, 1
        %v3259 = vpop.permute.xlu0 %3258
        %3260 = vrot.lane.b32.xlu0 %v3254, 127
        %v3261 = vpop.permute.xlu0 %3260
        %3262 = vrot.lane.b32.xlu0 %v3255, 127
        %v3263 = vpop.permute.xlu0 %3262
        %s3264 = sld [smem:[#allocation19 + $0x30]]
        %v3265 = vstv %s3264
        %v3266 = vmul.f32 %v3257, %v3265
        %v3267 = vmul.f32 %v3259, %v3265
        %v3268 = vadd.f32 %v3252, %v3266
        %v3269 = vadd.f32 %v3253, %v3267
        %s3270 = sld [smem:[#allocation19 + $0x38]]
        %v3271 = vstv %s3270
        %v3272 = vmul.f32 %v3254, %v3271
        %v3273 = vmul.f32 %v3255, %v3271
        %v3274 = vadd.f32 %v3268, %v3272
        %v3275 = vadd.f32 %v3269, %v3273
        %s3276 = sld [smem:[#allocation19 + $0x40]]
        %v3277 = vstv %s3276
        %v3278 = vmul.f32 %v3261, %v3277
        %v3279 = vmul.f32 %v3263, %v3277
        %v3280 = vadd.f32 %v3274, %v3278
        %v3281 = vadd.f32 %v3275, %v3279
        %v3282 = vld [vmem:[%s493] sm:$0xff]
        %v3283 = vld [vmem:[%s493 + $0x8] sm:$0xff]
        %3284 = vrot.lane.b32.xlu0 %v3282, 1
        %v3285 = vpop.permute.xlu0 %3284
        %3286 = vrot.lane.b32.xlu0 %v3283, 1
        %v3287 = vpop.permute.xlu0 %3286
        %3288 = vrot.lane.b32.xlu0 %v3282, 127
        %v3289 = vpop.permute.xlu0 %3288
        %3290 = vrot.lane.b32.xlu0 %v3283, 127
        %v3291 = vpop.permute.xlu0 %3290
        %s3292 = sld [smem:[#allocation19 + $0x1]]
        %v3293 = vstv %s3292
        %v3294 = vmul.f32 %v3285, %v3293
        %v3295 = vmul.f32 %v3287, %v3293
        %v3296 = vadd.f32 %v3280, %v3294
        %v3297 = vadd.f32 %v3281, %v3295
        %s3298 = sld [smem:[#allocation19 + $0x9]]
        %v3299 = vstv %s3298
        %v3300 = vmul.f32 %v3282, %v3299
        %v3301 = vmul.f32 %v3283, %v3299
        %v3302 = vadd.f32 %v3296, %v3300
        %v3303 = vadd.f32 %v3297, %v3301
        %s3304 = sld [smem:[#allocation19 + $0x11]]
        %v3305 = vstv %s3304
        %v3306 = vmul.f32 %v3289, %v3305
        %v3307 = vmul.f32 %v3291, %v3305
        %v3308 = vadd.f32 %v3302, %v3306
        %v3309 = vadd.f32 %v3303, %v3307
        %v3310 = vld [vmem:[%s493 + $0x1] sm:$0xff]
        %v3311 = vld [vmem:[%s493 + $0x9] sm:$0xff]
        %3312 = vrot.lane.b32.xlu0 %v3310, 1
        %v3313 = vpop.permute.xlu0 %3312
        %3314 = vrot.lane.b32.xlu0 %v3311, 1
        %v3315 = vpop.permute.xlu0 %3314
        %3316 = vrot.lane.b32.xlu0 %v3310, 127
        %v3317 = vpop.permute.xlu0 %3316
        %3318 = vrot.lane.b32.xlu0 %v3311, 127
        %v3319 = vpop.permute.xlu0 %3318
        %s3320 = sld [smem:[#allocation19 + $0x19]]
        %v3321 = vstv %s3320
        %v3322 = vmul.f32 %v3313, %v3321
        %v3323 = vmul.f32 %v3315, %v3321
        %v3324 = vadd.f32 %v3308, %v3322
        %v3325 = vadd.f32 %v3309, %v3323
        %s3326 = sld [smem:[#allocation19 + $0x21]]
        %v3327 = vstv %s3326
        %v3328 = vmul.f32 %v3310, %v3327
        %v3329 = vmul.f32 %v3311, %v3327
        %v3330 = vadd.f32 %v3324, %v3328
        %v3331 = vadd.f32 %v3325, %v3329
        %s3332 = sld [smem:[#allocation19 + $0x29]]
        %v3333 = vstv %s3332
        %v3334 = vmul.f32 %v3317, %v3333
        %v3335 = vmul.f32 %v3319, %v3333
        %v3336 = vadd.f32 %v3330, %v3334
        %v3337 = vadd.f32 %v3331, %v3335
        %v3338 = vld [vmem:[%s493 + $0x2] sm:$0xff]
        %v3339 = vld [vmem:[%s493 + $0xa] sm:$0xff]
        %3340 = vrot.lane.b32.xlu0 %v3338, 1
        %v3341 = vpop.permute.xlu0 %3340
        %3342 = vrot.lane.b32.xlu0 %v3339, 1
        %v3343 = vpop.permute.xlu0 %3342
        %3344 = vrot.lane.b32.xlu0 %v3338, 127
        %v3345 = vpop.permute.xlu0 %3344
        %3346 = vrot.lane.b32.xlu0 %v3339, 127
        %v3347 = vpop.permute.xlu0 %3346
        %s3348 = sld [smem:[#allocation19 + $0x31]]
        %v3349 = vstv %s3348
        %v3350 = vmul.f32 %v3341, %v3349
        %v3351 = vmul.f32 %v3343, %v3349
        %v3352 = vadd.f32 %v3336, %v3350
        %v3353 = vadd.f32 %v3337, %v3351
        %s3354 = sld [smem:[#allocation19 + $0x39]]
        %v3355 = vstv %s3354
        %v3356 = vmul.f32 %v3338, %v3355
        %v3357 = vmul.f32 %v3339, %v3355
        %v3358 = vadd.f32 %v3352, %v3356
        %v3359 = vadd.f32 %v3353, %v3357
        %s3360 = sld [smem:[#allocation19 + $0x41]]
        %v3361 = vstv %s3360
        %v3362 = vmul.f32 %v3345, %v3361
        %v3363 = vmul.f32 %v3347, %v3361
        %v3364 = vadd.f32 %v3358, %v3362
        %v3365 = vadd.f32 %v3359, %v3363
        %v3366 = vld [vmem:[%s496] sm:$0xff]
        %v3367 = vld [vmem:[%s496 + $0x8] sm:$0xff]
        %3368 = vrot.lane.b32.xlu0 %v3366, 1
        %v3369 = vpop.permute.xlu0 %3368
        %3370 = vrot.lane.b32.xlu0 %v3367, 1
        %v3371 = vpop.permute.xlu0 %3370
        %3372 = vrot.lane.b32.xlu0 %v3366, 127
        %v3373 = vpop.permute.xlu0 %3372
        %3374 = vrot.lane.b32.xlu0 %v3367, 127
        %v3375 = vpop.permute.xlu0 %3374
        %s3376 = sld [smem:[#allocation19 + $0x2]]
        %v3377 = vstv %s3376
        %v3378 = vmul.f32 %v3369, %v3377
        %v3379 = vmul.f32 %v3371, %v3377
        %v3380 = vadd.f32 %v3364, %v3378
        %v3381 = vadd.f32 %v3365, %v3379
        %s3382 = sld [smem:[#allocation19 + $0xa]]
        %v3383 = vstv %s3382
        %v3384 = vmul.f32 %v3366, %v3383
        %v3385 = vmul.f32 %v3367, %v3383
        %v3386 = vadd.f32 %v3380, %v3384
        %v3387 = vadd.f32 %v3381, %v3385
        %s3388 = sld [smem:[#allocation19 + $0x12]]
        %v3389 = vstv %s3388
        %v3390 = vmul.f32 %v3373, %v3389
        %v3391 = vmul.f32 %v3375, %v3389
        %v3392 = vadd.f32 %v3386, %v3390
        %v3393 = vadd.f32 %v3387, %v3391
        %v3394 = vld [vmem:[%s496 + $0x1] sm:$0xff]
        %v3395 = vld [vmem:[%s496 + $0x9] sm:$0xff]
        %3396 = vrot.lane.b32.xlu0 %v3394, 1
        %v3397 = vpop.permute.xlu0 %3396
        %3398 = vrot.lane.b32.xlu0 %v3395, 1
        %v3399 = vpop.permute.xlu0 %3398
        %3400 = vrot.lane.b32.xlu0 %v3394, 127
        %v3401 = vpop.permute.xlu0 %3400
        %3402 = vrot.lane.b32.xlu0 %v3395, 127
        %v3403 = vpop.permute.xlu0 %3402
        %s3404 = sld [smem:[#allocation19 + $0x1a]]
        %v3405 = vstv %s3404
        %v3406 = vmul.f32 %v3397, %v3405
        %v3407 = vmul.f32 %v3399, %v3405
        %v3408 = vadd.f32 %v3392, %v3406
        %v3409 = vadd.f32 %v3393, %v3407
        %s3410 = sld [smem:[#allocation19 + $0x22]]
        %v3411 = vstv %s3410
        %v3412 = vmul.f32 %v3394, %v3411
        %v3413 = vmul.f32 %v3395, %v3411
        %v3414 = vadd.f32 %v3408, %v3412
        %v3415 = vadd.f32 %v3409, %v3413
        %s3416 = sld [smem:[#allocation19 + $0x2a]]
        %v3417 = vstv %s3416
        %v3418 = vmul.f32 %v3401, %v3417
        %v3419 = vmul.f32 %v3403, %v3417
        %v3420 = vadd.f32 %v3414, %v3418
        %v3421 = vadd.f32 %v3415, %v3419
        %v3422 = vld [vmem:[%s496 + $0x2] sm:$0xff]
        %v3423 = vld [vmem:[%s496 + $0xa] sm:$0xff]
        %3424 = vrot.lane.b32.xlu0 %v3422, 1
        %v3425 = vpop.permute.xlu0 %3424
        %3426 = vrot.lane.b32.xlu0 %v3423, 1
        %v3427 = vpop.permute.xlu0 %3426
        %3428 = vrot.lane.b32.xlu0 %v3422, 127
        %v3429 = vpop.permute.xlu0 %3428
        %3430 = vrot.lane.b32.xlu0 %v3423, 127
        %v3431 = vpop.permute.xlu0 %3430
        %s3432 = sld [smem:[#allocation19 + $0x32]]
        %v3433 = vstv %s3432
        %v3434 = vmul.f32 %v3425, %v3433
        %v3435 = vmul.f32 %v3427, %v3433
        %v3436 = vadd.f32 %v3420, %v3434
        %v3437 = vadd.f32 %v3421, %v3435
        %s3438 = sld [smem:[#allocation19 + $0x3a]]
        %v3439 = vstv %s3438
        %v3440 = vmul.f32 %v3422, %v3439
        %v3441 = vmul.f32 %v3423, %v3439
        %v3442 = vadd.f32 %v3436, %v3440
        %v3443 = vadd.f32 %v3437, %v3441
        %s3444 = sld [smem:[#allocation19 + $0x42]]
        %v3445 = vstv %s3444
        %v3446 = vmul.f32 %v3429, %v3445
        %v3447 = vmul.f32 %v3431, %v3445
        %v3448 = vadd.f32 %v3442, %v3446
        %v3449 = vadd.f32 %v3443, %v3447
        %v3450 = vld [vmem:[%s499] sm:$0xff]
        %v3451 = vld [vmem:[%s499 + $0x8] sm:$0xff]
        %3452 = vrot.lane.b32.xlu0 %v3450, 1
        %v3453 = vpop.permute.xlu0 %3452
        %3454 = vrot.lane.b32.xlu0 %v3451, 1
        %v3455 = vpop.permute.xlu0 %3454
        %3456 = vrot.lane.b32.xlu0 %v3450, 127
        %v3457 = vpop.permute.xlu0 %3456
        %3458 = vrot.lane.b32.xlu0 %v3451, 127
        %v3459 = vpop.permute.xlu0 %3458
        %s3460 = sld [smem:[#allocation19 + $0x3]]
        %v3461 = vstv %s3460
        %v3462 = vmul.f32 %v3453, %v3461
        %v3463 = vmul.f32 %v3455, %v3461
        %v3464 = vadd.f32 %v3448, %v3462
        %v3465 = vadd.f32 %v3449, %v3463
        %s3466 = sld [smem:[#allocation19 + $0xb]]
        %v3467 = vstv %s3466
        %v3468 = vmul.f32 %v3450, %v3467
        %v3469 = vmul.f32 %v3451, %v3467
        %v3470 = vadd.f32 %v3464, %v3468
        %v3471 = vadd.f32 %v3465, %v3469
        %s3472 = sld [smem:[#allocation19 + $0x13]]
        %v3473 = vstv %s3472
        %v3474 = vmul.f32 %v3457, %v3473
        %v3475 = vmul.f32 %v3459, %v3473
        %v3476 = vadd.f32 %v3470, %v3474
        %v3477 = vadd.f32 %v3471, %v3475
        %v3478 = vld [vmem:[%s499 + $0x1] sm:$0xff]
        %v3479 = vld [vmem:[%s499 + $0x9] sm:$0xff]
        %3480 = vrot.lane.b32.xlu0 %v3478, 1
        %v3481 = vpop.permute.xlu0 %3480
        %3482 = vrot.lane.b32.xlu0 %v3479, 1
        %v3483 = vpop.permute.xlu0 %3482
        %3484 = vrot.lane.b32.xlu0 %v3478, 127
        %v3485 = vpop.permute.xlu0 %3484
        %3486 = vrot.lane.b32.xlu0 %v3479, 127
        %v3487 = vpop.permute.xlu0 %3486
        %s3488 = sld [smem:[#allocation19 + $0x1b]]
        %v3489 = vstv %s3488
        %v3490 = vmul.f32 %v3481, %v3489
        %v3491 = vmul.f32 %v3483, %v3489
        %v3492 = vadd.f32 %v3476, %v3490
        %v3493 = vadd.f32 %v3477, %v3491
        %s3494 = sld [smem:[#allocation19 + $0x23]]
        %v3495 = vstv %s3494
        %v3496 = vmul.f32 %v3478, %v3495
        %v3497 = vmul.f32 %v3479, %v3495
        %v3498 = vadd.f32 %v3492, %v3496
        %v3499 = vadd.f32 %v3493, %v3497
        %s3500 = sld [smem:[#allocation19 + $0x2b]]
        %v3501 = vstv %s3500
        %v3502 = vmul.f32 %v3485, %v3501
        %v3503 = vmul.f32 %v3487, %v3501
        %v3504 = vadd.f32 %v3498, %v3502
        %v3505 = vadd.f32 %v3499, %v3503
        %v3506 = vld [vmem:[%s499 + $0x2] sm:$0xff]
        %v3507 = vld [vmem:[%s499 + $0xa] sm:$0xff]
        %3508 = vrot.lane.b32.xlu0 %v3506, 1
        %v3509 = vpop.permute.xlu0 %3508
        %3510 = vrot.lane.b32.xlu0 %v3507, 1
        %v3511 = vpop.permute.xlu0 %3510
        %3512 = vrot.lane.b32.xlu0 %v3506, 127
        %v3513 = vpop.permute.xlu0 %3512
        %3514 = vrot.lane.b32.xlu0 %v3507, 127
        %v3515 = vpop.permute.xlu0 %3514
        %s3516 = sld [smem:[#allocation19 + $0x33]]
        %v3517 = vstv %s3516
        %v3518 = vmul.f32 %v3509, %v3517
        %v3519 = vmul.f32 %v3511, %v3517
        %v3520 = vadd.f32 %v3504, %v3518
        %v3521 = vadd.f32 %v3505, %v3519
        %s3522 = sld [smem:[#allocation19 + $0x3b]]
        %v3523 = vstv %s3522
        %v3524 = vmul.f32 %v3506, %v3523
        %v3525 = vmul.f32 %v3507, %v3523
        %v3526 = vadd.f32 %v3520, %v3524
        %v3527 = vadd.f32 %v3521, %v3525
        %s3528 = sld [smem:[#allocation19 + $0x43]]
        %v3529 = vstv %s3528
        %v3530 = vmul.f32 %v3513, %v3529
        %v3531 = vmul.f32 %v3515, %v3529
        %v3532 = vadd.f32 %v3526, %v3530
        %v3533 = vadd.f32 %v3527, %v3531
        %v3534 = vld [vmem:[%s502] sm:$0xff]
        %v3535 = vld [vmem:[%s502 + $0x8] sm:$0xff]
        %3536 = vrot.lane.b32.xlu0 %v3534, 1
        %v3537 = vpop.permute.xlu0 %3536
        %3538 = vrot.lane.b32.xlu0 %v3535, 1
        %v3539 = vpop.permute.xlu0 %3538
        %3540 = vrot.lane.b32.xlu0 %v3534, 127
        %v3541 = vpop.permute.xlu0 %3540
        %3542 = vrot.lane.b32.xlu0 %v3535, 127
        %v3543 = vpop.permute.xlu0 %3542
        %s3544 = sld [smem:[#allocation19 + $0x4]]
        %v3545 = vstv %s3544
        %v3546 = vmul.f32 %v3537, %v3545
        %v3547 = vmul.f32 %v3539, %v3545
        %v3548 = vadd.f32 %v3532, %v3546
        %v3549 = vadd.f32 %v3533, %v3547
        %s3550 = sld [smem:[#allocation19 + $0xc]]
        %v3551 = vstv %s3550
        %v3552 = vmul.f32 %v3534, %v3551
        %v3553 = vmul.f32 %v3535, %v3551
        %v3554 = vadd.f32 %v3548, %v3552
        %v3555 = vadd.f32 %v3549, %v3553
        %s3556 = sld [smem:[#allocation19 + $0x14]]
        %v3557 = vstv %s3556
        %v3558 = vmul.f32 %v3541, %v3557
        %v3559 = vmul.f32 %v3543, %v3557
        %v3560 = vadd.f32 %v3554, %v3558
        %v3561 = vadd.f32 %v3555, %v3559
        %v3562 = vld [vmem:[%s502 + $0x1] sm:$0xff]
        %v3563 = vld [vmem:[%s502 + $0x9] sm:$0xff]
        %3564 = vrot.lane.b32.xlu0 %v3562, 1
        %v3565 = vpop.permute.xlu0 %3564
        %3566 = vrot.lane.b32.xlu0 %v3563, 1
        %v3567 = vpop.permute.xlu0 %3566
        %3568 = vrot.lane.b32.xlu0 %v3562, 127
        %v3569 = vpop.permute.xlu0 %3568
        %3570 = vrot.lane.b32.xlu0 %v3563, 127
        %v3571 = vpop.permute.xlu0 %3570
        %s3572 = sld [smem:[#allocation19 + $0x1c]]
        %v3573 = vstv %s3572
        %v3574 = vmul.f32 %v3565, %v3573
        %v3575 = vmul.f32 %v3567, %v3573
        %v3576 = vadd.f32 %v3560, %v3574
        %v3577 = vadd.f32 %v3561, %v3575
        %s3578 = sld [smem:[#allocation19 + $0x24]]
        %v3579 = vstv %s3578
        %v3580 = vmul.f32 %v3562, %v3579
        %v3581 = vmul.f32 %v3563, %v3579
        %v3582 = vadd.f32 %v3576, %v3580
        %v3583 = vadd.f32 %v3577, %v3581
        %s3584 = sld [smem:[#allocation19 + $0x2c]]
        %v3585 = vstv %s3584
        %v3586 = vmul.f32 %v3569, %v3585
        %v3587 = vmul.f32 %v3571, %v3585
        %v3588 = vadd.f32 %v3582, %v3586
        %v3589 = vadd.f32 %v3583, %v3587
        %v3590 = vld [vmem:[%s502 + $0x2] sm:$0xff]
        %v3591 = vld [vmem:[%s502 + $0xa] sm:$0xff]
        %3592 = vrot.lane.b32.xlu0 %v3590, 1
        %v3593 = vpop.permute.xlu0 %3592
        %3594 = vrot.lane.b32.xlu0 %v3591, 1
        %v3595 = vpop.permute.xlu0 %3594
        %3596 = vrot.lane.b32.xlu0 %v3590, 127
        %v3597 = vpop.permute.xlu0 %3596
        %3598 = vrot.lane.b32.xlu0 %v3591, 127
        %v3599 = vpop.permute.xlu0 %3598
        %s3600 = sld [smem:[#allocation19 + $0x34]]
        %v3601 = vstv %s3600
        %v3602 = vmul.f32 %v3593, %v3601
        %v3603 = vmul.f32 %v3595, %v3601
        %v3604 = vadd.f32 %v3588, %v3602
        %v3605 = vadd.f32 %v3589, %v3603
        %s3606 = sld [smem:[#allocation19 + $0x3c]]
        %v3607 = vstv %s3606
        %v3608 = vmul.f32 %v3590, %v3607
        %v3609 = vmul.f32 %v3591, %v3607
        %v3610 = vadd.f32 %v3604, %v3608
        %v3611 = vadd.f32 %v3605, %v3609
        %s3612 = sld [smem:[#allocation19 + $0x44]]
        %v3613 = vstv %s3612
        %v3614 = vmul.f32 %v3597, %v3613
        %v3615 = vmul.f32 %v3599, %v3613
        %v3616 = vadd.f32 %v3610, %v3614
        %v3617 = vadd.f32 %v3611, %v3615
        %v3618 = vld [vmem:[%s505] sm:$0xff]
        %v3619 = vld [vmem:[%s505 + $0x8] sm:$0xff]
        %3620 = vrot.lane.b32.xlu0 %v3618, 1
        %v3621 = vpop.permute.xlu0 %3620
        %3622 = vrot.lane.b32.xlu0 %v3619, 1
        %v3623 = vpop.permute.xlu0 %3622
        %3624 = vrot.lane.b32.xlu0 %v3618, 127
        %v3625 = vpop.permute.xlu0 %3624
        %3626 = vrot.lane.b32.xlu0 %v3619, 127
        %v3627 = vpop.permute.xlu0 %3626
        %s3628 = sld [smem:[#allocation19 + $0x5]]
        %v3629 = vstv %s3628
        %v3630 = vmul.f32 %v3621, %v3629
        %v3631 = vmul.f32 %v3623, %v3629
        %v3632 = vadd.f32 %v3616, %v3630
        %v3633 = vadd.f32 %v3617, %v3631
        %s3634 = sld [smem:[#allocation19 + $0xd]]
        %v3635 = vstv %s3634
        %v3636 = vmul.f32 %v3618, %v3635
        %v3637 = vmul.f32 %v3619, %v3635
        %v3638 = vadd.f32 %v3632, %v3636
        %v3639 = vadd.f32 %v3633, %v3637
        %s3640 = sld [smem:[#allocation19 + $0x15]]
        %v3641 = vstv %s3640
        %v3642 = vmul.f32 %v3625, %v3641
        %v3643 = vmul.f32 %v3627, %v3641
        %v3644 = vadd.f32 %v3638, %v3642
        %v3645 = vadd.f32 %v3639, %v3643
        %v3646 = vld [vmem:[%s505 + $0x1] sm:$0xff]
        %v3647 = vld [vmem:[%s505 + $0x9] sm:$0xff]
        %3648 = vrot.lane.b32.xlu0 %v3646, 1
        %v3649 = vpop.permute.xlu0 %3648
        %3650 = vrot.lane.b32.xlu0 %v3647, 1
        %v3651 = vpop.permute.xlu0 %3650
        %3652 = vrot.lane.b32.xlu0 %v3646, 127
        %v3653 = vpop.permute.xlu0 %3652
        %3654 = vrot.lane.b32.xlu0 %v3647, 127
        %v3655 = vpop.permute.xlu0 %3654
        %s3656 = sld [smem:[#allocation19 + $0x1d]]
        %v3657 = vstv %s3656
        %v3658 = vmul.f32 %v3649, %v3657
        %v3659 = vmul.f32 %v3651, %v3657
        %v3660 = vadd.f32 %v3644, %v3658
        %v3661 = vadd.f32 %v3645, %v3659
        %s3662 = sld [smem:[#allocation19 + $0x25]]
        %v3663 = vstv %s3662
        %v3664 = vmul.f32 %v3646, %v3663
        %v3665 = vmul.f32 %v3647, %v3663
        %v3666 = vadd.f32 %v3660, %v3664
        %v3667 = vadd.f32 %v3661, %v3665
        %s3668 = sld [smem:[#allocation19 + $0x2d]]
        %v3669 = vstv %s3668
        %v3670 = vmul.f32 %v3653, %v3669
        %v3671 = vmul.f32 %v3655, %v3669
        %v3672 = vadd.f32 %v3666, %v3670
        %v3673 = vadd.f32 %v3667, %v3671
        %v3674 = vld [vmem:[%s505 + $0x2] sm:$0xff]
        %v3675 = vld [vmem:[%s505 + $0xa] sm:$0xff]
        %3676 = vrot.lane.b32.xlu0 %v3674, 1
        %v3677 = vpop.permute.xlu0 %3676
        %3678 = vrot.lane.b32.xlu0 %v3675, 1
        %v3679 = vpop.permute.xlu0 %3678
        %3680 = vrot.lane.b32.xlu0 %v3674, 127
        %v3681 = vpop.permute.xlu0 %3680
        %3682 = vrot.lane.b32.xlu0 %v3675, 127
        %v3683 = vpop.permute.xlu0 %3682
        %s3684 = sld [smem:[#allocation19 + $0x35]]
        %v3685 = vstv %s3684
        %v3686 = vmul.f32 %v3677, %v3685
        %v3687 = vmul.f32 %v3679, %v3685
        %v3688 = vadd.f32 %v3672, %v3686
        %v3689 = vadd.f32 %v3673, %v3687
        %s3690 = sld [smem:[#allocation19 + $0x3d]]
        %v3691 = vstv %s3690
        %v3692 = vmul.f32 %v3674, %v3691
        %v3693 = vmul.f32 %v3675, %v3691
        %v3694 = vadd.f32 %v3688, %v3692
        %v3695 = vadd.f32 %v3689, %v3693
        %s3696 = sld [smem:[#allocation19 + $0x45]]
        %v3697 = vstv %s3696
        %v3698 = vmul.f32 %v3681, %v3697
        %v3699 = vmul.f32 %v3683, %v3697
        %v3700 = vadd.f32 %v3694, %v3698
        %v3701 = vadd.f32 %v3695, %v3699
        %v3702 = vld [vmem:[%s508] sm:$0xff]
        %v3703 = vld [vmem:[%s508 + $0x8] sm:$0xff]
        %3704 = vrot.lane.b32.xlu0 %v3702, 1
        %v3705 = vpop.permute.xlu0 %3704
        %3706 = vrot.lane.b32.xlu0 %v3703, 1
        %v3707 = vpop.permute.xlu0 %3706
        %3708 = vrot.lane.b32.xlu0 %v3702, 127
        %v3709 = vpop.permute.xlu0 %3708
        %3710 = vrot.lane.b32.xlu0 %v3703, 127
        %v3711 = vpop.permute.xlu0 %3710
        %s3712 = sld [smem:[#allocation19 + $0x6]]
        %v3713 = vstv %s3712
        %v3714 = vmul.f32 %v3705, %v3713
        %v3715 = vmul.f32 %v3707, %v3713
        %v3716 = vadd.f32 %v3700, %v3714
        %v3717 = vadd.f32 %v3701, %v3715
        %s3718 = sld [smem:[#allocation19 + $0xe]]
        %v3719 = vstv %s3718
        %v3720 = vmul.f32 %v3702, %v3719
        %v3721 = vmul.f32 %v3703, %v3719
        %v3722 = vadd.f32 %v3716, %v3720
        %v3723 = vadd.f32 %v3717, %v3721
        %s3724 = sld [smem:[#allocation19 + $0x16]]
        %v3725 = vstv %s3724
        %v3726 = vmul.f32 %v3709, %v3725
        %v3727 = vmul.f32 %v3711, %v3725
        %v3728 = vadd.f32 %v3722, %v3726
        %v3729 = vadd.f32 %v3723, %v3727
        %v3730 = vld [vmem:[%s508 + $0x1] sm:$0xff]
        %v3731 = vld [vmem:[%s508 + $0x9] sm:$0xff]
        %3732 = vrot.lane.b32.xlu0 %v3730, 1
        %v3733 = vpop.permute.xlu0 %3732
        %3734 = vrot.lane.b32.xlu0 %v3731, 1
        %v3735 = vpop.permute.xlu0 %3734
        %3736 = vrot.lane.b32.xlu0 %v3730, 127
        %v3737 = vpop.permute.xlu0 %3736
        %3738 = vrot.lane.b32.xlu0 %v3731, 127
        %v3739 = vpop.permute.xlu0 %3738
        %s3740 = sld [smem:[#allocation19 + $0x1e]]
        %v3741 = vstv %s3740
        %v3742 = vmul.f32 %v3733, %v3741
        %v3743 = vmul.f32 %v3735, %v3741
        %v3744 = vadd.f32 %v3728, %v3742
        %v3745 = vadd.f32 %v3729, %v3743
        %s3746 = sld [smem:[#allocation19 + $0x26]]
        %v3747 = vstv %s3746
        %v3748 = vmul.f32 %v3730, %v3747
        %v3749 = vmul.f32 %v3731, %v3747
        %v3750 = vadd.f32 %v3744, %v3748
        %v3751 = vadd.f32 %v3745, %v3749
        %s3752 = sld [smem:[#allocation19 + $0x2e]]
        %v3753 = vstv %s3752
        %v3754 = vmul.f32 %v3737, %v3753
        %v3755 = vmul.f32 %v3739, %v3753
        %v3756 = vadd.f32 %v3750, %v3754
        %v3757 = vadd.f32 %v3751, %v3755
        %v3758 = vld [vmem:[%s508 + $0x2] sm:$0xff]
        %v3759 = vld [vmem:[%s508 + $0xa] sm:$0xff]
        %3760 = vrot.lane.b32.xlu0 %v3758, 1
        %v3761 = vpop.permute.xlu0 %3760
        %3762 = vrot.lane.b32.xlu0 %v3759, 1
        %v3763 = vpop.permute.xlu0 %3762
        %3764 = vrot.lane.b32.xlu0 %v3758, 127
        %v3765 = vpop.permute.xlu0 %3764
        %3766 = vrot.lane.b32.xlu0 %v3759, 127
        %v3767 = vpop.permute.xlu0 %3766
        %s3768 = sld [smem:[#allocation19 + $0x36]]
        %v3769 = vstv %s3768
        %v3770 = vmul.f32 %v3761, %v3769
        %v3771 = vmul.f32 %v3763, %v3769
        %v3772 = vadd.f32 %v3756, %v3770
        %v3773 = vadd.f32 %v3757, %v3771
        %s3774 = sld [smem:[#allocation19 + $0x3e]]
        %v3775 = vstv %s3774
        %v3776 = vmul.f32 %v3758, %v3775
        %v3777 = vmul.f32 %v3759, %v3775
        %v3778 = vadd.f32 %v3772, %v3776
        %v3779 = vadd.f32 %v3773, %v3777
        %s3780 = sld [smem:[#allocation19 + $0x46]]
        %v3781 = vstv %s3780
        %v3782 = vmul.f32 %v3765, %v3781
        %v3783 = vmul.f32 %v3767, %v3781
        %v3784 = vadd.f32 %v3778, %v3782
        %v3785 = vadd.f32 %v3779, %v3783
        %v3786 = vld [vmem:[%s511] sm:$0xff]
        %v3787 = vld [vmem:[%s511 + $0x8] sm:$0xff]
        %3788 = vrot.lane.b32.xlu0 %v3786, 1
        %v3789 = vpop.permute.xlu0 %3788
        %3790 = vrot.lane.b32.xlu0 %v3787, 1
        %v3791 = vpop.permute.xlu0 %3790
        %3792 = vrot.lane.b32.xlu0 %v3786, 127
        %v3793 = vpop.permute.xlu0 %3792
        %3794 = vrot.lane.b32.xlu0 %v3787, 127
        %v3795 = vpop.permute.xlu0 %3794
        %s3796 = sld [smem:[#allocation19 + $0x7]]
        %v3797 = vstv %s3796
        %v3798 = vmul.f32 %v3789, %v3797
        %v3799 = vmul.f32 %v3791, %v3797
        %v3800 = vadd.f32 %v3784, %v3798
        %v3801 = vadd.f32 %v3785, %v3799
        %s3802 = sld [smem:[#allocation19 + $0xf]]
        %v3803 = vstv %s3802
        %v3804 = vmul.f32 %v3786, %v3803
        %v3805 = vmul.f32 %v3787, %v3803
        %v3806 = vadd.f32 %v3800, %v3804
        %v3807 = vadd.f32 %v3801, %v3805
        %s3808 = sld [smem:[#allocation19 + $0x17]]
        %v3809 = vstv %s3808
        %v3810 = vmul.f32 %v3793, %v3809
        %v3811 = vmul.f32 %v3795, %v3809
        %v3812 = vadd.f32 %v3806, %v3810
        %v3813 = vadd.f32 %v3807, %v3811
        %v3814 = vld [vmem:[%s511 + $0x1] sm:$0xff]
        %v3815 = vld [vmem:[%s511 + $0x9] sm:$0xff]
        %3816 = vrot.lane.b32.xlu0 %v3814, 1
        %v3817 = vpop.permute.xlu0 %3816
        %3818 = vrot.lane.b32.xlu0 %v3815, 1
        %v3819 = vpop.permute.xlu0 %3818
        %3820 = vrot.lane.b32.xlu0 %v3814, 127
        %v3821 = vpop.permute.xlu0 %3820
        %3822 = vrot.lane.b32.xlu0 %v3815, 127
        %v3823 = vpop.permute.xlu0 %3822
        %s3824 = sld [smem:[#allocation19 + $0x1f]]
        %v3825 = vstv %s3824
        %v3826 = vmul.f32 %v3817, %v3825
        %v3827 = vmul.f32 %v3819, %v3825
        %v3828 = vadd.f32 %v3812, %v3826
        %v3829 = vadd.f32 %v3813, %v3827
        %s3830 = sld [smem:[#allocation19 + $0x27]]
        %v3831 = vstv %s3830
        %v3832 = vmul.f32 %v3814, %v3831
        %v3833 = vmul.f32 %v3815, %v3831
        %v3834 = vadd.f32 %v3828, %v3832
        %v3835 = vadd.f32 %v3829, %v3833
        %s3836 = sld [smem:[#allocation19 + $0x2f]]
        %v3837 = vstv %s3836
        %v3838 = vmul.f32 %v3821, %v3837
        %v3839 = vmul.f32 %v3823, %v3837
        %v3840 = vadd.f32 %v3834, %v3838
        %v3841 = vadd.f32 %v3835, %v3839
        %v3842 = vld [vmem:[%s511 + $0x2] sm:$0xff]
        %v3843 = vld [vmem:[%s511 + $0xa] sm:$0xff]
        %3844 = vrot.lane.b32.xlu0 %v3842, 1
        %v3845 = vpop.permute.xlu0 %3844
        %3846 = vrot.lane.b32.xlu0 %v3843, 1
        %v3847 = vpop.permute.xlu0 %3846
        %3848 = vrot.lane.b32.xlu0 %v3842, 127
        %v3849 = vpop.permute.xlu0 %3848
        %3850 = vrot.lane.b32.xlu0 %v3843, 127
        %v3851 = vpop.permute.xlu0 %3850
        %s3852 = sld [smem:[#allocation19 + $0x37]]
        %v3853 = vstv %s3852
        %v3854 = vmul.f32 %v3845, %v3853
        %v3855 = vmul.f32 %v3847, %v3853
        %v3856 = vadd.f32 %v3840, %v3854
        %v3857 = vadd.f32 %v3841, %v3855
        %s3858 = sld [smem:[#allocation19 + $0x3f]]
        %v3859 = vstv %s3858
        %v3860 = vmul.f32 %v3842, %v3859
        %v3861 = vmul.f32 %v3843, %v3859
        %v3862 = vadd.f32 %v3856, %v3860
        %v3863 = vadd.f32 %v3857, %v3861
        %s3864 = sld [smem:[#allocation19 + $0x47]]
        %v3865 = vstv %s3864
        %v3866 = vmul.f32 %v3849, %v3865
        %v3867 = vmul.f32 %v3851, %v3865
        %v3868 = vadd.f32 %v3862, %v3866
        %v3869 = vadd.f32 %v3863, %v3867
        %v3870 = vsel %vm2198, %v3868, 0.0
        %v3871 = vsel %vm2198, %v3869, 0.0
        %v3872 = vadd.f32 %v2183, %v3870
        %v3873 = vadd.f32 %v2186, %v3871
        %3874 = vst.msk [vmem:[%s412] sm:$0xff] %vm2192, %v3872
        %3875 = vst.msk [vmem:[%s412 + $0x8] sm:$0xff] %vm2192, %v3873
        %s3876 = sand.u32 %s235, 1
        %s3877 = scalar_lea.sflag [#allocation23], %s3876
        %s3878 = sand.u32 %s235, 1
        %s3879 = smul.addr %s3878, 16
        %s3880 = scalar_lea.vmem [#allocation26], %s3879
        %s3881 = sand.u32 %s91, 1
        %s3882 = scalar_lea.sflag [#allocation28], %s3881
        %s3883 = sand.u32 %s261, 1
        %s3884 = smul.addr %s3883, 8
        %s3885 = scalar_lea.vmem [#allocation27], %s3884
        %s3886 = sand.u32 %s91, 1
        %s3887 = scalar_lea.sflag [#allocation28], %s3886
        %s3888 = sand.u32 %s287, 1
        %s3889 = smul.addr %s3888, 4
        %s3890 = scalar_lea.vmem [#allocation29], %s3889
        // Predicated region
        $region53: #{pyramid_forward.1} parent=43 // pred_check
          %p3891 = pneg %p245
        $region54: #{pyramid_forward.1} parent=43 // pred_check_branch
          %3893 = sbr.rel (%p3891) target = $region56
        $region55: #{pyramid_forward.1} parent=43 // pred_region
          %3895 = vsyncadd %s3877, 0
          %s3896 = smul.addr %s91, 2
          %s3897 = smul.addr %s3896, 8
          %s3898 = scalar_lea.hbm %s18, %s3897
          %s3899 = sshll.u32 %s3880, 4
          %s3900 = int_to_ptr.vmem [resolvable:$true] %s3899
          %s3901 = sshll.u32 %s3898, 4
          %s3902 = int_to_ptr.hbm [resolvable:$true] %s3901
          %3907 = dma.vmem_to_hbm [thread:$0]  %s3900, 256, %s3902, %s3877, 128, 128, 8
        $region56: #{pyramid_forward.1} parent=43 // pred_fallthru
          _
        // Predicated region
        $region57: #{pyramid_forward.1} parent=43 // pred_check
          %p3908 = pneg %p271
        $region58: #{pyramid_forward.1} parent=43 // pred_check_branch
          %3910 = sbr.rel (%p3908) target = $region60
        $region59: #{pyramid_forward.1} parent=43 // pred_region
          %3912 = vsyncadd %s3882, 0
          %s3913 = smul.addr %s91, 8
          %s3914 = scalar_lea.hbm %s19, %s3913
          %s3916 = sshll.u32 %s3885, 4
          %s3917 = int_to_ptr.vmem [resolvable:$true] %s3916
          %s3918 = sshll.u32 %s3914, 4
          %s3919 = int_to_ptr.hbm [resolvable:$true] %s3918
          %3921 = dma.vmem_to_hbm [thread:$0]  %s3917, 128, %s3919, %s3882
        $region60: #{pyramid_forward.1} parent=43 // pred_fallthru
          _
        // Predicated region
        $region61: #{pyramid_forward.1} parent=43 // pred_check
          %p3922 = pneg %p297
        $region62: #{pyramid_forward.1} parent=43 // pred_check_branch
          %3924 = sbr.rel (%p3922) target = $region64
        $region63: #{pyramid_forward.1} parent=43 // pred_region
          %3926 = vsyncadd %s3887, 0
          %s3927 = smul.addr %s91, 4
          %s3928 = scalar_lea.hbm %s20, %s3927
          %s3930 = sshll.u32 %s3890, 4
          %s3931 = int_to_ptr.vmem [resolvable:$true] %s3930
          %s3932 = sshll.u32 %s3928, 4
          %s3933 = int_to_ptr.hbm [resolvable:$true] %s3932
          %3935 = dma.vmem_to_hbm [thread:$0]  %s3931, 64, %s3933, %s3887
        $region64: #{pyramid_forward.1} parent=43 // pred_fallthru
          _
      $region44: #{pyramid_forward.1} parent=5 // pred_fallthru
        _
      %p3936 = scmp.le.s32.totalorder 2, %s86
      // Predicated region
      $region65: #{pyramid_forward.1} parent=5 // pred_check
        %p3937 = pneg %p3936
      $region66: #{pyramid_forward.1} parent=5 // pred_check_branch
        %3939 = sbr.rel (%p3937) target = $region68
      $region67: #{pyramid_forward.1} parent=5 // pred_region
        %s3940 = ssub.s32 %s86, 2
        // Predicated region
        $region69: #{pyramid_forward.1} parent=67 // pred_check
          %p3941 = pneg %p251
        $region70: #{pyramid_forward.1} parent=67 // pred_check_branch
          %3943 = sbr.rel (%p3941) target = $region72
        $region71: #{pyramid_forward.1} parent=67 // pred_region
          %s3944 = sand.u32 %s236, 1
          %s3945 = scalar_lea.sflag [#allocation23], %s3944
          %s3946 = sand.u32 %s236, 1
          %s3947 = smul.addr %s3946, 16
          %s3948 = scalar_lea.vmem [#allocation26], %s3947
          %3950 = dma.done %s3945, 256
        $region72: #{pyramid_forward.1} parent=67 // pred_fallthru
          _
        // Predicated region
        $region73: #{pyramid_forward.1} parent=67 // pred_check
          %p3951 = pneg %p277
        $region74: #{pyramid_forward.1} parent=67 // pred_check_branch
          %3953 = sbr.rel (%p3951) target = $region76
        $region75: #{pyramid_forward.1} parent=67 // pred_region
          %s3954 = sand.u32 %s92, 1
          %s3955 = scalar_lea.sflag [#allocation28], %s3954
          %s3956 = sand.u32 %s262, 1
          %s3957 = smul.addr %s3956, 8
          %s3958 = scalar_lea.vmem [#allocation27], %s3957
          %3960 = dma.done %s3955, 128
        $region76: #{pyramid_forward.1} parent=67 // pred_fallthru
          _
        // Predicated region
        $region77: #{pyramid_forward.1} parent=67 // pred_check
          %p3961 = pneg %p303
        $region78: #{pyramid_forward.1} parent=67 // pred_check_branch
          %3963 = sbr.rel (%p3961) target = $region80
        $region79: #{pyramid_forward.1} parent=67 // pred_region
          %s3964 = sand.u32 %s92, 1
          %s3965 = scalar_lea.sflag [#allocation28], %s3964
          %s3966 = sand.u32 %s288, 1
          %s3967 = smul.addr %s3966, 4
          %s3968 = scalar_lea.vmem [#allocation29], %s3967
          %3970 = dma.done %s3965, 64
        $region80: #{pyramid_forward.1} parent=67 // pred_fallthru
          _
      $region68: #{pyramid_forward.1} parent=5 // pred_fallthru
        _
    $region6: #{pyramid_forward.1} parent=1 // loop_footer
      %s90 = sadd.s32 1, %s86
    $region7: #{pyramid_forward.1} parent=1 // loop_footer_branch
      %85 = sbr.rel target = $region3
    $region8: #{pyramid_forward.1} parent=1 // loop_exit
      _
    %3971 = vsyncpa [#allocation22], 1
    %s3972 = scalar_lea.sflag [#allocation22], 1
    %3973 = vsyncpa %s3972, 1
    %3974 = vsyncpa [#allocation25], 1
    %3975 = vsyncpa [#allocation23], 1
    %s3976 = scalar_lea.sflag [#allocation23], 1
    %3977 = vsyncpa %s3976, 1
    %3978 = vsyncpa [#allocation28], 1
    %s3979 = scalar_lea.sflag [#allocation28], 1
    %3980 = vsyncpa %s3979, 1

</llo_original>
